<compile_context>
chip_gen: v7x
topology: tpu7x:2x2x1
jax: 0.10.0
libtpu: 0.0.40
codegen_flags: <defaults>
</compile_context>

<pallas_src>
import numpy as np
import jax
import jax.numpy as jnp
from jax import lax
from jax.experimental import pallas as pl
from jax.experimental.pallas import tpu as pltpu


# ------------------------------------------------------------------------------
# Hardware heuristics
# ------------------------------------------------------------------------------
def _device_kind():
    try:
        return jax.devices()[0].device_kind.lower()
    except Exception:
        return ""


def _pick_vmem_limit_bytes():
    """Generation-aware scoped-VMEM limit (v7x has only 64 MiB physical per TC)."""
    try:
        cap = getattr(pltpu.get_tpu_info(), "vmem_capacity_bytes", None)
        if cap:
            return int(min(0.8 * cap, 110 * 2**20))
    except Exception:
        pass
    kind = _device_kind()
    if "v7" in kind:
        return 48 * 2**20
    if "v5" in kind or "v6" in kind:
        return 100 * 2**20
    return 64 * 2**20


def _default_use_gauss():
    """Gauss 3-multiply only pays off on v5e (slow MXU); 4-matmul elsewhere."""
    kind = _device_kind()
    return ("v5e" in kind) or ("v5 lite" in kind) or ("v5lite" in kind)


def _padded_size(n):
    # Lane-dense multiple of 128 (e.g. 400 -> 512); keep small test sizes as-is.
    if n <= 128 or n % 128 == 0:
        return n
    return ((n + 127) // 128) * 128


# ------------------------------------------------------------------------------
# Kernel: all (num_layers + 1) propagation steps for one batch element
# ------------------------------------------------------------------------------
def _make_dnn_kernel(num_layers, use_gauss):
    bf16 = jnp.bfloat16
    f32 = jnp.float32
    n_const = 8 if use_gauss else 4

    def kernel(*refs):
        xr_ref, xi_ref = refs[:2]                       # (1, Np, Np) input field
        crefs = refs[2:2 + n_const]                     # bf16 DFT constants
        hr_ref, hi_ref, mc_ref, ms_ref = refs[2 + n_const:6 + n_const]
        or_ref, oi_ref, abs_ref = refs[6 + n_const:9 + n_const]
        if use_gauss:
            (fr_ref, fi_ref, sf_ref, df_ref,
             gr_ref, gi_ref, sg_ref, dg_ref) = crefs
        else:
            fr_ref, fi_ref, gr_ref, gi_ref = crefs
            sf_ref = df_ref = sg_ref = dg_ref = None

        def dot32(a, b):
            return jnp.dot(a, b, preferred_element_type=f32)

        def cmm_const_left(cr_ref, ci_ref, cs_ref, ar, ai):
            """(C) @ (a): C = cr + i*ci resident bf16 constant, a = ar + i*ai f32."""
            if use_gauss:
                # k1=(Cr+Ci)@ar, k2=Cr@(ai-ar), k3=Ci@(ar+ai); re=k1-k3, im=k1+k2
                k1 = dot32(cs_ref[...], ar.astype(bf16))
                k2 = dot32(cr_ref[...], (ai - ar).astype(bf16))
                k3 = dot32(ci_ref[...], (ar + ai).astype(bf16))
                return k1 - k3, k1 + k2
            arb = ar.astype(bf16)
            aib = ai.astype(bf16)
            return (dot32(cr_ref[...], arb) - dot32(ci_ref[...], aib),
                    dot32(cr_ref[...], aib) + dot32(ci_ref[...], arb))

        def cmm_const_right(ar, ai, cr_ref, ci_ref, cs_ref, cd_ref):
            """(a) @ (C): C = cr + i*ci const; cs = Cr+Ci, cd = Ci-Cr precomputed bf16."""
            if use_gauss:
                k1 = dot32((ar + ai).astype(bf16), cr_ref[...])
                k2 = dot32(ar.astype(bf16), cd_ref[...])
                k3 = dot32(ai.astype(bf16), cs_ref[...])
                return k1 - k3, k1 + k2
            arb = ar.astype(bf16)
            aib = ai.astype(bf16)
            return (dot32(arb, cr_ref[...]) - dot32(aib, ci_ref[...]),
                    dot32(arb, ci_ref[...]) + dot32(aib, cr_ref[...]))

        def propagate(ar, ai):
            """Angular-spectrum step x -> ifft2(fft2(x) * H) as dense DFT matmuls."""
            tr, ti = cmm_const_left(fr_ref, fi_ref, sf_ref, ar, ai)            # F @ a
            tr, ti = cmm_const_right(tr, ti, fr_ref, fi_ref, sf_ref, df_ref)   # . @ F
            hr = hr_ref[...]
            hi = hi_ref[...]
            ur = tr * hr - ti * hi                                             # * H (VPU, f32)
            ui = tr * hi + ti * hr
            vr, vi = cmm_const_left(gr_ref, gi_ref, sg_ref, ur, ui)            # G @ u
            return cmm_const_right(vr, vi, gr_ref, gi_ref, sg_ref, dg_ref)     # . @ G

        # Field accumulator lives in the resident output VMEM block.
        or_ref[0] = xr_ref[0]
        oi_ref[0] = xi_ref[0]

        def layer_step(i, carry):
            ar, ai = or_ref[0], oi_ref[0]
            ar, ai = propagate(ar, ai)
            # phase-only modulation: * exp(i * 2*pi*sigmoid(phase_i))
            cr = mc_ref[i].astype(f32)
            ci = ms_ref[i].astype(f32)
            or_ref[0] = ar * cr - ai * ci
            oi_ref[0] = ar * ci + ai * cr
            return carry

        lax.fori_loop(0, num_layers, layer_step, 0)

        # Last diffractive layer: propagation only (identity mask skipped), fused
        # |x|^2 epilogue.
        ar, ai = propagate(or_ref[0], oi_ref[0])
        or_ref[0] = ar
        oi_ref[0] = ai
        abs_ref[0] = ar * ar + ai * ai

    return kernel


# ------------------------------------------------------------------------------
# pallas_call wrapper
# ------------------------------------------------------------------------------
def _dnn_pallas_call(xr, xi, mcos, msin, consts, use_gauss, single_buffer_consts):
    B, Np, _ = xr.shape
    L = mcos.shape[0]
    kernel = _make_dnn_kernel(L, use_gauss)

    if use_gauss:
        const_args = (consts["Fr"], consts["Fi"], consts["SF"], consts["DF"],
                      consts["Gr"], consts["Gi"], consts["SG"], consts["DG"])
    else:
        const_args = (consts["Fr"], consts["Fi"], consts["Gr"], consts["Gi"])

    spec_kw = {}
    if single_buffer_consts and hasattr(pl, "Buffered"):
        # Constant-index blocks never change -> single buffer halves their VMEM.
        spec_kw = {"pipeline_mode": pl.Buffered(1)}

    fld_in = pl.BlockSpec((1, Np, Np), lambda b: (b, 0, 0))
    mat = pl.BlockSpec((Np, Np), lambda b: (0, 0), **spec_kw)
    msk = pl.BlockSpec((L, Np, Np), lambda b: (0, 0, 0), **spec_kw)
    fld_out = pl.BlockSpec((1, Np, Np), lambda b: (b, 0, 0))

    return pl.pallas_call(
        kernel,
        out_shape=(jax.ShapeDtypeStruct((B, Np, Np), jnp.float32),) * 3,
        grid=(B,),
        in_specs=[fld_in, fld_in] + [mat] * (len(const_args) + 2) + [msk, msk],
        out_specs=(fld_out, fld_out, fld_out),
        compiler_params=pltpu.CompilerParams(
            # batch axis is megacore-shardable on v7x (needs B >= 2 to use both TCs);
            # all constants are resident so there is no sequential grid axis.
            dimension_semantics=("parallel",),
            vmem_limit_bytes=_pick_vmem_limit_bytes()),
    )(xr, xi, *const_args, consts["Hr"], consts["Hi"], mcos, msin)


# ------------------------------------------------------------------------------
# Host-side constant construction (mirrors DNN.__init__ / DiffractiveLayer)
# ------------------------------------------------------------------------------
def make_dnn_constants(N, wl=5.32e-07, pixel_size=2e-05, distance=0.01):
    """DFT matrices (zero-padded, pre-cast to bf16) + angular-spectrum transfer fn."""
    Np = _padded_size(N)

    j = np.arange(N)
    F = np.exp(-2j * np.pi * np.outer(j, j) / N)            # (N, N) complex128
    G = np.conj(F) / N

    fx = np.fft.fftfreq(N, d=pixel_size)
    FX, FY = np.meshgrid(fx, fx)
    arg = 1.0 - (wl * FX) ** 2 - (wl * FY) ** 2
    prop_mask = (arg > 0.0).astype(np.float64)
    H = np.exp(1j * 2.0 * np.pi / wl * distance *
               np.sqrt(np.clip(arg, 0.0, None))) * prop_mask

    def pad(a):
        return np.pad(a, ((0, Np - N), (0, Np - N)))

    Fr, Fi = pad(F.real), pad(F.imag)
    Gr, Gi = pad(G.real), pad(G.imag)
    Hr, Hi = pad(H.real), pad(H.imag)

    bf = jnp.bfloat16
    return {
        "N": N, "Np": Np,
        # bf16 MXU constants (casts hoisted out of the kernel).
        "Fr": jnp.asarray(Fr, bf), "Fi": jnp.asarray(Fi, bf),
        "Gr": jnp.asarray(Gr, bf), "Gi": jnp.asarray(Gi, bf),
        # precomputed Gauss 3-multiply combinations (used on the v5e path only).
        "SF": jnp.asarray(Fr + Fi, bf), "DF": jnp.asarray(Fi - Fr, bf),
        "SG": jnp.asarray(Gr + Gi, bf), "DG": jnp.asarray(Gi - Gr, bf),
        # transfer function kept f32 (elementwise on the VPU).
        "Hr": jnp.asarray(Hr, jnp.float32), "Hi": jnp.asarray(Hi, jnp.float32),
    }


# ------------------------------------------------------------------------------
# Model forward (mirrors DNN.forward)
# ------------------------------------------------------------------------------
def dnn_apply(xr, xi, phases, consts, *, use_gauss=None, single_buffer_consts=True):
    """num_layers modulated propagations + final propagation, then |x|^2.

    Returns (output, x_abs, field_real, field_imag)."""
    if use_gauss is None:
        use_gauss = _default_use_gauss()

    B, N, _ = xr.shape
    Np = consts["Np"]
    assert consts["N"] == N

    # constr_phase = 2*pi*sigmoid(phase); modulation mask = exp(i*constr_phase).
    # cos/sin computed once per forward outside the kernel (tiny vs field compute)
    # and passed as VMEM-resident bf16 stacks.
    theta = 2.0 * jnp.pi * jax.nn.sigmoid(phases.astype(jnp.float32))
    mcos = jnp.cos(theta)
    msin = jnp.sin(theta)

    if Np != N:
        padw = ((0, 0), (0, Np - N), (0, Np - N))
        xr, xi = jnp.pad(xr, padw), jnp.pad(xi, padw)
        mcos, msin = jnp.pad(mcos, padw), jnp.pad(msin, padw)
    mcos = mcos.astype(jnp.bfloat16)
    msin = msin.astype(jnp.bfloat16)

    try:
        out_r, out_i, x_abs = _dnn_pallas_call(
            xr, xi, mcos, msin, consts, use_gauss, single_buffer_consts)
    except Exception:
        if not single_buffer_consts:
            raise
        # pl.Buffered(1) not supported by this jax version: fall back to default
        # double buffering (identical semantics, slightly more VMEM).
        out_r, out_i, x_abs = _dnn_pallas_call(
            xr, xi, mcos, msin, consts, use_gauss, False)

    if Np != N:
        out_r = out_r[:, :N, :N]
        out_i = out_i[:, :N, :N]
        x_abs = x_abs[:, :N, :N]

    # TODO(synk): detector_region() not provided; intensity map passed through.
    output = x_abs
    return output, x_abs, out_r, out_i


# ------------------------------------------------------------------------------
if __name__ == "__main__":
    WL, PIXEL, DIST = 5.32e-07, 2e-05, 0.01

    def numpy_reference(xr, xi, phases):
        N = xr.shape[-1]
        x = (np.asarray(xr) + 1j * np.asarray(xi)).astype(np.complex128)
        fx = np.fft.fftfreq(N, d=PIXEL)
        FX, FY = np.meshgrid(fx, fx)
        arg = 1.0 - (WL * FX) ** 2 - (WL * FY) ** 2
        H = (np.exp(1j * 2.0 * np.pi / WL * DIST * np.sqrt(np.clip(arg, 0.0, None)))
             * (arg > 0.0))
        theta = 2.0 * np.pi / (1.0 + np.exp(-np.asarray(phases, np.float64)))
        z = x
        for i in range(phases.shape[0]):
            z = np.fft.ifft2(np.fft.fft2(z) * H)
            z = z * np.exp(1j * theta[i])
        z = np.fft.ifft2(np.fft.fft2(z) * H)
        return z, np.abs(z) ** 2

    def run_case(label, key, B, N, L, use_gauss, tol_field, tol_abs):
        k_ph, k_re, k_im = jax.random.split(key, 3)
        phases = jax.random.uniform(k_ph, (L, N, N), dtype=jnp.float32) - 0.5
        xr = jax.random.normal(k_re, (B, N, N), dtype=jnp.float32)
        xi = jax.random.normal(k_im, (B, N, N), dtype=jnp.float32)

        consts = make_dnn_constants(N, WL, PIXEL, DIST)
        output, x_abs, out_r, out_i = dnn_apply(xr, xi, phases, consts,
                                                use_gauss=use_gauss)
        x_abs = jax.block_until_ready(x_abs)

        ref_field, ref_abs = numpy_reference(xr, xi, phases)
        got_field = np.asarray(out_r) + 1j * np.asarray(out_i)
        got_abs = np.asarray(x_abs)

        assert got_abs.shape == (B, N, N)
        assert np.all(np.isfinite(got_abs))
        f_err = (np.linalg.norm(got_field - ref_field)
                 / (np.linalg.norm(ref_field) + 1e-12))
        a_err = (np.linalg.norm(got_abs - ref_abs)
                 / (np.linalg.norm(ref_abs) + 1e-12))
        # bf16-operand matmul chains: a few % relative error expected; structural
        # errors would be O(1).
        assert f_err < tol_field, f"{label}: field rel L2 err {f_err:.4f}"
        assert a_err < tol_abs, f"{label}: |x|^2 rel L2 err {a_err:.4f}"

    key = jax.random.PRNGKey(0)
    k1, k2, k3 = jax.random.split(key, 3)
    run_case("N=64 / 4-matmul", k1, B=2, N=64, L=3, use_gauss=False,
             tol_field=0.10, tol_abs=0.15)
    run_case("N=64 / Gauss (v5e path)", k2, B=2, N=64, L=3, use_gauss=True,
             tol_field=0.10, tol_abs=0.15)
    run_case("N=160 -> padded 256", k3, B=1, N=160, L=2, use_gauss=None,
             tol_field=0.15, tol_abs=0.20)
    print("KERNEL_OK")
</pallas_src>

<mosaic_0001>
module attributes {stable_mosaic.version = 11 : i64} {
  func.func @kernel(%arg0: i32, %arg1: memref<1x64x64xf32, #tpu.memory_space<vmem>>, %arg2: memref<1x64x64xf32, #tpu.memory_space<vmem>>, %arg3: memref<64x64xbf16, #tpu.memory_space<vmem>>, %arg4: memref<64x64xbf16, #tpu.memory_space<vmem>>, %arg5: memref<64x64xbf16, #tpu.memory_space<vmem>>, %arg6: memref<64x64xbf16, #tpu.memory_space<vmem>>, %arg7: memref<64x64xf32, #tpu.memory_space<vmem>>, %arg8: memref<64x64xf32, #tpu.memory_space<vmem>>, %arg9: memref<3x64x64xbf16, #tpu.memory_space<vmem>>, %arg10: memref<3x64x64xbf16, #tpu.memory_space<vmem>>, %arg11: memref<1x64x64xf32, #tpu.memory_space<vmem>>, %arg12: memref<1x64x64xf32, #tpu.memory_space<vmem>>, %arg13: memref<1x64x64xf32, #tpu.memory_space<vmem>>) attributes {dimension_semantics = [#tpu.dimension_semantics<parallel>], iteration_bounds = array<i64: 2>, scalar_prefetch = 0 : i64, scratch_operands = 0 : i64, tpu.core_type = #tpu.core_type<tc>, window_params = [{transform_indices = @transform_0, window_bounds = array<i64: 1, 64, 64>}, {transform_indices = @transform_1, window_bounds = array<i64: 1, 64, 64>}, {pipeline_mode = #tpu.pipeline_mode<synchronous>, transform_indices = @transform_2, window_bounds = array<i64: 64, 64>}, {pipeline_mode = #tpu.pipeline_mode<synchronous>, transform_indices = @transform_3, window_bounds = array<i64: 64, 64>}, {pipeline_mode = #tpu.pipeline_mode<synchronous>, transform_indices = @transform_4, window_bounds = array<i64: 64, 64>}, {pipeline_mode = #tpu.pipeline_mode<synchronous>, transform_indices = @transform_5, window_bounds = array<i64: 64, 64>}, {pipeline_mode = #tpu.pipeline_mode<synchronous>, transform_indices = @transform_6, window_bounds = array<i64: 64, 64>}, {pipeline_mode = #tpu.pipeline_mode<synchronous>, transform_indices = @transform_7, window_bounds = array<i64: 64, 64>}, {pipeline_mode = #tpu.pipeline_mode<synchronous>, transform_indices = @transform_8, window_bounds = array<i64: 3, 64, 64>}, {pipeline_mode = #tpu.pipeline_mode<synchronous>, transform_indices = @transform_9, window_bounds = array<i64: 3, 64, 64>}, {transform_indices = @transform_10, window_bounds = array<i64: 1, 64, 64>}, {transform_indices = @transform_11, window_bounds = array<i64: 1, 64, 64>}, {transform_indices = @transform_12, window_bounds = array<i64: 1, 64, 64>}]} {
    %c0 = arith.constant 0 : index
    %c0_0 = arith.constant 0 : index
    %c0_1 = arith.constant 0 : index
    %0 = vector.load %arg1[%c0, %c0_0, %c0_1] : memref<1x64x64xf32, #tpu.memory_space<vmem>>, vector<1x64x64xf32>
    %1 = vector.shape_cast %0 : vector<1x64x64xf32> to vector<64x64xf32>
    %c0_2 = arith.constant 0 : index
    %c0_3 = arith.constant 0 : index
    %c0_4 = arith.constant 0 : index
    %2 = vector.load %arg11[%c0_2, %c0_3, %c0_4] : memref<1x64x64xf32, #tpu.memory_space<vmem>>, vector<1x64x64xf32>
    %3 = vector.shape_cast %2 : vector<1x64x64xf32> to vector<64x64xf32>
    %4 = vector.shape_cast %1 : vector<64x64xf32> to vector<1x64x64xf32>
    tpu.vector_store %arg11[%c0_2, %c0_3, %c0_4], %4 {strides = array<i32>} : memref<1x64x64xf32, #tpu.memory_space<vmem>>, vector<1x64x64xf32>,
    %c0_5 = arith.constant 0 : index
    %c0_6 = arith.constant 0 : index
    %c0_7 = arith.constant 0 : index
    %5 = vector.load %arg2[%c0_5, %c0_6, %c0_7] : memref<1x64x64xf32, #tpu.memory_space<vmem>>, vector<1x64x64xf32>
    %6 = vector.shape_cast %5 : vector<1x64x64xf32> to vector<64x64xf32>
    %c0_8 = arith.constant 0 : index
    %c0_9 = arith.constant 0 : index
    %c0_10 = arith.constant 0 : index
    %7 = vector.load %arg12[%c0_8, %c0_9, %c0_10] : memref<1x64x64xf32, #tpu.memory_space<vmem>>, vector<1x64x64xf32>
    %8 = vector.shape_cast %7 : vector<1x64x64xf32> to vector<64x64xf32>
    %9 = vector.shape_cast %6 : vector<64x64xf32> to vector<1x64x64xf32>
    tpu.vector_store %arg12[%c0_8, %c0_9, %c0_10], %9 {strides = array<i32>} : memref<1x64x64xf32, #tpu.memory_space<vmem>>, vector<1x64x64xf32>,
    %c0_i32 = arith.constant 0 : i32
    %c3_i32 = arith.constant 3 : i32
    %10 = arith.addi %c0_i32, %c3_i32 : i32
    %c1_i32 = arith.constant 1 : i32
    scf.for %arg14 = %c0_i32 to %10 step %c1_i32  : i32 {
      %c0_78 = arith.constant 0 : index
      %c0_79 = arith.constant 0 : index
      %c0_80 = arith.constant 0 : index
      %83 = vector.load %arg11[%c0_78, %c0_79, %c0_80] : memref<1x64x64xf32, #tpu.memory_space<vmem>>, vector<1x64x64xf32>
      %84 = vector.shape_cast %83 : vector<1x64x64xf32> to vector<64x64xf32>
      %c0_81 = arith.constant 0 : index
      %c0_82 = arith.constant 0 : index
      %c0_83 = arith.constant 0 : index
      %85 = vector.load %arg12[%c0_81, %c0_82, %c0_83] : memref<1x64x64xf32, #tpu.memory_space<vmem>>, vector<1x64x64xf32>
      %86 = vector.shape_cast %85 : vector<1x64x64xf32> to vector<64x64xf32>
      %87 = arith.truncf %84 : vector<64x64xf32> to vector<64x64xbf16>
      %88 = arith.truncf %86 : vector<64x64xf32> to vector<64x64xbf16>
      %c0_84 = arith.constant 0 : index
      %c0_85 = arith.constant 0 : index
      %89 = vector.load %arg3[%c0_84, %c0_85] : memref<64x64xbf16, #tpu.memory_space<vmem>>, vector<64x64xbf16>
      %cst_86 = arith.constant dense<0.000000e+00> : vector<64x64xf32>
      %90 = tpu.matmul %89, %87, %cst_86 {dimension_numbers = #tpu.dot_dimension_numbers<[1], [0], [0], [1], [0, 0, 1, 1], [], []>} : vector<64x64xbf16>, vector<64x64xbf16>, vector<64x64xf32> -> vector<64x64xf32>
      %c0_87 = arith.constant 0 : index
      %c0_88 = arith.constant 0 : index
      %91 = vector.load %arg4[%c0_87, %c0_88] : memref<64x64xbf16, #tpu.memory_space<vmem>>, vector<64x64xbf16>
      %cst_89 = arith.constant dense<0.000000e+00> : vector<64x64xf32>
      %92 = tpu.matmul %91, %88, %cst_89 {dimension_numbers = #tpu.dot_dimension_numbers<[1], [0], [0], [1], [0, 0, 1, 1], [], []>} : vector<64x64xbf16>, vector<64x64xbf16>, vector<64x64xf32> -> vector<64x64xf32>
      %93 = arith.subf %90, %92 : vector<64x64xf32>
      %c0_90 = arith.constant 0 : index
      %c0_91 = arith.constant 0 : index
      %94 = vector.load %arg3[%c0_90, %c0_91] : memref<64x64xbf16, #tpu.memory_space<vmem>>, vector<64x64xbf16>
      %cst_92 = arith.constant dense<0.000000e+00> : vector<64x64xf32>
      %95 = tpu.matmul %94, %88, %cst_92 {dimension_numbers = #tpu.dot_dimension_numbers<[1], [0], [0], [1], [0, 0, 1, 1], [], []>} : vector<64x64xbf16>, vector<64x64xbf16>, vector<64x64xf32> -> vector<64x64xf32>
      %c0_93 = arith.constant 0 : index
      %c0_94 = arith.constant 0 : index
      %96 = vector.load %arg4[%c0_93, %c0_94] : memref<64x64xbf16, #tpu.memory_space<vmem>>, vector<64x64xbf16>
      %cst_95 = arith.constant dense<0.000000e+00> : vector<64x64xf32>
      %97 = tpu.matmul %96, %87, %cst_95 {dimension_numbers = #tpu.dot_dimension_numbers<[1], [0], [0], [1], [0, 0, 1, 1], [], []>} : vector<64x64xbf16>, vector<64x64xbf16>, vector<64x64xf32> -> vector<64x64xf32>
      %98 = arith.addf %95, %97 : vector<64x64xf32>
      %99 = arith.truncf %93 : vector<64x64xf32> to vector<64x64xbf16>
      %100 = arith.truncf %98 : vector<64x64xf32> to vector<64x64xbf16>
      %c0_96 = arith.constant 0 : index
      %c0_97 = arith.constant 0 : index
      %101 = vector.load %arg3[%c0_96, %c0_97] : memref<64x64xbf16, #tpu.memory_space<vmem>>, vector<64x64xbf16>
      %cst_98 = arith.constant dense<0.000000e+00> : vector<64x64xf32>
      %102 = tpu.matmul %99, %101, %cst_98 {dimension_numbers = #tpu.dot_dimension_numbers<[1], [0], [0], [1], [0, 0, 1, 1], [], []>} : vector<64x64xbf16>, vector<64x64xbf16>, vector<64x64xf32> -> vector<64x64xf32>
      %c0_99 = arith.constant 0 : index
      %c0_100 = arith.constant 0 : index
      %103 = vector.load %arg4[%c0_99, %c0_100] : memref<64x64xbf16, #tpu.memory_space<vmem>>, vector<64x64xbf16>
      %cst_101 = arith.constant dense<0.000000e+00> : vector<64x64xf32>
      %104 = tpu.matmul %100, %103, %cst_101 {dimension_numbers = #tpu.dot_dimension_numbers<[1], [0], [0], [1], [0, 0, 1, 1], [], []>} : vector<64x64xbf16>, vector<64x64xbf16>, vector<64x64xf32> -> vector<64x64xf32>
      %105 = arith.subf %102, %104 : vector<64x64xf32>
      %c0_102 = arith.constant 0 : index
      %c0_103 = arith.constant 0 : index
      %106 = vector.load %arg4[%c0_102, %c0_103] : memref<64x64xbf16, #tpu.memory_space<vmem>>, vector<64x64xbf16>
      %cst_104 = arith.constant dense<0.000000e+00> : vector<64x64xf32>
      %107 = tpu.matmul %99, %106, %cst_104 {dimension_numbers = #tpu.dot_dimension_numbers<[1], [0], [0], [1], [0, 0, 1, 1], [], []>} : vector<64x64xbf16>, vector<64x64xbf16>, vector<64x64xf32> -> vector<64x64xf32>
      %c0_105 = arith.constant 0 : index
      %c0_106 = arith.constant 0 : index
      %108 = vector.load %arg3[%c0_105, %c0_106] : memref<64x64xbf16, #tpu.memory_space<vmem>>, vector<64x64xbf16>
      %cst_107 = arith.constant dense<0.000000e+00> : vector<64x64xf32>
      %109 = tpu.matmul %100, %108, %cst_107 {dimension_numbers = #tpu.dot_dimension_numbers<[1], [0], [0], [1], [0, 0, 1, 1], [], []>} : vector<64x64xbf16>, vector<64x64xbf16>, vector<64x64xf32> -> vector<64x64xf32>
      %110 = arith.addf %107, %109 : vector<64x64xf32>
      %c0_108 = arith.constant 0 : index
      %c0_109 = arith.constant 0 : index
      %111 = vector.load %arg7[%c0_108, %c0_109] : memref<64x64xf32, #tpu.memory_space<vmem>>, vector<64x64xf32>
      %c0_110 = arith.constant 0 : index
      %c0_111 = arith.constant 0 : index
      %112 = vector.load %arg8[%c0_110, %c0_111] : memref<64x64xf32, #tpu.memory_space<vmem>>, vector<64x64xf32>
      %113 = arith.mulf %105, %111 : vector<64x64xf32>
      %114 = arith.mulf %110, %112 : vector<64x64xf32>
      %115 = arith.subf %113, %114 : vector<64x64xf32>
      %116 = arith.mulf %105, %112 : vector<64x64xf32>
      %117 = arith.mulf %110, %111 : vector<64x64xf32>
      %118 = arith.addf %116, %117 : vector<64x64xf32>
      %119 = arith.truncf %115 : vector<64x64xf32> to vector<64x64xbf16>
      %120 = arith.truncf %118 : vector<64x64xf32> to vector<64x64xbf16>
      %c0_112 = arith.constant 0 : index
      %c0_113 = arith.constant 0 : index
      %121 = vector.load %arg5[%c0_112, %c0_113] : memref<64x64xbf16, #tpu.memory_space<vmem>>, vector<64x64xbf16>
      %cst_114 = arith.constant dense<0.000000e+00> : vector<64x64xf32>
      %122 = tpu.matmul %121, %119, %cst_114 {dimension_numbers = #tpu.dot_dimension_numbers<[1], [0], [0], [1], [0, 0, 1, 1], [], []>} : vector<64x64xbf16>, vector<64x64xbf16>, vector<64x64xf32> -> vector<64x64xf32>
      %c0_115 = arith.constant 0 : index
      %c0_116 = arith.constant 0 : index
      %123 = vector.load %arg6[%c0_115, %c0_116] : memref<64x64xbf16, #tpu.memory_space<vmem>>, vector<64x64xbf16>
      %cst_117 = arith.constant dense<0.000000e+00> : vector<64x64xf32>
      %124 = tpu.matmul %123, %120, %cst_117 {dimension_numbers = #tpu.dot_dimension_numbers<[1], [0], [0], [1], [0, 0, 1, 1], [], []>} : vector<64x64xbf16>, vector<64x64xbf16>, vector<64x64xf32> -> vector<64x64xf32>
      %125 = arith.subf %122, %124 : vector<64x64xf32>
      %c0_118 = arith.constant 0 : index
      %c0_119 = arith.constant 0 : index
      %126 = vector.load %arg5[%c0_118, %c0_119] : memref<64x64xbf16, #tpu.memory_space<vmem>>, vector<64x64xbf16>
      %cst_120 = arith.constant dense<0.000000e+00> : vector<64x64xf32>
      %127 = tpu.matmul %126, %120, %cst_120 {dimension_numbers = #tpu.dot_dimension_numbers<[1], [0], [0], [1], [0, 0, 1, 1], [], []>} : vector<64x64xbf16>, vector<64x64xbf16>, vector<64x64xf32> -> vector<64x64xf32>
      %c0_121 = arith.constant 0 : index
      %c0_122 = arith.constant 0 : index
      %128 = vector.load %arg6[%c0_121, %c0_122] : memref<64x64xbf16, #tpu.memory_space<vmem>>, vector<64x64xbf16>
      %cst_123 = arith.constant dense<0.000000e+00> : vector<64x64xf32>
      %129 = tpu.matmul %128, %119, %cst_123 {dimension_numbers = #tpu.dot_dimension_numbers<[1], [0], [0], [1], [0, 0, 1, 1], [], []>} : vector<64x64xbf16>, vector<64x64xbf16>, vector<64x64xf32> -> vector<64x64xf32>
      %130 = arith.addf %127, %129 : vector<64x64xf32>
      %131 = arith.truncf %125 : vector<64x64xf32> to vector<64x64xbf16>
      %132 = arith.truncf %130 : vector<64x64xf32> to vector<64x64xbf16>
      %c0_124 = arith.constant 0 : index
      %c0_125 = arith.constant 0 : index
      %133 = vector.load %arg5[%c0_124, %c0_125] : memref<64x64xbf16, #tpu.memory_space<vmem>>, vector<64x64xbf16>
      %cst_126 = arith.constant dense<0.000000e+00> : vector<64x64xf32>
      %134 = tpu.matmul %131, %133, %cst_126 {dimension_numbers = #tpu.dot_dimension_numbers<[1], [0], [0], [1], [0, 0, 1, 1], [], []>} : vector<64x64xbf16>, vector<64x64xbf16>, vector<64x64xf32> -> vector<64x64xf32>
      %c0_127 = arith.constant 0 : index
      %c0_128 = arith.constant 0 : index
      %135 = vector.load %arg6[%c0_127, %c0_128] : memref<64x64xbf16, #tpu.memory_space<vmem>>, vector<64x64xbf16>
      %cst_129 = arith.constant dense<0.000000e+00> : vector<64x64xf32>
      %136 = tpu.matmul %132, %135, %cst_129 {dimension_numbers = #tpu.dot_dimension_numbers<[1], [0], [0], [1], [0, 0, 1, 1], [], []>} : vector<64x64xbf16>, vector<64x64xbf16>, vector<64x64xf32> -> vector<64x64xf32>
      %137 = arith.subf %134, %136 : vector<64x64xf32>
      %c0_130 = arith.constant 0 : index
      %c0_131 = arith.constant 0 : index
      %138 = vector.load %arg6[%c0_130, %c0_131] : memref<64x64xbf16, #tpu.memory_space<vmem>>, vector<64x64xbf16>
      %cst_132 = arith.constant dense<0.000000e+00> : vector<64x64xf32>
      %139 = tpu.matmul %131, %138, %cst_132 {dimension_numbers = #tpu.dot_dimension_numbers<[1], [0], [0], [1], [0, 0, 1, 1], [], []>} : vector<64x64xbf16>, vector<64x64xbf16>, vector<64x64xf32> -> vector<64x64xf32>
      %c0_133 = arith.constant 0 : index
      %c0_134 = arith.constant 0 : index
      %140 = vector.load %arg5[%c0_133, %c0_134] : memref<64x64xbf16, #tpu.memory_space<vmem>>, vector<64x64xbf16>
      %cst_135 = arith.constant dense<0.000000e+00> : vector<64x64xf32>
      %141 = tpu.matmul %132, %140, %cst_135 {dimension_numbers = #tpu.dot_dimension_numbers<[1], [0], [0], [1], [0, 0, 1, 1], [], []>} : vector<64x64xbf16>, vector<64x64xbf16>, vector<64x64xf32> -> vector<64x64xf32>
      %142 = arith.addf %139, %141 : vector<64x64xf32>
      %143 = arith.index_cast %arg14 : i32 to index
      %c0_136 = arith.constant 0 : index
      %c0_137 = arith.constant 0 : index
      %144 = vector.load %arg9[%143, %c0_136, %c0_137] : memref<3x64x64xbf16, #tpu.memory_space<vmem>>, vector<1x64x64xbf16>
      %145 = vector.shape_cast %144 : vector<1x64x64xbf16> to vector<64x64xbf16>
      %146 = arith.extf %145 : vector<64x64xbf16> to vector<64x64xf32>
      %147 = arith.index_cast %arg14 : i32 to index
      %c0_138 = arith.constant 0 : index
      %c0_139 = arith.constant 0 : index
      %148 = vector.load %arg10[%147, %c0_138, %c0_139] : memref<3x64x64xbf16, #tpu.memory_space<vmem>>, vector<1x64x64xbf16>
      %149 = vector.shape_cast %148 : vector<1x64x64xbf16> to vector<64x64xbf16>
      %150 = arith.extf %149 : vector<64x64xbf16> to vector<64x64xf32>
      %151 = arith.mulf %137, %146 : vector<64x64xf32>
      %152 = arith.mulf %142, %150 : vector<64x64xf32>
      %153 = arith.subf %151, %152 : vector<64x64xf32>
      %c0_140 = arith.constant 0 : index
      %c0_141 = arith.constant 0 : index
      %c0_142 = arith.constant 0 : index
      %154 = vector.load %arg11[%c0_140, %c0_141, %c0_142] : memref<1x64x64xf32, #tpu.memory_space<vmem>>, vector<1x64x64xf32>
      %155 = vector.shape_cast %154 : vector<1x64x64xf32> to vector<64x64xf32>
      %156 = vector.shape_cast %153 : vector<64x64xf32> to vector<1x64x64xf32>
      tpu.vector_store %arg11[%c0_140, %c0_141, %c0_142], %156 {strides = array<i32>} : memref<1x64x64xf32, #tpu.memory_space<vmem>>, vector<1x64x64xf32>,
      %157 = arith.mulf %137, %150 : vector<64x64xf32>
      %158 = arith.mulf %142, %146 : vector<64x64xf32>
      %159 = arith.addf %157, %158 : vector<64x64xf32>
      %c0_143 = arith.constant 0 : index
      %c0_144 = arith.constant 0 : index
      %c0_145 = arith.constant 0 : index
      %160 = vector.load %arg12[%c0_143, %c0_144, %c0_145] : memref<1x64x64xf32, #tpu.memory_space<vmem>>, vector<1x64x64xf32>
      %161 = vector.shape_cast %160 : vector<1x64x64xf32> to vector<64x64xf32>
      %162 = vector.shape_cast %159 : vector<64x64xf32> to vector<1x64x64xf32>
      tpu.vector_store %arg12[%c0_143, %c0_144, %c0_145], %162 {strides = array<i32>} : memref<1x64x64xf32, #tpu.memory_space<vmem>>, vector<1x64x64xf32>,
    }
    %c3_i32_11 = arith.constant 3 : i32
    %c0_12 = arith.constant 0 : index
    %c0_13 = arith.constant 0 : index
    %c0_14 = arith.constant 0 : index
    %11 = vector.load %arg11[%c0_12, %c0_13, %c0_14] : memref<1x64x64xf32, #tpu.memory_space<vmem>>, vector<1x64x64xf32>
    %12 = vector.shape_cast %11 : vector<1x64x64xf32> to vector<64x64xf32>
    %c0_15 = arith.constant 0 : index
    %c0_16 = arith.constant 0 : index
    %c0_17 = arith.constant 0 : index
    %13 = vector.load %arg12[%c0_15, %c0_16, %c0_17] : memref<1x64x64xf32, #tpu.memory_space<vmem>>, vector<1x64x64xf32>
    %14 = vector.shape_cast %13 : vector<1x64x64xf32> to vector<64x64xf32>
    %15 = arith.truncf %12 : vector<64x64xf32> to vector<64x64xbf16>
    %16 = arith.truncf %14 : vector<64x64xf32> to vector<64x64xbf16>
    %c0_18 = arith.constant 0 : index
    %c0_19 = arith.constant 0 : index
    %17 = vector.load %arg3[%c0_18, %c0_19] : memref<64x64xbf16, #tpu.memory_space<vmem>>, vector<64x64xbf16>
    %cst = arith.constant dense<0.000000e+00> : vector<64x64xf32>
    %18 = tpu.matmul %17, %15, %cst {dimension_numbers = #tpu.dot_dimension_numbers<[1], [0], [0], [1], [0, 0, 1, 1], [], []>} : vector<64x64xbf16>, vector<64x64xbf16>, vector<64x64xf32> -> vector<64x64xf32>
    %c0_20 = arith.constant 0 : index
    %c0_21 = arith.constant 0 : index
    %19 = vector.load %arg4[%c0_20, %c0_21] : memref<64x64xbf16, #tpu.memory_space<vmem>>, vector<64x64xbf16>
    %cst_22 = arith.constant dense<0.000000e+00> : vector<64x64xf32>
    %20 = tpu.matmul %19, %16, %cst_22 {dimension_numbers = #tpu.dot_dimension_numbers<[1], [0], [0], [1], [0, 0, 1, 1], [], []>} : vector<64x64xbf16>, vector<64x64xbf16>, vector<64x64xf32> -> vector<64x64xf32>
    %21 = arith.subf %18, %20 : vector<64x64xf32>
    %c0_23 = arith.constant 0 : index
    %c0_24 = arith.constant 0 : index
    %22 = vector.load %arg3[%c0_23, %c0_24] : memref<64x64xbf16, #tpu.memory_space<vmem>>, vector<64x64xbf16>
    %cst_25 = arith.constant dense<0.000000e+00> : vector<64x64xf32>
    %23 = tpu.matmul %22, %16, %cst_25 {dimension_numbers = #tpu.dot_dimension_numbers<[1], [0], [0], [1], [0, 0, 1, 1], [], []>} : vector<64x64xbf16>, vector<64x64xbf16>, vector<64x64xf32> -> vector<64x64xf32>
    %c0_26 = arith.constant 0 : index
    %c0_27 = arith.constant 0 : index
    %24 = vector.load %arg4[%c0_26, %c0_27] : memref<64x64xbf16, #tpu.memory_space<vmem>>, vector<64x64xbf16>
    %cst_28 = arith.constant dense<0.000000e+00> : vector<64x64xf32>
    %25 = tpu.matmul %24, %15, %cst_28 {dimension_numbers = #tpu.dot_dimension_numbers<[1], [0], [0], [1], [0, 0, 1, 1], [], []>} : vector<64x64xbf16>, vector<64x64xbf16>, vector<64x64xf32> -> vector<64x64xf32>
    %26 = arith.addf %23, %25 : vector<64x64xf32>
    %27 = arith.truncf %21 : vector<64x64xf32> to vector<64x64xbf16>
    %28 = arith.truncf %26 : vector<64x64xf32> to vector<64x64xbf16>
    %c0_29 = arith.constant 0 : index
    %c0_30 = arith.constant 0 : index
    %29 = vector.load %arg3[%c0_29, %c0_30] : memref<64x64xbf16, #tpu.memory_space<vmem>>, vector<64x64xbf16>
    %cst_31 = arith.constant dense<0.000000e+00> : vector<64x64xf32>
    %30 = tpu.matmul %27, %29, %cst_31 {dimension_numbers = #tpu.dot_dimension_numbers<[1], [0], [0], [1], [0, 0, 1, 1], [], []>} : vector<64x64xbf16>, vector<64x64xbf16>, vector<64x64xf32> -> vector<64x64xf32>
    %c0_32 = arith.constant 0 : index
    %c0_33 = arith.constant 0 : index
    %31 = vector.load %arg4[%c0_32, %c0_33] : memref<64x64xbf16, #tpu.memory_space<vmem>>, vector<64x64xbf16>
    %cst_34 = arith.constant dense<0.000000e+00> : vector<64x64xf32>
    %32 = tpu.matmul %28, %31, %cst_34 {dimension_numbers = #tpu.dot_dimension_numbers<[1], [0], [0], [1], [0, 0, 1, 1], [], []>} : vector<64x64xbf16>, vector<64x64xbf16>, vector<64x64xf32> -> vector<64x64xf32>
    %33 = arith.subf %30, %32 : vector<64x64xf32>
    %c0_35 = arith.constant 0 : index
    %c0_36 = arith.constant 0 : index
    %34 = vector.load %arg4[%c0_35, %c0_36] : memref<64x64xbf16, #tpu.memory_space<vmem>>, vector<64x64xbf16>
    %cst_37 = arith.constant dense<0.000000e+00> : vector<64x64xf32>
    %35 = tpu.matmul %27, %34, %cst_37 {dimension_numbers = #tpu.dot_dimension_numbers<[1], [0], [0], [1], [0, 0, 1, 1], [], []>} : vector<64x64xbf16>, vector<64x64xbf16>, vector<64x64xf32> -> vector<64x64xf32>
    %c0_38 = arith.constant 0 : index
    %c0_39 = arith.constant 0 : index
    %36 = vector.load %arg3[%c0_38, %c0_39] : memref<64x64xbf16, #tpu.memory_space<vmem>>, vector<64x64xbf16>
    %cst_40 = arith.constant dense<0.000000e+00> : vector<64x64xf32>
    %37 = tpu.matmul %28, %36, %cst_40 {dimension_numbers = #tpu.dot_dimension_numbers<[1], [0], [0], [1], [0, 0, 1, 1], [], []>} : vector<64x64xbf16>, vector<64x64xbf16>, vector<64x64xf32> -> vector<64x64xf32>
    %38 = arith.addf %35, %37 : vector<64x64xf32>
    %c0_41 = arith.constant 0 : index
    %c0_42 = arith.constant 0 : index
    %39 = vector.load %arg7[%c0_41, %c0_42] : memref<64x64xf32, #tpu.memory_space<vmem>>, vector<64x64xf32>
    %c0_43 = arith.constant 0 : index
    %c0_44 = arith.constant 0 : index
    %40 = vector.load %arg8[%c0_43, %c0_44] : memref<64x64xf32, #tpu.memory_space<vmem>>, vector<64x64xf32>
    %41 = arith.mulf %33, %39 : vector<64x64xf32>
    %42 = arith.mulf %38, %40 : vector<64x64xf32>
    %43 = arith.subf %41, %42 : vector<64x64xf32>
    %44 = arith.mulf %33, %40 : vector<64x64xf32>
    %45 = arith.mulf %38, %39 : vector<64x64xf32>
    %46 = arith.addf %44, %45 : vector<64x64xf32>
    %47 = arith.truncf %43 : vector<64x64xf32> to vector<64x64xbf16>
    %48 = arith.truncf %46 : vector<64x64xf32> to vector<64x64xbf16>
    %c0_45 = arith.constant 0 : index
    %c0_46 = arith.constant 0 : index
    %49 = vector.load %arg5[%c0_45, %c0_46] : memref<64x64xbf16, #tpu.memory_space<vmem>>, vector<64x64xbf16>
    %cst_47 = arith.constant dense<0.000000e+00> : vector<64x64xf32>
    %50 = tpu.matmul %49, %47, %cst_47 {dimension_numbers = #tpu.dot_dimension_numbers<[1], [0], [0], [1], [0, 0, 1, 1], [], []>} : vector<64x64xbf16>, vector<64x64xbf16>, vector<64x64xf32> -> vector<64x64xf32>
    %c0_48 = arith.constant 0 : index
    %c0_49 = arith.constant 0 : index
    %51 = vector.load %arg6[%c0_48, %c0_49] : memref<64x64xbf16, #tpu.memory_space<vmem>>, vector<64x64xbf16>
    %cst_50 = arith.constant dense<0.000000e+00> : vector<64x64xf32>
    %52 = tpu.matmul %51, %48, %cst_50 {dimension_numbers = #tpu.dot_dimension_numbers<[1], [0], [0], [1], [0, 0, 1, 1], [], []>} : vector<64x64xbf16>, vector<64x64xbf16>, vector<64x64xf32> -> vector<64x64xf32>
    %53 = arith.subf %50, %52 : vector<64x64xf32>
    %c0_51 = arith.constant 0 : index
    %c0_52 = arith.constant 0 : index
    %54 = vector.load %arg5[%c0_51, %c0_52] : memref<64x64xbf16, #tpu.memory_space<vmem>>, vector<64x64xbf16>
    %cst_53 = arith.constant dense<0.000000e+00> : vector<64x64xf32>
    %55 = tpu.matmul %54, %48, %cst_53 {dimension_numbers = #tpu.dot_dimension_numbers<[1], [0], [0], [1], [0, 0, 1, 1], [], []>} : vector<64x64xbf16>, vector<64x64xbf16>, vector<64x64xf32> -> vector<64x64xf32>
    %c0_54 = arith.constant 0 : index
    %c0_55 = arith.constant 0 : index
    %56 = vector.load %arg6[%c0_54, %c0_55] : memref<64x64xbf16, #tpu.memory_space<vmem>>, vector<64x64xbf16>
    %cst_56 = arith.constant dense<0.000000e+00> : vector<64x64xf32>
    %57 = tpu.matmul %56, %47, %cst_56 {dimension_numbers = #tpu.dot_dimension_numbers<[1], [0], [0], [1], [0, 0, 1, 1], [], []>} : vector<64x64xbf16>, vector<64x64xbf16>, vector<64x64xf32> -> vector<64x64xf32>
    %58 = arith.addf %55, %57 : vector<64x64xf32>
    %59 = arith.truncf %53 : vector<64x64xf32> to vector<64x64xbf16>
    %60 = arith.truncf %58 : vector<64x64xf32> to vector<64x64xbf16>
    %c0_57 = arith.constant 0 : index
    %c0_58 = arith.constant 0 : index
    %61 = vector.load %arg5[%c0_57, %c0_58] : memref<64x64xbf16, #tpu.memory_space<vmem>>, vector<64x64xbf16>
    %cst_59 = arith.constant dense<0.000000e+00> : vector<64x64xf32>
    %62 = tpu.matmul %59, %61, %cst_59 {dimension_numbers = #tpu.dot_dimension_numbers<[1], [0], [0], [1], [0, 0, 1, 1], [], []>} : vector<64x64xbf16>, vector<64x64xbf16>, vector<64x64xf32> -> vector<64x64xf32>
    %c0_60 = arith.constant 0 : index
    %c0_61 = arith.constant 0 : index
    %63 = vector.load %arg6[%c0_60, %c0_61] : memref<64x64xbf16, #tpu.memory_space<vmem>>, vector<64x64xbf16>
    %cst_62 = arith.constant dense<0.000000e+00> : vector<64x64xf32>
    %64 = tpu.matmul %60, %63, %cst_62 {dimension_numbers = #tpu.dot_dimension_numbers<[1], [0], [0], [1], [0, 0, 1, 1], [], []>} : vector<64x64xbf16>, vector<64x64xbf16>, vector<64x64xf32> -> vector<64x64xf32>
    %65 = arith.subf %62, %64 : vector<64x64xf32>
    %c0_63 = arith.constant 0 : index
    %c0_64 = arith.constant 0 : index
    %66 = vector.load %arg6[%c0_63, %c0_64] : memref<64x64xbf16, #tpu.memory_space<vmem>>, vector<64x64xbf16>
    %cst_65 = arith.constant dense<0.000000e+00> : vector<64x64xf32>
    %67 = tpu.matmul %59, %66, %cst_65 {dimension_numbers = #tpu.dot_dimension_numbers<[1], [0], [0], [1], [0, 0, 1, 1], [], []>} : vector<64x64xbf16>, vector<64x64xbf16>, vector<64x64xf32> -> vector<64x64xf32>
    %c0_66 = arith.constant 0 : index
    %c0_67 = arith.constant 0 : index
    %68 = vector.load %arg5[%c0_66, %c0_67] : memref<64x64xbf16, #tpu.memory_space<vmem>>, vector<64x64xbf16>
    %cst_68 = arith.constant dense<0.000000e+00> : vector<64x64xf32>
    %69 = tpu.matmul %60, %68, %cst_68 {dimension_numbers = #tpu.dot_dimension_numbers<[1], [0], [0], [1], [0, 0, 1, 1], [], []>} : vector<64x64xbf16>, vector<64x64xbf16>, vector<64x64xf32> -> vector<64x64xf32>
    %70 = arith.addf %67, %69 : vector<64x64xf32>
    %c0_69 = arith.constant 0 : index
    %c0_70 = arith.constant 0 : index
    %c0_71 = arith.constant 0 : index
    %71 = vector.load %arg11[%c0_69, %c0_70, %c0_71] : memref<1x64x64xf32, #tpu.memory_space<vmem>>, vector<1x64x64xf32>
    %72 = vector.shape_cast %71 : vector<1x64x64xf32> to vector<64x64xf32>
    %73 = vector.shape_cast %65 : vector<64x64xf32> to vector<1x64x64xf32>
    tpu.vector_store %arg11[%c0_69, %c0_70, %c0_71], %73 {strides = array<i32>} : memref<1x64x64xf32, #tpu.memory_space<vmem>>, vector<1x64x64xf32>,
    %c0_72 = arith.constant 0 : index
    %c0_73 = arith.constant 0 : index
    %c0_74 = arith.constant 0 : index
    %74 = vector.load %arg12[%c0_72, %c0_73, %c0_74] : memref<1x64x64xf32, #tpu.memory_space<vmem>>, vector<1x64x64xf32>
    %75 = vector.shape_cast %74 : vector<1x64x64xf32> to vector<64x64xf32>
    %76 = vector.shape_cast %70 : vector<64x64xf32> to vector<1x64x64xf32>
    tpu.vector_store %arg12[%c0_72, %c0_73, %c0_74], %76 {strides = array<i32>} : memref<1x64x64xf32, #tpu.memory_space<vmem>>, vector<1x64x64xf32>,
    %77 = arith.mulf %65, %65 : vector<64x64xf32>
    %78 = arith.mulf %70, %70 : vector<64x64xf32>
    %79 = arith.addf %77, %78 : vector<64x64xf32>
    %c0_75 = arith.constant 0 : index
    %c0_76 = arith.constant 0 : index
    %c0_77 = arith.constant 0 : index
    %80 = vector.load %arg13[%c0_75, %c0_76, %c0_77] : memref<1x64x64xf32, #tpu.memory_space<vmem>>, vector<1x64x64xf32>
    %81 = vector.shape_cast %80 : vector<1x64x64xf32> to vector<64x64xf32>
    %82 = vector.shape_cast %79 : vector<64x64xf32> to vector<1x64x64xf32>
    tpu.vector_store %arg13[%c0_75, %c0_76, %c0_77], %82 {strides = array<i32>} : memref<1x64x64xf32, #tpu.memory_space<vmem>>, vector<1x64x64xf32>,
    return
  }
  func.func @transform_0(%arg0: i32) -> (i32, i32, i32) {
    %c0_i32 = arith.constant 0 : i32
    %c0_i32_0 = arith.constant 0 : i32
    %c0_i32_1 = arith.constant 0 : i32
    return %arg0, %c0_i32, %c0_i32_0 : i32, i32, i32
  }
  func.func @transform_1(%arg0: i32) -> (i32, i32, i32) {
    %c0_i32 = arith.constant 0 : i32
    %c0_i32_0 = arith.constant 0 : i32
    %c0_i32_1 = arith.constant 0 : i32
    return %arg0, %c0_i32, %c0_i32_0 : i32, i32, i32
  }
  func.func @transform_2(%arg0: i32) -> (i32, i32) {
    %c0_i32 = arith.constant 0 : i32
    %c0_i32_0 = arith.constant 0 : i32
    %c0_i32_1 = arith.constant 0 : i32
    return %c0_i32, %c0_i32_0 : i32, i32
  }
  func.func @transform_3(%arg0: i32) -> (i32, i32) {
    %c0_i32 = arith.constant 0 : i32
    %c0_i32_0 = arith.constant 0 : i32
    %c0_i32_1 = arith.constant 0 : i32
    return %c0_i32, %c0_i32_0 : i32, i32
  }
  func.func @transform_4(%arg0: i32) -> (i32, i32) {
    %c0_i32 = arith.constant 0 : i32
    %c0_i32_0 = arith.constant 0 : i32
    %c0_i32_1 = arith.constant 0 : i32
    return %c0_i32, %c0_i32_0 : i32, i32
  }
  func.func @transform_5(%arg0: i32) -> (i32, i32) {
    %c0_i32 = arith.constant 0 : i32
    %c0_i32_0 = arith.constant 0 : i32
    %c0_i32_1 = arith.constant 0 : i32
    return %c0_i32, %c0_i32_0 : i32, i32
  }
  func.func @transform_6(%arg0: i32) -> (i32, i32) {
    %c0_i32 = arith.constant 0 : i32
    %c0_i32_0 = arith.constant 0 : i32
    %c0_i32_1 = arith.constant 0 : i32
    return %c0_i32, %c0_i32_0 : i32, i32
  }
  func.func @transform_7(%arg0: i32) -> (i32, i32) {
    %c0_i32 = arith.constant 0 : i32
    %c0_i32_0 = arith.constant 0 : i32
    %c0_i32_1 = arith.constant 0 : i32
    return %c0_i32, %c0_i32_0 : i32, i32
  }
  func.func @transform_8(%arg0: i32) -> (i32, i32, i32) {
    %c0_i32 = arith.constant 0 : i32
    %c0_i32_0 = arith.constant 0 : i32
    %c0_i32_1 = arith.constant 0 : i32
    %c0_i32_2 = arith.constant 0 : i32
    return %c0_i32, %c0_i32_0, %c0_i32_1 : i32, i32, i32
  }
  func.func @transform_9(%arg0: i32) -> (i32, i32, i32) {
    %c0_i32 = arith.constant 0 : i32
    %c0_i32_0 = arith.constant 0 : i32
    %c0_i32_1 = arith.constant 0 : i32
    %c0_i32_2 = arith.constant 0 : i32
    return %c0_i32, %c0_i32_0, %c0_i32_1 : i32, i32, i32
  }
  func.func @transform_10(%arg0: i32) -> (i32, i32, i32) {
    %c0_i32 = arith.constant 0 : i32
    %c0_i32_0 = arith.constant 0 : i32
    %c0_i32_1 = arith.constant 0 : i32
    return %arg0, %c0_i32, %c0_i32_0 : i32, i32, i32
  }
  func.func @transform_11(%arg0: i32) -> (i32, i32, i32) {
    %c0_i32 = arith.constant 0 : i32
    %c0_i32_0 = arith.constant 0 : i32
    %c0_i32_1 = arith.constant 0 : i32
    return %arg0, %c0_i32, %c0_i32_0 : i32, i32, i32
  }
  func.func @transform_12(%arg0: i32) -> (i32, i32, i32) {
    %c0_i32 = arith.constant 0 : i32
    %c0_i32_0 = arith.constant 0 : i32
    %c0_i32_1 = arith.constant 0 : i32
    return %arg0, %c0_i32, %c0_i32_0 : i32, i32, i32
  }
}

module attributes {stable_mosaic.version = 11 : i64} {
  func.func @kernel(%arg0: i32, %arg1: memref<1x64x64xf32, #tpu.memory_space<vmem>>, %arg2: memref<1x64x64xf32, #tpu.memory_space<vmem>>, %arg3: memref<64x64xbf16, #tpu.memory_space<vmem>>, %arg4: memref<64x64xbf16, #tpu.memory_space<vmem>>, %arg5: memref<64x64xbf16, #tpu.memory_space<vmem>>, %arg6: memref<64x64xbf16, #tpu.memory_space<vmem>>, %arg7: memref<64x64xf32, #tpu.memory_space<vmem>>, %arg8: memref<64x64xf32, #tpu.memory_space<vmem>>, %arg9: memref<3x64x64xbf16, #tpu.memory_space<vmem>>, %arg10: memref<3x64x64xbf16, #tpu.memory_space<vmem>>, %arg11: memref<1x64x64xf32, #tpu.memory_space<vmem>>, %arg12: memref<1x64x64xf32, #tpu.memory_space<vmem>>, %arg13: memref<1x64x64xf32, #tpu.memory_space<vmem>>) attributes {dimension_semantics = [#tpu.dimension_semantics<parallel>], iteration_bounds = array<i64: 2>, scalar_prefetch = 0 : i64, scratch_operands = 0 : i64, tpu.core_type = #tpu.core_type<tc>, window_params = [{transform_indices = @transform_0, window_bounds = array<i64: 1, 64, 64>}, {transform_indices = @transform_1, window_bounds = array<i64: 1, 64, 64>}, {pipeline_mode = #tpu.pipeline_mode<synchronous>, transform_indices = @transform_2, window_bounds = array<i64: 64, 64>}, {pipeline_mode = #tpu.pipeline_mode<synchronous>, transform_indices = @transform_3, window_bounds = array<i64: 64, 64>}, {pipeline_mode = #tpu.pipeline_mode<synchronous>, transform_indices = @transform_4, window_bounds = array<i64: 64, 64>}, {pipeline_mode = #tpu.pipeline_mode<synchronous>, transform_indices = @transform_5, window_bounds = array<i64: 64, 64>}, {pipeline_mode = #tpu.pipeline_mode<synchronous>, transform_indices = @transform_6, window_bounds = array<i64: 64, 64>}, {pipeline_mode = #tpu.pipeline_mode<synchronous>, transform_indices = @transform_7, window_bounds = array<i64: 64, 64>}, {pipeline_mode = #tpu.pipeline_mode<synchronous>, transform_indices = @transform_8, window_bounds = array<i64: 3, 64, 64>}, {pipeline_mode = #tpu.pipeline_mode<synchronous>, transform_indices = @transform_9, window_bounds = array<i64: 3, 64, 64>}, {transform_indices = @transform_10, window_bounds = array<i64: 1, 64, 64>}, {transform_indices = @transform_11, window_bounds = array<i64: 1, 64, 64>}, {transform_indices = @transform_12, window_bounds = array<i64: 1, 64, 64>}]} {
    %c0 = arith.constant 0 : index
    %c0_0 = arith.constant 0 : index
    %c0_1 = arith.constant 0 : index
    %0 = vector.load %arg1[%c0, %c0_0, %c0_1] : memref<1x64x64xf32, #tpu.memory_space<vmem>>, vector<1x64x64xf32>
    %1 = vector.shape_cast %0 : vector<1x64x64xf32> to vector<64x64xf32>
    %c0_2 = arith.constant 0 : index
    %c0_3 = arith.constant 0 : index
    %c0_4 = arith.constant 0 : index
    %2 = vector.load %arg11[%c0_2, %c0_3, %c0_4] : memref<1x64x64xf32, #tpu.memory_space<vmem>>, vector<1x64x64xf32>
    %3 = vector.shape_cast %2 : vector<1x64x64xf32> to vector<64x64xf32>
    %4 = vector.shape_cast %1 : vector<64x64xf32> to vector<1x64x64xf32>
    tpu.vector_store %arg11[%c0_2, %c0_3, %c0_4], %4 {strides = array<i32>} : memref<1x64x64xf32, #tpu.memory_space<vmem>>, vector<1x64x64xf32>,
    %c0_5 = arith.constant 0 : index
    %c0_6 = arith.constant 0 : index
    %c0_7 = arith.constant 0 : index
    %5 = vector.load %arg2[%c0_5, %c0_6, %c0_7] : memref<1x64x64xf32, #tpu.memory_space<vmem>>, vector<1x64x64xf32>
    %6 = vector.shape_cast %5 : vector<1x64x64xf32> to vector<64x64xf32>
    %c0_8 = arith.constant 0 : index
    %c0_9 = arith.constant 0 : index
    %c0_10 = arith.constant 0 : index
    %7 = vector.load %arg12[%c0_8, %c0_9, %c0_10] : memref<1x64x64xf32, #tpu.memory_space<vmem>>, vector<1x64x64xf32>
    %8 = vector.shape_cast %7 : vector<1x64x64xf32> to vector<64x64xf32>
    %9 = vector.shape_cast %6 : vector<64x64xf32> to vector<1x64x64xf32>
    tpu.vector_store %arg12[%c0_8, %c0_9, %c0_10], %9 {strides = array<i32>} : memref<1x64x64xf32, #tpu.memory_space<vmem>>, vector<1x64x64xf32>,
    %c0_i32 = arith.constant 0 : i32
    %c3_i32 = arith.constant 3 : i32
    %10 = arith.addi %c0_i32, %c3_i32 : i32
    %c1_i32 = arith.constant 1 : i32
    scf.for %arg14 = %c0_i32 to %10 step %c1_i32  : i32 {
      %c0_78 = arith.constant 0 : index
      %c0_79 = arith.constant 0 : index
      %c0_80 = arith.constant 0 : index
      %83 = vector.load %arg11[%c0_78, %c0_79, %c0_80] : memref<1x64x64xf32, #tpu.memory_space<vmem>>, vector<1x64x64xf32>
      %84 = vector.shape_cast %83 : vector<1x64x64xf32> to vector<64x64xf32>
      %c0_81 = arith.constant 0 : index
      %c0_82 = arith.constant 0 : index
      %c0_83 = arith.constant 0 : index
      %85 = vector.load %arg12[%c0_81, %c0_82, %c0_83] : memref<1x64x64xf32, #tpu.memory_space<vmem>>, vector<1x64x64xf32>
      %86 = vector.shape_cast %85 : vector<1x64x64xf32> to vector<64x64xf32>
      %87 = arith.truncf %84 : vector<64x64xf32> to vector<64x64xbf16>
      %88 = arith.truncf %86 : vector<64x64xf32> to vector<64x64xbf16>
      %c0_84 = arith.constant 0 : index
      %c0_85 = arith.constant 0 : index
      %89 = vector.load %arg3[%c0_84, %c0_85] : memref<64x64xbf16, #tpu.memory_space<vmem>>, vector<64x64xbf16>
      %cst_86 = arith.constant dense<0.000000e+00> : vector<64x64xf32>
      %90 = tpu.matmul %89, %87, %cst_86 {dimension_numbers = #tpu.dot_dimension_numbers<[1], [0], [0], [1], [0, 0, 1, 1], [], []>} : vector<64x64xbf16>, vector<64x64xbf16>, vector<64x64xf32> -> vector<64x64xf32>
      %c0_87 = arith.constant 0 : index
      %c0_88 = arith.constant 0 : index
      %91 = vector.load %arg4[%c0_87, %c0_88] : memref<64x64xbf16, #tpu.memory_space<vmem>>, vector<64x64xbf16>
      %cst_89 = arith.constant dense<0.000000e+00> : vector<64x64xf32>
      %92 = tpu.matmul %91, %88, %cst_89 {dimension_numbers = #tpu.dot_dimension_numbers<[1], [0], [0], [1], [0, 0, 1, 1], [], []>} : vector<64x64xbf16>, vector<64x64xbf16>, vector<64x64xf32> -> vector<64x64xf32>
      %93 = arith.subf %90, %92 : vector<64x64xf32>
      %c0_90 = arith.constant 0 : index
      %c0_91 = arith.constant 0 : index
      %94 = vector.load %arg3[%c0_90, %c0_91] : memref<64x64xbf16, #tpu.memory_space<vmem>>, vector<64x64xbf16>
      %cst_92 = arith.constant dense<0.000000e+00> : vector<64x64xf32>
      %95 = tpu.matmul %94, %88, %cst_92 {dimension_numbers = #tpu.dot_dimension_numbers<[1], [0], [0], [1], [0, 0, 1, 1], [], []>} : vector<64x64xbf16>, vector<64x64xbf16>, vector<64x64xf32> -> vector<64x64xf32>
      %c0_93 = arith.constant 0 : index
      %c0_94 = arith.constant 0 : index
      %96 = vector.load %arg4[%c0_93, %c0_94] : memref<64x64xbf16, #tpu.memory_space<vmem>>, vector<64x64xbf16>
      %cst_95 = arith.constant dense<0.000000e+00> : vector<64x64xf32>
      %97 = tpu.matmul %96, %87, %cst_95 {dimension_numbers = #tpu.dot_dimension_numbers<[1], [0], [0], [1], [0, 0, 1, 1], [], []>} : vector<64x64xbf16>, vector<64x64xbf16>, vector<64x64xf32> -> vector<64x64xf32>
      %98 = arith.addf %95, %97 : vector<64x64xf32>
      %99 = arith.truncf %93 : vector<64x64xf32> to vector<64x64xbf16>
      %100 = arith.truncf %98 : vector<64x64xf32> to vector<64x64xbf16>
      %c0_96 = arith.constant 0 : index
      %c0_97 = arith.constant 0 : index
      %101 = vector.load %arg3[%c0_96, %c0_97] : memref<64x64xbf16, #tpu.memory_space<vmem>>, vector<64x64xbf16>
      %cst_98 = arith.constant dense<0.000000e+00> : vector<64x64xf32>
      %102 = tpu.matmul %99, %101, %cst_98 {dimension_numbers = #tpu.dot_dimension_numbers<[1], [0], [0], [1], [0, 0, 1, 1], [], []>} : vector<64x64xbf16>, vector<64x64xbf16>, vector<64x64xf32> -> vector<64x64xf32>
      %c0_99 = arith.constant 0 : index
      %c0_100 = arith.constant 0 : index
      %103 = vector.load %arg4[%c0_99, %c0_100] : memref<64x64xbf16, #tpu.memory_space<vmem>>, vector<64x64xbf16>
      %cst_101 = arith.constant dense<0.000000e+00> : vector<64x64xf32>
      %104 = tpu.matmul %100, %103, %cst_101 {dimension_numbers = #tpu.dot_dimension_numbers<[1], [0], [0], [1], [0, 0, 1, 1], [], []>} : vector<64x64xbf16>, vector<64x64xbf16>, vector<64x64xf32> -> vector<64x64xf32>
      %105 = arith.subf %102, %104 : vector<64x64xf32>
      %c0_102 = arith.constant 0 : index
      %c0_103 = arith.constant 0 : index
      %106 = vector.load %arg4[%c0_102, %c0_103] : memref<64x64xbf16, #tpu.memory_space<vmem>>, vector<64x64xbf16>
      %cst_104 = arith.constant dense<0.000000e+00> : vector<64x64xf32>
      %107 = tpu.matmul %99, %106, %cst_104 {dimension_numbers = #tpu.dot_dimension_numbers<[1], [0], [0], [1], [0, 0, 1, 1], [], []>} : vector<64x64xbf16>, vector<64x64xbf16>, vector<64x64xf32> -> vector<64x64xf32>
      %c0_105 = arith.constant 0 : index
      %c0_106 = arith.constant 0 : index
      %108 = vector.load %arg3[%c0_105, %c0_106] : memref<64x64xbf16, #tpu.memory_space<vmem>>, vector<64x64xbf16>
      %cst_107 = arith.constant dense<0.000000e+00> : vector<64x64xf32>
      %109 = tpu.matmul %100, %108, %cst_107 {dimension_numbers = #tpu.dot_dimension_numbers<[1], [0], [0], [1], [0, 0, 1, 1], [], []>} : vector<64x64xbf16>, vector<64x64xbf16>, vector<64x64xf32> -> vector<64x64xf32>
      %110 = arith.addf %107, %109 : vector<64x64xf32>
      %c0_108 = arith.constant 0 : index
      %c0_109 = arith.constant 0 : index
      %111 = vector.load %arg7[%c0_108, %c0_109] : memref<64x64xf32, #tpu.memory_space<vmem>>, vector<64x64xf32>
      %c0_110 = arith.constant 0 : index
      %c0_111 = arith.constant 0 : index
      %112 = vector.load %arg8[%c0_110, %c0_111] : memref<64x64xf32, #tpu.memory_space<vmem>>, vector<64x64xf32>
      %113 = arith.mulf %105, %111 : vector<64x64xf32>
      %114 = arith.mulf %110, %112 : vector<64x64xf32>
      %115 = arith.subf %113, %114 : vector<64x64xf32>
      %116 = arith.mulf %105, %112 : vector<64x64xf32>
      %117 = arith.mulf %110, %111 : vector<64x64xf32>
      %118 = arith.addf %116, %117 : vector<64x64xf32>
      %119 = arith.truncf %115 : vector<64x64xf32> to vector<64x64xbf16>
      %120 = arith.truncf %118 : vector<64x64xf32> to vector<64x64xbf16>
      %c0_112 = arith.constant 0 : index
      %c0_113 = arith.constant 0 : index
      %121 = vector.load %arg5[%c0_112, %c0_113] : memref<64x64xbf16, #tpu.memory_space<vmem>>, vector<64x64xbf16>
      %cst_114 = arith.constant dense<0.000000e+00> : vector<64x64xf32>
      %122 = tpu.matmul %121, %119, %cst_114 {dimension_numbers = #tpu.dot_dimension_numbers<[1], [0], [0], [1], [0, 0, 1, 1], [], []>} : vector<64x64xbf16>, vector<64x64xbf16>, vector<64x64xf32> -> vector<64x64xf32>
      %c0_115 = arith.constant 0 : index
      %c0_116 = arith.constant 0 : index
      %123 = vector.load %arg6[%c0_115, %c0_116] : memref<64x64xbf16, #tpu.memory_space<vmem>>, vector<64x64xbf16>
      %cst_117 = arith.constant dense<0.000000e+00> : vector<64x64xf32>
      %124 = tpu.matmul %123, %120, %cst_117 {dimension_numbers = #tpu.dot_dimension_numbers<[1], [0], [0], [1], [0, 0, 1, 1], [], []>} : vector<64x64xbf16>, vector<64x64xbf16>, vector<64x64xf32> -> vector<64x64xf32>
      %125 = arith.subf %122, %124 : vector<64x64xf32>
      %c0_118 = arith.constant 0 : index
      %c0_119 = arith.constant 0 : index
      %126 = vector.load %arg5[%c0_118, %c0_119] : memref<64x64xbf16, #tpu.memory_space<vmem>>, vector<64x64xbf16>
      %cst_120 = arith.constant dense<0.000000e+00> : vector<64x64xf32>
      %127 = tpu.matmul %126, %120, %cst_120 {dimension_numbers = #tpu.dot_dimension_numbers<[1], [0], [0], [1], [0, 0, 1, 1], [], []>} : vector<64x64xbf16>, vector<64x64xbf16>, vector<64x64xf32> -> vector<64x64xf32>
      %c0_121 = arith.constant 0 : index
      %c0_122 = arith.constant 0 : index
      %128 = vector.load %arg6[%c0_121, %c0_122] : memref<64x64xbf16, #tpu.memory_space<vmem>>, vector<64x64xbf16>
      %cst_123 = arith.constant dense<0.000000e+00> : vector<64x64xf32>
      %129 = tpu.matmul %128, %119, %cst_123 {dimension_numbers = #tpu.dot_dimension_numbers<[1], [0], [0], [1], [0, 0, 1, 1], [], []>} : vector<64x64xbf16>, vector<64x64xbf16>, vector<64x64xf32> -> vector<64x64xf32>
      %130 = arith.addf %127, %129 : vector<64x64xf32>
      %131 = arith.truncf %125 : vector<64x64xf32> to vector<64x64xbf16>
      %132 = arith.truncf %130 : vector<64x64xf32> to vector<64x64xbf16>
      %c0_124 = arith.constant 0 : index
      %c0_125 = arith.constant 0 : index
      %133 = vector.load %arg5[%c0_124, %c0_125] : memref<64x64xbf16, #tpu.memory_space<vmem>>, vector<64x64xbf16>
      %cst_126 = arith.constant dense<0.000000e+00> : vector<64x64xf32>
      %134 = tpu.matmul %131, %133, %cst_126 {dimension_numbers = #tpu.dot_dimension_numbers<[1], [0], [0], [1], [0, 0, 1, 1], [], []>} : vector<64x64xbf16>, vector<64x64xbf16>, vector<64x64xf32> -> vector<64x64xf32>
      %c0_127 = arith.constant 0 : index
      %c0_128 = arith.constant 0 : index
      %135 = vector.load %arg6[%c0_127, %c0_128] : memref<64x64xbf16, #tpu.memory_space<vmem>>, vector<64x64xbf16>
      %cst_129 = arith.constant dense<0.000000e+00> : vector<64x64xf32>
      %136 = tpu.matmul %132, %135, %cst_129 {dimension_numbers = #tpu.dot_dimension_numbers<[1], [0], [0], [1], [0, 0, 1, 1], [], []>} : vector<64x64xbf16>, vector<64x64xbf16>, vector<64x64xf32> -> vector<64x64xf32>
      %137 = arith.subf %134, %136 : vector<64x64xf32>
      %c0_130 = arith.constant 0 : index
      %c0_131 = arith.constant 0 : index
      %138 = vector.load %arg6[%c0_130, %c0_131] : memref<64x64xbf16, #tpu.memory_space<vmem>>, vector<64x64xbf16>
      %cst_132 = arith.constant dense<0.000000e+00> : vector<64x64xf32>
      %139 = tpu.matmul %131, %138, %cst_132 {dimension_numbers = #tpu.dot_dimension_numbers<[1], [0], [0], [1], [0, 0, 1, 1], [], []>} : vector<64x64xbf16>, vector<64x64xbf16>, vector<64x64xf32> -> vector<64x64xf32>
      %c0_133 = arith.constant 0 : index
      %c0_134 = arith.constant 0 : index
      %140 = vector.load %arg5[%c0_133, %c0_134] : memref<64x64xbf16, #tpu.memory_space<vmem>>, vector<64x64xbf16>
      %cst_135 = arith.constant dense<0.000000e+00> : vector<64x64xf32>
      %141 = tpu.matmul %132, %140, %cst_135 {dimension_numbers = #tpu.dot_dimension_numbers<[1], [0], [0], [1], [0, 0, 1, 1], [], []>} : vector<64x64xbf16>, vector<64x64xbf16>, vector<64x64xf32> -> vector<64x64xf32>
      %142 = arith.addf %139, %141 : vector<64x64xf32>
      %143 = arith.index_cast %arg14 : i32 to index
      %c0_136 = arith.constant 0 : index
      %c0_137 = arith.constant 0 : index
      %144 = vector.load %arg9[%143, %c0_136, %c0_137] : memref<3x64x64xbf16, #tpu.memory_space<vmem>>, vector<1x64x64xbf16>
      %145 = vector.shape_cast %144 : vector<1x64x64xbf16> to vector<64x64xbf16>
      %146 = arith.extf %145 : vector<64x64xbf16> to vector<64x64xf32>
      %147 = arith.index_cast %arg14 : i32 to index
      %c0_138 = arith.constant 0 : index
      %c0_139 = arith.constant 0 : index
      %148 = vector.load %arg10[%147, %c0_138, %c0_139] : memref<3x64x64xbf16, #tpu.memory_space<vmem>>, vector<1x64x64xbf16>
      %149 = vector.shape_cast %148 : vector<1x64x64xbf16> to vector<64x64xbf16>
      %150 = arith.extf %149 : vector<64x64xbf16> to vector<64x64xf32>
      %151 = arith.mulf %137, %146 : vector<64x64xf32>
      %152 = arith.mulf %142, %150 : vector<64x64xf32>
      %153 = arith.subf %151, %152 : vector<64x64xf32>
      %c0_140 = arith.constant 0 : index
      %c0_141 = arith.constant 0 : index
      %c0_142 = arith.constant 0 : index
      %154 = vector.load %arg11[%c0_140, %c0_141, %c0_142] : memref<1x64x64xf32, #tpu.memory_space<vmem>>, vector<1x64x64xf32>
      %155 = vector.shape_cast %154 : vector<1x64x64xf32> to vector<64x64xf32>
      %156 = vector.shape_cast %153 : vector<64x64xf32> to vector<1x64x64xf32>
      tpu.vector_store %arg11[%c0_140, %c0_141, %c0_142], %156 {strides = array<i32>} : memref<1x64x64xf32, #tpu.memory_space<vmem>>, vector<1x64x64xf32>,
      %157 = arith.mulf %137, %150 : vector<64x64xf32>
      %158 = arith.mulf %142, %146 : vector<64x64xf32>
      %159 = arith.addf %157, %158 : vector<64x64xf32>
      %c0_143 = arith.constant 0 : index
      %c0_144 = arith.constant 0 : index
      %c0_145 = arith.constant 0 : index
      %160 = vector.load %arg12[%c0_143, %c0_144, %c0_145] : memref<1x64x64xf32, #tpu.memory_space<vmem>>, vector<1x64x64xf32>
      %161 = vector.shape_cast %160 : vector<1x64x64xf32> to vector<64x64xf32>
      %162 = vector.shape_cast %159 : vector<64x64xf32> to vector<1x64x64xf32>
      tpu.vector_store %arg12[%c0_143, %c0_144, %c0_145], %162 {strides = array<i32>} : memref<1x64x64xf32, #tpu.memory_space<vmem>>, vector<1x64x64xf32>,
    }
    %c3_i32_11 = arith.constant 3 : i32
    %c0_12 = arith.constant 0 : index
    %c0_13 = arith.constant 0 : index
    %c0_14 = arith.constant 0 : index
    %11 = vector.load %arg11[%c0_12, %c0_13, %c0_14] : memref<1x64x64xf32, #tpu.memory_space<vmem>>, vector<1x64x64xf32>
    %12 = vector.shape_cast %11 : vector<1x64x64xf32> to vector<64x64xf32>
    %c0_15 = arith.constant 0 : index
    %c0_16 = arith.constant 0 : index
    %c0_17 = arith.constant 0 : index
    %13 = vector.load %arg12[%c0_15, %c0_16, %c0_17] : memref<1x64x64xf32, #tpu.memory_space<vmem>>, vector<1x64x64xf32>
    %14 = vector.shape_cast %13 : vector<1x64x64xf32> to vector<64x64xf32>
    %15 = arith.truncf %12 : vector<64x64xf32> to vector<64x64xbf16>
    %16 = arith.truncf %14 : vector<64x64xf32> to vector<64x64xbf16>
    %c0_18 = arith.constant 0 : index
    %c0_19 = arith.constant 0 : index
    %17 = vector.load %arg3[%c0_18, %c0_19] : memref<64x64xbf16, #tpu.memory_space<vmem>>, vector<64x64xbf16>
    %cst = arith.constant dense<0.000000e+00> : vector<64x64xf32>
    %18 = tpu.matmul %17, %15, %cst {dimension_numbers = #tpu.dot_dimension_numbers<[1], [0], [0], [1], [0, 0, 1, 1], [], []>} : vector<64x64xbf16>, vector<64x64xbf16>, vector<64x64xf32> -> vector<64x64xf32>
    %c0_20 = arith.constant 0 : index
    %c0_21 = arith.constant 0 : index
    %19 = vector.load %arg4[%c0_20, %c0_21] : memref<64x64xbf16, #tpu.memory_space<vmem>>, vector<64x64xbf16>
    %cst_22 = arith.constant dense<0.000000e+00> : vector<64x64xf32>
    %20 = tpu.matmul %19, %16, %cst_22 {dimension_numbers = #tpu.dot_dimension_numbers<[1], [0], [0], [1], [0, 0, 1, 1], [], []>} : vector<64x64xbf16>, vector<64x64xbf16>, vector<64x64xf32> -> vector<64x64xf32>
    %21 = arith.subf %18, %20 : vector<64x64xf32>
    %c0_23 = arith.constant 0 : index
    %c0_24 = arith.constant 0 : index
    %22 = vector.load %arg3[%c0_23, %c0_24] : memref<64x64xbf16, #tpu.memory_space<vmem>>, vector<64x64xbf16>
    %cst_25 = arith.constant dense<0.000000e+00> : vector<64x64xf32>
    %23 = tpu.matmul %22, %16, %cst_25 {dimension_numbers = #tpu.dot_dimension_numbers<[1], [0], [0], [1], [0, 0, 1, 1], [], []>} : vector<64x64xbf16>, vector<64x64xbf16>, vector<64x64xf32> -> vector<64x64xf32>
    %c0_26 = arith.constant 0 : index
    %c0_27 = arith.constant 0 : index
    %24 = vector.load %arg4[%c0_26, %c0_27] : memref<64x64xbf16, #tpu.memory_space<vmem>>, vector<64x64xbf16>
    %cst_28 = arith.constant dense<0.000000e+00> : vector<64x64xf32>
    %25 = tpu.matmul %24, %15, %cst_28 {dimension_numbers = #tpu.dot_dimension_numbers<[1], [0], [0], [1], [0, 0, 1, 1], [], []>} : vector<64x64xbf16>, vector<64x64xbf16>, vector<64x64xf32> -> vector<64x64xf32>
    %26 = arith.addf %23, %25 : vector<64x64xf32>
    %27 = arith.truncf %21 : vector<64x64xf32> to vector<64x64xbf16>
    %28 = arith.truncf %26 : vector<64x64xf32> to vector<64x64xbf16>
    %c0_29 = arith.constant 0 : index
    %c0_30 = arith.constant 0 : index
    %29 = vector.load %arg3[%c0_29, %c0_30] : memref<64x64xbf16, #tpu.memory_space<vmem>>, vector<64x64xbf16>
    %cst_31 = arith.constant dense<0.000000e+00> : vector<64x64xf32>
    %30 = tpu.matmul %27, %29, %cst_31 {dimension_numbers = #tpu.dot_dimension_numbers<[1], [0], [0], [1], [0, 0, 1, 1], [], []>} : vector<64x64xbf16>, vector<64x64xbf16>, vector<64x64xf32> -> vector<64x64xf32>
    %c0_32 = arith.constant 0 : index
    %c0_33 = arith.constant 0 : index
    %31 = vector.load %arg4[%c0_32, %c0_33] : memref<64x64xbf16, #tpu.memory_space<vmem>>, vector<64x64xbf16>
    %cst_34 = arith.constant dense<0.000000e+00> : vector<64x64xf32>
    %32 = tpu.matmul %28, %31, %cst_34 {dimension_numbers = #tpu.dot_dimension_numbers<[1], [0], [0], [1], [0, 0, 1, 1], [], []>} : vector<64x64xbf16>, vector<64x64xbf16>, vector<64x64xf32> -> vector<64x64xf32>
    %33 = arith.subf %30, %32 : vector<64x64xf32>
    %c0_35 = arith.constant 0 : index
    %c0_36 = arith.constant 0 : index
    %34 = vector.load %arg4[%c0_35, %c0_36] : memref<64x64xbf16, #tpu.memory_space<vmem>>, vector<64x64xbf16>
    %cst_37 = arith.constant dense<0.000000e+00> : vector<64x64xf32>
    %35 = tpu.matmul %27, %34, %cst_37 {dimension_numbers = #tpu.dot_dimension_numbers<[1], [0], [0], [1], [0, 0, 1, 1], [], []>} : vector<64x64xbf16>, vector<64x64xbf16>, vector<64x64xf32> -> vector<64x64xf32>
    %c0_38 = arith.constant 0 : index
    %c0_39 = arith.constant 0 : index
    %36 = vector.load %arg3[%c0_38, %c0_39] : memref<64x64xbf16, #tpu.memory_space<vmem>>, vector<64x64xbf16>
    %cst_40 = arith.constant dense<0.000000e+00> : vector<64x64xf32>
    %37 = tpu.matmul %28, %36, %cst_40 {dimension_numbers = #tpu.dot_dimension_numbers<[1], [0], [0], [1], [0, 0, 1, 1], [], []>} : vector<64x64xbf16>, vector<64x64xbf16>, vector<64x64xf32> -> vector<64x64xf32>
    %38 = arith.addf %35, %37 : vector<64x64xf32>
    %c0_41 = arith.constant 0 : index
    %c0_42 = arith.constant 0 : index
    %39 = vector.load %arg7[%c0_41, %c0_42] : memref<64x64xf32, #tpu.memory_space<vmem>>, vector<64x64xf32>
    %c0_43 = arith.constant 0 : index
    %c0_44 = arith.constant 0 : index
    %40 = vector.load %arg8[%c0_43, %c0_44] : memref<64x64xf32, #tpu.memory_space<vmem>>, vector<64x64xf32>
    %41 = arith.mulf %33, %39 : vector<64x64xf32>
    %42 = arith.mulf %38, %40 : vector<64x64xf32>
    %43 = arith.subf %41, %42 : vector<64x64xf32>
    %44 = arith.mulf %33, %40 : vector<64x64xf32>
    %45 = arith.mulf %38, %39 : vector<64x64xf32>
    %46 = arith.addf %44, %45 : vector<64x64xf32>
    %47 = arith.truncf %43 : vector<64x64xf32> to vector<64x64xbf16>
    %48 = arith.truncf %46 : vector<64x64xf32> to vector<64x64xbf16>
    %c0_45 = arith.constant 0 : index
    %c0_46 = arith.constant 0 : index
    %49 = vector.load %arg5[%c0_45, %c0_46] : memref<64x64xbf16, #tpu.memory_space<vmem>>, vector<64x64xbf16>
    %cst_47 = arith.constant dense<0.000000e+00> : vector<64x64xf32>
    %50 = tpu.matmul %49, %47, %cst_47 {dimension_numbers = #tpu.dot_dimension_numbers<[1], [0], [0], [1], [0, 0, 1, 1], [], []>} : vector<64x64xbf16>, vector<64x64xbf16>, vector<64x64xf32> -> vector<64x64xf32>
    %c0_48 = arith.constant 0 : index
    %c0_49 = arith.constant 0 : index
    %51 = vector.load %arg6[%c0_48, %c0_49] : memref<64x64xbf16, #tpu.memory_space<vmem>>, vector<64x64xbf16>
    %cst_50 = arith.constant dense<0.000000e+00> : vector<64x64xf32>
    %52 = tpu.matmul %51, %48, %cst_50 {dimension_numbers = #tpu.dot_dimension_numbers<[1], [0], [0], [1], [0, 0, 1, 1], [], []>} : vector<64x64xbf16>, vector<64x64xbf16>, vector<64x64xf32> -> vector<64x64xf32>
    %53 = arith.subf %50, %52 : vector<64x64xf32>
    %c0_51 = arith.constant 0 : index
    %c0_52 = arith.constant 0 : index
    %54 = vector.load %arg5[%c0_51, %c0_52] : memref<64x64xbf16, #tpu.memory_space<vmem>>, vector<64x64xbf16>
    %cst_53 = arith.constant dense<0.000000e+00> : vector<64x64xf32>
    %55 = tpu.matmul %54, %48, %cst_53 {dimension_numbers = #tpu.dot_dimension_numbers<[1], [0], [0], [1], [0, 0, 1, 1], [], []>} : vector<64x64xbf16>, vector<64x64xbf16>, vector<64x64xf32> -> vector<64x64xf32>
    %c0_54 = arith.constant 0 : index
    %c0_55 = arith.constant 0 : index
    %56 = vector.load %arg6[%c0_54, %c0_55] : memref<64x64xbf16, #tpu.memory_space<vmem>>, vector<64x64xbf16>
    %cst_56 = arith.constant dense<0.000000e+00> : vector<64x64xf32>
    %57 = tpu.matmul %56, %47, %cst_56 {dimension_numbers = #tpu.dot_dimension_numbers<[1], [0], [0], [1], [0, 0, 1, 1], [], []>} : vector<64x64xbf16>, vector<64x64xbf16>, vector<64x64xf32> -> vector<64x64xf32>
    %58 = arith.addf %55, %57 : vector<64x64xf32>
    %59 = arith.truncf %53 : vector<64x64xf32> to vector<64x64xbf16>
    %60 = arith.truncf %58 : vector<64x64xf32> to vector<64x64xbf16>
    %c0_57 = arith.constant 0 : index
    %c0_58 = arith.constant 0 : index
    %61 = vector.load %arg5[%c0_57, %c0_58] : memref<64x64xbf16, #tpu.memory_space<vmem>>, vector<64x64xbf16>
    %cst_59 = arith.constant dense<0.000000e+00> : vector<64x64xf32>
    %62 = tpu.matmul %59, %61, %cst_59 {dimension_numbers = #tpu.dot_dimension_numbers<[1], [0], [0], [1], [0, 0, 1, 1], [], []>} : vector<64x64xbf16>, vector<64x64xbf16>, vector<64x64xf32> -> vector<64x64xf32>
    %c0_60 = arith.constant 0 : index
    %c0_61 = arith.constant 0 : index
    %63 = vector.load %arg6[%c0_60, %c0_61] : memref<64x64xbf16, #tpu.memory_space<vmem>>, vector<64x64xbf16>
    %cst_62 = arith.constant dense<0.000000e+00> : vector<64x64xf32>
    %64 = tpu.matmul %60, %63, %cst_62 {dimension_numbers = #tpu.dot_dimension_numbers<[1], [0], [0], [1], [0, 0, 1, 1], [], []>} : vector<64x64xbf16>, vector<64x64xbf16>, vector<64x64xf32> -> vector<64x64xf32>
    %65 = arith.subf %62, %64 : vector<64x64xf32>
    %c0_63 = arith.constant 0 : index
    %c0_64 = arith.constant 0 : index
    %66 = vector.load %arg6[%c0_63, %c0_64] : memref<64x64xbf16, #tpu.memory_space<vmem>>, vector<64x64xbf16>
    %cst_65 = arith.constant dense<0.000000e+00> : vector<64x64xf32>
    %67 = tpu.matmul %59, %66, %cst_65 {dimension_numbers = #tpu.dot_dimension_numbers<[1], [0], [0], [1], [0, 0, 1, 1], [], []>} : vector<64x64xbf16>, vector<64x64xbf16>, vector<64x64xf32> -> vector<64x64xf32>
    %c0_66 = arith.constant 0 : index
    %c0_67 = arith.constant 0 : index
    %68 = vector.load %arg5[%c0_66, %c0_67] : memref<64x64xbf16, #tpu.memory_space<vmem>>, vector<64x64xbf16>
    %cst_68 = arith.constant dense<0.000000e+00> : vector<64x64xf32>
    %69 = tpu.matmul %60, %68, %cst_68 {dimension_numbers = #tpu.dot_dimension_numbers<[1], [0], [0], [1], [0, 0, 1, 1], [], []>} : vector<64x64xbf16>, vector<64x64xbf16>, vector<64x64xf32> -> vector<64x64xf32>
    %70 = arith.addf %67, %69 : vector<64x64xf32>
    %c0_69 = arith.constant 0 : index
    %c0_70 = arith.constant 0 : index
    %c0_71 = arith.constant 0 : index
    %71 = vector.load %arg11[%c0_69, %c0_70, %c0_71] : memref<1x64x64xf32, #tpu.memory_space<vmem>>, vector<1x64x64xf32>
    %72 = vector.shape_cast %71 : vector<1x64x64xf32> to vector<64x64xf32>
    %73 = vector.shape_cast %65 : vector<64x64xf32> to vector<1x64x64xf32>
    tpu.vector_store %arg11[%c0_69, %c0_70, %c0_71], %73 {strides = array<i32>} : memref<1x64x64xf32, #tpu.memory_space<vmem>>, vector<1x64x64xf32>,
    %c0_72 = arith.constant 0 : index
    %c0_73 = arith.constant 0 : index
    %c0_74 = arith.constant 0 : index
    %74 = vector.load %arg12[%c0_72, %c0_73, %c0_74] : memref<1x64x64xf32, #tpu.memory_space<vmem>>, vector<1x64x64xf32>
    %75 = vector.shape_cast %74 : vector<1x64x64xf32> to vector<64x64xf32>
    %76 = vector.shape_cast %70 : vector<64x64xf32> to vector<1x64x64xf32>
    tpu.vector_store %arg12[%c0_72, %c0_73, %c0_74], %76 {strides = array<i32>} : memref<1x64x64xf32, #tpu.memory_space<vmem>>, vector<1x64x64xf32>,
    %77 = arith.mulf %65, %65 : vector<64x64xf32>
    %78 = arith.mulf %70, %70 : vector<64x64xf32>
    %79 = arith.addf %77, %78 : vector<64x64xf32>
    %c0_75 = arith.constant 0 : index
    %c0_76 = arith.constant 0 : index
    %c0_77 = arith.constant 0 : index
    %80 = vector.load %arg13[%c0_75, %c0_76, %c0_77] : memref<1x64x64xf32, #tpu.memory_space<vmem>>, vector<1x64x64xf32>
    %81 = vector.shape_cast %80 : vector<1x64x64xf32> to vector<64x64xf32>
    %82 = vector.shape_cast %79 : vector<64x64xf32> to vector<1x64x64xf32>
    tpu.vector_store %arg13[%c0_75, %c0_76, %c0_77], %82 {strides = array<i32>} : memref<1x64x64xf32, #tpu.memory_space<vmem>>, vector<1x64x64xf32>,
    return
  }
  func.func @transform_0(%arg0: i32) -> (i32, i32, i32) {
    %c0_i32 = arith.constant 0 : i32
    %c0_i32_0 = arith.constant 0 : i32
    %c0_i32_1 = arith.constant 0 : i32
    return %arg0, %c0_i32, %c0_i32_0 : i32, i32, i32
  }
  func.func @transform_1(%arg0: i32) -> (i32, i32, i32) {
    %c0_i32 = arith.constant 0 : i32
    %c0_i32_0 = arith.constant 0 : i32
    %c0_i32_1 = arith.constant 0 : i32
    return %arg0, %c0_i32, %c0_i32_0 : i32, i32, i32
  }
  func.func @transform_2(%arg0: i32) -> (i32, i32) {
    %c0_i32 = arith.constant 0 : i32
    %c0_i32_0 = arith.constant 0 : i32
    %c0_i32_1 = arith.constant 0 : i32
    return %c0_i32, %c0_i32_0 : i32, i32
  }
  func.func @transform_3(%arg0: i32) -> (i32, i32) {
    %c0_i32 = arith.constant 0 : i32
    %c0_i32_0 = arith.constant 0 : i32
    %c0_i32_1 = arith.constant 0 : i32
    return %c0_i32, %c0_i32_0 : i32, i32
  }
  func.func @transform_4(%arg0: i32) -> (i32, i32) {
    %c0_i32 = arith.constant 0 : i32
    %c0_i32_0 = arith.constant 0 : i32
    %c0_i32_1 = arith.constant 0 : i32
    return %c0_i32, %c0_i32_0 : i32, i32
  }
  func.func @transform_5(%arg0: i32) -> (i32, i32) {
    %c0_i32 = arith.constant 0 : i32
    %c0_i32_0 = arith.constant 0 : i32
    %c0_i32_1 = arith.constant 0 : i32
    return %c0_i32, %c0_i32_0 : i32, i32
  }
  func.func @transform_6(%arg0: i32) -> (i32, i32) {
    %c0_i32 = arith.constant 0 : i32
    %c0_i32_0 = arith.constant 0 : i32
    %c0_i32_1 = arith.constant 0 : i32
    return %c0_i32, %c0_i32_0 : i32, i32
  }
  func.func @transform_7(%arg0: i32) -> (i32, i32) {
    %c0_i32 = arith.constant 0 : i32
    %c0_i32_0 = arith.constant 0 : i32
    %c0_i32_1 = arith.constant 0 : i32
    return %c0_i32, %c0_i32_0 : i32, i32
  }
  func.func @transform_8(%arg0: i32) -> (i32, i32, i32) {
    %c0_i32 = arith.constant 0 : i32
    %c0_i32_0 = arith.constant 0 : i32
    %c0_i32_1 = arith.constant 0 : i32
    %c0_i32_2 = arith.constant 0 : i32
    return %c0_i32, %c0_i32_0, %c0_i32_1 : i32, i32, i32
  }
  func.func @transform_9(%arg0: i32) -> (i32, i32, i32) {
    %c0_i32 = arith.constant 0 : i32
    %c0_i32_0 = arith.constant 0 : i32
    %c0_i32_1 = arith.constant 0 : i32
    %c0_i32_2 = arith.constant 0 : i32
    return %c0_i32, %c0_i32_0, %c0_i32_1 : i32, i32, i32
  }
  func.func @transform_10(%arg0: i32) -> (i32, i32, i32) {
    %c0_i32 = arith.constant 0 : i32
    %c0_i32_0 = arith.constant 0 : i32
    %c0_i32_1 = arith.constant 0 : i32
    return %arg0, %c0_i32, %c0_i32_0 : i32, i32, i32
  }
  func.func @transform_11(%arg0: i32) -> (i32, i32, i32) {
    %c0_i32 = arith.constant 0 : i32
    %c0_i32_0 = arith.constant 0 : i32
    %c0_i32_1 = arith.constant 0 : i32
    return %arg0, %c0_i32, %c0_i32_0 : i32, i32, i32
  }
  func.func @transform_12(%arg0: i32) -> (i32, i32, i32) {
    %c0_i32 = arith.constant 0 : i32
    %c0_i32_0 = arith.constant 0 : i32
    %c0_i32_1 = arith.constant 0 : i32
    return %arg0, %c0_i32, %c0_i32_0 : i32, i32, i32
  }
}

</mosaic_0001>

<llo_original>
// kernel: tpu_custom_call.1
$region0: #{tpu_custom_call.1}
  #allocation0 [shape = 'u32[]', space=smem, size = 0x4, offset = 0x4, fixed_abs, tag = 'smem constant byte address 0x4 - core index']
  #allocation1 [shape = 'u32[144,128]{1,0:T(1,128)}', space=vmem, size = 0x12000, scoped, tag = 'internal scratch']
  %s0 = inlined_call_operand.hbm [shape: f32[2,64,64], index: 0, kind: input, shape index: {}]
  %s1 = inlined_call_operand.hbm [shape: f32[2,64,64], index: 1, kind: input, shape index: {}]
  %s2 = inlined_call_operand.hbm [shape: bf16[64,64], index: 2, kind: input, shape index: {}]
  %s3 = inlined_call_operand.hbm [shape: bf16[64,64], index: 3, kind: input, shape index: {}]
  %s4 = inlined_call_operand.hbm [shape: bf16[64,64], index: 4, kind: input, shape index: {}]
  %s5 = inlined_call_operand.hbm [shape: bf16[64,64], index: 5, kind: input, shape index: {}]
  %s6 = inlined_call_operand.hbm [shape: f32[64,64], index: 6, kind: input, shape index: {}]
  %s7 = inlined_call_operand.hbm [shape: f32[64,64], index: 7, kind: input, shape index: {}]
  %s8 = inlined_call_operand.hbm [shape: bf16[3,64,64], index: 8, kind: input, shape index: {}]
  %s9 = inlined_call_operand.hbm [shape: bf16[3,64,64], index: 9, kind: input, shape index: {}]
  %s10 = inlined_call_operand.hbm [shape: f32[2,64,64], index: 10, kind: output, shape index: {0}]
  %s11 = inlined_call_operand.hbm [shape: f32[2,64,64], index: 11, kind: output, shape index: {1}]
  %s12 = inlined_call_operand.hbm [shape: f32[2,64,64], index: 12, kind: output, shape index: {2}]
  %13 = xla_tuple %s10, %s11, %s12
  %s14 = sld [smem:[#allocation0]]
  $region136: #{tpu_custom_call.1} parent=0
    _
  %s16 = ssub.s32 1, %s14
  %s17 = scalar_select 0, %s16, %s14
  $region1: #{tpu_custom_call.1} parent=0
    #allocation2 [shape = 'u8[65536]{0}', space=vmem, size = 0x10000, scoped, tag = 'input window, operand 0']
    #allocation3 [shape = 's32[2]{0}', space=sflag, size = 0x8, scoped, tag = 'scoped memory for tpu_custom_call.1']
    #allocation4 [shape = 's32[2]{0}', space=sflag, size = 0x8, scoped, tag = 'scoped memory for tpu_custom_call.1']
    #allocation5 [shape = 'u8[65536]{0}', space=vmem, size = 0x10000, scoped, tag = 'input window, operand 1']
    #allocation6 [shape = 's32[2]{0}', space=sflag, size = 0x8, scoped, tag = 'scoped memory for tpu_custom_call.1']
    #allocation7 [shape = 'u8[16384]{0}', space=vmem, size = 0x4000, scoped, tag = 'input window, operand 2, single buffered']
    #allocation8 [shape = 'u8[16384]{0}', space=vmem, size = 0x4000, scoped, tag = 'input window, operand 3, single buffered']
    #allocation9 [shape = 's32[1]{0}', space=sflag, size = 0x4, scoped, tag = 'scoped memory for tpu_custom_call.1']
    #allocation10 [shape = 'u8[16384]{0}', space=vmem, size = 0x4000, scoped, tag = 'input window, operand 4, single buffered']
    #allocation11 [shape = 'u8[16384]{0}', space=vmem, size = 0x4000, scoped, tag = 'input window, operand 5, single buffered']
    #allocation12 [shape = 's32[1]{0}', space=sflag, size = 0x4, scoped, tag = 'scoped memory for tpu_custom_call.1']
    #allocation13 [shape = 'u8[32768]{0}', space=vmem, size = 0x8000, scoped, tag = 'input window, operand 6, single buffered']
    #allocation14 [shape = 'u8[32768]{0}', space=vmem, size = 0x8000, scoped, tag = 'input window, operand 7, single buffered']
    #allocation15 [shape = 's32[1]{0}', space=sflag, size = 0x4, scoped, tag = 'scoped memory for tpu_custom_call.1']
    #allocation16 [shape = 'u8[49152]{0}', space=vmem, size = 0xc000, scoped, tag = 'input window, operand 8, single buffered']
    #allocation17 [shape = 'u8[49152]{0}', space=vmem, size = 0xc000, scoped, tag = 'input window, operand 9, single buffered']
    #allocation18 [shape = 's32[1]{0}', space=sflag, size = 0x4, scoped, tag = 'scoped memory for tpu_custom_call.1']
    #allocation19 [shape = 'u8[65536]{0}', space=vmem, size = 0x10000, scoped, tag = 'output window, operand 0']
    #allocation20 [shape = 'u8[65536]{0}', space=vmem, size = 0x10000, scoped, tag = 'output window, operand 1']
    #allocation21 [shape = 's32[2]{0}', space=sflag, size = 0x8, scoped, tag = 'scoped memory for tpu_custom_call.1']
    #allocation22 [shape = 'u8[65536]{0}', space=vmem, size = 0x10000, scoped, tag = 'output window, operand 2']
    %18 = vsyncpa [#allocation3], 0
    %s19 = scalar_lea.sflag [#allocation3], 1
    %20 = vsyncpa %s19, 0
    %21 = vsyncpa [#allocation6], 0
    %s22 = scalar_lea.sflag [#allocation6], 1
    %23 = vsyncpa %s22, 0
    %24 = vsyncpa [#allocation9], 0
    %25 = vsyncpa [#allocation12], 0
    %26 = vsyncpa [#allocation15], 0
    %27 = vsyncpa [#allocation18], 0
    %28 = vsyncpa [#allocation4], 0
    %s29 = scalar_lea.sflag [#allocation4], 1
    %30 = vsyncpa %s29, 0
    %31 = vsyncpa [#allocation21], 0
    %s32 = scalar_lea.sflag [#allocation21], 1
    %33 = vsyncpa %s32, 0
    loop: start=0, step=1, limit=4
    $region2: #{tpu_custom_call.1} parent=1 // loop_pre_header
      _
    $region3: #{tpu_custom_call.1} parent=1 // loop_header
      %s35 = sphi 0, %s39
      %p36 = scmp.ge.s32.totalorder %s35, 4
      %s45 = sphi 0, %s47
      %s48 = sphi 0, %s45
      %s49 = sphi 0, %s48
      %s65 = sphi 0, %s49
      %s71 = sphi 0, %s73
      %s74 = sphi 0, %s71
      %s75 = sphi 0, %s74
      %s91 = sphi 0, %s75
      %s95 = sphi 0, %s95
      %s97 = sphi 0, %s95
      %s98 = sphi 0, %s97
      %s112 = sphi 0, %s98
      %s116 = sphi 0, %s116
      %s118 = sphi 0, %s116
      %s119 = sphi 0, %s118
      %s133 = sphi 0, %s119
      %s137 = sphi 0, %s137
      %s139 = sphi 0, %s137
      %s140 = sphi 0, %s139
      %s154 = sphi 0, %s140
      %s158 = sphi 0, %s158
      %s160 = sphi 0, %s158
      %s161 = sphi 0, %s160
      %s175 = sphi 0, %s161
      %s179 = sphi 0, %s179
      %s181 = sphi 0, %s179
      %s182 = sphi 0, %s181
      %s196 = sphi 0, %s182
      %s200 = sphi 0, %s200
      %s202 = sphi 0, %s200
      %s203 = sphi 0, %s202
      %s217 = sphi 0, %s203
      %s221 = sphi 0, %s221
      %s223 = sphi 0, %s221
      %s224 = sphi 0, %s223
      %s238 = sphi 0, %s224
      %s242 = sphi 0, %s242
      %s244 = sphi 0, %s242
      %s245 = sphi 0, %s244
      %s259 = sphi 0, %s245
      %s265 = sphi 0, %s267
      %s268 = sphi 0, %s265
      %s269 = sphi 0, %s268
      %s285 = sphi 0, %s269
      %s291 = sphi 0, %s293
      %s294 = sphi 0, %s291
      %s295 = sphi 0, %s294
      %s311 = sphi 0, %s295
      %s317 = sphi 0, %s319
      %s320 = sphi 0, %s317
      %s321 = sphi 0, %s320
      %s337 = sphi 0, %s321
    $region4: #{tpu_custom_call.1} parent=1 // loop_header_branch
      %38 = sbr.rel (%p36) target = $region8
    $region5: #{tpu_custom_call.1} parent=1 // loop_body
      %s40 = ssub.s32 %s35, 1
      %s41 = ssub.s32 %s35, 2
      %s42 = sadd.s32 %s35, 1
      %s43 = ssub.s32 %s35, %s42
      %p44 = scmp.eq.s32.totalorder %s43, 0
      %s46 = sadd.s32 %s45, 1
      %s47 = scalar_select %p44, %s45, %s46
      %p50 = pneg %p44
      %p51 = scmp.eq.s32.totalorder %s35, 1
      %p52 = por %p50, %p51
      %p53 = scmp.ne.s32.totalorder %s45, %s48
      %p54 = scmp.eq.s32.totalorder %s35, 0
      %p55 = por %p53, %p54
      %p56 = scmp.ne.s32.totalorder %s45, %s48
      %p57 = scmp.eq.s32.totalorder %s40, 1
      %p58 = por %p56, %p57
      %p59 = scmp.ne.s32.totalorder %s48, %s49
      %p60 = scmp.eq.s32.totalorder %s40, 0
      %p61 = por %p59, %p60
      %p62 = scmp.ne.s32.totalorder %s48, %s49
      %p63 = scmp.eq.s32.totalorder %s41, 1
      %p64 = por %p62, %p63
      %p66 = scmp.ne.s32.totalorder %s49, %s65
      %p67 = scmp.eq.s32.totalorder %s41, 0
      %p68 = por %p66, %p67
      %s69 = ssub.s32 %s35, %s42
      %p70 = scmp.eq.s32.totalorder %s69, 0
      %s72 = sadd.s32 %s71, 1
      %s73 = scalar_select %p70, %s71, %s72
      %p76 = pneg %p70
      %p77 = scmp.eq.s32.totalorder %s35, 1
      %p78 = por %p76, %p77
      %p79 = scmp.ne.s32.totalorder %s71, %s74
      %p80 = scmp.eq.s32.totalorder %s35, 0
      %p81 = por %p79, %p80
      %p82 = scmp.ne.s32.totalorder %s71, %s74
      %p83 = scmp.eq.s32.totalorder %s40, 1
      %p84 = por %p82, %p83
      %p85 = scmp.ne.s32.totalorder %s74, %s75
      %p86 = scmp.eq.s32.totalorder %s40, 0
      %p87 = por %p85, %p86
      %p88 = scmp.ne.s32.totalorder %s74, %s75
      %p89 = scmp.eq.s32.totalorder %s41, 1
      %p90 = por %p88, %p89
      %p92 = scmp.ne.s32.totalorder %s75, %s91
      %p93 = scmp.eq.s32.totalorder %s41, 0
      %p94 = por %p92, %p93
      %s96 = sadd.s32 %s95, 1
      %p99 = scmp.eq.s32.totalorder %s35, 1
      %p100 = scmp.ne.s32.totalorder %s95, %s97
      %p101 = scmp.eq.s32.totalorder %s35, 0
      %p102 = por %p100, %p101
      %p103 = scmp.ne.s32.totalorder %s95, %s97
      %p104 = scmp.eq.s32.totalorder %s40, 1
      %p105 = por %p103, %p104
      %p106 = scmp.ne.s32.totalorder %s97, %s98
      %p107 = scmp.eq.s32.totalorder %s40, 0
      %p108 = por %p106, %p107
      %p109 = scmp.ne.s32.totalorder %s97, %s98
      %p110 = scmp.eq.s32.totalorder %s41, 1
      %p111 = por %p109, %p110
      %p113 = scmp.ne.s32.totalorder %s98, %s112
      %p114 = scmp.eq.s32.totalorder %s41, 0
      %p115 = por %p113, %p114
      %s117 = sadd.s32 %s116, 1
      %p120 = scmp.eq.s32.totalorder %s35, 1
      %p121 = scmp.ne.s32.totalorder %s116, %s118
      %p122 = scmp.eq.s32.totalorder %s35, 0
      %p123 = por %p121, %p122
      %p124 = scmp.ne.s32.totalorder %s116, %s118
      %p125 = scmp.eq.s32.totalorder %s40, 1
      %p126 = por %p124, %p125
      %p127 = scmp.ne.s32.totalorder %s118, %s119
      %p128 = scmp.eq.s32.totalorder %s40, 0
      %p129 = por %p127, %p128
      %p130 = scmp.ne.s32.totalorder %s118, %s119
      %p131 = scmp.eq.s32.totalorder %s41, 1
      %p132 = por %p130, %p131
      %p134 = scmp.ne.s32.totalorder %s119, %s133
      %p135 = scmp.eq.s32.totalorder %s41, 0
      %p136 = por %p134, %p135
      %s138 = sadd.s32 %s137, 1
      %p141 = scmp.eq.s32.totalorder %s35, 1
      %p142 = scmp.ne.s32.totalorder %s137, %s139
      %p143 = scmp.eq.s32.totalorder %s35, 0
      %p144 = por %p142, %p143
      %p145 = scmp.ne.s32.totalorder %s137, %s139
      %p146 = scmp.eq.s32.totalorder %s40, 1
      %p147 = por %p145, %p146
      %p148 = scmp.ne.s32.totalorder %s139, %s140
      %p149 = scmp.eq.s32.totalorder %s40, 0
      %p150 = por %p148, %p149
      %p151 = scmp.ne.s32.totalorder %s139, %s140
      %p152 = scmp.eq.s32.totalorder %s41, 1
      %p153 = por %p151, %p152
      %p155 = scmp.ne.s32.totalorder %s140, %s154
      %p156 = scmp.eq.s32.totalorder %s41, 0
      %p157 = por %p155, %p156
      %s159 = sadd.s32 %s158, 1
      %p162 = scmp.eq.s32.totalorder %s35, 1
      %p163 = scmp.ne.s32.totalorder %s158, %s160
      %p164 = scmp.eq.s32.totalorder %s35, 0
      %p165 = por %p163, %p164
      %p166 = scmp.ne.s32.totalorder %s158, %s160
      %p167 = scmp.eq.s32.totalorder %s40, 1
      %p168 = por %p166, %p167
      %p169 = scmp.ne.s32.totalorder %s160, %s161
      %p170 = scmp.eq.s32.totalorder %s40, 0
      %p171 = por %p169, %p170
      %p172 = scmp.ne.s32.totalorder %s160, %s161
      %p173 = scmp.eq.s32.totalorder %s41, 1
      %p174 = por %p172, %p173
      %p176 = scmp.ne.s32.totalorder %s161, %s175
      %p177 = scmp.eq.s32.totalorder %s41, 0
      %p178 = por %p176, %p177
      %s180 = sadd.s32 %s179, 1
      %p183 = scmp.eq.s32.totalorder %s35, 1
      %p184 = scmp.ne.s32.totalorder %s179, %s181
      %p185 = scmp.eq.s32.totalorder %s35, 0
      %p186 = por %p184, %p185
      %p187 = scmp.ne.s32.totalorder %s179, %s181
      %p188 = scmp.eq.s32.totalorder %s40, 1
      %p189 = por %p187, %p188
      %p190 = scmp.ne.s32.totalorder %s181, %s182
      %p191 = scmp.eq.s32.totalorder %s40, 0
      %p192 = por %p190, %p191
      %p193 = scmp.ne.s32.totalorder %s181, %s182
      %p194 = scmp.eq.s32.totalorder %s41, 1
      %p195 = por %p193, %p194
      %p197 = scmp.ne.s32.totalorder %s182, %s196
      %p198 = scmp.eq.s32.totalorder %s41, 0
      %p199 = por %p197, %p198
      %s201 = sadd.s32 %s200, 1
      %p204 = scmp.eq.s32.totalorder %s35, 1
      %p205 = scmp.ne.s32.totalorder %s200, %s202
      %p206 = scmp.eq.s32.totalorder %s35, 0
      %p207 = por %p205, %p206
      %p208 = scmp.ne.s32.totalorder %s200, %s202
      %p209 = scmp.eq.s32.totalorder %s40, 1
      %p210 = por %p208, %p209
      %p211 = scmp.ne.s32.totalorder %s202, %s203
      %p212 = scmp.eq.s32.totalorder %s40, 0
      %p213 = por %p211, %p212
      %p214 = scmp.ne.s32.totalorder %s202, %s203
      %p215 = scmp.eq.s32.totalorder %s41, 1
      %p216 = por %p214, %p215
      %p218 = scmp.ne.s32.totalorder %s203, %s217
      %p219 = scmp.eq.s32.totalorder %s41, 0
      %p220 = por %p218, %p219
      %s222 = sadd.s32 %s221, 1
      %p225 = scmp.eq.s32.totalorder %s35, 1
      %p226 = scmp.ne.s32.totalorder %s221, %s223
      %p227 = scmp.eq.s32.totalorder %s35, 0
      %p228 = por %p226, %p227
      %p229 = scmp.ne.s32.totalorder %s221, %s223
      %p230 = scmp.eq.s32.totalorder %s40, 1
      %p231 = por %p229, %p230
      %p232 = scmp.ne.s32.totalorder %s223, %s224
      %p233 = scmp.eq.s32.totalorder %s40, 0
      %p234 = por %p232, %p233
      %p235 = scmp.ne.s32.totalorder %s223, %s224
      %p236 = scmp.eq.s32.totalorder %s41, 1
      %p237 = por %p235, %p236
      %p239 = scmp.ne.s32.totalorder %s224, %s238
      %p240 = scmp.eq.s32.totalorder %s41, 0
      %p241 = por %p239, %p240
      %s243 = sadd.s32 %s242, 1
      %p246 = scmp.eq.s32.totalorder %s35, 1
      %p247 = scmp.ne.s32.totalorder %s242, %s244
      %p248 = scmp.eq.s32.totalorder %s35, 0
      %p249 = por %p247, %p248
      %p250 = scmp.ne.s32.totalorder %s242, %s244
      %p251 = scmp.eq.s32.totalorder %s40, 1
      %p252 = por %p250, %p251
      %p253 = scmp.ne.s32.totalorder %s244, %s245
      %p254 = scmp.eq.s32.totalorder %s40, 0
      %p255 = por %p253, %p254
      %p256 = scmp.ne.s32.totalorder %s244, %s245
      %p257 = scmp.eq.s32.totalorder %s41, 1
      %p258 = por %p256, %p257
      %p260 = scmp.ne.s32.totalorder %s245, %s259
      %p261 = scmp.eq.s32.totalorder %s41, 0
      %p262 = por %p260, %p261
      %s263 = ssub.s32 %s35, %s42
      %p264 = scmp.eq.s32.totalorder %s263, 0
      %s266 = sadd.s32 %s265, 1
      %s267 = scalar_select %p264, %s265, %s266
      %p270 = pneg %p264
      %p271 = scmp.eq.s32.totalorder %s35, 1
      %p272 = por %p270, %p271
      %p273 = scmp.ne.s32.totalorder %s265, %s268
      %p274 = scmp.eq.s32.totalorder %s35, 0
      %p275 = por %p273, %p274
      %p276 = scmp.ne.s32.totalorder %s265, %s268
      %p277 = scmp.eq.s32.totalorder %s40, 1
      %p278 = por %p276, %p277
      %p279 = scmp.ne.s32.totalorder %s268, %s269
      %p280 = scmp.eq.s32.totalorder %s40, 0
      %p281 = por %p279, %p280
      %p282 = scmp.ne.s32.totalorder %s268, %s269
      %p283 = scmp.eq.s32.totalorder %s41, 1
      %p284 = por %p282, %p283
      %p286 = scmp.ne.s32.totalorder %s269, %s285
      %p287 = scmp.eq.s32.totalorder %s41, 0
      %p288 = por %p286, %p287
      %s289 = ssub.s32 %s35, %s42
      %p290 = scmp.eq.s32.totalorder %s289, 0
      %s292 = sadd.s32 %s291, 1
      %s293 = scalar_select %p290, %s291, %s292
      %p296 = pneg %p290
      %p297 = scmp.eq.s32.totalorder %s35, 1
      %p298 = por %p296, %p297
      %p299 = scmp.ne.s32.totalorder %s291, %s294
      %p300 = scmp.eq.s32.totalorder %s35, 0
      %p301 = por %p299, %p300
      %p302 = scmp.ne.s32.totalorder %s291, %s294
      %p303 = scmp.eq.s32.totalorder %s40, 1
      %p304 = por %p302, %p303
      %p305 = scmp.ne.s32.totalorder %s294, %s295
      %p306 = scmp.eq.s32.totalorder %s40, 0
      %p307 = por %p305, %p306
      %p308 = scmp.ne.s32.totalorder %s294, %s295
      %p309 = scmp.eq.s32.totalorder %s41, 1
      %p310 = por %p308, %p309
      %p312 = scmp.ne.s32.totalorder %s295, %s311
      %p313 = scmp.eq.s32.totalorder %s41, 0
      %p314 = por %p312, %p313
      %s315 = ssub.s32 %s35, %s42
      %p316 = scmp.eq.s32.totalorder %s315, 0
      %s318 = sadd.s32 %s317, 1
      %s319 = scalar_select %p316, %s317, %s318
      %p322 = pneg %p316
      %p323 = scmp.eq.s32.totalorder %s35, 1
      %p324 = por %p322, %p323
      %p325 = scmp.ne.s32.totalorder %s317, %s320
      %p326 = scmp.eq.s32.totalorder %s35, 0
      %p327 = por %p325, %p326
      %p328 = scmp.ne.s32.totalorder %s317, %s320
      %p329 = scmp.eq.s32.totalorder %s40, 1
      %p330 = por %p328, %p329
      %p331 = scmp.ne.s32.totalorder %s320, %s321
      %p332 = scmp.eq.s32.totalorder %s40, 0
      %p333 = por %p331, %p332
      %p334 = scmp.ne.s32.totalorder %s320, %s321
      %p335 = scmp.eq.s32.totalorder %s41, 1
      %p336 = por %p334, %p335
      %p338 = scmp.ne.s32.totalorder %s321, %s337
      %p339 = scmp.eq.s32.totalorder %s41, 0
      %p340 = por %p338, %p339
      %p341 = scmp.le.s32.totalorder 1, %s35
      %p342 = scmp.lt.s32.totalorder %s35, 3
      %p343 = pnand %p341, %p342
      %p344 = pneg %p343
      // Predicated region
      $region9: #{tpu_custom_call.1} parent=5 // pred_check
        _
      $region10: #{tpu_custom_call.1} parent=5 // pred_check_branch
        %346 = sbr.rel (%p343) target = $region12
      $region11: #{tpu_custom_call.1} parent=5 // pred_region
        %s347 = ssub.s32 %s35, 1
        // Predicated region
        $region13: #{tpu_custom_call.1} parent=11 // pred_check
          %p348 = pneg %p108
        $region14: #{tpu_custom_call.1} parent=11 // pred_check_branch
          %350 = sbr.rel (%p348) target = $region16
        $region15: #{tpu_custom_call.1} parent=11 // pred_region
          %s352 = ssub.s32 512, 512
          %353 = vsyncadd [#allocation6], %s352
          %s354 = sshll.u32 [#allocation7], 4
          %s355 = int_to_ptr.vmem [resolvable:$true] %s354
          %360 = dma.hbm_to_vmem [thread:$0]  %s2, 512, %s355, [#allocation6], 64, 64, 4
        $region16: #{tpu_custom_call.1} parent=11 // pred_fallthru
          _
        // Predicated region
        $region17: #{tpu_custom_call.1} parent=11 // pred_check
          %p361 = pneg %p129
        $region18: #{tpu_custom_call.1} parent=11 // pred_check_branch
          %363 = sbr.rel (%p361) target = $region20
        $region19: #{tpu_custom_call.1} parent=11 // pred_region
          %s365 = ssub.s32 512, 512
          %366 = vsyncadd [#allocation9], %s365
          %s367 = sshll.u32 [#allocation8], 4
          %s368 = int_to_ptr.vmem [resolvable:$true] %s367
          %373 = dma.hbm_to_vmem [thread:$0]  %s3, 512, %s368, [#allocation9], 64, 64, 4
        $region20: #{tpu_custom_call.1} parent=11 // pred_fallthru
          _
        // Predicated region
        $region21: #{tpu_custom_call.1} parent=11 // pred_check
          %p374 = pneg %p150
        $region22: #{tpu_custom_call.1} parent=11 // pred_check_branch
          %376 = sbr.rel (%p374) target = $region24
        $region23: #{tpu_custom_call.1} parent=11 // pred_region
          %s378 = ssub.s32 512, 512
          %379 = vsyncadd [#allocation9], %s378
          %s380 = sshll.u32 [#allocation10], 4
          %s381 = int_to_ptr.vmem [resolvable:$true] %s380
          %386 = dma.hbm_to_vmem [thread:$0]  %s4, 512, %s381, [#allocation9], 64, 64, 4
        $region24: #{tpu_custom_call.1} parent=11 // pred_fallthru
          _
        // Predicated region
        $region25: #{tpu_custom_call.1} parent=11 // pred_check
          %p387 = pneg %p171
        $region26: #{tpu_custom_call.1} parent=11 // pred_check_branch
          %389 = sbr.rel (%p387) target = $region28
        $region27: #{tpu_custom_call.1} parent=11 // pred_region
          %s391 = ssub.s32 512, 512
          %392 = vsyncadd [#allocation12], %s391
          %s393 = sshll.u32 [#allocation11], 4
          %s394 = int_to_ptr.vmem [resolvable:$true] %s393
          %399 = dma.hbm_to_vmem [thread:$0]  %s5, 512, %s394, [#allocation12], 64, 64, 4
        $region28: #{tpu_custom_call.1} parent=11 // pred_fallthru
          _
        // Predicated region
        $region29: #{tpu_custom_call.1} parent=11 // pred_check
          %p400 = pneg %p192
        $region30: #{tpu_custom_call.1} parent=11 // pred_check_branch
          %402 = sbr.rel (%p400) target = $region32
        $region31: #{tpu_custom_call.1} parent=11 // pred_region
          %s404 = ssub.s32 1024, 1024
          %405 = vsyncadd [#allocation12], %s404
          %s406 = sshll.u32 [#allocation13], 4
          %s407 = int_to_ptr.vmem [resolvable:$true] %s406
          %412 = dma.hbm_to_vmem [thread:$0]  %s6, 1024, %s407, [#allocation12], 128, 128, 8
        $region32: #{tpu_custom_call.1} parent=11 // pred_fallthru
          _
        // Predicated region
        $region33: #{tpu_custom_call.1} parent=11 // pred_check
          %p413 = pneg %p213
        $region34: #{tpu_custom_call.1} parent=11 // pred_check_branch
          %415 = sbr.rel (%p413) target = $region36
        $region35: #{tpu_custom_call.1} parent=11 // pred_region
          %s417 = ssub.s32 1024, 1024
          %418 = vsyncadd [#allocation15], %s417
          %s419 = sshll.u32 [#allocation14], 4
          %s420 = int_to_ptr.vmem [resolvable:$true] %s419
          %425 = dma.hbm_to_vmem [thread:$0]  %s7, 1024, %s420, [#allocation15], 128, 128, 8
        $region36: #{tpu_custom_call.1} parent=11 // pred_fallthru
          _
        // Predicated region
        $region37: #{tpu_custom_call.1} parent=11 // pred_check
          %p426 = pneg %p234
        $region38: #{tpu_custom_call.1} parent=11 // pred_check_branch
          %428 = sbr.rel (%p426) target = $region40
        $region39: #{tpu_custom_call.1} parent=11 // pred_region
          %s430 = ssub.s32 1536, 1536
          %431 = vsyncadd [#allocation15], %s430
          %s432 = sshll.u32 [#allocation16], 4
          %s433 = int_to_ptr.vmem [resolvable:$true] %s432
          %438 = dma.hbm_to_vmem [thread:$0]  %s8, 1536, %s433, [#allocation15], 64, 64, 4
        $region40: #{tpu_custom_call.1} parent=11 // pred_fallthru
          _
        // Predicated region
        $region41: #{tpu_custom_call.1} parent=11 // pred_check
          %p439 = pneg %p255
        $region42: #{tpu_custom_call.1} parent=11 // pred_check_branch
          %441 = sbr.rel (%p439) target = $region44
        $region43: #{tpu_custom_call.1} parent=11 // pred_region
          %s443 = ssub.s32 1536, 1536
          %444 = vsyncadd [#allocation18], %s443
          %s445 = sshll.u32 [#allocation17], 4
          %s446 = int_to_ptr.vmem [resolvable:$true] %s445
          %451 = dma.hbm_to_vmem [thread:$0]  %s9, 1536, %s446, [#allocation18], 64, 64, 4
        $region44: #{tpu_custom_call.1} parent=11 // pred_fallthru
          _
      $region12: #{tpu_custom_call.1} parent=5 // pred_fallthru
        _
      %p452 = scmp.lt.s32.totalorder %s35, 2
      // Predicated region
      $region45: #{tpu_custom_call.1} parent=5 // pred_check
        %p453 = pneg %p452
      $region46: #{tpu_custom_call.1} parent=5 // pred_check_branch
        %455 = sbr.rel (%p453) target = $region48
      $region47: #{tpu_custom_call.1} parent=5 // pred_region
        // Predicated region
        $region49: #{tpu_custom_call.1} parent=47 // pred_check
          %p456 = pneg %p55
        $region50: #{tpu_custom_call.1} parent=47 // pred_check_branch
          %458 = sbr.rel (%p456) target = $region52
        $region51: #{tpu_custom_call.1} parent=47 // pred_region
          %s459 = sand.u32 %s45, 1
          %s460 = scalar_lea.sflag [#allocation3], %s459
          %s461 = sand.u32 %s45, 1
          %s462 = smul.addr %s461, 64
          %s463 = scalar_lea.vmem [#allocation2], %s462
          %s465 = ssub.s32 1024, 1024
          %466 = vsyncadd %s460, %s465
          %s467 = smul.addr %s35, 8
          %s468 = smul.addr %s467, 128
          %s469 = scalar_lea.hbm %s0, %s468
          %s470 = sshll.u32 %s463, 4
          %s471 = int_to_ptr.vmem [resolvable:$true] %s470
          %476 = dma.hbm_to_vmem [thread:$0]  %s469, 1024, %s471, %s460, 128, 128, 8
        $region52: #{tpu_custom_call.1} parent=47 // pred_fallthru
          _
        // Predicated region
        $region53: #{tpu_custom_call.1} parent=47 // pred_check
          %p477 = pneg %p81
        $region54: #{tpu_custom_call.1} parent=47 // pred_check_branch
          %479 = sbr.rel (%p477) target = $region56
        $region55: #{tpu_custom_call.1} parent=47 // pred_region
          %s480 = sand.u32 %s35, 1
          %s481 = scalar_lea.sflag [#allocation6], %s480
          %s482 = sand.u32 %s71, 1
          %s483 = smul.addr %s482, 64
          %s484 = scalar_lea.vmem [#allocation5], %s483
          %s486 = ssub.s32 1024, 1024
          %487 = vsyncadd %s481, %s486
          %s488 = smul.addr %s35, 8
          %s489 = smul.addr %s488, 128
          %s490 = scalar_lea.hbm %s1, %s489
          %s491 = sshll.u32 %s484, 4
          %s492 = int_to_ptr.vmem [resolvable:$true] %s491
          %497 = dma.hbm_to_vmem [thread:$0]  %s490, 1024, %s492, %s481, 128, 128, 8
        $region56: #{tpu_custom_call.1} parent=47 // pred_fallthru
          _
      $region48: #{tpu_custom_call.1} parent=5 // pred_fallthru
        _
      %p498 = scmp.le.s32.totalorder 1, %s35
      %p499 = scmp.lt.s32.totalorder %s35, 3
      %p500 = pnand %p498, %p499
      %p501 = pneg %p500
      // Predicated region
      $region57: #{tpu_custom_call.1} parent=5 // pred_check
        _
      $region58: #{tpu_custom_call.1} parent=5 // pred_check_branch
        %503 = sbr.rel (%p500) target = $region60
      $region59: #{tpu_custom_call.1} parent=5 // pred_region
        %s504 = ssub.s32 %s35, 1
        %s505 = sand.u32 %s48, 1
        %s506 = scalar_lea.sflag [#allocation3], %s505
        %s507 = sand.u32 %s48, 1
        %s508 = smul.addr %s507, 64
        %s509 = scalar_lea.vmem [#allocation2], %s508
        // Predicated region
        $region61: #{tpu_custom_call.1} parent=59 // pred_check
          %p510 = pneg %p61
        $region62: #{tpu_custom_call.1} parent=59 // pred_check_branch
          %512 = sbr.rel (%p510) target = $region64
        $region63: #{tpu_custom_call.1} parent=59 // pred_region
          %513 = dma.done %s506, 1024
        $region64: #{tpu_custom_call.1} parent=59 // pred_fallthru
          _
        %s514 = sand.u32 %s40, 1
        %s515 = scalar_lea.sflag [#allocation6], %s514
        %s516 = sand.u32 %s74, 1
        %s517 = smul.addr %s516, 64
        %s518 = scalar_lea.vmem [#allocation5], %s517
        // Predicated region
        $region65: #{tpu_custom_call.1} parent=59 // pred_check
          %p519 = pneg %p87
        $region66: #{tpu_custom_call.1} parent=59 // pred_check_branch
          %521 = sbr.rel (%p519) target = $region68
        $region67: #{tpu_custom_call.1} parent=59 // pred_region
          %522 = dma.done %s515, 1024
        $region68: #{tpu_custom_call.1} parent=59 // pred_fallthru
          _
        // Predicated region
        $region69: #{tpu_custom_call.1} parent=59 // pred_check
          %p523 = pneg %p108
        $region70: #{tpu_custom_call.1} parent=59 // pred_check_branch
          %525 = sbr.rel (%p523) target = $region72
        $region71: #{tpu_custom_call.1} parent=59 // pred_region
          %526 = dma.done [#allocation6], 512
        $region72: #{tpu_custom_call.1} parent=59 // pred_fallthru
          _
        // Predicated region
        $region73: #{tpu_custom_call.1} parent=59 // pred_check
          %p527 = pneg %p129
        $region74: #{tpu_custom_call.1} parent=59 // pred_check_branch
          %529 = sbr.rel (%p527) target = $region76
        $region75: #{tpu_custom_call.1} parent=59 // pred_region
          %530 = dma.done [#allocation9], 512
        $region76: #{tpu_custom_call.1} parent=59 // pred_fallthru
          _
        // Predicated region
        $region77: #{tpu_custom_call.1} parent=59 // pred_check
          %p531 = pneg %p150
        $region78: #{tpu_custom_call.1} parent=59 // pred_check_branch
          %533 = sbr.rel (%p531) target = $region80
        $region79: #{tpu_custom_call.1} parent=59 // pred_region
          %534 = dma.done [#allocation9], 512
        $region80: #{tpu_custom_call.1} parent=59 // pred_fallthru
          _
        // Predicated region
        $region81: #{tpu_custom_call.1} parent=59 // pred_check
          %p535 = pneg %p171
        $region82: #{tpu_custom_call.1} parent=59 // pred_check_branch
          %537 = sbr.rel (%p535) target = $region84
        $region83: #{tpu_custom_call.1} parent=59 // pred_region
          %538 = dma.done [#allocation12], 512
        $region84: #{tpu_custom_call.1} parent=59 // pred_fallthru
          _
        // Predicated region
        $region85: #{tpu_custom_call.1} parent=59 // pred_check
          %p539 = pneg %p192
        $region86: #{tpu_custom_call.1} parent=59 // pred_check_branch
          %541 = sbr.rel (%p539) target = $region88
        $region87: #{tpu_custom_call.1} parent=59 // pred_region
          %542 = dma.done [#allocation12], 1024
        $region88: #{tpu_custom_call.1} parent=59 // pred_fallthru
          _
        // Predicated region
        $region89: #{tpu_custom_call.1} parent=59 // pred_check
          %p543 = pneg %p213
        $region90: #{tpu_custom_call.1} parent=59 // pred_check_branch
          %545 = sbr.rel (%p543) target = $region92
        $region91: #{tpu_custom_call.1} parent=59 // pred_region
          %546 = dma.done [#allocation15], 1024
        $region92: #{tpu_custom_call.1} parent=59 // pred_fallthru
          _
        // Predicated region
        $region93: #{tpu_custom_call.1} parent=59 // pred_check
          %p547 = pneg %p234
        $region94: #{tpu_custom_call.1} parent=59 // pred_check_branch
          %549 = sbr.rel (%p547) target = $region96
        $region95: #{tpu_custom_call.1} parent=59 // pred_region
          %550 = dma.done [#allocation15], 1536
        $region96: #{tpu_custom_call.1} parent=59 // pred_fallthru
          _
        // Predicated region
        $region97: #{tpu_custom_call.1} parent=59 // pred_check
          %p551 = pneg %p255
        $region98: #{tpu_custom_call.1} parent=59 // pred_check_branch
          %553 = sbr.rel (%p551) target = $region100
        $region99: #{tpu_custom_call.1} parent=59 // pred_region
          %554 = dma.done [#allocation18], 1536
        $region100: #{tpu_custom_call.1} parent=59 // pred_fallthru
          _
        %s555 = sand.u32 %s48, 1
        %s556 = scalar_lea.sflag [#allocation3], %s555
        %s557 = sand.u32 %s48, 1
        %s558 = smul.addr %s557, 64
        %s559 = scalar_lea.vmem [#allocation2], %s558
        %p560 = pneg %p61
        %p561 = pneg %p58
        %s562 = sand.u32 %s40, 1
        %s563 = scalar_lea.sflag [#allocation6], %s562
        %s564 = sand.u32 %s74, 1
        %s565 = smul.addr %s564, 64
        %s566 = scalar_lea.vmem [#allocation5], %s565
        %p567 = pneg %p87
        %p568 = pneg %p84
        %p569 = pneg %p108
        %p570 = pneg %p105
        %p571 = pneg %p129
        %p572 = pneg %p126
        %p573 = pneg %p150
        %p574 = pneg %p147
        %p575 = pneg %p171
        %p576 = pneg %p168
        %p577 = pneg %p192
        %p578 = pneg %p189
        %p579 = pneg %p213
        %p580 = pneg %p210
        %p581 = pneg %p234
        %p582 = pneg %p231
        %p583 = pneg %p255
        %p584 = pneg %p252
        %p585 = pneg %p281
        %p586 = pneg %p278
        %s587 = sand.u32 %s268, 1
        %s588 = scalar_lea.sflag [#allocation4], %s587
        %s589 = sand.u32 %s268, 1
        %s590 = smul.addr %s589, 64
        %s591 = scalar_lea.vmem [#allocation19], %s590
        %p592 = pneg %p307
        %p593 = pneg %p304
        %s594 = sand.u32 %s40, 1
        %s595 = scalar_lea.sflag [#allocation21], %s594
        %s596 = sand.u32 %s294, 1
        %s597 = smul.addr %s596, 64
        %s598 = scalar_lea.vmem [#allocation20], %s597
        %p599 = pneg %p333
        %p600 = pneg %p330
        %s601 = sand.u32 %s40, 1
        %s602 = scalar_lea.sflag [#allocation21], %s601
        %s603 = sand.u32 %s320, 1
        %s604 = smul.addr %s603, 64
        %s605 = scalar_lea.vmem [#allocation22], %s604
        %v607 = vld [vmem:[%s509] sm:$0xff]
        %v608 = vld [vmem:[%s509 + $0x8] sm:$0xff]
        %v609 = vld [vmem:[%s509 + $0x10] sm:$0xff]
        %v610 = vld [vmem:[%s509 + $0x18] sm:$0xff]
        %v611 = vld [vmem:[%s509 + $0x20] sm:$0xff]
        %v612 = vld [vmem:[%s509 + $0x28] sm:$0xff]
        %v613 = vld [vmem:[%s509 + $0x30] sm:$0xff]
        %v614 = vld [vmem:[%s509 + $0x38] sm:$0xff]
        %vm615 = vcmask 523264
        %616 = vst.msk [vmem:[%s591] sm:$0xff] %vm615, %v607
        %617 = vst.msk [vmem:[%s591 + $0x8] sm:$0xff] %vm615, %v608
        %618 = vst.msk [vmem:[%s591 + $0x10] sm:$0xff] %vm615, %v609
        %619 = vst.msk [vmem:[%s591 + $0x18] sm:$0xff] %vm615, %v610
        %620 = vst.msk [vmem:[%s591 + $0x20] sm:$0xff] %vm615, %v611
        %621 = vst.msk [vmem:[%s591 + $0x28] sm:$0xff] %vm615, %v612
        %622 = vst.msk [vmem:[%s591 + $0x30] sm:$0xff] %vm615, %v613
        %623 = vst.msk [vmem:[%s591 + $0x38] sm:$0xff] %vm615, %v614
        %v624 = vld [vmem:[%s518] sm:$0xff]
        %v625 = vld [vmem:[%s518 + $0x8] sm:$0xff]
        %v626 = vld [vmem:[%s518 + $0x10] sm:$0xff]
        %v627 = vld [vmem:[%s518 + $0x18] sm:$0xff]
        %v628 = vld [vmem:[%s518 + $0x20] sm:$0xff]
        %v629 = vld [vmem:[%s518 + $0x28] sm:$0xff]
        %v630 = vld [vmem:[%s518 + $0x30] sm:$0xff]
        %v631 = vld [vmem:[%s518 + $0x38] sm:$0xff]
        %632 = vst.msk [vmem:[%s598] sm:$0xff] %vm615, %v624
        %633 = vst.msk [vmem:[%s598 + $0x8] sm:$0xff] %vm615, %v625
        %634 = vst.msk [vmem:[%s598 + $0x10] sm:$0xff] %vm615, %v626
        %635 = vst.msk [vmem:[%s598 + $0x18] sm:$0xff] %vm615, %v627
        %636 = vst.msk [vmem:[%s598 + $0x20] sm:$0xff] %vm615, %v628
        %637 = vst.msk [vmem:[%s598 + $0x28] sm:$0xff] %vm615, %v629
        %638 = vst.msk [vmem:[%s598 + $0x30] sm:$0xff] %vm615, %v630
        %639 = vst.msk [vmem:[%s598 + $0x38] sm:$0xff] %vm615, %v631
        loop: start=0, step=1, limit=3
        $region101: #{tpu_custom_call.1} parent=59 // loop_pre_header
          _
        $region102: #{tpu_custom_call.1} parent=59 // loop_header
          %s641 = sphi 0, %s645
          %p642 = scmp.ge.s32.totalorder %s641, 3
        $region103: #{tpu_custom_call.1} parent=59 // loop_header_branch
          %644 = sbr.rel (%p642) target = $region107
        $region104: #{tpu_custom_call.1} parent=59 // loop_body
          %v646 = vld [vmem:[%s591] sm:$0xff]
          %v647 = vld [vmem:[%s591 + $0x8] sm:$0xff]
          %v648 = vld [vmem:[%s591 + $0x10] sm:$0xff]
          %v649 = vld [vmem:[%s591 + $0x18] sm:$0xff]
          %v650 = vld [vmem:[%s591 + $0x20] sm:$0xff]
          %v651 = vld [vmem:[%s591 + $0x28] sm:$0xff]
          %v652 = vld [vmem:[%s591 + $0x30] sm:$0xff]
          %v653 = vld [vmem:[%s591 + $0x38] sm:$0xff]
          %v654 = vld [vmem:[%s598] sm:$0xff]
          %v655 = vld [vmem:[%s598 + $0x8] sm:$0xff]
          %v656 = vld [vmem:[%s598 + $0x10] sm:$0xff]
          %v657 = vld [vmem:[%s598 + $0x18] sm:$0xff]
          %v658 = vld [vmem:[%s598 + $0x20] sm:$0xff]
          %v659 = vld [vmem:[%s598 + $0x28] sm:$0xff]
          %v660 = vld [vmem:[%s598 + $0x30] sm:$0xff]
          %v661 = vld [vmem:[%s598 + $0x38] sm:$0xff]
          %v662 = vpack.c.bf16 %v647, %v646
          %v663 = vpack.c.bf16 %v649, %v648
          %v664 = vpack.c.bf16 %v651, %v650
          %v665 = vpack.c.bf16 %v653, %v652
          %v666 = vpack.c.bf16 %v655, %v654
          %v667 = vpack.c.bf16 %v657, %v656
          %v668 = vpack.c.bf16 %v659, %v658
          %v669 = vpack.c.bf16 %v661, %v660
          %v670 = vld [vmem:[#allocation7] sm:$0xf]
          %v671 = vld [vmem:[#allocation7 + $0x4] sm:$0xf]
          %v672 = vld [vmem:[#allocation7 + $0x8] sm:$0xf]
          %v673 = vld [vmem:[#allocation7 + $0xc] sm:$0xf]
          %v674 = vld [vmem:[#allocation7 + $0x10] sm:$0xf]
          %v675 = vld [vmem:[#allocation7 + $0x14] sm:$0xf]
          %v676 = vld [vmem:[#allocation7 + $0x18] sm:$0xf]
          %v677 = vld [vmem:[#allocation7 + $0x1c] sm:$0xf]
          %v686 = vunpack.c.l.b16 %v670
          %v687 = vunpack.c.l.b16 %v671
          %v688 = vunpack.c.l.b16 %v672
          %v689 = vunpack.c.l.b16 %v673
          %v690 = vunpack.c.l.b16 %v674
          %v691 = vunpack.c.l.b16 %v675
          %v692 = vunpack.c.l.b16 %v676
          %v693 = vunpack.c.l.b16 %v677
          %v694 = vpack.c.b16 %v687, %v686
          %v695 = vpack.c.b16 %v689, %v688
          %v696 = vpack.c.b16 %v691, %v690
          %v697 = vpack.c.b16 %v693, %v692
          %v699 = vsel %vm615, %v694, 0
          %v702 = vsel %vm615, %v695, 0
          %v705 = vsel %vm615, %v696, 0
          %v708 = vsel %vm615, %v697, 0
          %710 = vmatprep.subr.bf16.mxu0 0
          %711 = vmatpush1.bf16.msra.mxu0 %v662
          %712 = vmatprep.subr.bf16.mxu0 0
          %713 = vmatpush1.bf16.msra.mxu0 %v663
          %714 = vmatprep.subr.bf16.mxu0 0
          %715 = vmatpush1.bf16.msra.mxu0 %v664
          %716 = vmatprep.subr.bf16.mxu0 0
          %717 = vmatpush1.bf16.msra.mxu0 %v665
          %718 = vmatprep.subr.bf16.mxu0 0
          %719 = vmatpush1.bf16.msra.mxu0 0
          %720 = vmatprep.subr.bf16.mxu0 0
          %721 = vmatpush1.bf16.msra.mxu0 0
          %722 = vmatprep.subr.bf16.mxu0 0
          %723 = vmatpush1.bf16.msra.mxu0 0
          %724 = vmatprep.subr.bf16.mxu0 0
          %725 = vmatpush1.bf16.msra.mxu0 0
          %726 = vmatprep.subr.bf16.mxu0 0
          %727 = vmatpush1.bf16.msra.mxu0 0
          %728 = vmatprep.subr.bf16.mxu0 0
          %729 = vmatpush1.bf16.msra.mxu0 0
          %730 = vmatprep.subr.bf16.mxu0 0
          %731 = vmatpush1.bf16.msra.mxu0 0
          %732 = vmatprep.subr.bf16.mxu0 0
          %733 = vmatpush1.bf16.msra.mxu0 0
          %734 = vmatprep.subr.bf16.mxu0 0
          %735 = vmatpush1.bf16.msra.mxu0 0
          %736 = vmatprep.subr.bf16.mxu0 0
          %737 = vmatpush1.bf16.msra.mxu0 0
          %738 = vmatprep.subr.bf16.mxu0 0
          %739 = vmatpush1.bf16.msra.mxu0 0
          %740 = vmatprep.subr.bf16.mxu0 0
          %741 = vmatpush1.bf16.msra.mxu0 0
          %742 = vmatprep.mubr.bf16.mxu0 0
          %743 = vmatmul.mubr.bf16.gmra.mrb[0].mxu0 %v699
          %v744 = vpop.f32.mrb[0].mxu0
          %v745 = vadd.f32 0.0, %v744
          %v746 = vpop.f32.mrb[0].mxu0
          %v747 = vpop.f32.mrb[0].mxu0
          %v748 = vadd.f32 0.0, %v747
          %v749 = vpop.f32.mrb[0].mxu0
          %750 = vmatprep.mubr.bf16.mxu0 0
          %751 = vmatmul.mubr.bf16.gmra.mrb[0].mxu0 %v702
          %v752 = vpop.f32.mrb[0].mxu0
          %v753 = vadd.f32 0.0, %v752
          %v754 = vpop.f32.mrb[0].mxu0
          %v755 = vpop.f32.mrb[0].mxu0
          %v756 = vadd.f32 0.0, %v755
          %v757 = vpop.f32.mrb[0].mxu0
          %758 = vmatprep.mubr.bf16.mxu0 0
          %759 = vmatmul.mubr.bf16.gmra.mrb[0].mxu0 %v705
          %v760 = vpop.f32.mrb[0].mxu0
          %v761 = vadd.f32 0.0, %v760
          %v762 = vpop.f32.mrb[0].mxu0
          %v763 = vpop.f32.mrb[0].mxu0
          %v764 = vadd.f32 0.0, %v763
          %v765 = vpop.f32.mrb[0].mxu0
          %766 = vmatprep.mubr.bf16.mxu0 0
          %767 = vmatmul.mubr.bf16.gmra.mrb[0].mxu0 %v708
          %v768 = vpop.f32.mrb[0].mxu0
          %v769 = vadd.f32 0.0, %v768
          %v770 = vpop.f32.mrb[0].mxu0
          %v771 = vpop.f32.mrb[0].mxu0
          %v772 = vadd.f32 0.0, %v771
          %v773 = vpop.f32.mrb[0].mxu0
          %774 = vdwg.mxu0
          %v775 = vld [vmem:[#allocation8] sm:$0xf]
          %v776 = vld [vmem:[#allocation8 + $0x4] sm:$0xf]
          %v777 = vld [vmem:[#allocation8 + $0x8] sm:$0xf]
          %v778 = vld [vmem:[#allocation8 + $0xc] sm:$0xf]
          %v779 = vld [vmem:[#allocation8 + $0x10] sm:$0xf]
          %v780 = vld [vmem:[#allocation8 + $0x14] sm:$0xf]
          %v781 = vld [vmem:[#allocation8 + $0x18] sm:$0xf]
          %v782 = vld [vmem:[#allocation8 + $0x1c] sm:$0xf]
          %v791 = vunpack.c.l.b16 %v775
          %v792 = vunpack.c.l.b16 %v776
          %v793 = vunpack.c.l.b16 %v777
          %v794 = vunpack.c.l.b16 %v778
          %v795 = vunpack.c.l.b16 %v779
          %v796 = vunpack.c.l.b16 %v780
          %v797 = vunpack.c.l.b16 %v781
          %v798 = vunpack.c.l.b16 %v782
          %v799 = vpack.c.b16 %v792, %v791
          %v800 = vpack.c.b16 %v794, %v793
          %v801 = vpack.c.b16 %v796, %v795
          %v802 = vpack.c.b16 %v798, %v797
          %v804 = vsel %vm615, %v799, 0
          %v807 = vsel %vm615, %v800, 0
          %v810 = vsel %vm615, %v801, 0
          %v813 = vsel %vm615, %v802, 0
          %815 = vmatprep.subr.bf16.mxu0 0
          %816 = vmatpush1.bf16.msra.mxu0 %v666
          %817 = vmatprep.subr.bf16.mxu0 0
          %818 = vmatpush1.bf16.msra.mxu0 %v667
          %819 = vmatprep.subr.bf16.mxu0 0
          %820 = vmatpush1.bf16.msra.mxu0 %v668
          %821 = vmatprep.subr.bf16.mxu0 0
          %822 = vmatpush1.bf16.msra.mxu0 %v669
          %823 = vmatprep.subr.bf16.mxu0 0
          %824 = vmatpush1.bf16.msra.mxu0 0
          %825 = vmatprep.subr.bf16.mxu0 0
          %826 = vmatpush1.bf16.msra.mxu0 0
          %827 = vmatprep.subr.bf16.mxu0 0
          %828 = vmatpush1.bf16.msra.mxu0 0
          %829 = vmatprep.subr.bf16.mxu0 0
          %830 = vmatpush1.bf16.msra.mxu0 0
          %831 = vmatprep.subr.bf16.mxu0 0
          %832 = vmatpush1.bf16.msra.mxu0 0
          %833 = vmatprep.subr.bf16.mxu0 0
          %834 = vmatpush1.bf16.msra.mxu0 0
          %835 = vmatprep.subr.bf16.mxu0 0
          %836 = vmatpush1.bf16.msra.mxu0 0
          %837 = vmatprep.subr.bf16.mxu0 0
          %838 = vmatpush1.bf16.msra.mxu0 0
          %839 = vmatprep.subr.bf16.mxu0 0
          %840 = vmatpush1.bf16.msra.mxu0 0
          %841 = vmatprep.subr.bf16.mxu0 0
          %842 = vmatpush1.bf16.msra.mxu0 0
          %843 = vmatprep.subr.bf16.mxu0 0
          %844 = vmatpush1.bf16.msra.mxu0 0
          %845 = vmatprep.subr.bf16.mxu0 0
          %846 = vmatpush1.bf16.msra.mxu0 0
          %847 = vmatprep.mubr.bf16.mxu0 0
          %848 = vmatmul.mubr.bf16.gmra.mrb[0].mxu0 %v804
          %v849 = vpop.f32.mrb[0].mxu0
          %v850 = vadd.f32 0.0, %v849
          %v851 = vpop.f32.mrb[0].mxu0
          %v852 = vpop.f32.mrb[0].mxu0
          %v853 = vadd.f32 0.0, %v852
          %v854 = vpop.f32.mrb[0].mxu0
          %855 = vmatprep.mubr.bf16.mxu0 0
          %856 = vmatmul.mubr.bf16.gmra.mrb[0].mxu0 %v807
          %v857 = vpop.f32.mrb[0].mxu0
          %v858 = vadd.f32 0.0, %v857
          %v859 = vpop.f32.mrb[0].mxu0
          %v860 = vpop.f32.mrb[0].mxu0
          %v861 = vadd.f32 0.0, %v860
          %v862 = vpop.f32.mrb[0].mxu0
          %863 = vmatprep.mubr.bf16.mxu0 0
          %864 = vmatmul.mubr.bf16.gmra.mrb[0].mxu0 %v810
          %v865 = vpop.f32.mrb[0].mxu0
          %v866 = vadd.f32 0.0, %v865
          %v867 = vpop.f32.mrb[0].mxu0
          %v868 = vpop.f32.mrb[0].mxu0
          %v869 = vadd.f32 0.0, %v868
          %v870 = vpop.f32.mrb[0].mxu0
          %871 = vmatprep.mubr.bf16.mxu0 0
          %872 = vmatmul.mubr.bf16.gmra.mrb[0].mxu0 %v813
          %v873 = vpop.f32.mrb[0].mxu0
          %v874 = vadd.f32 0.0, %v873
          %v875 = vpop.f32.mrb[0].mxu0
          %v876 = vpop.f32.mrb[0].mxu0
          %v877 = vadd.f32 0.0, %v876
          %v878 = vpop.f32.mrb[0].mxu0
          %879 = vdwg.mxu0
          %v880 = vsub.f32 %v745, %v850
          %v881 = vsub.f32 %v748, %v853
          %v882 = vsub.f32 %v753, %v858
          %v883 = vsub.f32 %v756, %v861
          %v884 = vsub.f32 %v761, %v866
          %v885 = vsub.f32 %v764, %v869
          %v886 = vsub.f32 %v769, %v874
          %v887 = vsub.f32 %v772, %v877
          %888 = vmatprep.subr.bf16.mxu0 0
          %889 = vmatpush1.bf16.msra.mxu0 %v662
          %890 = vmatprep.subr.bf16.mxu0 0
          %891 = vmatpush1.bf16.msra.mxu0 %v663
          %892 = vmatprep.subr.bf16.mxu0 0
          %893 = vmatpush1.bf16.msra.mxu0 %v664
          %894 = vmatprep.subr.bf16.mxu0 0
          %895 = vmatpush1.bf16.msra.mxu0 %v665
          %896 = vmatprep.subr.bf16.mxu0 0
          %897 = vmatpush1.bf16.msra.mxu0 0
          %898 = vmatprep.subr.bf16.mxu0 0
          %899 = vmatpush1.bf16.msra.mxu0 0
          %900 = vmatprep.subr.bf16.mxu0 0
          %901 = vmatpush1.bf16.msra.mxu0 0
          %902 = vmatprep.subr.bf16.mxu0 0
          %903 = vmatpush1.bf16.msra.mxu0 0
          %904 = vmatprep.subr.bf16.mxu0 0
          %905 = vmatpush1.bf16.msra.mxu0 0
          %906 = vmatprep.subr.bf16.mxu0 0
          %907 = vmatpush1.bf16.msra.mxu0 0
          %908 = vmatprep.subr.bf16.mxu0 0
          %909 = vmatpush1.bf16.msra.mxu0 0
          %910 = vmatprep.subr.bf16.mxu0 0
          %911 = vmatpush1.bf16.msra.mxu0 0
          %912 = vmatprep.subr.bf16.mxu0 0
          %913 = vmatpush1.bf16.msra.mxu0 0
          %914 = vmatprep.subr.bf16.mxu0 0
          %915 = vmatpush1.bf16.msra.mxu0 0
          %916 = vmatprep.subr.bf16.mxu0 0
          %917 = vmatpush1.bf16.msra.mxu0 0
          %918 = vmatprep.subr.bf16.mxu0 0
          %919 = vmatpush1.bf16.msra.mxu0 0
          %920 = vmatprep.mubr.bf16.mxu0 0
          %921 = vmatmul.mubr.bf16.gmra.mrb[0].mxu0 %v804
          %v922 = vpop.f32.mrb[0].mxu0
          %v923 = vadd.f32 0.0, %v922
          %v924 = vpop.f32.mrb[0].mxu0
          %v925 = vpop.f32.mrb[0].mxu0
          %v926 = vadd.f32 0.0, %v925
          %v927 = vpop.f32.mrb[0].mxu0
          %928 = vmatprep.mubr.bf16.mxu0 0
          %929 = vmatmul.mubr.bf16.gmra.mrb[0].mxu0 %v807
          %v930 = vpop.f32.mrb[0].mxu0
          %v931 = vadd.f32 0.0, %v930
          %v932 = vpop.f32.mrb[0].mxu0
          %v933 = vpop.f32.mrb[0].mxu0
          %v934 = vadd.f32 0.0, %v933
          %v935 = vpop.f32.mrb[0].mxu0
          %936 = vmatprep.mubr.bf16.mxu0 0
          %937 = vmatmul.mubr.bf16.gmra.mrb[0].mxu0 %v810
          %v938 = vpop.f32.mrb[0].mxu0
          %v939 = vadd.f32 0.0, %v938
          %v940 = vpop.f32.mrb[0].mxu0
          %v941 = vpop.f32.mrb[0].mxu0
          %v942 = vadd.f32 0.0, %v941
          %v943 = vpop.f32.mrb[0].mxu0
          %944 = vmatprep.mubr.bf16.mxu0 0
          %945 = vmatmul.mubr.bf16.gmra.mrb[0].mxu0 %v813
          %v946 = vpop.f32.mrb[0].mxu0
          %v947 = vadd.f32 0.0, %v946
          %v948 = vpop.f32.mrb[0].mxu0
          %v949 = vpop.f32.mrb[0].mxu0
          %v950 = vadd.f32 0.0, %v949
          %v951 = vpop.f32.mrb[0].mxu0
          %952 = vdwg.mxu0
          %953 = vmatprep.subr.bf16.mxu0 0
          %954 = vmatpush1.bf16.msra.mxu0 %v666
          %955 = vmatprep.subr.bf16.mxu0 0
          %956 = vmatpush1.bf16.msra.mxu0 %v667
          %957 = vmatprep.subr.bf16.mxu0 0
          %958 = vmatpush1.bf16.msra.mxu0 %v668
          %959 = vmatprep.subr.bf16.mxu0 0
          %960 = vmatpush1.bf16.msra.mxu0 %v669
          %961 = vmatprep.subr.bf16.mxu0 0
          %962 = vmatpush1.bf16.msra.mxu0 0
          %963 = vmatprep.subr.bf16.mxu0 0
          %964 = vmatpush1.bf16.msra.mxu0 0
          %965 = vmatprep.subr.bf16.mxu0 0
          %966 = vmatpush1.bf16.msra.mxu0 0
          %967 = vmatprep.subr.bf16.mxu0 0
          %968 = vmatpush1.bf16.msra.mxu0 0
          %969 = vmatprep.subr.bf16.mxu0 0
          %970 = vmatpush1.bf16.msra.mxu0 0
          %971 = vmatprep.subr.bf16.mxu0 0
          %972 = vmatpush1.bf16.msra.mxu0 0
          %973 = vmatprep.subr.bf16.mxu0 0
          %974 = vmatpush1.bf16.msra.mxu0 0
          %975 = vmatprep.subr.bf16.mxu0 0
          %976 = vmatpush1.bf16.msra.mxu0 0
          %977 = vmatprep.subr.bf16.mxu0 0
          %978 = vmatpush1.bf16.msra.mxu0 0
          %979 = vmatprep.subr.bf16.mxu0 0
          %980 = vmatpush1.bf16.msra.mxu0 0
          %981 = vmatprep.subr.bf16.mxu0 0
          %982 = vmatpush1.bf16.msra.mxu0 0
          %983 = vmatprep.subr.bf16.mxu0 0
          %984 = vmatpush1.bf16.msra.mxu0 0
          %985 = vmatprep.mubr.bf16.mxu0 0
          %986 = vmatmul.mubr.bf16.gmra.mrb[0].mxu0 %v699
          %v987 = vpop.f32.mrb[0].mxu0
          %v988 = vadd.f32 %v923, %v987
          %v989 = vpop.f32.mrb[0].mxu0
          %v990 = vpop.f32.mrb[0].mxu0
          %v991 = vadd.f32 %v926, %v990
          %v992 = vpop.f32.mrb[0].mxu0
          %993 = vmatprep.mubr.bf16.mxu0 0
          %994 = vmatmul.mubr.bf16.gmra.mrb[0].mxu0 %v702
          %v995 = vpop.f32.mrb[0].mxu0
          %v996 = vadd.f32 %v931, %v995
          %v997 = vpop.f32.mrb[0].mxu0
          %v998 = vpop.f32.mrb[0].mxu0
          %v999 = vadd.f32 %v934, %v998
          %v1000 = vpop.f32.mrb[0].mxu0
          %1001 = vmatprep.mubr.bf16.mxu0 0
          %1002 = vmatmul.mubr.bf16.gmra.mrb[0].mxu0 %v705
          %v1003 = vpop.f32.mrb[0].mxu0
          %v1004 = vadd.f32 %v939, %v1003
          %v1005 = vpop.f32.mrb[0].mxu0
          %v1006 = vpop.f32.mrb[0].mxu0
          %v1007 = vadd.f32 %v942, %v1006
          %v1008 = vpop.f32.mrb[0].mxu0
          %1009 = vmatprep.mubr.bf16.mxu0 0
          %1010 = vmatmul.mubr.bf16.gmra.mrb[0].mxu0 %v708
          %v1011 = vpop.f32.mrb[0].mxu0
          %v1012 = vadd.f32 %v947, %v1011
          %v1013 = vpop.f32.mrb[0].mxu0
          %v1014 = vpop.f32.mrb[0].mxu0
          %v1015 = vadd.f32 %v950, %v1014
          %v1016 = vpop.f32.mrb[0].mxu0
          %1017 = vdwg.mxu0
          %v1018 = vpack.c.bf16 %v881, %v880
          %v1019 = vpack.c.bf16 %v883, %v882
          %v1020 = vpack.c.bf16 %v885, %v884
          %v1021 = vpack.c.bf16 %v887, %v886
          %v1022 = vpack.c.bf16 %v991, %v988
          %v1023 = vpack.c.bf16 %v999, %v996
          %v1024 = vpack.c.bf16 %v1007, %v1004
          %v1025 = vpack.c.bf16 %v1015, %v1012
          %v1031 = vsel %vm615, %v1018, 0
          %v1034 = vsel %vm615, %v1019, 0
          %v1037 = vsel %vm615, %v1020, 0
          %v1040 = vsel %vm615, %v1021, 0
          %1042 = vmatprep.subr.bf16.mxu0 0
          %1043 = vmatpush1.bf16.msra.mxu0 %v694
          %1044 = vmatprep.subr.bf16.mxu0 0
          %1045 = vmatpush1.bf16.msra.mxu0 %v695
          %1046 = vmatprep.subr.bf16.mxu0 0
          %1047 = vmatpush1.bf16.msra.mxu0 %v696
          %1048 = vmatprep.subr.bf16.mxu0 0
          %1049 = vmatpush1.bf16.msra.mxu0 %v697
          %1050 = vmatprep.subr.bf16.mxu0 0
          %1051 = vmatpush1.bf16.msra.mxu0 0
          %1052 = vmatprep.subr.bf16.mxu0 0
          %1053 = vmatpush1.bf16.msra.mxu0 0
          %1054 = vmatprep.subr.bf16.mxu0 0
          %1055 = vmatpush1.bf16.msra.mxu0 0
          %1056 = vmatprep.subr.bf16.mxu0 0
          %1057 = vmatpush1.bf16.msra.mxu0 0
          %1058 = vmatprep.subr.bf16.mxu0 0
          %1059 = vmatpush1.bf16.msra.mxu0 0
          %1060 = vmatprep.subr.bf16.mxu0 0
          %1061 = vmatpush1.bf16.msra.mxu0 0
          %1062 = vmatprep.subr.bf16.mxu0 0
          %1063 = vmatpush1.bf16.msra.mxu0 0
          %1064 = vmatprep.subr.bf16.mxu0 0
          %1065 = vmatpush1.bf16.msra.mxu0 0
          %1066 = vmatprep.subr.bf16.mxu0 0
          %1067 = vmatpush1.bf16.msra.mxu0 0
          %1068 = vmatprep.subr.bf16.mxu0 0
          %1069 = vmatpush1.bf16.msra.mxu0 0
          %1070 = vmatprep.subr.bf16.mxu0 0
          %1071 = vmatpush1.bf16.msra.mxu0 0
          %1072 = vmatprep.subr.bf16.mxu0 0
          %1073 = vmatpush1.bf16.msra.mxu0 0
          %1074 = vmatprep.mubr.bf16.mxu0 0
          %1075 = vmatmul.mubr.bf16.gmra.mrb[0].mxu0 %v1031
          %v1076 = vpop.f32.mrb[0].mxu0
          %v1077 = vadd.f32 0.0, %v1076
          %v1078 = vpop.f32.mrb[0].mxu0
          %v1079 = vpop.f32.mrb[0].mxu0
          %v1080 = vadd.f32 0.0, %v1079
          %v1081 = vpop.f32.mrb[0].mxu0
          %1082 = vmatprep.mubr.bf16.mxu0 0
          %1083 = vmatmul.mubr.bf16.gmra.mrb[0].mxu0 %v1034
          %v1084 = vpop.f32.mrb[0].mxu0
          %v1085 = vadd.f32 0.0, %v1084
          %v1086 = vpop.f32.mrb[0].mxu0
          %v1087 = vpop.f32.mrb[0].mxu0
          %v1088 = vadd.f32 0.0, %v1087
          %v1089 = vpop.f32.mrb[0].mxu0
          %1090 = vmatprep.mubr.bf16.mxu0 0
          %1091 = vmatmul.mubr.bf16.gmra.mrb[0].mxu0 %v1037
          %v1092 = vpop.f32.mrb[0].mxu0
          %v1093 = vadd.f32 0.0, %v1092
          %v1094 = vpop.f32.mrb[0].mxu0
          %v1095 = vpop.f32.mrb[0].mxu0
          %v1096 = vadd.f32 0.0, %v1095
          %v1097 = vpop.f32.mrb[0].mxu0
          %1098 = vmatprep.mubr.bf16.mxu0 0
          %1099 = vmatmul.mubr.bf16.gmra.mrb[0].mxu0 %v1040
          %v1100 = vpop.f32.mrb[0].mxu0
          %v1101 = vadd.f32 0.0, %v1100
          %v1102 = vpop.f32.mrb[0].mxu0
          %v1103 = vpop.f32.mrb[0].mxu0
          %v1104 = vadd.f32 0.0, %v1103
          %v1105 = vpop.f32.mrb[0].mxu0
          %1106 = vdwg.mxu0
          %v1112 = vsel %vm615, %v1022, 0
          %v1115 = vsel %vm615, %v1023, 0
          %v1118 = vsel %vm615, %v1024, 0
          %v1121 = vsel %vm615, %v1025, 0
          %1123 = vmatprep.subr.bf16.mxu0 0
          %1124 = vmatpush1.bf16.msra.mxu0 %v799
          %1125 = vmatprep.subr.bf16.mxu0 0
          %1126 = vmatpush1.bf16.msra.mxu0 %v800
          %1127 = vmatprep.subr.bf16.mxu0 0
          %1128 = vmatpush1.bf16.msra.mxu0 %v801
          %1129 = vmatprep.subr.bf16.mxu0 0
          %1130 = vmatpush1.bf16.msra.mxu0 %v802
          %1131 = vmatprep.subr.bf16.mxu0 0
          %1132 = vmatpush1.bf16.msra.mxu0 0
          %1133 = vmatprep.subr.bf16.mxu0 0
          %1134 = vmatpush1.bf16.msra.mxu0 0
          %1135 = vmatprep.subr.bf16.mxu0 0
          %1136 = vmatpush1.bf16.msra.mxu0 0
          %1137 = vmatprep.subr.bf16.mxu0 0
          %1138 = vmatpush1.bf16.msra.mxu0 0
          %1139 = vmatprep.subr.bf16.mxu0 0
          %1140 = vmatpush1.bf16.msra.mxu0 0
          %1141 = vmatprep.subr.bf16.mxu0 0
          %1142 = vmatpush1.bf16.msra.mxu0 0
          %1143 = vmatprep.subr.bf16.mxu0 0
          %1144 = vmatpush1.bf16.msra.mxu0 0
          %1145 = vmatprep.subr.bf16.mxu0 0
          %1146 = vmatpush1.bf16.msra.mxu0 0
          %1147 = vmatprep.subr.bf16.mxu0 0
          %1148 = vmatpush1.bf16.msra.mxu0 0
          %1149 = vmatprep.subr.bf16.mxu0 0
          %1150 = vmatpush1.bf16.msra.mxu0 0
          %1151 = vmatprep.subr.bf16.mxu0 0
          %1152 = vmatpush1.bf16.msra.mxu0 0
          %1153 = vmatprep.subr.bf16.mxu0 0
          %1154 = vmatpush1.bf16.msra.mxu0 0
          %1155 = vmatprep.mubr.bf16.mxu0 0
          %1156 = vmatmul.mubr.bf16.gmra.mrb[0].mxu0 %v1112
          %v1157 = vpop.f32.mrb[0].mxu0
          %v1158 = vadd.f32 0.0, %v1157
          %v1159 = vpop.f32.mrb[0].mxu0
          %v1160 = vpop.f32.mrb[0].mxu0
          %v1161 = vadd.f32 0.0, %v1160
          %v1162 = vpop.f32.mrb[0].mxu0
          %1163 = vmatprep.mubr.bf16.mxu0 0
          %1164 = vmatmul.mubr.bf16.gmra.mrb[0].mxu0 %v1115
          %v1165 = vpop.f32.mrb[0].mxu0
          %v1166 = vadd.f32 0.0, %v1165
          %v1167 = vpop.f32.mrb[0].mxu0
          %v1168 = vpop.f32.mrb[0].mxu0
          %v1169 = vadd.f32 0.0, %v1168
          %v1170 = vpop.f32.mrb[0].mxu0
          %1171 = vmatprep.mubr.bf16.mxu0 0
          %1172 = vmatmul.mubr.bf16.gmra.mrb[0].mxu0 %v1118
          %v1173 = vpop.f32.mrb[0].mxu0
          %v1174 = vadd.f32 0.0, %v1173
          %v1175 = vpop.f32.mrb[0].mxu0
          %v1176 = vpop.f32.mrb[0].mxu0
          %v1177 = vadd.f32 0.0, %v1176
          %v1178 = vpop.f32.mrb[0].mxu0
          %1179 = vmatprep.mubr.bf16.mxu0 0
          %1180 = vmatmul.mubr.bf16.gmra.mrb[0].mxu0 %v1121
          %v1181 = vpop.f32.mrb[0].mxu0
          %v1182 = vadd.f32 0.0, %v1181
          %v1183 = vpop.f32.mrb[0].mxu0
          %v1184 = vpop.f32.mrb[0].mxu0
          %v1185 = vadd.f32 0.0, %v1184
          %v1186 = vpop.f32.mrb[0].mxu0
          %1187 = vdwg.mxu0
          %v1188 = vsub.f32 %v1077, %v1158
          %v1189 = vsub.f32 %v1080, %v1161
          %v1190 = vsub.f32 %v1085, %v1166
          %v1191 = vsub.f32 %v1088, %v1169
          %v1192 = vsub.f32 %v1093, %v1174
          %v1193 = vsub.f32 %v1096, %v1177
          %v1194 = vsub.f32 %v1101, %v1182
          %v1195 = vsub.f32 %v1104, %v1185
          %1196 = vmatprep.subr.bf16.mxu0 0
          %1197 = vmatpush1.bf16.msra.mxu0 %v694
          %1198 = vmatprep.subr.bf16.mxu0 0
          %1199 = vmatpush1.bf16.msra.mxu0 %v695
          %1200 = vmatprep.subr.bf16.mxu0 0
          %1201 = vmatpush1.bf16.msra.mxu0 %v696
          %1202 = vmatprep.subr.bf16.mxu0 0
          %1203 = vmatpush1.bf16.msra.mxu0 %v697
          %1204 = vmatprep.subr.bf16.mxu0 0
          %1205 = vmatpush1.bf16.msra.mxu0 0
          %1206 = vmatprep.subr.bf16.mxu0 0
          %1207 = vmatpush1.bf16.msra.mxu0 0
          %1208 = vmatprep.subr.bf16.mxu0 0
          %1209 = vmatpush1.bf16.msra.mxu0 0
          %1210 = vmatprep.subr.bf16.mxu0 0
          %1211 = vmatpush1.bf16.msra.mxu0 0
          %1212 = vmatprep.subr.bf16.mxu0 0
          %1213 = vmatpush1.bf16.msra.mxu0 0
          %1214 = vmatprep.subr.bf16.mxu0 0
          %1215 = vmatpush1.bf16.msra.mxu0 0
          %1216 = vmatprep.subr.bf16.mxu0 0
          %1217 = vmatpush1.bf16.msra.mxu0 0
          %1218 = vmatprep.subr.bf16.mxu0 0
          %1219 = vmatpush1.bf16.msra.mxu0 0
          %1220 = vmatprep.subr.bf16.mxu0 0
          %1221 = vmatpush1.bf16.msra.mxu0 0
          %1222 = vmatprep.subr.bf16.mxu0 0
          %1223 = vmatpush1.bf16.msra.mxu0 0
          %1224 = vmatprep.subr.bf16.mxu0 0
          %1225 = vmatpush1.bf16.msra.mxu0 0
          %1226 = vmatprep.subr.bf16.mxu0 0
          %1227 = vmatpush1.bf16.msra.mxu0 0
          %1228 = vmatprep.mubr.bf16.mxu0 0
          %1229 = vmatmul.mubr.bf16.gmra.mrb[0].mxu0 %v1112
          %v1230 = vpop.f32.mrb[0].mxu0
          %v1231 = vadd.f32 0.0, %v1230
          %v1232 = vpop.f32.mrb[0].mxu0
          %v1233 = vpop.f32.mrb[0].mxu0
          %v1234 = vadd.f32 0.0, %v1233
          %v1235 = vpop.f32.mrb[0].mxu0
          %1236 = vmatprep.mubr.bf16.mxu0 0
          %1237 = vmatmul.mubr.bf16.gmra.mrb[0].mxu0 %v1115
          %v1238 = vpop.f32.mrb[0].mxu0
          %v1239 = vadd.f32 0.0, %v1238
          %v1240 = vpop.f32.mrb[0].mxu0
          %v1241 = vpop.f32.mrb[0].mxu0
          %v1242 = vadd.f32 0.0, %v1241
          %v1243 = vpop.f32.mrb[0].mxu0
          %1244 = vmatprep.mubr.bf16.mxu0 0
          %1245 = vmatmul.mubr.bf16.gmra.mrb[0].mxu0 %v1118
          %v1246 = vpop.f32.mrb[0].mxu0
          %v1247 = vadd.f32 0.0, %v1246
          %v1248 = vpop.f32.mrb[0].mxu0
          %v1249 = vpop.f32.mrb[0].mxu0
          %v1250 = vadd.f32 0.0, %v1249
          %v1251 = vpop.f32.mrb[0].mxu0
          %1252 = vmatprep.mubr.bf16.mxu0 0
          %1253 = vmatmul.mubr.bf16.gmra.mrb[0].mxu0 %v1121
          %v1254 = vpop.f32.mrb[0].mxu0
          %v1255 = vadd.f32 0.0, %v1254
          %v1256 = vpop.f32.mrb[0].mxu0
          %v1257 = vpop.f32.mrb[0].mxu0
          %v1258 = vadd.f32 0.0, %v1257
          %v1259 = vpop.f32.mrb[0].mxu0
          %1260 = vdwg.mxu0
          %1261 = vmatprep.subr.bf16.mxu0 0
          %1262 = vmatpush1.bf16.msra.mxu0 %v799
          %1263 = vmatprep.subr.bf16.mxu0 0
          %1264 = vmatpush1.bf16.msra.mxu0 %v800
          %1265 = vmatprep.subr.bf16.mxu0 0
          %1266 = vmatpush1.bf16.msra.mxu0 %v801
          %1267 = vmatprep.subr.bf16.mxu0 0
          %1268 = vmatpush1.bf16.msra.mxu0 %v802
          %1269 = vmatprep.subr.bf16.mxu0 0
          %1270 = vmatpush1.bf16.msra.mxu0 0
          %1271 = vmatprep.subr.bf16.mxu0 0
          %1272 = vmatpush1.bf16.msra.mxu0 0
          %1273 = vmatprep.subr.bf16.mxu0 0
          %1274 = vmatpush1.bf16.msra.mxu0 0
          %1275 = vmatprep.subr.bf16.mxu0 0
          %1276 = vmatpush1.bf16.msra.mxu0 0
          %1277 = vmatprep.subr.bf16.mxu0 0
          %1278 = vmatpush1.bf16.msra.mxu0 0
          %1279 = vmatprep.subr.bf16.mxu0 0
          %1280 = vmatpush1.bf16.msra.mxu0 0
          %1281 = vmatprep.subr.bf16.mxu0 0
          %1282 = vmatpush1.bf16.msra.mxu0 0
          %1283 = vmatprep.subr.bf16.mxu0 0
          %1284 = vmatpush1.bf16.msra.mxu0 0
          %1285 = vmatprep.subr.bf16.mxu0 0
          %1286 = vmatpush1.bf16.msra.mxu0 0
          %1287 = vmatprep.subr.bf16.mxu0 0
          %1288 = vmatpush1.bf16.msra.mxu0 0
          %1289 = vmatprep.subr.bf16.mxu0 0
          %1290 = vmatpush1.bf16.msra.mxu0 0
          %1291 = vmatprep.subr.bf16.mxu0 0
          %1292 = vmatpush1.bf16.msra.mxu0 0
          %1293 = vmatprep.mubr.bf16.mxu0 0
          %1294 = vmatmul.mubr.bf16.gmra.mrb[0].mxu0 %v1031
          %v1295 = vpop.f32.mrb[0].mxu0
          %v1296 = vadd.f32 %v1231, %v1295
          %v1297 = vpop.f32.mrb[0].mxu0
          %v1298 = vpop.f32.mrb[0].mxu0
          %v1299 = vadd.f32 %v1234, %v1298
          %v1300 = vpop.f32.mrb[0].mxu0
          %1301 = vmatprep.mubr.bf16.mxu0 0
          %1302 = vmatmul.mubr.bf16.gmra.mrb[0].mxu0 %v1034
          %v1303 = vpop.f32.mrb[0].mxu0
          %v1304 = vadd.f32 %v1239, %v1303
          %v1305 = vpop.f32.mrb[0].mxu0
          %v1306 = vpop.f32.mrb[0].mxu0
          %v1307 = vadd.f32 %v1242, %v1306
          %v1308 = vpop.f32.mrb[0].mxu0
          %1309 = vmatprep.mubr.bf16.mxu0 0
          %1310 = vmatmul.mubr.bf16.gmra.mrb[0].mxu0 %v1037
          %v1311 = vpop.f32.mrb[0].mxu0
          %v1312 = vadd.f32 %v1247, %v1311
          %v1313 = vpop.f32.mrb[0].mxu0
          %v1314 = vpop.f32.mrb[0].mxu0
          %v1315 = vadd.f32 %v1250, %v1314
          %v1316 = vpop.f32.mrb[0].mxu0
          %1317 = vmatprep.mubr.bf16.mxu0 0
          %1318 = vmatmul.mubr.bf16.gmra.mrb[0].mxu0 %v1040
          %v1319 = vpop.f32.mrb[0].mxu0
          %v1320 = vadd.f32 %v1255, %v1319
          %v1321 = vpop.f32.mrb[0].mxu0
          %v1322 = vpop.f32.mrb[0].mxu0
          %v1323 = vadd.f32 %v1258, %v1322
          %v1324 = vpop.f32.mrb[0].mxu0
          %1325 = vdwg.mxu0
          %v1326 = vld [vmem:[#allocation13] sm:$0xff]
          %v1327 = vld [vmem:[#allocation13 + $0x8] sm:$0xff]
          %v1328 = vld [vmem:[#allocation13 + $0x10] sm:$0xff]
          %v1329 = vld [vmem:[#allocation13 + $0x18] sm:$0xff]
          %v1330 = vld [vmem:[#allocation13 + $0x20] sm:$0xff]
          %v1331 = vld [vmem:[#allocation13 + $0x28] sm:$0xff]
          %v1332 = vld [vmem:[#allocation13 + $0x30] sm:$0xff]
          %v1333 = vld [vmem:[#allocation13 + $0x38] sm:$0xff]
          %v1334 = vld [vmem:[#allocation14] sm:$0xff]
          %v1335 = vld [vmem:[#allocation14 + $0x8] sm:$0xff]
          %v1336 = vld [vmem:[#allocation14 + $0x10] sm:$0xff]
          %v1337 = vld [vmem:[#allocation14 + $0x18] sm:$0xff]
          %v1338 = vld [vmem:[#allocation14 + $0x20] sm:$0xff]
          %v1339 = vld [vmem:[#allocation14 + $0x28] sm:$0xff]
          %v1340 = vld [vmem:[#allocation14 + $0x30] sm:$0xff]
          %v1341 = vld [vmem:[#allocation14 + $0x38] sm:$0xff]
          %v1342 = vmul.f32 %v1188, %v1326
          %v1343 = vmul.f32 %v1189, %v1327
          %v1344 = vmul.f32 %v1190, %v1328
          %v1345 = vmul.f32 %v1191, %v1329
          %v1346 = vmul.f32 %v1192, %v1330
          %v1347 = vmul.f32 %v1193, %v1331
          %v1348 = vmul.f32 %v1194, %v1332
          %v1349 = vmul.f32 %v1195, %v1333
          %v1350 = vmul.f32 %v1296, %v1334
          %v1351 = vmul.f32 %v1299, %v1335
          %v1352 = vmul.f32 %v1304, %v1336
          %v1353 = vmul.f32 %v1307, %v1337
          %v1354 = vmul.f32 %v1312, %v1338
          %v1355 = vmul.f32 %v1315, %v1339
          %v1356 = vmul.f32 %v1320, %v1340
          %v1357 = vmul.f32 %v1323, %v1341
          %v1358 = vsub.f32 %v1342, %v1350
          %v1359 = vsub.f32 %v1343, %v1351
          %v1360 = vsub.f32 %v1344, %v1352
          %v1361 = vsub.f32 %v1345, %v1353
          %v1362 = vsub.f32 %v1346, %v1354
          %v1363 = vsub.f32 %v1347, %v1355
          %v1364 = vsub.f32 %v1348, %v1356
          %v1365 = vsub.f32 %v1349, %v1357
          %v1366 = vmul.f32 %v1188, %v1334
          %v1367 = vmul.f32 %v1189, %v1335
          %v1368 = vmul.f32 %v1190, %v1336
          %v1369 = vmul.f32 %v1191, %v1337
          %v1370 = vmul.f32 %v1192, %v1338
          %v1371 = vmul.f32 %v1193, %v1339
          %v1372 = vmul.f32 %v1194, %v1340
          %v1373 = vmul.f32 %v1195, %v1341
          %v1374 = vmul.f32 %v1296, %v1326
          %v1375 = vmul.f32 %v1299, %v1327
          %v1376 = vmul.f32 %v1304, %v1328
          %v1377 = vmul.f32 %v1307, %v1329
          %v1378 = vmul.f32 %v1312, %v1330
          %v1379 = vmul.f32 %v1315, %v1331
          %v1380 = vmul.f32 %v1320, %v1332
          %v1381 = vmul.f32 %v1323, %v1333
          %v1382 = vadd.f32 %v1366, %v1374
          %v1383 = vadd.f32 %v1367, %v1375
          %v1384 = vadd.f32 %v1368, %v1376
          %v1385 = vadd.f32 %v1369, %v1377
          %v1386 = vadd.f32 %v1370, %v1378
          %v1387 = vadd.f32 %v1371, %v1379
          %v1388 = vadd.f32 %v1372, %v1380
          %v1389 = vadd.f32 %v1373, %v1381
          %v1390 = vpack.c.bf16 %v1359, %v1358
          %v1391 = vpack.c.bf16 %v1361, %v1360
          %v1392 = vpack.c.bf16 %v1363, %v1362
          %v1393 = vpack.c.bf16 %v1365, %v1364
          %v1394 = vpack.c.bf16 %v1383, %v1382
          %v1395 = vpack.c.bf16 %v1385, %v1384
          %v1396 = vpack.c.bf16 %v1387, %v1386
          %v1397 = vpack.c.bf16 %v1389, %v1388
          %v1398 = vld [vmem:[#allocation10] sm:$0xf]
          %v1399 = vld [vmem:[#allocation10 + $0x4] sm:$0xf]
          %v1400 = vld [vmem:[#allocation10 + $0x8] sm:$0xf]
          %v1401 = vld [vmem:[#allocation10 + $0xc] sm:$0xf]
          %v1402 = vld [vmem:[#allocation10 + $0x10] sm:$0xf]
          %v1403 = vld [vmem:[#allocation10 + $0x14] sm:$0xf]
          %v1404 = vld [vmem:[#allocation10 + $0x18] sm:$0xf]
          %v1405 = vld [vmem:[#allocation10 + $0x1c] sm:$0xf]
          %v1414 = vunpack.c.l.b16 %v1398
          %v1415 = vunpack.c.l.b16 %v1399
          %v1416 = vunpack.c.l.b16 %v1400
          %v1417 = vunpack.c.l.b16 %v1401
          %v1418 = vunpack.c.l.b16 %v1402
          %v1419 = vunpack.c.l.b16 %v1403
          %v1420 = vunpack.c.l.b16 %v1404
          %v1421 = vunpack.c.l.b16 %v1405
          %v1422 = vpack.c.b16 %v1415, %v1414
          %v1423 = vpack.c.b16 %v1417, %v1416
          %v1424 = vpack.c.b16 %v1419, %v1418
          %v1425 = vpack.c.b16 %v1421, %v1420
          %v1427 = vsel %vm615, %v1422, 0
          %v1430 = vsel %vm615, %v1423, 0
          %v1433 = vsel %vm615, %v1424, 0
          %v1436 = vsel %vm615, %v1425, 0
          %1438 = vmatprep.subr.bf16.mxu0 0
          %1439 = vmatpush1.bf16.msra.mxu0 %v1390
          %1440 = vmatprep.subr.bf16.mxu0 0
          %1441 = vmatpush1.bf16.msra.mxu0 %v1391
          %1442 = vmatprep.subr.bf16.mxu0 0
          %1443 = vmatpush1.bf16.msra.mxu0 %v1392
          %1444 = vmatprep.subr.bf16.mxu0 0
          %1445 = vmatpush1.bf16.msra.mxu0 %v1393
          %1446 = vmatprep.subr.bf16.mxu0 0
          %1447 = vmatpush1.bf16.msra.mxu0 0
          %1448 = vmatprep.subr.bf16.mxu0 0
          %1449 = vmatpush1.bf16.msra.mxu0 0
          %1450 = vmatprep.subr.bf16.mxu0 0
          %1451 = vmatpush1.bf16.msra.mxu0 0
          %1452 = vmatprep.subr.bf16.mxu0 0
          %1453 = vmatpush1.bf16.msra.mxu0 0
          %1454 = vmatprep.subr.bf16.mxu0 0
          %1455 = vmatpush1.bf16.msra.mxu0 0
          %1456 = vmatprep.subr.bf16.mxu0 0
          %1457 = vmatpush1.bf16.msra.mxu0 0
          %1458 = vmatprep.subr.bf16.mxu0 0
          %1459 = vmatpush1.bf16.msra.mxu0 0
          %1460 = vmatprep.subr.bf16.mxu0 0
          %1461 = vmatpush1.bf16.msra.mxu0 0
          %1462 = vmatprep.subr.bf16.mxu0 0
          %1463 = vmatpush1.bf16.msra.mxu0 0
          %1464 = vmatprep.subr.bf16.mxu0 0
          %1465 = vmatpush1.bf16.msra.mxu0 0
          %1466 = vmatprep.subr.bf16.mxu0 0
          %1467 = vmatpush1.bf16.msra.mxu0 0
          %1468 = vmatprep.subr.bf16.mxu0 0
          %1469 = vmatpush1.bf16.msra.mxu0 0
          %1470 = vmatprep.mubr.bf16.mxu0 0
          %1471 = vmatmul.mubr.bf16.gmra.mrb[0].mxu0 %v1427
          %v1472 = vpop.f32.mrb[0].mxu0
          %v1473 = vadd.f32 0.0, %v1472
          %v1474 = vpop.f32.mrb[0].mxu0
          %v1475 = vpop.f32.mrb[0].mxu0
          %v1476 = vadd.f32 0.0, %v1475
          %v1477 = vpop.f32.mrb[0].mxu0
          %1478 = vmatprep.mubr.bf16.mxu0 0
          %1479 = vmatmul.mubr.bf16.gmra.mrb[0].mxu0 %v1430
          %v1480 = vpop.f32.mrb[0].mxu0
          %v1481 = vadd.f32 0.0, %v1480
          %v1482 = vpop.f32.mrb[0].mxu0
          %v1483 = vpop.f32.mrb[0].mxu0
          %v1484 = vadd.f32 0.0, %v1483
          %v1485 = vpop.f32.mrb[0].mxu0
          %1486 = vmatprep.mubr.bf16.mxu0 0
          %1487 = vmatmul.mubr.bf16.gmra.mrb[0].mxu0 %v1433
          %v1488 = vpop.f32.mrb[0].mxu0
          %v1489 = vadd.f32 0.0, %v1488
          %v1490 = vpop.f32.mrb[0].mxu0
          %v1491 = vpop.f32.mrb[0].mxu0
          %v1492 = vadd.f32 0.0, %v1491
          %v1493 = vpop.f32.mrb[0].mxu0
          %1494 = vmatprep.mubr.bf16.mxu0 0
          %1495 = vmatmul.mubr.bf16.gmra.mrb[0].mxu0 %v1436
          %v1496 = vpop.f32.mrb[0].mxu0
          %v1497 = vadd.f32 0.0, %v1496
          %v1498 = vpop.f32.mrb[0].mxu0
          %v1499 = vpop.f32.mrb[0].mxu0
          %v1500 = vadd.f32 0.0, %v1499
          %v1501 = vpop.f32.mrb[0].mxu0
          %1502 = vdwg.mxu0
          %v1503 = vld [vmem:[#allocation11] sm:$0xf]
          %v1504 = vld [vmem:[#allocation11 + $0x4] sm:$0xf]
          %v1505 = vld [vmem:[#allocation11 + $0x8] sm:$0xf]
          %v1506 = vld [vmem:[#allocation11 + $0xc] sm:$0xf]
          %v1507 = vld [vmem:[#allocation11 + $0x10] sm:$0xf]
          %v1508 = vld [vmem:[#allocation11 + $0x14] sm:$0xf]
          %v1509 = vld [vmem:[#allocation11 + $0x18] sm:$0xf]
          %v1510 = vld [vmem:[#allocation11 + $0x1c] sm:$0xf]
          %v1519 = vunpack.c.l.b16 %v1503
          %v1520 = vunpack.c.l.b16 %v1504
          %v1521 = vunpack.c.l.b16 %v1505
          %v1522 = vunpack.c.l.b16 %v1506
          %v1523 = vunpack.c.l.b16 %v1507
          %v1524 = vunpack.c.l.b16 %v1508
          %v1525 = vunpack.c.l.b16 %v1509
          %v1526 = vunpack.c.l.b16 %v1510
          %v1527 = vpack.c.b16 %v1520, %v1519
          %v1528 = vpack.c.b16 %v1522, %v1521
          %v1529 = vpack.c.b16 %v1524, %v1523
          %v1530 = vpack.c.b16 %v1526, %v1525
          %v1532 = vsel %vm615, %v1527, 0
          %v1535 = vsel %vm615, %v1528, 0
          %v1538 = vsel %vm615, %v1529, 0
          %v1541 = vsel %vm615, %v1530, 0
          %1543 = vmatprep.subr.bf16.mxu0 0
          %1544 = vmatpush1.bf16.msra.mxu0 %v1394
          %1545 = vmatprep.subr.bf16.mxu0 0
          %1546 = vmatpush1.bf16.msra.mxu0 %v1395
          %1547 = vmatprep.subr.bf16.mxu0 0
          %1548 = vmatpush1.bf16.msra.mxu0 %v1396
          %1549 = vmatprep.subr.bf16.mxu0 0
          %1550 = vmatpush1.bf16.msra.mxu0 %v1397
          %1551 = vmatprep.subr.bf16.mxu0 0
          %1552 = vmatpush1.bf16.msra.mxu0 0
          %1553 = vmatprep.subr.bf16.mxu0 0
          %1554 = vmatpush1.bf16.msra.mxu0 0
          %1555 = vmatprep.subr.bf16.mxu0 0
          %1556 = vmatpush1.bf16.msra.mxu0 0
          %1557 = vmatprep.subr.bf16.mxu0 0
          %1558 = vmatpush1.bf16.msra.mxu0 0
          %1559 = vmatprep.subr.bf16.mxu0 0
          %1560 = vmatpush1.bf16.msra.mxu0 0
          %1561 = vmatprep.subr.bf16.mxu0 0
          %1562 = vmatpush1.bf16.msra.mxu0 0
          %1563 = vmatprep.subr.bf16.mxu0 0
          %1564 = vmatpush1.bf16.msra.mxu0 0
          %1565 = vmatprep.subr.bf16.mxu0 0
          %1566 = vmatpush1.bf16.msra.mxu0 0
          %1567 = vmatprep.subr.bf16.mxu0 0
          %1568 = vmatpush1.bf16.msra.mxu0 0
          %1569 = vmatprep.subr.bf16.mxu0 0
          %1570 = vmatpush1.bf16.msra.mxu0 0
          %1571 = vmatprep.subr.bf16.mxu0 0
          %1572 = vmatpush1.bf16.msra.mxu0 0
          %1573 = vmatprep.subr.bf16.mxu0 0
          %1574 = vmatpush1.bf16.msra.mxu0 0
          %1575 = vmatprep.mubr.bf16.mxu0 0
          %1576 = vmatmul.mubr.bf16.gmra.mrb[0].mxu0 %v1532
          %v1577 = vpop.f32.mrb[0].mxu0
          %v1578 = vadd.f32 0.0, %v1577
          %v1579 = vpop.f32.mrb[0].mxu0
          %v1580 = vpop.f32.mrb[0].mxu0
          %v1581 = vadd.f32 0.0, %v1580
          %v1582 = vpop.f32.mrb[0].mxu0
          %1583 = vmatprep.mubr.bf16.mxu0 0
          %1584 = vmatmul.mubr.bf16.gmra.mrb[0].mxu0 %v1535
          %v1585 = vpop.f32.mrb[0].mxu0
          %v1586 = vadd.f32 0.0, %v1585
          %v1587 = vpop.f32.mrb[0].mxu0
          %v1588 = vpop.f32.mrb[0].mxu0
          %v1589 = vadd.f32 0.0, %v1588
          %v1590 = vpop.f32.mrb[0].mxu0
          %1591 = vmatprep.mubr.bf16.mxu0 0
          %1592 = vmatmul.mubr.bf16.gmra.mrb[0].mxu0 %v1538
          %v1593 = vpop.f32.mrb[0].mxu0
          %v1594 = vadd.f32 0.0, %v1593
          %v1595 = vpop.f32.mrb[0].mxu0
          %v1596 = vpop.f32.mrb[0].mxu0
          %v1597 = vadd.f32 0.0, %v1596
          %v1598 = vpop.f32.mrb[0].mxu0
          %1599 = vmatprep.mubr.bf16.mxu0 0
          %1600 = vmatmul.mubr.bf16.gmra.mrb[0].mxu0 %v1541
          %v1601 = vpop.f32.mrb[0].mxu0
          %v1602 = vadd.f32 0.0, %v1601
          %v1603 = vpop.f32.mrb[0].mxu0
          %v1604 = vpop.f32.mrb[0].mxu0
          %v1605 = vadd.f32 0.0, %v1604
          %v1606 = vpop.f32.mrb[0].mxu0
          %1607 = vdwg.mxu0
          %v1608 = vsub.f32 %v1473, %v1578
          %v1609 = vsub.f32 %v1476, %v1581
          %v1610 = vsub.f32 %v1481, %v1586
          %v1611 = vsub.f32 %v1484, %v1589
          %v1612 = vsub.f32 %v1489, %v1594
          %v1613 = vsub.f32 %v1492, %v1597
          %v1614 = vsub.f32 %v1497, %v1602
          %v1615 = vsub.f32 %v1500, %v1605
          %1616 = vmatprep.subr.bf16.mxu0 0
          %1617 = vmatpush1.bf16.msra.mxu0 %v1390
          %1618 = vmatprep.subr.bf16.mxu0 0
          %1619 = vmatpush1.bf16.msra.mxu0 %v1391
          %1620 = vmatprep.subr.bf16.mxu0 0
          %1621 = vmatpush1.bf16.msra.mxu0 %v1392
          %1622 = vmatprep.subr.bf16.mxu0 0
          %1623 = vmatpush1.bf16.msra.mxu0 %v1393
          %1624 = vmatprep.subr.bf16.mxu0 0
          %1625 = vmatpush1.bf16.msra.mxu0 0
          %1626 = vmatprep.subr.bf16.mxu0 0
          %1627 = vmatpush1.bf16.msra.mxu0 0
          %1628 = vmatprep.subr.bf16.mxu0 0
          %1629 = vmatpush1.bf16.msra.mxu0 0
          %1630 = vmatprep.subr.bf16.mxu0 0
          %1631 = vmatpush1.bf16.msra.mxu0 0
          %1632 = vmatprep.subr.bf16.mxu0 0
          %1633 = vmatpush1.bf16.msra.mxu0 0
          %1634 = vmatprep.subr.bf16.mxu0 0
          %1635 = vmatpush1.bf16.msra.mxu0 0
          %1636 = vmatprep.subr.bf16.mxu0 0
          %1637 = vmatpush1.bf16.msra.mxu0 0
          %1638 = vmatprep.subr.bf16.mxu0 0
          %1639 = vmatpush1.bf16.msra.mxu0 0
          %1640 = vmatprep.subr.bf16.mxu0 0
          %1641 = vmatpush1.bf16.msra.mxu0 0
          %1642 = vmatprep.subr.bf16.mxu0 0
          %1643 = vmatpush1.bf16.msra.mxu0 0
          %1644 = vmatprep.subr.bf16.mxu0 0
          %1645 = vmatpush1.bf16.msra.mxu0 0
          %1646 = vmatprep.subr.bf16.mxu0 0
          %1647 = vmatpush1.bf16.msra.mxu0 0
          %1648 = vmatprep.mubr.bf16.mxu0 0
          %1649 = vmatmul.mubr.bf16.gmra.mrb[0].mxu0 %v1532
          %v1650 = vpop.f32.mrb[0].mxu0
          %v1651 = vadd.f32 0.0, %v1650
          %v1652 = vpop.f32.mrb[0].mxu0
          %v1653 = vpop.f32.mrb[0].mxu0
          %v1654 = vadd.f32 0.0, %v1653
          %v1655 = vpop.f32.mrb[0].mxu0
          %1656 = vmatprep.mubr.bf16.mxu0 0
          %1657 = vmatmul.mubr.bf16.gmra.mrb[0].mxu0 %v1535
          %v1658 = vpop.f32.mrb[0].mxu0
          %v1659 = vadd.f32 0.0, %v1658
          %v1660 = vpop.f32.mrb[0].mxu0
          %v1661 = vpop.f32.mrb[0].mxu0
          %v1662 = vadd.f32 0.0, %v1661
          %v1663 = vpop.f32.mrb[0].mxu0
          %1664 = vmatprep.mubr.bf16.mxu0 0
          %1665 = vmatmul.mubr.bf16.gmra.mrb[0].mxu0 %v1538
          %v1666 = vpop.f32.mrb[0].mxu0
          %v1667 = vadd.f32 0.0, %v1666
          %v1668 = vpop.f32.mrb[0].mxu0
          %v1669 = vpop.f32.mrb[0].mxu0
          %v1670 = vadd.f32 0.0, %v1669
          %v1671 = vpop.f32.mrb[0].mxu0
          %1672 = vmatprep.mubr.bf16.mxu0 0
          %1673 = vmatmul.mubr.bf16.gmra.mrb[0].mxu0 %v1541
          %v1674 = vpop.f32.mrb[0].mxu0
          %v1675 = vadd.f32 0.0, %v1674
          %v1676 = vpop.f32.mrb[0].mxu0
          %v1677 = vpop.f32.mrb[0].mxu0
          %v1678 = vadd.f32 0.0, %v1677
          %v1679 = vpop.f32.mrb[0].mxu0
          %1680 = vdwg.mxu0
          %1681 = vmatprep.subr.bf16.mxu0 0
          %1682 = vmatpush1.bf16.msra.mxu0 %v1394
          %1683 = vmatprep.subr.bf16.mxu0 0
          %1684 = vmatpush1.bf16.msra.mxu0 %v1395
          %1685 = vmatprep.subr.bf16.mxu0 0
          %1686 = vmatpush1.bf16.msra.mxu0 %v1396
          %1687 = vmatprep.subr.bf16.mxu0 0
          %1688 = vmatpush1.bf16.msra.mxu0 %v1397
          %1689 = vmatprep.subr.bf16.mxu0 0
          %1690 = vmatpush1.bf16.msra.mxu0 0
          %1691 = vmatprep.subr.bf16.mxu0 0
          %1692 = vmatpush1.bf16.msra.mxu0 0
          %1693 = vmatprep.subr.bf16.mxu0 0
          %1694 = vmatpush1.bf16.msra.mxu0 0
          %1695 = vmatprep.subr.bf16.mxu0 0
          %1696 = vmatpush1.bf16.msra.mxu0 0
          %1697 = vmatprep.subr.bf16.mxu0 0
          %1698 = vmatpush1.bf16.msra.mxu0 0
          %1699 = vmatprep.subr.bf16.mxu0 0
          %1700 = vmatpush1.bf16.msra.mxu0 0
          %1701 = vmatprep.subr.bf16.mxu0 0
          %1702 = vmatpush1.bf16.msra.mxu0 0
          %1703 = vmatprep.subr.bf16.mxu0 0
          %1704 = vmatpush1.bf16.msra.mxu0 0
          %1705 = vmatprep.subr.bf16.mxu0 0
          %1706 = vmatpush1.bf16.msra.mxu0 0
          %1707 = vmatprep.subr.bf16.mxu0 0
          %1708 = vmatpush1.bf16.msra.mxu0 0
          %1709 = vmatprep.subr.bf16.mxu0 0
          %1710 = vmatpush1.bf16.msra.mxu0 0
          %1711 = vmatprep.subr.bf16.mxu0 0
          %1712 = vmatpush1.bf16.msra.mxu0 0
          %1713 = vmatprep.mubr.bf16.mxu0 0
          %1714 = vmatmul.mubr.bf16.gmra.mrb[0].mxu0 %v1427
          %v1715 = vpop.f32.mrb[0].mxu0
          %v1716 = vadd.f32 %v1651, %v1715
          %v1717 = vpop.f32.mrb[0].mxu0
          %v1718 = vpop.f32.mrb[0].mxu0
          %v1719 = vadd.f32 %v1654, %v1718
          %v1720 = vpop.f32.mrb[0].mxu0
          %1721 = vmatprep.mubr.bf16.mxu0 0
          %1722 = vmatmul.mubr.bf16.gmra.mrb[0].mxu0 %v1430
          %v1723 = vpop.f32.mrb[0].mxu0
          %v1724 = vadd.f32 %v1659, %v1723
          %v1725 = vpop.f32.mrb[0].mxu0
          %v1726 = vpop.f32.mrb[0].mxu0
          %v1727 = vadd.f32 %v1662, %v1726
          %v1728 = vpop.f32.mrb[0].mxu0
          %1729 = vmatprep.mubr.bf16.mxu0 0
          %1730 = vmatmul.mubr.bf16.gmra.mrb[0].mxu0 %v1433
          %v1731 = vpop.f32.mrb[0].mxu0
          %v1732 = vadd.f32 %v1667, %v1731
          %v1733 = vpop.f32.mrb[0].mxu0
          %v1734 = vpop.f32.mrb[0].mxu0
          %v1735 = vadd.f32 %v1670, %v1734
          %v1736 = vpop.f32.mrb[0].mxu0
          %1737 = vmatprep.mubr.bf16.mxu0 0
          %1738 = vmatmul.mubr.bf16.gmra.mrb[0].mxu0 %v1436
          %v1739 = vpop.f32.mrb[0].mxu0
          %v1740 = vadd.f32 %v1675, %v1739
          %v1741 = vpop.f32.mrb[0].mxu0
          %v1742 = vpop.f32.mrb[0].mxu0
          %v1743 = vadd.f32 %v1678, %v1742
          %v1744 = vpop.f32.mrb[0].mxu0
          %1745 = vdwg.mxu0
          %v1746 = vpack.c.bf16 %v1609, %v1608
          %v1747 = vpack.c.bf16 %v1611, %v1610
          %v1748 = vpack.c.bf16 %v1613, %v1612
          %v1749 = vpack.c.bf16 %v1615, %v1614
          %v1750 = vpack.c.bf16 %v1719, %v1716
          %v1751 = vpack.c.bf16 %v1727, %v1724
          %v1752 = vpack.c.bf16 %v1735, %v1732
          %v1753 = vpack.c.bf16 %v1743, %v1740
          %v1759 = vsel %vm615, %v1746, 0
          %v1762 = vsel %vm615, %v1747, 0
          %v1765 = vsel %vm615, %v1748, 0
          %v1768 = vsel %vm615, %v1749, 0
          %1770 = vmatprep.subr.bf16.mxu0 0
          %1771 = vmatpush1.bf16.msra.mxu0 %v1422
          %1772 = vmatprep.subr.bf16.mxu0 0
          %1773 = vmatpush1.bf16.msra.mxu0 %v1423
          %1774 = vmatprep.subr.bf16.mxu0 0
          %1775 = vmatpush1.bf16.msra.mxu0 %v1424
          %1776 = vmatprep.subr.bf16.mxu0 0
          %1777 = vmatpush1.bf16.msra.mxu0 %v1425
          %1778 = vmatprep.subr.bf16.mxu0 0
          %1779 = vmatpush1.bf16.msra.mxu0 0
          %1780 = vmatprep.subr.bf16.mxu0 0
          %1781 = vmatpush1.bf16.msra.mxu0 0
          %1782 = vmatprep.subr.bf16.mxu0 0
          %1783 = vmatpush1.bf16.msra.mxu0 0
          %1784 = vmatprep.subr.bf16.mxu0 0
          %1785 = vmatpush1.bf16.msra.mxu0 0
          %1786 = vmatprep.subr.bf16.mxu0 0
          %1787 = vmatpush1.bf16.msra.mxu0 0
          %1788 = vmatprep.subr.bf16.mxu0 0
          %1789 = vmatpush1.bf16.msra.mxu0 0
          %1790 = vmatprep.subr.bf16.mxu0 0
          %1791 = vmatpush1.bf16.msra.mxu0 0
          %1792 = vmatprep.subr.bf16.mxu0 0
          %1793 = vmatpush1.bf16.msra.mxu0 0
          %1794 = vmatprep.subr.bf16.mxu0 0
          %1795 = vmatpush1.bf16.msra.mxu0 0
          %1796 = vmatprep.subr.bf16.mxu0 0
          %1797 = vmatpush1.bf16.msra.mxu0 0
          %1798 = vmatprep.subr.bf16.mxu0 0
          %1799 = vmatpush1.bf16.msra.mxu0 0
          %1800 = vmatprep.subr.bf16.mxu0 0
          %1801 = vmatpush1.bf16.msra.mxu0 0
          %1802 = vmatprep.mubr.bf16.mxu0 0
          %1803 = vmatmul.mubr.bf16.gmra.mrb[0].mxu0 %v1759
          %v1804 = vpop.f32.mrb[0].mxu0
          %v1805 = vadd.f32 0.0, %v1804
          %v1806 = vpop.f32.mrb[0].mxu0
          %v1807 = vpop.f32.mrb[0].mxu0
          %v1808 = vadd.f32 0.0, %v1807
          %v1809 = vpop.f32.mrb[0].mxu0
          %1810 = vmatprep.mubr.bf16.mxu0 0
          %1811 = vmatmul.mubr.bf16.gmra.mrb[0].mxu0 %v1762
          %v1812 = vpop.f32.mrb[0].mxu0
          %v1813 = vadd.f32 0.0, %v1812
          %v1814 = vpop.f32.mrb[0].mxu0
          %v1815 = vpop.f32.mrb[0].mxu0
          %v1816 = vadd.f32 0.0, %v1815
          %v1817 = vpop.f32.mrb[0].mxu0
          %1818 = vmatprep.mubr.bf16.mxu0 0
          %1819 = vmatmul.mubr.bf16.gmra.mrb[0].mxu0 %v1765
          %v1820 = vpop.f32.mrb[0].mxu0
          %v1821 = vadd.f32 0.0, %v1820
          %v1822 = vpop.f32.mrb[0].mxu0
          %v1823 = vpop.f32.mrb[0].mxu0
          %v1824 = vadd.f32 0.0, %v1823
          %v1825 = vpop.f32.mrb[0].mxu0
          %1826 = vmatprep.mubr.bf16.mxu0 0
          %1827 = vmatmul.mubr.bf16.gmra.mrb[0].mxu0 %v1768
          %v1828 = vpop.f32.mrb[0].mxu0
          %v1829 = vadd.f32 0.0, %v1828
          %v1830 = vpop.f32.mrb[0].mxu0
          %v1831 = vpop.f32.mrb[0].mxu0
          %v1832 = vadd.f32 0.0, %v1831
          %v1833 = vpop.f32.mrb[0].mxu0
          %1834 = vdwg.mxu0
          %v1840 = vsel %vm615, %v1750, 0
          %v1843 = vsel %vm615, %v1751, 0
          %v1846 = vsel %vm615, %v1752, 0
          %v1849 = vsel %vm615, %v1753, 0
          %1851 = vmatprep.subr.bf16.mxu0 0
          %1852 = vmatpush1.bf16.msra.mxu0 %v1527
          %1853 = vmatprep.subr.bf16.mxu0 0
          %1854 = vmatpush1.bf16.msra.mxu0 %v1528
          %1855 = vmatprep.subr.bf16.mxu0 0
          %1856 = vmatpush1.bf16.msra.mxu0 %v1529
          %1857 = vmatprep.subr.bf16.mxu0 0
          %1858 = vmatpush1.bf16.msra.mxu0 %v1530
          %1859 = vmatprep.subr.bf16.mxu0 0
          %1860 = vmatpush1.bf16.msra.mxu0 0
          %1861 = vmatprep.subr.bf16.mxu0 0
          %1862 = vmatpush1.bf16.msra.mxu0 0
          %1863 = vmatprep.subr.bf16.mxu0 0
          %1864 = vmatpush1.bf16.msra.mxu0 0
          %1865 = vmatprep.subr.bf16.mxu0 0
          %1866 = vmatpush1.bf16.msra.mxu0 0
          %1867 = vmatprep.subr.bf16.mxu0 0
          %1868 = vmatpush1.bf16.msra.mxu0 0
          %1869 = vmatprep.subr.bf16.mxu0 0
          %1870 = vmatpush1.bf16.msra.mxu0 0
          %1871 = vmatprep.subr.bf16.mxu0 0
          %1872 = vmatpush1.bf16.msra.mxu0 0
          %1873 = vmatprep.subr.bf16.mxu0 0
          %1874 = vmatpush1.bf16.msra.mxu0 0
          %1875 = vmatprep.subr.bf16.mxu0 0
          %1876 = vmatpush1.bf16.msra.mxu0 0
          %1877 = vmatprep.subr.bf16.mxu0 0
          %1878 = vmatpush1.bf16.msra.mxu0 0
          %1879 = vmatprep.subr.bf16.mxu0 0
          %1880 = vmatpush1.bf16.msra.mxu0 0
          %1881 = vmatprep.subr.bf16.mxu0 0
          %1882 = vmatpush1.bf16.msra.mxu0 0
          %1883 = vmatprep.mubr.bf16.mxu0 0
          %1884 = vmatmul.mubr.bf16.gmra.mrb[0].mxu0 %v1840
          %v1885 = vpop.f32.mrb[0].mxu0
          %v1886 = vadd.f32 0.0, %v1885
          %v1887 = vpop.f32.mrb[0].mxu0
          %v1888 = vpop.f32.mrb[0].mxu0
          %v1889 = vadd.f32 0.0, %v1888
          %v1890 = vpop.f32.mrb[0].mxu0
          %1891 = vmatprep.mubr.bf16.mxu0 0
          %1892 = vmatmul.mubr.bf16.gmra.mrb[0].mxu0 %v1843
          %v1893 = vpop.f32.mrb[0].mxu0
          %v1894 = vadd.f32 0.0, %v1893
          %v1895 = vpop.f32.mrb[0].mxu0
          %v1896 = vpop.f32.mrb[0].mxu0
          %v1897 = vadd.f32 0.0, %v1896
          %v1898 = vpop.f32.mrb[0].mxu0
          %1899 = vmatprep.mubr.bf16.mxu0 0
          %1900 = vmatmul.mubr.bf16.gmra.mrb[0].mxu0 %v1846
          %v1901 = vpop.f32.mrb[0].mxu0
          %v1902 = vadd.f32 0.0, %v1901
          %v1903 = vpop.f32.mrb[0].mxu0
          %v1904 = vpop.f32.mrb[0].mxu0
          %v1905 = vadd.f32 0.0, %v1904
          %v1906 = vpop.f32.mrb[0].mxu0
          %1907 = vmatprep.mubr.bf16.mxu0 0
          %1908 = vmatmul.mubr.bf16.gmra.mrb[0].mxu0 %v1849
          %v1909 = vpop.f32.mrb[0].mxu0
          %v1910 = vadd.f32 0.0, %v1909
          %v1911 = vpop.f32.mrb[0].mxu0
          %v1912 = vpop.f32.mrb[0].mxu0
          %v1913 = vadd.f32 0.0, %v1912
          %v1914 = vpop.f32.mrb[0].mxu0
          %1915 = vdwg.mxu0
          %v1916 = vsub.f32 %v1805, %v1886
          %v1917 = vsub.f32 %v1808, %v1889
          %v1918 = vsub.f32 %v1813, %v1894
          %v1919 = vsub.f32 %v1816, %v1897
          %v1920 = vsub.f32 %v1821, %v1902
          %v1921 = vsub.f32 %v1824, %v1905
          %v1922 = vsub.f32 %v1829, %v1910
          %v1923 = vsub.f32 %v1832, %v1913
          %1924 = vmatprep.subr.bf16.mxu0 0
          %1925 = vmatpush1.bf16.msra.mxu0 %v1422
          %1926 = vmatprep.subr.bf16.mxu0 0
          %1927 = vmatpush1.bf16.msra.mxu0 %v1423
          %1928 = vmatprep.subr.bf16.mxu0 0
          %1929 = vmatpush1.bf16.msra.mxu0 %v1424
          %1930 = vmatprep.subr.bf16.mxu0 0
          %1931 = vmatpush1.bf16.msra.mxu0 %v1425
          %1932 = vmatprep.subr.bf16.mxu0 0
          %1933 = vmatpush1.bf16.msra.mxu0 0
          %1934 = vmatprep.subr.bf16.mxu0 0
          %1935 = vmatpush1.bf16.msra.mxu0 0
          %1936 = vmatprep.subr.bf16.mxu0 0
          %1937 = vmatpush1.bf16.msra.mxu0 0
          %1938 = vmatprep.subr.bf16.mxu0 0
          %1939 = vmatpush1.bf16.msra.mxu0 0
          %1940 = vmatprep.subr.bf16.mxu0 0
          %1941 = vmatpush1.bf16.msra.mxu0 0
          %1942 = vmatprep.subr.bf16.mxu0 0
          %1943 = vmatpush1.bf16.msra.mxu0 0
          %1944 = vmatprep.subr.bf16.mxu0 0
          %1945 = vmatpush1.bf16.msra.mxu0 0
          %1946 = vmatprep.subr.bf16.mxu0 0
          %1947 = vmatpush1.bf16.msra.mxu0 0
          %1948 = vmatprep.subr.bf16.mxu0 0
          %1949 = vmatpush1.bf16.msra.mxu0 0
          %1950 = vmatprep.subr.bf16.mxu0 0
          %1951 = vmatpush1.bf16.msra.mxu0 0
          %1952 = vmatprep.subr.bf16.mxu0 0
          %1953 = vmatpush1.bf16.msra.mxu0 0
          %1954 = vmatprep.subr.bf16.mxu0 0
          %1955 = vmatpush1.bf16.msra.mxu0 0
          %1956 = vmatprep.mubr.bf16.mxu0 0
          %1957 = vmatmul.mubr.bf16.gmra.mrb[0].mxu0 %v1840
          %v1958 = vpop.f32.mrb[0].mxu0
          %v1959 = vadd.f32 0.0, %v1958
          %v1960 = vpop.f32.mrb[0].mxu0
          %v1961 = vpop.f32.mrb[0].mxu0
          %v1962 = vadd.f32 0.0, %v1961
          %v1963 = vpop.f32.mrb[0].mxu0
          %1964 = vmatprep.mubr.bf16.mxu0 0
          %1965 = vmatmul.mubr.bf16.gmra.mrb[0].mxu0 %v1843
          %v1966 = vpop.f32.mrb[0].mxu0
          %v1967 = vadd.f32 0.0, %v1966
          %v1968 = vpop.f32.mrb[0].mxu0
          %v1969 = vpop.f32.mrb[0].mxu0
          %v1970 = vadd.f32 0.0, %v1969
          %v1971 = vpop.f32.mrb[0].mxu0
          %1972 = vmatprep.mubr.bf16.mxu0 0
          %1973 = vmatmul.mubr.bf16.gmra.mrb[0].mxu0 %v1846
          %v1974 = vpop.f32.mrb[0].mxu0
          %v1975 = vadd.f32 0.0, %v1974
          %v1976 = vpop.f32.mrb[0].mxu0
          %v1977 = vpop.f32.mrb[0].mxu0
          %v1978 = vadd.f32 0.0, %v1977
          %v1979 = vpop.f32.mrb[0].mxu0
          %1980 = vmatprep.mubr.bf16.mxu0 0
          %1981 = vmatmul.mubr.bf16.gmra.mrb[0].mxu0 %v1849
          %v1982 = vpop.f32.mrb[0].mxu0
          %v1983 = vadd.f32 0.0, %v1982
          %v1984 = vpop.f32.mrb[0].mxu0
          %v1985 = vpop.f32.mrb[0].mxu0
          %v1986 = vadd.f32 0.0, %v1985
          %v1987 = vpop.f32.mrb[0].mxu0
          %1988 = vdwg.mxu0
          %1989 = vmatprep.subr.bf16.mxu0 0
          %1990 = vmatpush1.bf16.msra.mxu0 %v1527
          %1991 = vmatprep.subr.bf16.mxu0 0
          %1992 = vmatpush1.bf16.msra.mxu0 %v1528
          %1993 = vmatprep.subr.bf16.mxu0 0
          %1994 = vmatpush1.bf16.msra.mxu0 %v1529
          %1995 = vmatprep.subr.bf16.mxu0 0
          %1996 = vmatpush1.bf16.msra.mxu0 %v1530
          %1997 = vmatprep.subr.bf16.mxu0 0
          %1998 = vmatpush1.bf16.msra.mxu0 0
          %1999 = vmatprep.subr.bf16.mxu0 0
          %2000 = vmatpush1.bf16.msra.mxu0 0
          %2001 = vmatprep.subr.bf16.mxu0 0
          %2002 = vmatpush1.bf16.msra.mxu0 0
          %2003 = vmatprep.subr.bf16.mxu0 0
          %2004 = vmatpush1.bf16.msra.mxu0 0
          %2005 = vmatprep.subr.bf16.mxu0 0
          %2006 = vmatpush1.bf16.msra.mxu0 0
          %2007 = vmatprep.subr.bf16.mxu0 0
          %2008 = vmatpush1.bf16.msra.mxu0 0
          %2009 = vmatprep.subr.bf16.mxu0 0
          %2010 = vmatpush1.bf16.msra.mxu0 0
          %2011 = vmatprep.subr.bf16.mxu0 0
          %2012 = vmatpush1.bf16.msra.mxu0 0
          %2013 = vmatprep.subr.bf16.mxu0 0
          %2014 = vmatpush1.bf16.msra.mxu0 0
          %2015 = vmatprep.subr.bf16.mxu0 0
          %2016 = vmatpush1.bf16.msra.mxu0 0
          %2017 = vmatprep.subr.bf16.mxu0 0
          %2018 = vmatpush1.bf16.msra.mxu0 0
          %2019 = vmatprep.subr.bf16.mxu0 0
          %2020 = vmatpush1.bf16.msra.mxu0 0
          %2021 = vmatprep.mubr.bf16.mxu0 0
          %2022 = vmatmul.mubr.bf16.gmra.mrb[0].mxu0 %v1759
          %v2023 = vpop.f32.mrb[0].mxu0
          %v2024 = vadd.f32 %v1959, %v2023
          %v2025 = vpop.f32.mrb[0].mxu0
          %v2026 = vpop.f32.mrb[0].mxu0
          %v2027 = vadd.f32 %v1962, %v2026
          %v2028 = vpop.f32.mrb[0].mxu0
          %2029 = vmatprep.mubr.bf16.mxu0 0
          %2030 = vmatmul.mubr.bf16.gmra.mrb[0].mxu0 %v1762
          %v2031 = vpop.f32.mrb[0].mxu0
          %v2032 = vadd.f32 %v1967, %v2031
          %v2033 = vpop.f32.mrb[0].mxu0
          %v2034 = vpop.f32.mrb[0].mxu0
          %v2035 = vadd.f32 %v1970, %v2034
          %v2036 = vpop.f32.mrb[0].mxu0
          %2037 = vmatprep.mubr.bf16.mxu0 0
          %2038 = vmatmul.mubr.bf16.gmra.mrb[0].mxu0 %v1765
          %v2039 = vpop.f32.mrb[0].mxu0
          %v2040 = vadd.f32 %v1975, %v2039
          %v2041 = vpop.f32.mrb[0].mxu0
          %v2042 = vpop.f32.mrb[0].mxu0
          %v2043 = vadd.f32 %v1978, %v2042
          %v2044 = vpop.f32.mrb[0].mxu0
          %2045 = vmatprep.mubr.bf16.mxu0 0
          %2046 = vmatmul.mubr.bf16.gmra.mrb[0].mxu0 %v1768
          %v2047 = vpop.f32.mrb[0].mxu0
          %v2048 = vadd.f32 %v1983, %v2047
          %v2049 = vpop.f32.mrb[0].mxu0
          %v2050 = vpop.f32.mrb[0].mxu0
          %v2051 = vadd.f32 %v1986, %v2050
          %v2052 = vpop.f32.mrb[0].mxu0
          %2053 = vdwg.mxu0
          %s2054 = smul.u32 %s641, 8
          %s2055 = smul.addr %s2054, 4
          %s2056 = scalar_lea.vmem [#allocation16], %s2055
          %v2057 = vld [vmem:[%s2056] sm:$0xf]
          %v2058 = vld [vmem:[%s2056 + $0x4] sm:$0xf]
          %v2059 = vld [vmem:[%s2056 + $0x8] sm:$0xf]
          %v2060 = vld [vmem:[%s2056 + $0xc] sm:$0xf]
          %v2061 = vld [vmem:[%s2056 + $0x10] sm:$0xf]
          %v2062 = vld [vmem:[%s2056 + $0x14] sm:$0xf]
          %v2063 = vld [vmem:[%s2056 + $0x18] sm:$0xf]
          %v2064 = vld [vmem:[%s2056 + $0x1c] sm:$0xf]
          %v2065 = vunpack.c.l.bf16 %v2057
          %v2066 = vunpack.c.l.bf16 %v2058
          %v2067 = vunpack.c.l.bf16 %v2059
          %v2068 = vunpack.c.l.bf16 %v2060
          %v2069 = vunpack.c.l.bf16 %v2061
          %v2070 = vunpack.c.l.bf16 %v2062
          %v2071 = vunpack.c.l.bf16 %v2063
          %v2072 = vunpack.c.l.bf16 %v2064
          %s2073 = smul.addr %s2054, 4
          %s2074 = scalar_lea.vmem [#allocation17], %s2073
          %v2075 = vld [vmem:[%s2074] sm:$0xf]
          %v2076 = vld [vmem:[%s2074 + $0x4] sm:$0xf]
          %v2077 = vld [vmem:[%s2074 + $0x8] sm:$0xf]
          %v2078 = vld [vmem:[%s2074 + $0xc] sm:$0xf]
          %v2079 = vld [vmem:[%s2074 + $0x10] sm:$0xf]
          %v2080 = vld [vmem:[%s2074 + $0x14] sm:$0xf]
          %v2081 = vld [vmem:[%s2074 + $0x18] sm:$0xf]
          %v2082 = vld [vmem:[%s2074 + $0x1c] sm:$0xf]
          %v2083 = vunpack.c.l.bf16 %v2075
          %v2084 = vunpack.c.l.bf16 %v2076
          %v2085 = vunpack.c.l.bf16 %v2077
          %v2086 = vunpack.c.l.bf16 %v2078
          %v2087 = vunpack.c.l.bf16 %v2079
          %v2088 = vunpack.c.l.bf16 %v2080
          %v2089 = vunpack.c.l.bf16 %v2081
          %v2090 = vunpack.c.l.bf16 %v2082
          %v2091 = vmul.f32 %v1916, %v2065
          %v2092 = vmul.f32 %v1917, %v2066
          %v2093 = vmul.f32 %v1918, %v2067
          %v2094 = vmul.f32 %v1919, %v2068
          %v2095 = vmul.f32 %v1920, %v2069
          %v2096 = vmul.f32 %v1921, %v2070
          %v2097 = vmul.f32 %v1922, %v2071
          %v2098 = vmul.f32 %v1923, %v2072
          %v2099 = vmul.f32 %v2024, %v2083
          %v2100 = vmul.f32 %v2027, %v2084
          %v2101 = vmul.f32 %v2032, %v2085
          %v2102 = vmul.f32 %v2035, %v2086
          %v2103 = vmul.f32 %v2040, %v2087
          %v2104 = vmul.f32 %v2043, %v2088
          %v2105 = vmul.f32 %v2048, %v2089
          %v2106 = vmul.f32 %v2051, %v2090
          %v2107 = vsub.f32 %v2091, %v2099
          %v2108 = vsub.f32 %v2092, %v2100
          %v2109 = vsub.f32 %v2093, %v2101
          %v2110 = vsub.f32 %v2094, %v2102
          %v2111 = vsub.f32 %v2095, %v2103
          %v2112 = vsub.f32 %v2096, %v2104
          %v2113 = vsub.f32 %v2097, %v2105
          %v2114 = vsub.f32 %v2098, %v2106
          %2115 = vst.msk [vmem:[%s591] sm:$0xff] %vm615, %v2107
          %2116 = vst.msk [vmem:[%s591 + $0x8] sm:$0xff] %vm615, %v2108
          %2117 = vst.msk [vmem:[%s591 + $0x10] sm:$0xff] %vm615, %v2109
          %2118 = vst.msk [vmem:[%s591 + $0x18] sm:$0xff] %vm615, %v2110
          %2119 = vst.msk [vmem:[%s591 + $0x20] sm:$0xff] %vm615, %v2111
          %2120 = vst.msk [vmem:[%s591 + $0x28] sm:$0xff] %vm615, %v2112
          %2121 = vst.msk [vmem:[%s591 + $0x30] sm:$0xff] %vm615, %v2113
          %2122 = vst.msk [vmem:[%s591 + $0x38] sm:$0xff] %vm615, %v2114
          %v2123 = vmul.f32 %v1916, %v2083
          %v2124 = vmul.f32 %v1917, %v2084
          %v2125 = vmul.f32 %v1918, %v2085
          %v2126 = vmul.f32 %v1919, %v2086
          %v2127 = vmul.f32 %v1920, %v2087
          %v2128 = vmul.f32 %v1921, %v2088
          %v2129 = vmul.f32 %v1922, %v2089
          %v2130 = vmul.f32 %v1923, %v2090
          %v2131 = vmul.f32 %v2024, %v2065
          %v2132 = vmul.f32 %v2027, %v2066
          %v2133 = vmul.f32 %v2032, %v2067
          %v2134 = vmul.f32 %v2035, %v2068
          %v2135 = vmul.f32 %v2040, %v2069
          %v2136 = vmul.f32 %v2043, %v2070
          %v2137 = vmul.f32 %v2048, %v2071
          %v2138 = vmul.f32 %v2051, %v2072
          %v2139 = vadd.f32 %v2123, %v2131
          %v2140 = vadd.f32 %v2124, %v2132
          %v2141 = vadd.f32 %v2125, %v2133
          %v2142 = vadd.f32 %v2126, %v2134
          %v2143 = vadd.f32 %v2127, %v2135
          %v2144 = vadd.f32 %v2128, %v2136
          %v2145 = vadd.f32 %v2129, %v2137
          %v2146 = vadd.f32 %v2130, %v2138
          %2147 = vst.msk [vmem:[%s598] sm:$0xff] %vm615, %v2139
          %2148 = vst.msk [vmem:[%s598 + $0x8] sm:$0xff] %vm615, %v2140
          %2149 = vst.msk [vmem:[%s598 + $0x10] sm:$0xff] %vm615, %v2141
          %2150 = vst.msk [vmem:[%s598 + $0x18] sm:$0xff] %vm615, %v2142
          %2151 = vst.msk [vmem:[%s598 + $0x20] sm:$0xff] %vm615, %v2143
          %2152 = vst.msk [vmem:[%s598 + $0x28] sm:$0xff] %vm615, %v2144
          %2153 = vst.msk [vmem:[%s598 + $0x30] sm:$0xff] %vm615, %v2145
          %2154 = vst.msk [vmem:[%s598 + $0x38] sm:$0xff] %vm615, %v2146
        $region105: #{tpu_custom_call.1} parent=59 // loop_footer
          %s645 = sadd.s32 1, %s641
        $region106: #{tpu_custom_call.1} parent=59 // loop_footer_branch
          %640 = sbr.rel target = $region102
        $region107: #{tpu_custom_call.1} parent=59 // loop_exit
          _
        %v2155 = vld [vmem:[%s591] sm:$0xff]
        %v2156 = vld [vmem:[%s591 + $0x8] sm:$0xff]
        %v2157 = vld [vmem:[%s591 + $0x10] sm:$0xff]
        %v2158 = vld [vmem:[%s591 + $0x18] sm:$0xff]
        %v2159 = vld [vmem:[%s591 + $0x20] sm:$0xff]
        %v2160 = vld [vmem:[%s591 + $0x28] sm:$0xff]
        %v2161 = vld [vmem:[%s591 + $0x30] sm:$0xff]
        %v2162 = vld [vmem:[%s591 + $0x38] sm:$0xff]
        %v2163 = vld [vmem:[%s598] sm:$0xff]
        %v2164 = vld [vmem:[%s598 + $0x8] sm:$0xff]
        %v2165 = vld [vmem:[%s598 + $0x10] sm:$0xff]
        %v2166 = vld [vmem:[%s598 + $0x18] sm:$0xff]
        %v2167 = vld [vmem:[%s598 + $0x20] sm:$0xff]
        %v2168 = vld [vmem:[%s598 + $0x28] sm:$0xff]
        %v2169 = vld [vmem:[%s598 + $0x30] sm:$0xff]
        %v2170 = vld [vmem:[%s598 + $0x38] sm:$0xff]
        %v2171 = vpack.c.bf16 %v2156, %v2155
        %v2172 = vpack.c.bf16 %v2158, %v2157
        %v2173 = vpack.c.bf16 %v2160, %v2159
        %v2174 = vpack.c.bf16 %v2162, %v2161
        %v2175 = vpack.c.bf16 %v2164, %v2163
        %v2176 = vpack.c.bf16 %v2166, %v2165
        %v2177 = vpack.c.bf16 %v2168, %v2167
        %v2178 = vpack.c.bf16 %v2170, %v2169
        %v2179 = vld [vmem:[#allocation7] sm:$0xf]
        %v2180 = vld [vmem:[#allocation7 + $0x4] sm:$0xf]
        %v2181 = vld [vmem:[#allocation7 + $0x8] sm:$0xf]
        %v2182 = vld [vmem:[#allocation7 + $0xc] sm:$0xf]
        %v2183 = vld [vmem:[#allocation7 + $0x10] sm:$0xf]
        %v2184 = vld [vmem:[#allocation7 + $0x14] sm:$0xf]
        %v2185 = vld [vmem:[#allocation7 + $0x18] sm:$0xf]
        %v2186 = vld [vmem:[#allocation7 + $0x1c] sm:$0xf]
        %v2195 = vunpack.c.l.b16 %v2179
        %v2196 = vunpack.c.l.b16 %v2180
        %v2197 = vunpack.c.l.b16 %v2181
        %v2198 = vunpack.c.l.b16 %v2182
        %v2199 = vunpack.c.l.b16 %v2183
        %v2200 = vunpack.c.l.b16 %v2184
        %v2201 = vunpack.c.l.b16 %v2185
        %v2202 = vunpack.c.l.b16 %v2186
        %v2203 = vpack.c.b16 %v2196, %v2195
        %v2204 = vpack.c.b16 %v2198, %v2197
        %v2205 = vpack.c.b16 %v2200, %v2199
        %v2206 = vpack.c.b16 %v2202, %v2201
        %v2208 = vsel %vm615, %v2203, 0
        %v2211 = vsel %vm615, %v2204, 0
        %v2214 = vsel %vm615, %v2205, 0
        %v2217 = vsel %vm615, %v2206, 0
        %2219 = vmatprep.subr.bf16.mxu0 0
        %2220 = vmatpush1.bf16.msra.mxu0 %v2171
        %2221 = vmatprep.subr.bf16.mxu0 0
        %2222 = vmatpush1.bf16.msra.mxu0 %v2172
        %2223 = vmatprep.subr.bf16.mxu0 0
        %2224 = vmatpush1.bf16.msra.mxu0 %v2173
        %2225 = vmatprep.subr.bf16.mxu0 0
        %2226 = vmatpush1.bf16.msra.mxu0 %v2174
        %2227 = vmatprep.subr.bf16.mxu0 0
        %2228 = vmatpush1.bf16.msra.mxu0 0
        %2229 = vmatprep.subr.bf16.mxu0 0
        %2230 = vmatpush1.bf16.msra.mxu0 0
        %2231 = vmatprep.subr.bf16.mxu0 0
        %2232 = vmatpush1.bf16.msra.mxu0 0
        %2233 = vmatprep.subr.bf16.mxu0 0
        %2234 = vmatpush1.bf16.msra.mxu0 0
        %2235 = vmatprep.subr.bf16.mxu0 0
        %2236 = vmatpush1.bf16.msra.mxu0 0
        %2237 = vmatprep.subr.bf16.mxu0 0
        %2238 = vmatpush1.bf16.msra.mxu0 0
        %2239 = vmatprep.subr.bf16.mxu0 0
        %2240 = vmatpush1.bf16.msra.mxu0 0
        %2241 = vmatprep.subr.bf16.mxu0 0
        %2242 = vmatpush1.bf16.msra.mxu0 0
        %2243 = vmatprep.subr.bf16.mxu0 0
        %2244 = vmatpush1.bf16.msra.mxu0 0
        %2245 = vmatprep.subr.bf16.mxu0 0
        %2246 = vmatpush1.bf16.msra.mxu0 0
        %2247 = vmatprep.subr.bf16.mxu0 0
        %2248 = vmatpush1.bf16.msra.mxu0 0
        %2249 = vmatprep.subr.bf16.mxu0 0
        %2250 = vmatpush1.bf16.msra.mxu0 0
        %2251 = vmatprep.mubr.bf16.mxu0 0
        %2252 = vmatmul.mubr.bf16.gmra.mrb[0].mxu0 %v2208
        %v2253 = vpop.f32.mrb[0].mxu0
        %v2254 = vadd.f32 0.0, %v2253
        %v2255 = vpop.f32.mrb[0].mxu0
        %v2256 = vpop.f32.mrb[0].mxu0
        %v2257 = vadd.f32 0.0, %v2256
        %v2258 = vpop.f32.mrb[0].mxu0
        %2259 = vmatprep.mubr.bf16.mxu0 0
        %2260 = vmatmul.mubr.bf16.gmra.mrb[0].mxu0 %v2211
        %v2261 = vpop.f32.mrb[0].mxu0
        %v2262 = vadd.f32 0.0, %v2261
        %v2263 = vpop.f32.mrb[0].mxu0
        %v2264 = vpop.f32.mrb[0].mxu0
        %v2265 = vadd.f32 0.0, %v2264
        %v2266 = vpop.f32.mrb[0].mxu0
        %2267 = vmatprep.mubr.bf16.mxu0 0
        %2268 = vmatmul.mubr.bf16.gmra.mrb[0].mxu0 %v2214
        %v2269 = vpop.f32.mrb[0].mxu0
        %v2270 = vadd.f32 0.0, %v2269
        %v2271 = vpop.f32.mrb[0].mxu0
        %v2272 = vpop.f32.mrb[0].mxu0
        %v2273 = vadd.f32 0.0, %v2272
        %v2274 = vpop.f32.mrb[0].mxu0
        %2275 = vmatprep.mubr.bf16.mxu0 0
        %2276 = vmatmul.mubr.bf16.gmra.mrb[0].mxu0 %v2217
        %v2277 = vpop.f32.mrb[0].mxu0
        %v2278 = vadd.f32 0.0, %v2277
        %v2279 = vpop.f32.mrb[0].mxu0
        %v2280 = vpop.f32.mrb[0].mxu0
        %v2281 = vadd.f32 0.0, %v2280
        %v2282 = vpop.f32.mrb[0].mxu0
        %2283 = vdwg.mxu0
        %v2284 = vld [vmem:[#allocation8] sm:$0xf]
        %v2285 = vld [vmem:[#allocation8 + $0x4] sm:$0xf]
        %v2286 = vld [vmem:[#allocation8 + $0x8] sm:$0xf]
        %v2287 = vld [vmem:[#allocation8 + $0xc] sm:$0xf]
        %v2288 = vld [vmem:[#allocation8 + $0x10] sm:$0xf]
        %v2289 = vld [vmem:[#allocation8 + $0x14] sm:$0xf]
        %v2290 = vld [vmem:[#allocation8 + $0x18] sm:$0xf]
        %v2291 = vld [vmem:[#allocation8 + $0x1c] sm:$0xf]
        %v2300 = vunpack.c.l.b16 %v2284
        %v2301 = vunpack.c.l.b16 %v2285
        %v2302 = vunpack.c.l.b16 %v2286
        %v2303 = vunpack.c.l.b16 %v2287
        %v2304 = vunpack.c.l.b16 %v2288
        %v2305 = vunpack.c.l.b16 %v2289
        %v2306 = vunpack.c.l.b16 %v2290
        %v2307 = vunpack.c.l.b16 %v2291
        %v2308 = vpack.c.b16 %v2301, %v2300
        %v2309 = vpack.c.b16 %v2303, %v2302
        %v2310 = vpack.c.b16 %v2305, %v2304
        %v2311 = vpack.c.b16 %v2307, %v2306
        %v2313 = vsel %vm615, %v2308, 0
        %v2316 = vsel %vm615, %v2309, 0
        %v2319 = vsel %vm615, %v2310, 0
        %v2322 = vsel %vm615, %v2311, 0
        %2324 = vmatprep.subr.bf16.mxu0 0
        %2325 = vmatpush1.bf16.msra.mxu0 %v2175
        %2326 = vmatprep.subr.bf16.mxu0 0
        %2327 = vmatpush1.bf16.msra.mxu0 %v2176
        %2328 = vmatprep.subr.bf16.mxu0 0
        %2329 = vmatpush1.bf16.msra.mxu0 %v2177
        %2330 = vmatprep.subr.bf16.mxu0 0
        %2331 = vmatpush1.bf16.msra.mxu0 %v2178
        %2332 = vmatprep.subr.bf16.mxu0 0
        %2333 = vmatpush1.bf16.msra.mxu0 0
        %2334 = vmatprep.subr.bf16.mxu0 0
        %2335 = vmatpush1.bf16.msra.mxu0 0
        %2336 = vmatprep.subr.bf16.mxu0 0
        %2337 = vmatpush1.bf16.msra.mxu0 0
        %2338 = vmatprep.subr.bf16.mxu0 0
        %2339 = vmatpush1.bf16.msra.mxu0 0
        %2340 = vmatprep.subr.bf16.mxu0 0
        %2341 = vmatpush1.bf16.msra.mxu0 0
        %2342 = vmatprep.subr.bf16.mxu0 0
        %2343 = vmatpush1.bf16.msra.mxu0 0
        %2344 = vmatprep.subr.bf16.mxu0 0
        %2345 = vmatpush1.bf16.msra.mxu0 0
        %2346 = vmatprep.subr.bf16.mxu0 0
        %2347 = vmatpush1.bf16.msra.mxu0 0
        %2348 = vmatprep.subr.bf16.mxu0 0
        %2349 = vmatpush1.bf16.msra.mxu0 0
        %2350 = vmatprep.subr.bf16.mxu0 0
        %2351 = vmatpush1.bf16.msra.mxu0 0
        %2352 = vmatprep.subr.bf16.mxu0 0
        %2353 = vmatpush1.bf16.msra.mxu0 0
        %2354 = vmatprep.subr.bf16.mxu0 0
        %2355 = vmatpush1.bf16.msra.mxu0 0
        %2356 = vmatprep.mubr.bf16.mxu0 0
        %2357 = vmatmul.mubr.bf16.gmra.mrb[0].mxu0 %v2313
        %v2358 = vpop.f32.mrb[0].mxu0
        %v2359 = vadd.f32 0.0, %v2358
        %v2360 = vpop.f32.mrb[0].mxu0
        %v2361 = vpop.f32.mrb[0].mxu0
        %v2362 = vadd.f32 0.0, %v2361
        %v2363 = vpop.f32.mrb[0].mxu0
        %2364 = vmatprep.mubr.bf16.mxu0 0
        %2365 = vmatmul.mubr.bf16.gmra.mrb[0].mxu0 %v2316
        %v2366 = vpop.f32.mrb[0].mxu0
        %v2367 = vadd.f32 0.0, %v2366
        %v2368 = vpop.f32.mrb[0].mxu0
        %v2369 = vpop.f32.mrb[0].mxu0
        %v2370 = vadd.f32 0.0, %v2369
        %v2371 = vpop.f32.mrb[0].mxu0
        %2372 = vmatprep.mubr.bf16.mxu0 0
        %2373 = vmatmul.mubr.bf16.gmra.mrb[0].mxu0 %v2319
        %v2374 = vpop.f32.mrb[0].mxu0
        %v2375 = vadd.f32 0.0, %v2374
        %v2376 = vpop.f32.mrb[0].mxu0
        %v2377 = vpop.f32.mrb[0].mxu0
        %v2378 = vadd.f32 0.0, %v2377
        %v2379 = vpop.f32.mrb[0].mxu0
        %2380 = vmatprep.mubr.bf16.mxu0 0
        %2381 = vmatmul.mubr.bf16.gmra.mrb[0].mxu0 %v2322
        %v2382 = vpop.f32.mrb[0].mxu0
        %v2383 = vadd.f32 0.0, %v2382
        %v2384 = vpop.f32.mrb[0].mxu0
        %v2385 = vpop.f32.mrb[0].mxu0
        %v2386 = vadd.f32 0.0, %v2385
        %v2387 = vpop.f32.mrb[0].mxu0
        %2388 = vdwg.mxu0
        %v2389 = vsub.f32 %v2254, %v2359
        %v2390 = vsub.f32 %v2257, %v2362
        %v2391 = vsub.f32 %v2262, %v2367
        %v2392 = vsub.f32 %v2265, %v2370
        %v2393 = vsub.f32 %v2270, %v2375
        %v2394 = vsub.f32 %v2273, %v2378
        %v2395 = vsub.f32 %v2278, %v2383
        %v2396 = vsub.f32 %v2281, %v2386
        %2397 = vmatprep.subr.bf16.mxu0 0
        %2398 = vmatpush1.bf16.msra.mxu0 %v2171
        %2399 = vmatprep.subr.bf16.mxu0 0
        %2400 = vmatpush1.bf16.msra.mxu0 %v2172
        %2401 = vmatprep.subr.bf16.mxu0 0
        %2402 = vmatpush1.bf16.msra.mxu0 %v2173
        %2403 = vmatprep.subr.bf16.mxu0 0
        %2404 = vmatpush1.bf16.msra.mxu0 %v2174
        %2405 = vmatprep.subr.bf16.mxu0 0
        %2406 = vmatpush1.bf16.msra.mxu0 0
        %2407 = vmatprep.subr.bf16.mxu0 0
        %2408 = vmatpush1.bf16.msra.mxu0 0
        %2409 = vmatprep.subr.bf16.mxu0 0
        %2410 = vmatpush1.bf16.msra.mxu0 0
        %2411 = vmatprep.subr.bf16.mxu0 0
        %2412 = vmatpush1.bf16.msra.mxu0 0
        %2413 = vmatprep.subr.bf16.mxu0 0
        %2414 = vmatpush1.bf16.msra.mxu0 0
        %2415 = vmatprep.subr.bf16.mxu0 0
        %2416 = vmatpush1.bf16.msra.mxu0 0
        %2417 = vmatprep.subr.bf16.mxu0 0
        %2418 = vmatpush1.bf16.msra.mxu0 0
        %2419 = vmatprep.subr.bf16.mxu0 0
        %2420 = vmatpush1.bf16.msra.mxu0 0
        %2421 = vmatprep.subr.bf16.mxu0 0
        %2422 = vmatpush1.bf16.msra.mxu0 0
        %2423 = vmatprep.subr.bf16.mxu0 0
        %2424 = vmatpush1.bf16.msra.mxu0 0
        %2425 = vmatprep.subr.bf16.mxu0 0
        %2426 = vmatpush1.bf16.msra.mxu0 0
        %2427 = vmatprep.subr.bf16.mxu0 0
        %2428 = vmatpush1.bf16.msra.mxu0 0
        %2429 = vmatprep.mubr.bf16.mxu0 0
        %2430 = vmatmul.mubr.bf16.gmra.mrb[0].mxu0 %v2313
        %v2431 = vpop.f32.mrb[0].mxu0
        %v2432 = vadd.f32 0.0, %v2431
        %v2433 = vpop.f32.mrb[0].mxu0
        %v2434 = vpop.f32.mrb[0].mxu0
        %v2435 = vadd.f32 0.0, %v2434
        %v2436 = vpop.f32.mrb[0].mxu0
        %2437 = vmatprep.mubr.bf16.mxu0 0
        %2438 = vmatmul.mubr.bf16.gmra.mrb[0].mxu0 %v2316
        %v2439 = vpop.f32.mrb[0].mxu0
        %v2440 = vadd.f32 0.0, %v2439
        %v2441 = vpop.f32.mrb[0].mxu0
        %v2442 = vpop.f32.mrb[0].mxu0
        %v2443 = vadd.f32 0.0, %v2442
        %v2444 = vpop.f32.mrb[0].mxu0
        %2445 = vmatprep.mubr.bf16.mxu0 0
        %2446 = vmatmul.mubr.bf16.gmra.mrb[0].mxu0 %v2319
        %v2447 = vpop.f32.mrb[0].mxu0
        %v2448 = vadd.f32 0.0, %v2447
        %v2449 = vpop.f32.mrb[0].mxu0
        %v2450 = vpop.f32.mrb[0].mxu0
        %v2451 = vadd.f32 0.0, %v2450
        %v2452 = vpop.f32.mrb[0].mxu0
        %2453 = vmatprep.mubr.bf16.mxu0 0
        %2454 = vmatmul.mubr.bf16.gmra.mrb[0].mxu0 %v2322
        %v2455 = vpop.f32.mrb[0].mxu0
        %v2456 = vadd.f32 0.0, %v2455
        %v2457 = vpop.f32.mrb[0].mxu0
        %v2458 = vpop.f32.mrb[0].mxu0
        %v2459 = vadd.f32 0.0, %v2458
        %v2460 = vpop.f32.mrb[0].mxu0
        %2461 = vdwg.mxu0
        %2462 = vmatprep.subr.bf16.mxu0 0
        %2463 = vmatpush1.bf16.msra.mxu0 %v2175
        %2464 = vmatprep.subr.bf16.mxu0 0
        %2465 = vmatpush1.bf16.msra.mxu0 %v2176
        %2466 = vmatprep.subr.bf16.mxu0 0
        %2467 = vmatpush1.bf16.msra.mxu0 %v2177
        %2468 = vmatprep.subr.bf16.mxu0 0
        %2469 = vmatpush1.bf16.msra.mxu0 %v2178
        %2470 = vmatprep.subr.bf16.mxu0 0
        %2471 = vmatpush1.bf16.msra.mxu0 0
        %2472 = vmatprep.subr.bf16.mxu0 0
        %2473 = vmatpush1.bf16.msra.mxu0 0
        %2474 = vmatprep.subr.bf16.mxu0 0
        %2475 = vmatpush1.bf16.msra.mxu0 0
        %2476 = vmatprep.subr.bf16.mxu0 0
        %2477 = vmatpush1.bf16.msra.mxu0 0
        %2478 = vmatprep.subr.bf16.mxu0 0
        %2479 = vmatpush1.bf16.msra.mxu0 0
        %2480 = vmatprep.subr.bf16.mxu0 0
        %2481 = vmatpush1.bf16.msra.mxu0 0
        %2482 = vmatprep.subr.bf16.mxu0 0
        %2483 = vmatpush1.bf16.msra.mxu0 0
        %2484 = vmatprep.subr.bf16.mxu0 0
        %2485 = vmatpush1.bf16.msra.mxu0 0
        %2486 = vmatprep.subr.bf16.mxu0 0
        %2487 = vmatpush1.bf16.msra.mxu0 0
        %2488 = vmatprep.subr.bf16.mxu0 0
        %2489 = vmatpush1.bf16.msra.mxu0 0
        %2490 = vmatprep.subr.bf16.mxu0 0
        %2491 = vmatpush1.bf16.msra.mxu0 0
        %2492 = vmatprep.subr.bf16.mxu0 0
        %2493 = vmatpush1.bf16.msra.mxu0 0
        %2494 = vmatprep.mubr.bf16.mxu0 0
        %2495 = vmatmul.mubr.bf16.gmra.mrb[0].mxu0 %v2208
        %v2496 = vpop.f32.mrb[0].mxu0
        %v2497 = vadd.f32 %v2432, %v2496
        %v2498 = vpop.f32.mrb[0].mxu0
        %v2499 = vpop.f32.mrb[0].mxu0
        %v2500 = vadd.f32 %v2435, %v2499
        %v2501 = vpop.f32.mrb[0].mxu0
        %2502 = vmatprep.mubr.bf16.mxu0 0
        %2503 = vmatmul.mubr.bf16.gmra.mrb[0].mxu0 %v2211
        %v2504 = vpop.f32.mrb[0].mxu0
        %v2505 = vadd.f32 %v2440, %v2504
        %v2506 = vpop.f32.mrb[0].mxu0
        %v2507 = vpop.f32.mrb[0].mxu0
        %v2508 = vadd.f32 %v2443, %v2507
        %v2509 = vpop.f32.mrb[0].mxu0
        %2510 = vmatprep.mubr.bf16.mxu0 0
        %2511 = vmatmul.mubr.bf16.gmra.mrb[0].mxu0 %v2214
        %v2512 = vpop.f32.mrb[0].mxu0
        %v2513 = vadd.f32 %v2448, %v2512
        %v2514 = vpop.f32.mrb[0].mxu0
        %v2515 = vpop.f32.mrb[0].mxu0
        %v2516 = vadd.f32 %v2451, %v2515
        %v2517 = vpop.f32.mrb[0].mxu0
        %2518 = vmatprep.mubr.bf16.mxu0 0
        %2519 = vmatmul.mubr.bf16.gmra.mrb[0].mxu0 %v2217
        %v2520 = vpop.f32.mrb[0].mxu0
        %v2521 = vadd.f32 %v2456, %v2520
        %v2522 = vpop.f32.mrb[0].mxu0
        %v2523 = vpop.f32.mrb[0].mxu0
        %v2524 = vadd.f32 %v2459, %v2523
        %v2525 = vpop.f32.mrb[0].mxu0
        %2526 = vdwg.mxu0
        %v2527 = vpack.c.bf16 %v2390, %v2389
        %v2528 = vpack.c.bf16 %v2392, %v2391
        %v2529 = vpack.c.bf16 %v2394, %v2393
        %v2530 = vpack.c.bf16 %v2396, %v2395
        %v2531 = vpack.c.bf16 %v2500, %v2497
        %v2532 = vpack.c.bf16 %v2508, %v2505
        %v2533 = vpack.c.bf16 %v2516, %v2513
        %v2534 = vpack.c.bf16 %v2524, %v2521
        %v2540 = vsel %vm615, %v2527, 0
        %v2543 = vsel %vm615, %v2528, 0
        %v2546 = vsel %vm615, %v2529, 0
        %v2549 = vsel %vm615, %v2530, 0
        %2551 = vmatprep.subr.bf16.mxu0 0
        %2552 = vmatpush1.bf16.msra.mxu0 %v2203
        %2553 = vmatprep.subr.bf16.mxu0 0
        %2554 = vmatpush1.bf16.msra.mxu0 %v2204
        %2555 = vmatprep.subr.bf16.mxu0 0
        %2556 = vmatpush1.bf16.msra.mxu0 %v2205
        %2557 = vmatprep.subr.bf16.mxu0 0
        %2558 = vmatpush1.bf16.msra.mxu0 %v2206
        %2559 = vmatprep.subr.bf16.mxu0 0
        %2560 = vmatpush1.bf16.msra.mxu0 0
        %2561 = vmatprep.subr.bf16.mxu0 0
        %2562 = vmatpush1.bf16.msra.mxu0 0
        %2563 = vmatprep.subr.bf16.mxu0 0
        %2564 = vmatpush1.bf16.msra.mxu0 0
        %2565 = vmatprep.subr.bf16.mxu0 0
        %2566 = vmatpush1.bf16.msra.mxu0 0
        %2567 = vmatprep.subr.bf16.mxu0 0
        %2568 = vmatpush1.bf16.msra.mxu0 0
        %2569 = vmatprep.subr.bf16.mxu0 0
        %2570 = vmatpush1.bf16.msra.mxu0 0
        %2571 = vmatprep.subr.bf16.mxu0 0
        %2572 = vmatpush1.bf16.msra.mxu0 0
        %2573 = vmatprep.subr.bf16.mxu0 0
        %2574 = vmatpush1.bf16.msra.mxu0 0
        %2575 = vmatprep.subr.bf16.mxu0 0
        %2576 = vmatpush1.bf16.msra.mxu0 0
        %2577 = vmatprep.subr.bf16.mxu0 0
        %2578 = vmatpush1.bf16.msra.mxu0 0
        %2579 = vmatprep.subr.bf16.mxu0 0
        %2580 = vmatpush1.bf16.msra.mxu0 0
        %2581 = vmatprep.subr.bf16.mxu0 0
        %2582 = vmatpush1.bf16.msra.mxu0 0
        %2583 = vmatprep.mubr.bf16.mxu0 0
        %2584 = vmatmul.mubr.bf16.gmra.mrb[0].mxu0 %v2540
        %v2585 = vpop.f32.mrb[0].mxu0
        %v2586 = vadd.f32 0.0, %v2585
        %v2587 = vpop.f32.mrb[0].mxu0
        %v2588 = vpop.f32.mrb[0].mxu0
        %v2589 = vadd.f32 0.0, %v2588
        %v2590 = vpop.f32.mrb[0].mxu0
        %2591 = vmatprep.mubr.bf16.mxu0 0
        %2592 = vmatmul.mubr.bf16.gmra.mrb[0].mxu0 %v2543
        %v2593 = vpop.f32.mrb[0].mxu0
        %v2594 = vadd.f32 0.0, %v2593
        %v2595 = vpop.f32.mrb[0].mxu0
        %v2596 = vpop.f32.mrb[0].mxu0
        %v2597 = vadd.f32 0.0, %v2596
        %v2598 = vpop.f32.mrb[0].mxu0
        %2599 = vmatprep.mubr.bf16.mxu0 0
        %2600 = vmatmul.mubr.bf16.gmra.mrb[0].mxu0 %v2546
        %v2601 = vpop.f32.mrb[0].mxu0
        %v2602 = vadd.f32 0.0, %v2601
        %v2603 = vpop.f32.mrb[0].mxu0
        %v2604 = vpop.f32.mrb[0].mxu0
        %v2605 = vadd.f32 0.0, %v2604
        %v2606 = vpop.f32.mrb[0].mxu0
        %2607 = vmatprep.mubr.bf16.mxu0 0
        %2608 = vmatmul.mubr.bf16.gmra.mrb[0].mxu0 %v2549
        %v2609 = vpop.f32.mrb[0].mxu0
        %v2610 = vadd.f32 0.0, %v2609
        %v2611 = vpop.f32.mrb[0].mxu0
        %v2612 = vpop.f32.mrb[0].mxu0
        %v2613 = vadd.f32 0.0, %v2612
        %v2614 = vpop.f32.mrb[0].mxu0
        %2615 = vdwg.mxu0
        %v2621 = vsel %vm615, %v2531, 0
        %v2624 = vsel %vm615, %v2532, 0
        %v2627 = vsel %vm615, %v2533, 0
        %v2630 = vsel %vm615, %v2534, 0
        %2632 = vmatprep.subr.bf16.mxu0 0
        %2633 = vmatpush1.bf16.msra.mxu0 %v2308
        %2634 = vmatprep.subr.bf16.mxu0 0
        %2635 = vmatpush1.bf16.msra.mxu0 %v2309
        %2636 = vmatprep.subr.bf16.mxu0 0
        %2637 = vmatpush1.bf16.msra.mxu0 %v2310
        %2638 = vmatprep.subr.bf16.mxu0 0
        %2639 = vmatpush1.bf16.msra.mxu0 %v2311
        %2640 = vmatprep.subr.bf16.mxu0 0
        %2641 = vmatpush1.bf16.msra.mxu0 0
        %2642 = vmatprep.subr.bf16.mxu0 0
        %2643 = vmatpush1.bf16.msra.mxu0 0
        %2644 = vmatprep.subr.bf16.mxu0 0
        %2645 = vmatpush1.bf16.msra.mxu0 0
        %2646 = vmatprep.subr.bf16.mxu0 0
        %2647 = vmatpush1.bf16.msra.mxu0 0
        %2648 = vmatprep.subr.bf16.mxu0 0
        %2649 = vmatpush1.bf16.msra.mxu0 0
        %2650 = vmatprep.subr.bf16.mxu0 0
        %2651 = vmatpush1.bf16.msra.mxu0 0
        %2652 = vmatprep.subr.bf16.mxu0 0
        %2653 = vmatpush1.bf16.msra.mxu0 0
        %2654 = vmatprep.subr.bf16.mxu0 0
        %2655 = vmatpush1.bf16.msra.mxu0 0
        %2656 = vmatprep.subr.bf16.mxu0 0
        %2657 = vmatpush1.bf16.msra.mxu0 0
        %2658 = vmatprep.subr.bf16.mxu0 0
        %2659 = vmatpush1.bf16.msra.mxu0 0
        %2660 = vmatprep.subr.bf16.mxu0 0
        %2661 = vmatpush1.bf16.msra.mxu0 0
        %2662 = vmatprep.subr.bf16.mxu0 0
        %2663 = vmatpush1.bf16.msra.mxu0 0
        %2664 = vmatprep.mubr.bf16.mxu0 0
        %2665 = vmatmul.mubr.bf16.gmra.mrb[0].mxu0 %v2621
        %v2666 = vpop.f32.mrb[0].mxu0
        %v2667 = vadd.f32 0.0, %v2666
        %v2668 = vpop.f32.mrb[0].mxu0
        %v2669 = vpop.f32.mrb[0].mxu0
        %v2670 = vadd.f32 0.0, %v2669
        %v2671 = vpop.f32.mrb[0].mxu0
        %2672 = vmatprep.mubr.bf16.mxu0 0
        %2673 = vmatmul.mubr.bf16.gmra.mrb[0].mxu0 %v2624
        %v2674 = vpop.f32.mrb[0].mxu0
        %v2675 = vadd.f32 0.0, %v2674
        %v2676 = vpop.f32.mrb[0].mxu0
        %v2677 = vpop.f32.mrb[0].mxu0
        %v2678 = vadd.f32 0.0, %v2677
        %v2679 = vpop.f32.mrb[0].mxu0
        %2680 = vmatprep.mubr.bf16.mxu0 0
        %2681 = vmatmul.mubr.bf16.gmra.mrb[0].mxu0 %v2627
        %v2682 = vpop.f32.mrb[0].mxu0
        %v2683 = vadd.f32 0.0, %v2682
        %v2684 = vpop.f32.mrb[0].mxu0
        %v2685 = vpop.f32.mrb[0].mxu0
        %v2686 = vadd.f32 0.0, %v2685
        %v2687 = vpop.f32.mrb[0].mxu0
        %2688 = vmatprep.mubr.bf16.mxu0 0
        %2689 = vmatmul.mubr.bf16.gmra.mrb[0].mxu0 %v2630
        %v2690 = vpop.f32.mrb[0].mxu0
        %v2691 = vadd.f32 0.0, %v2690
        %v2692 = vpop.f32.mrb[0].mxu0
        %v2693 = vpop.f32.mrb[0].mxu0
        %v2694 = vadd.f32 0.0, %v2693
        %v2695 = vpop.f32.mrb[0].mxu0
        %2696 = vdwg.mxu0
        %v2697 = vsub.f32 %v2586, %v2667
        %v2698 = vsub.f32 %v2589, %v2670
        %v2699 = vsub.f32 %v2594, %v2675
        %v2700 = vsub.f32 %v2597, %v2678
        %v2701 = vsub.f32 %v2602, %v2683
        %v2702 = vsub.f32 %v2605, %v2686
        %v2703 = vsub.f32 %v2610, %v2691
        %v2704 = vsub.f32 %v2613, %v2694
        %2705 = vmatprep.subr.bf16.mxu0 0
        %2706 = vmatpush1.bf16.msra.mxu0 %v2203
        %2707 = vmatprep.subr.bf16.mxu0 0
        %2708 = vmatpush1.bf16.msra.mxu0 %v2204
        %2709 = vmatprep.subr.bf16.mxu0 0
        %2710 = vmatpush1.bf16.msra.mxu0 %v2205
        %2711 = vmatprep.subr.bf16.mxu0 0
        %2712 = vmatpush1.bf16.msra.mxu0 %v2206
        %2713 = vmatprep.subr.bf16.mxu0 0
        %2714 = vmatpush1.bf16.msra.mxu0 0
        %2715 = vmatprep.subr.bf16.mxu0 0
        %2716 = vmatpush1.bf16.msra.mxu0 0
        %2717 = vmatprep.subr.bf16.mxu0 0
        %2718 = vmatpush1.bf16.msra.mxu0 0
        %2719 = vmatprep.subr.bf16.mxu0 0
        %2720 = vmatpush1.bf16.msra.mxu0 0
        %2721 = vmatprep.subr.bf16.mxu0 0
        %2722 = vmatpush1.bf16.msra.mxu0 0
        %2723 = vmatprep.subr.bf16.mxu0 0
        %2724 = vmatpush1.bf16.msra.mxu0 0
        %2725 = vmatprep.subr.bf16.mxu0 0
        %2726 = vmatpush1.bf16.msra.mxu0 0
        %2727 = vmatprep.subr.bf16.mxu0 0
        %2728 = vmatpush1.bf16.msra.mxu0 0
        %2729 = vmatprep.subr.bf16.mxu0 0
        %2730 = vmatpush1.bf16.msra.mxu0 0
        %2731 = vmatprep.subr.bf16.mxu0 0
        %2732 = vmatpush1.bf16.msra.mxu0 0
        %2733 = vmatprep.subr.bf16.mxu0 0
        %2734 = vmatpush1.bf16.msra.mxu0 0
        %2735 = vmatprep.subr.bf16.mxu0 0
        %2736 = vmatpush1.bf16.msra.mxu0 0
        %2737 = vmatprep.mubr.bf16.mxu0 0
        %2738 = vmatmul.mubr.bf16.gmra.mrb[0].mxu0 %v2621
        %v2739 = vpop.f32.mrb[0].mxu0
        %v2740 = vadd.f32 0.0, %v2739
        %v2741 = vpop.f32.mrb[0].mxu0
        %v2742 = vpop.f32.mrb[0].mxu0
        %v2743 = vadd.f32 0.0, %v2742
        %v2744 = vpop.f32.mrb[0].mxu0
        %2745 = vmatprep.mubr.bf16.mxu0 0
        %2746 = vmatmul.mubr.bf16.gmra.mrb[0].mxu0 %v2624
        %v2747 = vpop.f32.mrb[0].mxu0
        %v2748 = vadd.f32 0.0, %v2747
        %v2749 = vpop.f32.mrb[0].mxu0
        %v2750 = vpop.f32.mrb[0].mxu0
        %v2751 = vadd.f32 0.0, %v2750
        %v2752 = vpop.f32.mrb[0].mxu0
        %2753 = vmatprep.mubr.bf16.mxu0 0
        %2754 = vmatmul.mubr.bf16.gmra.mrb[0].mxu0 %v2627
        %v2755 = vpop.f32.mrb[0].mxu0
        %v2756 = vadd.f32 0.0, %v2755
        %v2757 = vpop.f32.mrb[0].mxu0
        %v2758 = vpop.f32.mrb[0].mxu0
        %v2759 = vadd.f32 0.0, %v2758
        %v2760 = vpop.f32.mrb[0].mxu0
        %2761 = vmatprep.mubr.bf16.mxu0 0
        %2762 = vmatmul.mubr.bf16.gmra.mrb[0].mxu0 %v2630
        %v2763 = vpop.f32.mrb[0].mxu0
        %v2764 = vadd.f32 0.0, %v2763
        %v2765 = vpop.f32.mrb[0].mxu0
        %v2766 = vpop.f32.mrb[0].mxu0
        %v2767 = vadd.f32 0.0, %v2766
        %v2768 = vpop.f32.mrb[0].mxu0
        %2769 = vdwg.mxu0
        %2770 = vmatprep.subr.bf16.mxu0 0
        %2771 = vmatpush1.bf16.msra.mxu0 %v2308
        %2772 = vmatprep.subr.bf16.mxu0 0
        %2773 = vmatpush1.bf16.msra.mxu0 %v2309
        %2774 = vmatprep.subr.bf16.mxu0 0
        %2775 = vmatpush1.bf16.msra.mxu0 %v2310
        %2776 = vmatprep.subr.bf16.mxu0 0
        %2777 = vmatpush1.bf16.msra.mxu0 %v2311
        %2778 = vmatprep.subr.bf16.mxu0 0
        %2779 = vmatpush1.bf16.msra.mxu0 0
        %2780 = vmatprep.subr.bf16.mxu0 0
        %2781 = vmatpush1.bf16.msra.mxu0 0
        %2782 = vmatprep.subr.bf16.mxu0 0
        %2783 = vmatpush1.bf16.msra.mxu0 0
        %2784 = vmatprep.subr.bf16.mxu0 0
        %2785 = vmatpush1.bf16.msra.mxu0 0
        %2786 = vmatprep.subr.bf16.mxu0 0
        %2787 = vmatpush1.bf16.msra.mxu0 0
        %2788 = vmatprep.subr.bf16.mxu0 0
        %2789 = vmatpush1.bf16.msra.mxu0 0
        %2790 = vmatprep.subr.bf16.mxu0 0
        %2791 = vmatpush1.bf16.msra.mxu0 0
        %2792 = vmatprep.subr.bf16.mxu0 0
        %2793 = vmatpush1.bf16.msra.mxu0 0
        %2794 = vmatprep.subr.bf16.mxu0 0
        %2795 = vmatpush1.bf16.msra.mxu0 0
        %2796 = vmatprep.subr.bf16.mxu0 0
        %2797 = vmatpush1.bf16.msra.mxu0 0
        %2798 = vmatprep.subr.bf16.mxu0 0
        %2799 = vmatpush1.bf16.msra.mxu0 0
        %2800 = vmatprep.subr.bf16.mxu0 0
        %2801 = vmatpush1.bf16.msra.mxu0 0
        %2802 = vmatprep.mubr.bf16.mxu0 0
        %2803 = vmatmul.mubr.bf16.gmra.mrb[0].mxu0 %v2540
        %v2804 = vpop.f32.mrb[0].mxu0
        %v2805 = vadd.f32 %v2740, %v2804
        %v2806 = vpop.f32.mrb[0].mxu0
        %v2807 = vpop.f32.mrb[0].mxu0
        %v2808 = vadd.f32 %v2743, %v2807
        %v2809 = vpop.f32.mrb[0].mxu0
        %2810 = vmatprep.mubr.bf16.mxu0 0
        %2811 = vmatmul.mubr.bf16.gmra.mrb[0].mxu0 %v2543
        %v2812 = vpop.f32.mrb[0].mxu0
        %v2813 = vadd.f32 %v2748, %v2812
        %v2814 = vpop.f32.mrb[0].mxu0
        %v2815 = vpop.f32.mrb[0].mxu0
        %v2816 = vadd.f32 %v2751, %v2815
        %v2817 = vpop.f32.mrb[0].mxu0
        %2818 = vmatprep.mubr.bf16.mxu0 0
        %2819 = vmatmul.mubr.bf16.gmra.mrb[0].mxu0 %v2546
        %v2820 = vpop.f32.mrb[0].mxu0
        %v2821 = vadd.f32 %v2756, %v2820
        %v2822 = vpop.f32.mrb[0].mxu0
        %v2823 = vpop.f32.mrb[0].mxu0
        %v2824 = vadd.f32 %v2759, %v2823
        %v2825 = vpop.f32.mrb[0].mxu0
        %2826 = vmatprep.mubr.bf16.mxu0 0
        %2827 = vmatmul.mubr.bf16.gmra.mrb[0].mxu0 %v2549
        %v2828 = vpop.f32.mrb[0].mxu0
        %v2829 = vadd.f32 %v2764, %v2828
        %v2830 = vpop.f32.mrb[0].mxu0
        %v2831 = vpop.f32.mrb[0].mxu0
        %v2832 = vadd.f32 %v2767, %v2831
        %v2833 = vpop.f32.mrb[0].mxu0
        %2834 = vdwg.mxu0
        %v2835 = vld [vmem:[#allocation13] sm:$0xff]
        %v2836 = vld [vmem:[#allocation13 + $0x8] sm:$0xff]
        %v2837 = vld [vmem:[#allocation13 + $0x10] sm:$0xff]
        %v2838 = vld [vmem:[#allocation13 + $0x18] sm:$0xff]
        %v2839 = vld [vmem:[#allocation13 + $0x20] sm:$0xff]
        %v2840 = vld [vmem:[#allocation13 + $0x28] sm:$0xff]
        %v2841 = vld [vmem:[#allocation13 + $0x30] sm:$0xff]
        %v2842 = vld [vmem:[#allocation13 + $0x38] sm:$0xff]
        %v2843 = vld [vmem:[#allocation14] sm:$0xff]
        %v2844 = vld [vmem:[#allocation14 + $0x8] sm:$0xff]
        %v2845 = vld [vmem:[#allocation14 + $0x10] sm:$0xff]
        %v2846 = vld [vmem:[#allocation14 + $0x18] sm:$0xff]
        %v2847 = vld [vmem:[#allocation14 + $0x20] sm:$0xff]
        %v2848 = vld [vmem:[#allocation14 + $0x28] sm:$0xff]
        %v2849 = vld [vmem:[#allocation14 + $0x30] sm:$0xff]
        %v2850 = vld [vmem:[#allocation14 + $0x38] sm:$0xff]
        %v2851 = vmul.f32 %v2697, %v2835
        %v2852 = vmul.f32 %v2698, %v2836
        %v2853 = vmul.f32 %v2699, %v2837
        %v2854 = vmul.f32 %v2700, %v2838
        %v2855 = vmul.f32 %v2701, %v2839
        %v2856 = vmul.f32 %v2702, %v2840
        %v2857 = vmul.f32 %v2703, %v2841
        %v2858 = vmul.f32 %v2704, %v2842
        %v2859 = vmul.f32 %v2805, %v2843
        %v2860 = vmul.f32 %v2808, %v2844
        %v2861 = vmul.f32 %v2813, %v2845
        %v2862 = vmul.f32 %v2816, %v2846
        %v2863 = vmul.f32 %v2821, %v2847
        %v2864 = vmul.f32 %v2824, %v2848
        %v2865 = vmul.f32 %v2829, %v2849
        %v2866 = vmul.f32 %v2832, %v2850
        %v2867 = vsub.f32 %v2851, %v2859
        %v2868 = vsub.f32 %v2852, %v2860
        %v2869 = vsub.f32 %v2853, %v2861
        %v2870 = vsub.f32 %v2854, %v2862
        %v2871 = vsub.f32 %v2855, %v2863
        %v2872 = vsub.f32 %v2856, %v2864
        %v2873 = vsub.f32 %v2857, %v2865
        %v2874 = vsub.f32 %v2858, %v2866
        %v2875 = vmul.f32 %v2697, %v2843
        %v2876 = vmul.f32 %v2698, %v2844
        %v2877 = vmul.f32 %v2699, %v2845
        %v2878 = vmul.f32 %v2700, %v2846
        %v2879 = vmul.f32 %v2701, %v2847
        %v2880 = vmul.f32 %v2702, %v2848
        %v2881 = vmul.f32 %v2703, %v2849
        %v2882 = vmul.f32 %v2704, %v2850
        %v2883 = vmul.f32 %v2805, %v2835
        %v2884 = vmul.f32 %v2808, %v2836
        %v2885 = vmul.f32 %v2813, %v2837
        %v2886 = vmul.f32 %v2816, %v2838
        %v2887 = vmul.f32 %v2821, %v2839
        %v2888 = vmul.f32 %v2824, %v2840
        %v2889 = vmul.f32 %v2829, %v2841
        %v2890 = vmul.f32 %v2832, %v2842
        %v2891 = vadd.f32 %v2875, %v2883
        %v2892 = vadd.f32 %v2876, %v2884
        %v2893 = vadd.f32 %v2877, %v2885
        %v2894 = vadd.f32 %v2878, %v2886
        %v2895 = vadd.f32 %v2879, %v2887
        %v2896 = vadd.f32 %v2880, %v2888
        %v2897 = vadd.f32 %v2881, %v2889
        %v2898 = vadd.f32 %v2882, %v2890
        %v2899 = vpack.c.bf16 %v2868, %v2867
        %v2900 = vpack.c.bf16 %v2870, %v2869
        %v2901 = vpack.c.bf16 %v2872, %v2871
        %v2902 = vpack.c.bf16 %v2874, %v2873
        %v2903 = vpack.c.bf16 %v2892, %v2891
        %v2904 = vpack.c.bf16 %v2894, %v2893
        %v2905 = vpack.c.bf16 %v2896, %v2895
        %v2906 = vpack.c.bf16 %v2898, %v2897
        %v2907 = vld [vmem:[#allocation10] sm:$0xf]
        %v2908 = vld [vmem:[#allocation10 + $0x4] sm:$0xf]
        %v2909 = vld [vmem:[#allocation10 + $0x8] sm:$0xf]
        %v2910 = vld [vmem:[#allocation10 + $0xc] sm:$0xf]
        %v2911 = vld [vmem:[#allocation10 + $0x10] sm:$0xf]
        %v2912 = vld [vmem:[#allocation10 + $0x14] sm:$0xf]
        %v2913 = vld [vmem:[#allocation10 + $0x18] sm:$0xf]
        %v2914 = vld [vmem:[#allocation10 + $0x1c] sm:$0xf]
        %v2923 = vunpack.c.l.b16 %v2907
        %v2924 = vunpack.c.l.b16 %v2908
        %v2925 = vunpack.c.l.b16 %v2909
        %v2926 = vunpack.c.l.b16 %v2910
        %v2927 = vunpack.c.l.b16 %v2911
        %v2928 = vunpack.c.l.b16 %v2912
        %v2929 = vunpack.c.l.b16 %v2913
        %v2930 = vunpack.c.l.b16 %v2914
        %v2931 = vpack.c.b16 %v2924, %v2923
        %v2932 = vpack.c.b16 %v2926, %v2925
        %v2933 = vpack.c.b16 %v2928, %v2927
        %v2934 = vpack.c.b16 %v2930, %v2929
        %v2936 = vsel %vm615, %v2931, 0
        %v2939 = vsel %vm615, %v2932, 0
        %v2942 = vsel %vm615, %v2933, 0
        %v2945 = vsel %vm615, %v2934, 0
        %2947 = vmatprep.subr.bf16.mxu0 0
        %2948 = vmatpush1.bf16.msra.mxu0 %v2899
        %2949 = vmatprep.subr.bf16.mxu0 0
        %2950 = vmatpush1.bf16.msra.mxu0 %v2900
        %2951 = vmatprep.subr.bf16.mxu0 0
        %2952 = vmatpush1.bf16.msra.mxu0 %v2901
        %2953 = vmatprep.subr.bf16.mxu0 0
        %2954 = vmatpush1.bf16.msra.mxu0 %v2902
        %2955 = vmatprep.subr.bf16.mxu0 0
        %2956 = vmatpush1.bf16.msra.mxu0 0
        %2957 = vmatprep.subr.bf16.mxu0 0
        %2958 = vmatpush1.bf16.msra.mxu0 0
        %2959 = vmatprep.subr.bf16.mxu0 0
        %2960 = vmatpush1.bf16.msra.mxu0 0
        %2961 = vmatprep.subr.bf16.mxu0 0
        %2962 = vmatpush1.bf16.msra.mxu0 0
        %2963 = vmatprep.subr.bf16.mxu0 0
        %2964 = vmatpush1.bf16.msra.mxu0 0
        %2965 = vmatprep.subr.bf16.mxu0 0
        %2966 = vmatpush1.bf16.msra.mxu0 0
        %2967 = vmatprep.subr.bf16.mxu0 0
        %2968 = vmatpush1.bf16.msra.mxu0 0
        %2969 = vmatprep.subr.bf16.mxu0 0
        %2970 = vmatpush1.bf16.msra.mxu0 0
        %2971 = vmatprep.subr.bf16.mxu0 0
        %2972 = vmatpush1.bf16.msra.mxu0 0
        %2973 = vmatprep.subr.bf16.mxu0 0
        %2974 = vmatpush1.bf16.msra.mxu0 0
        %2975 = vmatprep.subr.bf16.mxu0 0
        %2976 = vmatpush1.bf16.msra.mxu0 0
        %2977 = vmatprep.subr.bf16.mxu0 0
        %2978 = vmatpush1.bf16.msra.mxu0 0
        %2979 = vmatprep.mubr.bf16.mxu0 0
        %2980 = vmatmul.mubr.bf16.gmra.mrb[0].mxu0 %v2936
        %v2981 = vpop.f32.mrb[0].mxu0
        %v2982 = vadd.f32 0.0, %v2981
        %v2983 = vpop.f32.mrb[0].mxu0
        %v2984 = vpop.f32.mrb[0].mxu0
        %v2985 = vadd.f32 0.0, %v2984
        %v2986 = vpop.f32.mrb[0].mxu0
        %2987 = vmatprep.mubr.bf16.mxu0 0
        %2988 = vmatmul.mubr.bf16.gmra.mrb[0].mxu0 %v2939
        %v2989 = vpop.f32.mrb[0].mxu0
        %v2990 = vadd.f32 0.0, %v2989
        %v2991 = vpop.f32.mrb[0].mxu0
        %v2992 = vpop.f32.mrb[0].mxu0
        %v2993 = vadd.f32 0.0, %v2992
        %v2994 = vpop.f32.mrb[0].mxu0
        %2995 = vmatprep.mubr.bf16.mxu0 0
        %2996 = vmatmul.mubr.bf16.gmra.mrb[0].mxu0 %v2942
        %v2997 = vpop.f32.mrb[0].mxu0
        %v2998 = vadd.f32 0.0, %v2997
        %v2999 = vpop.f32.mrb[0].mxu0
        %v3000 = vpop.f32.mrb[0].mxu0
        %v3001 = vadd.f32 0.0, %v3000
        %v3002 = vpop.f32.mrb[0].mxu0
        %3003 = vmatprep.mubr.bf16.mxu0 0
        %3004 = vmatmul.mubr.bf16.gmra.mrb[0].mxu0 %v2945
        %v3005 = vpop.f32.mrb[0].mxu0
        %v3006 = vadd.f32 0.0, %v3005
        %v3007 = vpop.f32.mrb[0].mxu0
        %v3008 = vpop.f32.mrb[0].mxu0
        %v3009 = vadd.f32 0.0, %v3008
        %v3010 = vpop.f32.mrb[0].mxu0
        %3011 = vdwg.mxu0
        %v3012 = vld [vmem:[#allocation11] sm:$0xf]
        %v3013 = vld [vmem:[#allocation11 + $0x4] sm:$0xf]
        %v3014 = vld [vmem:[#allocation11 + $0x8] sm:$0xf]
        %v3015 = vld [vmem:[#allocation11 + $0xc] sm:$0xf]
        %v3016 = vld [vmem:[#allocation11 + $0x10] sm:$0xf]
        %v3017 = vld [vmem:[#allocation11 + $0x14] sm:$0xf]
        %v3018 = vld [vmem:[#allocation11 + $0x18] sm:$0xf]
        %v3019 = vld [vmem:[#allocation11 + $0x1c] sm:$0xf]
        %v3028 = vunpack.c.l.b16 %v3012
        %v3029 = vunpack.c.l.b16 %v3013
        %v3030 = vunpack.c.l.b16 %v3014
        %v3031 = vunpack.c.l.b16 %v3015
        %v3032 = vunpack.c.l.b16 %v3016
        %v3033 = vunpack.c.l.b16 %v3017
        %v3034 = vunpack.c.l.b16 %v3018
        %v3035 = vunpack.c.l.b16 %v3019
        %v3036 = vpack.c.b16 %v3029, %v3028
        %v3037 = vpack.c.b16 %v3031, %v3030
        %v3038 = vpack.c.b16 %v3033, %v3032
        %v3039 = vpack.c.b16 %v3035, %v3034
        %v3041 = vsel %vm615, %v3036, 0
        %v3044 = vsel %vm615, %v3037, 0
        %v3047 = vsel %vm615, %v3038, 0
        %v3050 = vsel %vm615, %v3039, 0
        %3052 = vmatprep.subr.bf16.mxu0 0
        %3053 = vmatpush1.bf16.msra.mxu0 %v2903
        %3054 = vmatprep.subr.bf16.mxu0 0
        %3055 = vmatpush1.bf16.msra.mxu0 %v2904
        %3056 = vmatprep.subr.bf16.mxu0 0
        %3057 = vmatpush1.bf16.msra.mxu0 %v2905
        %3058 = vmatprep.subr.bf16.mxu0 0
        %3059 = vmatpush1.bf16.msra.mxu0 %v2906
        %3060 = vmatprep.subr.bf16.mxu0 0
        %3061 = vmatpush1.bf16.msra.mxu0 0
        %3062 = vmatprep.subr.bf16.mxu0 0
        %3063 = vmatpush1.bf16.msra.mxu0 0
        %3064 = vmatprep.subr.bf16.mxu0 0
        %3065 = vmatpush1.bf16.msra.mxu0 0
        %3066 = vmatprep.subr.bf16.mxu0 0
        %3067 = vmatpush1.bf16.msra.mxu0 0
        %3068 = vmatprep.subr.bf16.mxu0 0
        %3069 = vmatpush1.bf16.msra.mxu0 0
        %3070 = vmatprep.subr.bf16.mxu0 0
        %3071 = vmatpush1.bf16.msra.mxu0 0
        %3072 = vmatprep.subr.bf16.mxu0 0
        %3073 = vmatpush1.bf16.msra.mxu0 0
        %3074 = vmatprep.subr.bf16.mxu0 0
        %3075 = vmatpush1.bf16.msra.mxu0 0
        %3076 = vmatprep.subr.bf16.mxu0 0
        %3077 = vmatpush1.bf16.msra.mxu0 0
        %3078 = vmatprep.subr.bf16.mxu0 0
        %3079 = vmatpush1.bf16.msra.mxu0 0
        %3080 = vmatprep.subr.bf16.mxu0 0
        %3081 = vmatpush1.bf16.msra.mxu0 0
        %3082 = vmatprep.subr.bf16.mxu0 0
        %3083 = vmatpush1.bf16.msra.mxu0 0
        %3084 = vmatprep.mubr.bf16.mxu0 0
        %3085 = vmatmul.mubr.bf16.gmra.mrb[0].mxu0 %v3041
        %v3086 = vpop.f32.mrb[0].mxu0
        %v3087 = vadd.f32 0.0, %v3086
        %v3088 = vpop.f32.mrb[0].mxu0
        %v3089 = vpop.f32.mrb[0].mxu0
        %v3090 = vadd.f32 0.0, %v3089
        %v3091 = vpop.f32.mrb[0].mxu0
        %3092 = vmatprep.mubr.bf16.mxu0 0
        %3093 = vmatmul.mubr.bf16.gmra.mrb[0].mxu0 %v3044
        %v3094 = vpop.f32.mrb[0].mxu0
        %v3095 = vadd.f32 0.0, %v3094
        %v3096 = vpop.f32.mrb[0].mxu0
        %v3097 = vpop.f32.mrb[0].mxu0
        %v3098 = vadd.f32 0.0, %v3097
        %v3099 = vpop.f32.mrb[0].mxu0
        %3100 = vmatprep.mubr.bf16.mxu0 0
        %3101 = vmatmul.mubr.bf16.gmra.mrb[0].mxu0 %v3047
        %v3102 = vpop.f32.mrb[0].mxu0
        %v3103 = vadd.f32 0.0, %v3102
        %v3104 = vpop.f32.mrb[0].mxu0
        %v3105 = vpop.f32.mrb[0].mxu0
        %v3106 = vadd.f32 0.0, %v3105
        %v3107 = vpop.f32.mrb[0].mxu0
        %3108 = vmatprep.mubr.bf16.mxu0 0
        %3109 = vmatmul.mubr.bf16.gmra.mrb[0].mxu0 %v3050
        %v3110 = vpop.f32.mrb[0].mxu0
        %v3111 = vadd.f32 0.0, %v3110
        %v3112 = vpop.f32.mrb[0].mxu0
        %v3113 = vpop.f32.mrb[0].mxu0
        %v3114 = vadd.f32 0.0, %v3113
        %v3115 = vpop.f32.mrb[0].mxu0
        %3116 = vdwg.mxu0
        %v3117 = vsub.f32 %v2982, %v3087
        %v3118 = vsub.f32 %v2985, %v3090
        %v3119 = vsub.f32 %v2990, %v3095
        %v3120 = vsub.f32 %v2993, %v3098
        %v3121 = vsub.f32 %v2998, %v3103
        %v3122 = vsub.f32 %v3001, %v3106
        %v3123 = vsub.f32 %v3006, %v3111
        %v3124 = vsub.f32 %v3009, %v3114
        %3125 = vmatprep.subr.bf16.mxu0 0
        %3126 = vmatpush1.bf16.msra.mxu0 %v2899
        %3127 = vmatprep.subr.bf16.mxu0 0
        %3128 = vmatpush1.bf16.msra.mxu0 %v2900
        %3129 = vmatprep.subr.bf16.mxu0 0
        %3130 = vmatpush1.bf16.msra.mxu0 %v2901
        %3131 = vmatprep.subr.bf16.mxu0 0
        %3132 = vmatpush1.bf16.msra.mxu0 %v2902
        %3133 = vmatprep.subr.bf16.mxu0 0
        %3134 = vmatpush1.bf16.msra.mxu0 0
        %3135 = vmatprep.subr.bf16.mxu0 0
        %3136 = vmatpush1.bf16.msra.mxu0 0
        %3137 = vmatprep.subr.bf16.mxu0 0
        %3138 = vmatpush1.bf16.msra.mxu0 0
        %3139 = vmatprep.subr.bf16.mxu0 0
        %3140 = vmatpush1.bf16.msra.mxu0 0
        %3141 = vmatprep.subr.bf16.mxu0 0
        %3142 = vmatpush1.bf16.msra.mxu0 0
        %3143 = vmatprep.subr.bf16.mxu0 0
        %3144 = vmatpush1.bf16.msra.mxu0 0
        %3145 = vmatprep.subr.bf16.mxu0 0
        %3146 = vmatpush1.bf16.msra.mxu0 0
        %3147 = vmatprep.subr.bf16.mxu0 0
        %3148 = vmatpush1.bf16.msra.mxu0 0
        %3149 = vmatprep.subr.bf16.mxu0 0
        %3150 = vmatpush1.bf16.msra.mxu0 0
        %3151 = vmatprep.subr.bf16.mxu0 0
        %3152 = vmatpush1.bf16.msra.mxu0 0
        %3153 = vmatprep.subr.bf16.mxu0 0
        %3154 = vmatpush1.bf16.msra.mxu0 0
        %3155 = vmatprep.subr.bf16.mxu0 0
        %3156 = vmatpush1.bf16.msra.mxu0 0
        %3157 = vmatprep.mubr.bf16.mxu0 0
        %3158 = vmatmul.mubr.bf16.gmra.mrb[0].mxu0 %v3041
        %v3159 = vpop.f32.mrb[0].mxu0
        %v3160 = vadd.f32 0.0, %v3159
        %v3161 = vpop.f32.mrb[0].mxu0
        %v3162 = vpop.f32.mrb[0].mxu0
        %v3163 = vadd.f32 0.0, %v3162
        %v3164 = vpop.f32.mrb[0].mxu0
        %3165 = vmatprep.mubr.bf16.mxu0 0
        %3166 = vmatmul.mubr.bf16.gmra.mrb[0].mxu0 %v3044
        %v3167 = vpop.f32.mrb[0].mxu0
        %v3168 = vadd.f32 0.0, %v3167
        %v3169 = vpop.f32.mrb[0].mxu0
        %v3170 = vpop.f32.mrb[0].mxu0
        %v3171 = vadd.f32 0.0, %v3170
        %v3172 = vpop.f32.mrb[0].mxu0
        %3173 = vmatprep.mubr.bf16.mxu0 0
        %3174 = vmatmul.mubr.bf16.gmra.mrb[0].mxu0 %v3047
        %v3175 = vpop.f32.mrb[0].mxu0
        %v3176 = vadd.f32 0.0, %v3175
        %v3177 = vpop.f32.mrb[0].mxu0
        %v3178 = vpop.f32.mrb[0].mxu0
        %v3179 = vadd.f32 0.0, %v3178
        %v3180 = vpop.f32.mrb[0].mxu0
        %3181 = vmatprep.mubr.bf16.mxu0 0
        %3182 = vmatmul.mubr.bf16.gmra.mrb[0].mxu0 %v3050
        %v3183 = vpop.f32.mrb[0].mxu0
        %v3184 = vadd.f32 0.0, %v3183
        %v3185 = vpop.f32.mrb[0].mxu0
        %v3186 = vpop.f32.mrb[0].mxu0
        %v3187 = vadd.f32 0.0, %v3186
        %v3188 = vpop.f32.mrb[0].mxu0
        %3189 = vdwg.mxu0
        %3190 = vmatprep.subr.bf16.mxu0 0
        %3191 = vmatpush1.bf16.msra.mxu0 %v2903
        %3192 = vmatprep.subr.bf16.mxu0 0
        %3193 = vmatpush1.bf16.msra.mxu0 %v2904
        %3194 = vmatprep.subr.bf16.mxu0 0
        %3195 = vmatpush1.bf16.msra.mxu0 %v2905
        %3196 = vmatprep.subr.bf16.mxu0 0
        %3197 = vmatpush1.bf16.msra.mxu0 %v2906
        %3198 = vmatprep.subr.bf16.mxu0 0
        %3199 = vmatpush1.bf16.msra.mxu0 0
        %3200 = vmatprep.subr.bf16.mxu0 0
        %3201 = vmatpush1.bf16.msra.mxu0 0
        %3202 = vmatprep.subr.bf16.mxu0 0
        %3203 = vmatpush1.bf16.msra.mxu0 0
        %3204 = vmatprep.subr.bf16.mxu0 0
        %3205 = vmatpush1.bf16.msra.mxu0 0
        %3206 = vmatprep.subr.bf16.mxu0 0
        %3207 = vmatpush1.bf16.msra.mxu0 0
        %3208 = vmatprep.subr.bf16.mxu0 0
        %3209 = vmatpush1.bf16.msra.mxu0 0
        %3210 = vmatprep.subr.bf16.mxu0 0
        %3211 = vmatpush1.bf16.msra.mxu0 0
        %3212 = vmatprep.subr.bf16.mxu0 0
        %3213 = vmatpush1.bf16.msra.mxu0 0
        %3214 = vmatprep.subr.bf16.mxu0 0
        %3215 = vmatpush1.bf16.msra.mxu0 0
        %3216 = vmatprep.subr.bf16.mxu0 0
        %3217 = vmatpush1.bf16.msra.mxu0 0
        %3218 = vmatprep.subr.bf16.mxu0 0
        %3219 = vmatpush1.bf16.msra.mxu0 0
        %3220 = vmatprep.subr.bf16.mxu0 0
        %3221 = vmatpush1.bf16.msra.mxu0 0
        %3222 = vmatprep.mubr.bf16.mxu0 0
        %3223 = vmatmul.mubr.bf16.gmra.mrb[0].mxu0 %v2936
        %v3224 = vpop.f32.mrb[0].mxu0
        %v3225 = vadd.f32 %v3160, %v3224
        %v3226 = vpop.f32.mrb[0].mxu0
        %v3227 = vpop.f32.mrb[0].mxu0
        %v3228 = vadd.f32 %v3163, %v3227
        %v3229 = vpop.f32.mrb[0].mxu0
        %3230 = vmatprep.mubr.bf16.mxu0 0
        %3231 = vmatmul.mubr.bf16.gmra.mrb[0].mxu0 %v2939
        %v3232 = vpop.f32.mrb[0].mxu0
        %v3233 = vadd.f32 %v3168, %v3232
        %v3234 = vpop.f32.mrb[0].mxu0
        %v3235 = vpop.f32.mrb[0].mxu0
        %v3236 = vadd.f32 %v3171, %v3235
        %v3237 = vpop.f32.mrb[0].mxu0
        %3238 = vmatprep.mubr.bf16.mxu0 0
        %3239 = vmatmul.mubr.bf16.gmra.mrb[0].mxu0 %v2942
        %v3240 = vpop.f32.mrb[0].mxu0
        %v3241 = vadd.f32 %v3176, %v3240
        %v3242 = vpop.f32.mrb[0].mxu0
        %v3243 = vpop.f32.mrb[0].mxu0
        %v3244 = vadd.f32 %v3179, %v3243
        %v3245 = vpop.f32.mrb[0].mxu0
        %3246 = vmatprep.mubr.bf16.mxu0 0
        %3247 = vmatmul.mubr.bf16.gmra.mrb[0].mxu0 %v2945
        %v3248 = vpop.f32.mrb[0].mxu0
        %v3249 = vadd.f32 %v3184, %v3248
        %v3250 = vpop.f32.mrb[0].mxu0
        %v3251 = vpop.f32.mrb[0].mxu0
        %v3252 = vadd.f32 %v3187, %v3251
        %v3253 = vpop.f32.mrb[0].mxu0
        %3254 = vdwg.mxu0
        %v3255 = vpack.c.bf16 %v3118, %v3117
        %v3256 = vpack.c.bf16 %v3120, %v3119
        %v3257 = vpack.c.bf16 %v3122, %v3121
        %v3258 = vpack.c.bf16 %v3124, %v3123
        %v3259 = vpack.c.bf16 %v3228, %v3225
        %v3260 = vpack.c.bf16 %v3236, %v3233
        %v3261 = vpack.c.bf16 %v3244, %v3241
        %v3262 = vpack.c.bf16 %v3252, %v3249
        %v3268 = vsel %vm615, %v3255, 0
        %v3271 = vsel %vm615, %v3256, 0
        %v3274 = vsel %vm615, %v3257, 0
        %v3277 = vsel %vm615, %v3258, 0
        %3279 = vmatprep.subr.bf16.mxu0 0
        %3280 = vmatpush1.bf16.msra.mxu0 %v2931
        %3281 = vmatprep.subr.bf16.mxu0 0
        %3282 = vmatpush1.bf16.msra.mxu0 %v2932
        %3283 = vmatprep.subr.bf16.mxu0 0
        %3284 = vmatpush1.bf16.msra.mxu0 %v2933
        %3285 = vmatprep.subr.bf16.mxu0 0
        %3286 = vmatpush1.bf16.msra.mxu0 %v2934
        %3287 = vmatprep.subr.bf16.mxu0 0
        %3288 = vmatpush1.bf16.msra.mxu0 0
        %3289 = vmatprep.subr.bf16.mxu0 0
        %3290 = vmatpush1.bf16.msra.mxu0 0
        %3291 = vmatprep.subr.bf16.mxu0 0
        %3292 = vmatpush1.bf16.msra.mxu0 0
        %3293 = vmatprep.subr.bf16.mxu0 0
        %3294 = vmatpush1.bf16.msra.mxu0 0
        %3295 = vmatprep.subr.bf16.mxu0 0
        %3296 = vmatpush1.bf16.msra.mxu0 0
        %3297 = vmatprep.subr.bf16.mxu0 0
        %3298 = vmatpush1.bf16.msra.mxu0 0
        %3299 = vmatprep.subr.bf16.mxu0 0
        %3300 = vmatpush1.bf16.msra.mxu0 0
        %3301 = vmatprep.subr.bf16.mxu0 0
        %3302 = vmatpush1.bf16.msra.mxu0 0
        %3303 = vmatprep.subr.bf16.mxu0 0
        %3304 = vmatpush1.bf16.msra.mxu0 0
        %3305 = vmatprep.subr.bf16.mxu0 0
        %3306 = vmatpush1.bf16.msra.mxu0 0
        %3307 = vmatprep.subr.bf16.mxu0 0
        %3308 = vmatpush1.bf16.msra.mxu0 0
        %3309 = vmatprep.subr.bf16.mxu0 0
        %3310 = vmatpush1.bf16.msra.mxu0 0
        %3311 = vmatprep.mubr.bf16.mxu0 0
        %3312 = vmatmul.mubr.bf16.gmra.mrb[0].mxu0 %v3268
        %v3313 = vpop.f32.mrb[0].mxu0
        %v3314 = vadd.f32 0.0, %v3313
        %v3315 = vpop.f32.mrb[0].mxu0
        %v3316 = vpop.f32.mrb[0].mxu0
        %v3317 = vadd.f32 0.0, %v3316
        %v3318 = vpop.f32.mrb[0].mxu0
        %3319 = vmatprep.mubr.bf16.mxu0 0
        %3320 = vmatmul.mubr.bf16.gmra.mrb[0].mxu0 %v3271
        %v3321 = vpop.f32.mrb[0].mxu0
        %v3322 = vadd.f32 0.0, %v3321
        %v3323 = vpop.f32.mrb[0].mxu0
        %v3324 = vpop.f32.mrb[0].mxu0
        %v3325 = vadd.f32 0.0, %v3324
        %v3326 = vpop.f32.mrb[0].mxu0
        %3327 = vmatprep.mubr.bf16.mxu0 0
        %3328 = vmatmul.mubr.bf16.gmra.mrb[0].mxu0 %v3274
        %v3329 = vpop.f32.mrb[0].mxu0
        %v3330 = vadd.f32 0.0, %v3329
        %v3331 = vpop.f32.mrb[0].mxu0
        %v3332 = vpop.f32.mrb[0].mxu0
        %v3333 = vadd.f32 0.0, %v3332
        %v3334 = vpop.f32.mrb[0].mxu0
        %3335 = vmatprep.mubr.bf16.mxu0 0
        %3336 = vmatmul.mubr.bf16.gmra.mrb[0].mxu0 %v3277
        %v3337 = vpop.f32.mrb[0].mxu0
        %v3338 = vadd.f32 0.0, %v3337
        %v3339 = vpop.f32.mrb[0].mxu0
        %v3340 = vpop.f32.mrb[0].mxu0
        %v3341 = vadd.f32 0.0, %v3340
        %v3342 = vpop.f32.mrb[0].mxu0
        %3343 = vdwg.mxu0
        %v3349 = vsel %vm615, %v3259, 0
        %v3352 = vsel %vm615, %v3260, 0
        %v3355 = vsel %vm615, %v3261, 0
        %v3358 = vsel %vm615, %v3262, 0
        %3360 = vmatprep.subr.bf16.mxu0 0
        %3361 = vmatpush1.bf16.msra.mxu0 %v3036
        %3362 = vmatprep.subr.bf16.mxu0 0
        %3363 = vmatpush1.bf16.msra.mxu0 %v3037
        %3364 = vmatprep.subr.bf16.mxu0 0
        %3365 = vmatpush1.bf16.msra.mxu0 %v3038
        %3366 = vmatprep.subr.bf16.mxu0 0
        %3367 = vmatpush1.bf16.msra.mxu0 %v3039
        %3368 = vmatprep.subr.bf16.mxu0 0
        %3369 = vmatpush1.bf16.msra.mxu0 0
        %3370 = vmatprep.subr.bf16.mxu0 0
        %3371 = vmatpush1.bf16.msra.mxu0 0
        %3372 = vmatprep.subr.bf16.mxu0 0
        %3373 = vmatpush1.bf16.msra.mxu0 0
        %3374 = vmatprep.subr.bf16.mxu0 0
        %3375 = vmatpush1.bf16.msra.mxu0 0
        %3376 = vmatprep.subr.bf16.mxu0 0
        %3377 = vmatpush1.bf16.msra.mxu0 0
        %3378 = vmatprep.subr.bf16.mxu0 0
        %3379 = vmatpush1.bf16.msra.mxu0 0
        %3380 = vmatprep.subr.bf16.mxu0 0
        %3381 = vmatpush1.bf16.msra.mxu0 0
        %3382 = vmatprep.subr.bf16.mxu0 0
        %3383 = vmatpush1.bf16.msra.mxu0 0
        %3384 = vmatprep.subr.bf16.mxu0 0
        %3385 = vmatpush1.bf16.msra.mxu0 0
        %3386 = vmatprep.subr.bf16.mxu0 0
        %3387 = vmatpush1.bf16.msra.mxu0 0
        %3388 = vmatprep.subr.bf16.mxu0 0
        %3389 = vmatpush1.bf16.msra.mxu0 0
        %3390 = vmatprep.subr.bf16.mxu0 0
        %3391 = vmatpush1.bf16.msra.mxu0 0
        %3392 = vmatprep.mubr.bf16.mxu0 0
        %3393 = vmatmul.mubr.bf16.gmra.mrb[0].mxu0 %v3349
        %v3394 = vpop.f32.mrb[0].mxu0
        %v3395 = vadd.f32 0.0, %v3394
        %v3396 = vpop.f32.mrb[0].mxu0
        %v3397 = vpop.f32.mrb[0].mxu0
        %v3398 = vadd.f32 0.0, %v3397
        %v3399 = vpop.f32.mrb[0].mxu0
        %3400 = vmatprep.mubr.bf16.mxu0 0
        %3401 = vmatmul.mubr.bf16.gmra.mrb[0].mxu0 %v3352
        %v3402 = vpop.f32.mrb[0].mxu0
        %v3403 = vadd.f32 0.0, %v3402
        %v3404 = vpop.f32.mrb[0].mxu0
        %v3405 = vpop.f32.mrb[0].mxu0
        %v3406 = vadd.f32 0.0, %v3405
        %v3407 = vpop.f32.mrb[0].mxu0
        %3408 = vmatprep.mubr.bf16.mxu0 0
        %3409 = vmatmul.mubr.bf16.gmra.mrb[0].mxu0 %v3355
        %v3410 = vpop.f32.mrb[0].mxu0
        %v3411 = vadd.f32 0.0, %v3410
        %v3412 = vpop.f32.mrb[0].mxu0
        %v3413 = vpop.f32.mrb[0].mxu0
        %v3414 = vadd.f32 0.0, %v3413
        %v3415 = vpop.f32.mrb[0].mxu0
        %3416 = vmatprep.mubr.bf16.mxu0 0
        %3417 = vmatmul.mubr.bf16.gmra.mrb[0].mxu0 %v3358
        %v3418 = vpop.f32.mrb[0].mxu0
        %v3419 = vadd.f32 0.0, %v3418
        %v3420 = vpop.f32.mrb[0].mxu0
        %v3421 = vpop.f32.mrb[0].mxu0
        %v3422 = vadd.f32 0.0, %v3421
        %v3423 = vpop.f32.mrb[0].mxu0
        %3424 = vdwg.mxu0
        %v3425 = vsub.f32 %v3314, %v3395
        %v3426 = vsub.f32 %v3317, %v3398
        %v3427 = vsub.f32 %v3322, %v3403
        %v3428 = vsub.f32 %v3325, %v3406
        %v3429 = vsub.f32 %v3330, %v3411
        %v3430 = vsub.f32 %v3333, %v3414
        %v3431 = vsub.f32 %v3338, %v3419
        %v3432 = vsub.f32 %v3341, %v3422
        %3433 = vmatprep.subr.bf16.mxu0 0
        %3434 = vmatpush1.bf16.msra.mxu0 %v2931
        %3435 = vmatprep.subr.bf16.mxu0 0
        %3436 = vmatpush1.bf16.msra.mxu0 %v2932
        %3437 = vmatprep.subr.bf16.mxu0 0
        %3438 = vmatpush1.bf16.msra.mxu0 %v2933
        %3439 = vmatprep.subr.bf16.mxu0 0
        %3440 = vmatpush1.bf16.msra.mxu0 %v2934
        %3441 = vmatprep.subr.bf16.mxu0 0
        %3442 = vmatpush1.bf16.msra.mxu0 0
        %3443 = vmatprep.subr.bf16.mxu0 0
        %3444 = vmatpush1.bf16.msra.mxu0 0
        %3445 = vmatprep.subr.bf16.mxu0 0
        %3446 = vmatpush1.bf16.msra.mxu0 0
        %3447 = vmatprep.subr.bf16.mxu0 0
        %3448 = vmatpush1.bf16.msra.mxu0 0
        %3449 = vmatprep.subr.bf16.mxu0 0
        %3450 = vmatpush1.bf16.msra.mxu0 0
        %3451 = vmatprep.subr.bf16.mxu0 0
        %3452 = vmatpush1.bf16.msra.mxu0 0
        %3453 = vmatprep.subr.bf16.mxu0 0
        %3454 = vmatpush1.bf16.msra.mxu0 0
        %3455 = vmatprep.subr.bf16.mxu0 0
        %3456 = vmatpush1.bf16.msra.mxu0 0
        %3457 = vmatprep.subr.bf16.mxu0 0
        %3458 = vmatpush1.bf16.msra.mxu0 0
        %3459 = vmatprep.subr.bf16.mxu0 0
        %3460 = vmatpush1.bf16.msra.mxu0 0
        %3461 = vmatprep.subr.bf16.mxu0 0
        %3462 = vmatpush1.bf16.msra.mxu0 0
        %3463 = vmatprep.subr.bf16.mxu0 0
        %3464 = vmatpush1.bf16.msra.mxu0 0
        %3465 = vmatprep.mubr.bf16.mxu0 0
        %3466 = vmatmul.mubr.bf16.gmra.mrb[0].mxu0 %v3349
        %v3467 = vpop.f32.mrb[0].mxu0
        %v3468 = vadd.f32 0.0, %v3467
        %v3469 = vpop.f32.mrb[0].mxu0
        %v3470 = vpop.f32.mrb[0].mxu0
        %v3471 = vadd.f32 0.0, %v3470
        %v3472 = vpop.f32.mrb[0].mxu0
        %3473 = vmatprep.mubr.bf16.mxu0 0
        %3474 = vmatmul.mubr.bf16.gmra.mrb[0].mxu0 %v3352
        %v3475 = vpop.f32.mrb[0].mxu0
        %v3476 = vadd.f32 0.0, %v3475
        %v3477 = vpop.f32.mrb[0].mxu0
        %v3478 = vpop.f32.mrb[0].mxu0
        %v3479 = vadd.f32 0.0, %v3478
        %v3480 = vpop.f32.mrb[0].mxu0
        %3481 = vmatprep.mubr.bf16.mxu0 0
        %3482 = vmatmul.mubr.bf16.gmra.mrb[0].mxu0 %v3355
        %v3483 = vpop.f32.mrb[0].mxu0
        %v3484 = vadd.f32 0.0, %v3483
        %v3485 = vpop.f32.mrb[0].mxu0
        %v3486 = vpop.f32.mrb[0].mxu0
        %v3487 = vadd.f32 0.0, %v3486
        %v3488 = vpop.f32.mrb[0].mxu0
        %3489 = vmatprep.mubr.bf16.mxu0 0
        %3490 = vmatmul.mubr.bf16.gmra.mrb[0].mxu0 %v3358
        %v3491 = vpop.f32.mrb[0].mxu0
        %v3492 = vadd.f32 0.0, %v3491
        %v3493 = vpop.f32.mrb[0].mxu0
        %v3494 = vpop.f32.mrb[0].mxu0
        %v3495 = vadd.f32 0.0, %v3494
        %v3496 = vpop.f32.mrb[0].mxu0
        %3497 = vdwg.mxu0
        %3498 = vmatprep.subr.bf16.mxu0 0
        %3499 = vmatpush1.bf16.msra.mxu0 %v3036
        %3500 = vmatprep.subr.bf16.mxu0 0
        %3501 = vmatpush1.bf16.msra.mxu0 %v3037
        %3502 = vmatprep.subr.bf16.mxu0 0
        %3503 = vmatpush1.bf16.msra.mxu0 %v3038
        %3504 = vmatprep.subr.bf16.mxu0 0
        %3505 = vmatpush1.bf16.msra.mxu0 %v3039
        %3506 = vmatprep.subr.bf16.mxu0 0
        %3507 = vmatpush1.bf16.msra.mxu0 0
        %3508 = vmatprep.subr.bf16.mxu0 0
        %3509 = vmatpush1.bf16.msra.mxu0 0
        %3510 = vmatprep.subr.bf16.mxu0 0
        %3511 = vmatpush1.bf16.msra.mxu0 0
        %3512 = vmatprep.subr.bf16.mxu0 0
        %3513 = vmatpush1.bf16.msra.mxu0 0
        %3514 = vmatprep.subr.bf16.mxu0 0
        %3515 = vmatpush1.bf16.msra.mxu0 0
        %3516 = vmatprep.subr.bf16.mxu0 0
        %3517 = vmatpush1.bf16.msra.mxu0 0
        %3518 = vmatprep.subr.bf16.mxu0 0
        %3519 = vmatpush1.bf16.msra.mxu0 0
        %3520 = vmatprep.subr.bf16.mxu0 0
        %3521 = vmatpush1.bf16.msra.mxu0 0
        %3522 = vmatprep.subr.bf16.mxu0 0
        %3523 = vmatpush1.bf16.msra.mxu0 0
        %3524 = vmatprep.subr.bf16.mxu0 0
        %3525 = vmatpush1.bf16.msra.mxu0 0
        %3526 = vmatprep.subr.bf16.mxu0 0
        %3527 = vmatpush1.bf16.msra.mxu0 0
        %3528 = vmatprep.subr.bf16.mxu0 0
        %3529 = vmatpush1.bf16.msra.mxu0 0
        %3530 = vmatprep.mubr.bf16.mxu0 0
        %3531 = vmatmul.mubr.bf16.gmra.mrb[0].mxu0 %v3268
        %v3532 = vpop.f32.mrb[0].mxu0
        %v3533 = vadd.f32 %v3468, %v3532
        %v3534 = vpop.f32.mrb[0].mxu0
        %v3535 = vpop.f32.mrb[0].mxu0
        %v3536 = vadd.f32 %v3471, %v3535
        %v3537 = vpop.f32.mrb[0].mxu0
        %3538 = vmatprep.mubr.bf16.mxu0 0
        %3539 = vmatmul.mubr.bf16.gmra.mrb[0].mxu0 %v3271
        %v3540 = vpop.f32.mrb[0].mxu0
        %v3541 = vadd.f32 %v3476, %v3540
        %v3542 = vpop.f32.mrb[0].mxu0
        %v3543 = vpop.f32.mrb[0].mxu0
        %v3544 = vadd.f32 %v3479, %v3543
        %v3545 = vpop.f32.mrb[0].mxu0
        %3546 = vmatprep.mubr.bf16.mxu0 0
        %3547 = vmatmul.mubr.bf16.gmra.mrb[0].mxu0 %v3274
        %v3548 = vpop.f32.mrb[0].mxu0
        %v3549 = vadd.f32 %v3484, %v3548
        %v3550 = vpop.f32.mrb[0].mxu0
        %v3551 = vpop.f32.mrb[0].mxu0
        %v3552 = vadd.f32 %v3487, %v3551
        %v3553 = vpop.f32.mrb[0].mxu0
        %3554 = vmatprep.mubr.bf16.mxu0 0
        %3555 = vmatmul.mubr.bf16.gmra.mrb[0].mxu0 %v3277
        %v3556 = vpop.f32.mrb[0].mxu0
        %v3557 = vadd.f32 %v3492, %v3556
        %v3558 = vpop.f32.mrb[0].mxu0
        %v3559 = vpop.f32.mrb[0].mxu0
        %v3560 = vadd.f32 %v3495, %v3559
        %v3561 = vpop.f32.mrb[0].mxu0
        %3562 = vdwg.mxu0
        %3563 = vst.msk [vmem:[%s591] sm:$0xff] %vm615, %v3425
        %3564 = vst.msk [vmem:[%s591 + $0x8] sm:$0xff] %vm615, %v3426
        %3565 = vst.msk [vmem:[%s591 + $0x10] sm:$0xff] %vm615, %v3427
        %3566 = vst.msk [vmem:[%s591 + $0x18] sm:$0xff] %vm615, %v3428
        %3567 = vst.msk [vmem:[%s591 + $0x20] sm:$0xff] %vm615, %v3429
        %3568 = vst.msk [vmem:[%s591 + $0x28] sm:$0xff] %vm615, %v3430
        %3569 = vst.msk [vmem:[%s591 + $0x30] sm:$0xff] %vm615, %v3431
        %3570 = vst.msk [vmem:[%s591 + $0x38] sm:$0xff] %vm615, %v3432
        %3571 = vst.msk [vmem:[%s598] sm:$0xff] %vm615, %v3533
        %3572 = vst.msk [vmem:[%s598 + $0x8] sm:$0xff] %vm615, %v3536
        %3573 = vst.msk [vmem:[%s598 + $0x10] sm:$0xff] %vm615, %v3541
        %3574 = vst.msk [vmem:[%s598 + $0x18] sm:$0xff] %vm615, %v3544
        %3575 = vst.msk [vmem:[%s598 + $0x20] sm:$0xff] %vm615, %v3549
        %3576 = vst.msk [vmem:[%s598 + $0x28] sm:$0xff] %vm615, %v3552
        %3577 = vst.msk [vmem:[%s598 + $0x30] sm:$0xff] %vm615, %v3557
        %3578 = vst.msk [vmem:[%s598 + $0x38] sm:$0xff] %vm615, %v3560
        %v3579 = vmul.f32 %v3425, %v3425
        %v3580 = vmul.f32 %v3426, %v3426
        %v3581 = vmul.f32 %v3427, %v3427
        %v3582 = vmul.f32 %v3428, %v3428
        %v3583 = vmul.f32 %v3429, %v3429
        %v3584 = vmul.f32 %v3430, %v3430
        %v3585 = vmul.f32 %v3431, %v3431
        %v3586 = vmul.f32 %v3432, %v3432
        %v3587 = vmul.f32 %v3533, %v3533
        %v3588 = vmul.f32 %v3536, %v3536
        %v3589 = vmul.f32 %v3541, %v3541
        %v3590 = vmul.f32 %v3544, %v3544
        %v3591 = vmul.f32 %v3549, %v3549
        %v3592 = vmul.f32 %v3552, %v3552
        %v3593 = vmul.f32 %v3557, %v3557
        %v3594 = vmul.f32 %v3560, %v3560
        %v3595 = vadd.f32 %v3579, %v3587
        %v3596 = vadd.f32 %v3580, %v3588
        %v3597 = vadd.f32 %v3581, %v3589
        %v3598 = vadd.f32 %v3582, %v3590
        %v3599 = vadd.f32 %v3583, %v3591
        %v3600 = vadd.f32 %v3584, %v3592
        %v3601 = vadd.f32 %v3585, %v3593
        %v3602 = vadd.f32 %v3586, %v3594
        %3603 = vst.msk [vmem:[%s605] sm:$0xff] %vm615, %v3595
        %3604 = vst.msk [vmem:[%s605 + $0x8] sm:$0xff] %vm615, %v3596
        %3605 = vst.msk [vmem:[%s605 + $0x10] sm:$0xff] %vm615, %v3597
        %3606 = vst.msk [vmem:[%s605 + $0x18] sm:$0xff] %vm615, %v3598
        %3607 = vst.msk [vmem:[%s605 + $0x20] sm:$0xff] %vm615, %v3599
        %3608 = vst.msk [vmem:[%s605 + $0x28] sm:$0xff] %vm615, %v3600
        %3609 = vst.msk [vmem:[%s605 + $0x30] sm:$0xff] %vm615, %v3601
        %3610 = vst.msk [vmem:[%s605 + $0x38] sm:$0xff] %vm615, %v3602
        %s3611 = sand.u32 %s268, 1
        %s3612 = scalar_lea.sflag [#allocation4], %s3611
        %s3613 = sand.u32 %s268, 1
        %s3614 = smul.addr %s3613, 64
        %s3615 = scalar_lea.vmem [#allocation19], %s3614
        %s3616 = sand.u32 %s40, 1
        %s3617 = scalar_lea.sflag [#allocation21], %s3616
        %s3618 = sand.u32 %s294, 1
        %s3619 = smul.addr %s3618, 64
        %s3620 = scalar_lea.vmem [#allocation20], %s3619
        %s3621 = sand.u32 %s40, 1
        %s3622 = scalar_lea.sflag [#allocation21], %s3621
        %s3623 = sand.u32 %s320, 1
        %s3624 = smul.addr %s3623, 64
        %s3625 = scalar_lea.vmem [#allocation22], %s3624
        // Predicated region
        $region108: #{tpu_custom_call.1} parent=59 // pred_check
          %p3626 = pneg %p278
        $region109: #{tpu_custom_call.1} parent=59 // pred_check_branch
          %3628 = sbr.rel (%p3626) target = $region111
        $region110: #{tpu_custom_call.1} parent=59 // pred_region
          %s3630 = ssub.s32 1024, 1024
          %3631 = vsyncadd %s3612, %s3630
          %s3632 = smul.addr %s40, 8
          %s3633 = smul.addr %s3632, 128
          %s3634 = scalar_lea.hbm %s10, %s3633
          %s3635 = sshll.u32 %s3615, 4
          %s3636 = int_to_ptr.vmem [resolvable:$true] %s3635
          %3641 = dma.vmem_to_hbm [thread:$0]  %s3636, 1024, %s3634, %s3612, 128, 128, 8
        $region111: #{tpu_custom_call.1} parent=59 // pred_fallthru
          _
        // Predicated region
        $region112: #{tpu_custom_call.1} parent=59 // pred_check
          %p3642 = pneg %p304
        $region113: #{tpu_custom_call.1} parent=59 // pred_check_branch
          %3644 = sbr.rel (%p3642) target = $region115
        $region114: #{tpu_custom_call.1} parent=59 // pred_region
          %s3646 = ssub.s32 1024, 1024
          %3647 = vsyncadd %s3617, %s3646
          %s3648 = smul.addr %s40, 8
          %s3649 = smul.addr %s3648, 128
          %s3650 = scalar_lea.hbm %s11, %s3649
          %s3651 = sshll.u32 %s3620, 4
          %s3652 = int_to_ptr.vmem [resolvable:$true] %s3651
          %3657 = dma.vmem_to_hbm [thread:$0]  %s3652, 1024, %s3650, %s3617, 128, 128, 8
        $region115: #{tpu_custom_call.1} parent=59 // pred_fallthru
          _
        // Predicated region
        $region116: #{tpu_custom_call.1} parent=59 // pred_check
          %p3658 = pneg %p330
        $region117: #{tpu_custom_call.1} parent=59 // pred_check_branch
          %3660 = sbr.rel (%p3658) target = $region119
        $region118: #{tpu_custom_call.1} parent=59 // pred_region
          %s3662 = ssub.s32 1024, 1024
          %3663 = vsyncadd %s3622, %s3662
          %s3664 = smul.addr %s40, 8
          %s3665 = smul.addr %s3664, 128
          %s3666 = scalar_lea.hbm %s12, %s3665
          %s3667 = sshll.u32 %s3625, 4
          %s3668 = int_to_ptr.vmem [resolvable:$true] %s3667
          %3673 = dma.vmem_to_hbm [thread:$0]  %s3668, 1024, %s3666, %s3622, 128, 128, 8
        $region119: #{tpu_custom_call.1} parent=59 // pred_fallthru
          _
      $region60: #{tpu_custom_call.1} parent=5 // pred_fallthru
        _
      %p3674 = scmp.le.s32.totalorder 2, %s35
      // Predicated region
      $region120: #{tpu_custom_call.1} parent=5 // pred_check
        %p3675 = pneg %p3674
      $region121: #{tpu_custom_call.1} parent=5 // pred_check_branch
        %3677 = sbr.rel (%p3675) target = $region123
      $region122: #{tpu_custom_call.1} parent=5 // pred_region
        %s3678 = ssub.s32 %s35, 2
        // Predicated region
        $region124: #{tpu_custom_call.1} parent=122 // pred_check
          %p3679 = pneg %p284
        $region125: #{tpu_custom_call.1} parent=122 // pred_check_branch
          %3681 = sbr.rel (%p3679) target = $region127
        $region126: #{tpu_custom_call.1} parent=122 // pred_region
          %s3682 = sand.u32 %s269, 1
          %s3683 = scalar_lea.sflag [#allocation4], %s3682
          %s3684 = sand.u32 %s269, 1
          %s3685 = smul.addr %s3684, 64
          %s3686 = scalar_lea.vmem [#allocation19], %s3685
          %3687 = dma.done %s3683, 1024
        $region127: #{tpu_custom_call.1} parent=122 // pred_fallthru
          _
        // Predicated region
        $region128: #{tpu_custom_call.1} parent=122 // pred_check
          %p3688 = pneg %p310
        $region129: #{tpu_custom_call.1} parent=122 // pred_check_branch
          %3690 = sbr.rel (%p3688) target = $region131
        $region130: #{tpu_custom_call.1} parent=122 // pred_region
          %s3691 = sand.u32 %s41, 1
          %s3692 = scalar_lea.sflag [#allocation21], %s3691
          %s3693 = sand.u32 %s295, 1
          %s3694 = smul.addr %s3693, 64
          %s3695 = scalar_lea.vmem [#allocation20], %s3694
          %3696 = dma.done %s3692, 1024
        $region131: #{tpu_custom_call.1} parent=122 // pred_fallthru
          _
        // Predicated region
        $region132: #{tpu_custom_call.1} parent=122 // pred_check
          %p3697 = pneg %p336
        $region133: #{tpu_custom_call.1} parent=122 // pred_check_branch
          %3699 = sbr.rel (%p3697) target = $region135
        $region134: #{tpu_custom_call.1} parent=122 // pred_region
          %s3700 = sand.u32 %s41, 1
          %s3701 = scalar_lea.sflag [#allocation21], %s3700
          %s3702 = sand.u32 %s321, 1
          %s3703 = smul.addr %s3702, 64
          %s3704 = scalar_lea.vmem [#allocation22], %s3703
          %3705 = dma.done %s3701, 1024
        $region135: #{tpu_custom_call.1} parent=122 // pred_fallthru
          _
      $region123: #{tpu_custom_call.1} parent=5 // pred_fallthru
        _
    $region6: #{tpu_custom_call.1} parent=1 // loop_footer
      %s39 = sadd.s32 1, %s35
    $region7: #{tpu_custom_call.1} parent=1 // loop_footer_branch
      %34 = sbr.rel target = $region3
    $region8: #{tpu_custom_call.1} parent=1 // loop_exit
      _
    %3706 = vsyncpa [#allocation3], 1
    %s3707 = scalar_lea.sflag [#allocation3], 1
    %3708 = vsyncpa %s3707, 1
    %3709 = vsyncpa [#allocation6], 1
    %s3710 = scalar_lea.sflag [#allocation6], 1
    %3711 = vsyncpa %s3710, 1
    %3712 = vsyncpa [#allocation9], 1
    %3713 = vsyncpa [#allocation12], 1
    %3714 = vsyncpa [#allocation15], 1
    %3715 = vsyncpa [#allocation18], 1
    %3716 = vsyncpa [#allocation4], 1
    %s3717 = scalar_lea.sflag [#allocation4], 1
    %3718 = vsyncpa %s3717, 1
    %3719 = vsyncpa [#allocation21], 1
    %s3720 = scalar_lea.sflag [#allocation21], 1
    %3721 = vsyncpa %s3720, 1

// kernel: tpu_custom_call.1
$region0: #{tpu_custom_call.1}
  #allocation0 [shape = 'u32[]', space=smem, size = 0x4, offset = 0x4, fixed_abs, tag = 'smem constant byte address 0x4 - core index']
  #allocation1 [shape = 'u32[144,128]{1,0:T(1,128)}', space=vmem, size = 0x12000, scoped, tag = 'internal scratch']
  %s0 = inlined_call_operand.hbm [shape: f32[2,64,64], index: 0, kind: input, shape index: {}]
  %s1 = inlined_call_operand.hbm [shape: f32[2,64,64], index: 1, kind: input, shape index: {}]
  %s2 = inlined_call_operand.hbm [shape: bf16[64,64], index: 2, kind: input, shape index: {}]
  %s3 = inlined_call_operand.hbm [shape: bf16[64,64], index: 3, kind: input, shape index: {}]
  %s4 = inlined_call_operand.hbm [shape: bf16[64,64], index: 4, kind: input, shape index: {}]
  %s5 = inlined_call_operand.hbm [shape: bf16[64,64], index: 5, kind: input, shape index: {}]
  %s6 = inlined_call_operand.hbm [shape: f32[64,64], index: 6, kind: input, shape index: {}]
  %s7 = inlined_call_operand.hbm [shape: f32[64,64], index: 7, kind: input, shape index: {}]
  %s8 = inlined_call_operand.hbm [shape: bf16[3,64,64], index: 8, kind: input, shape index: {}]
  %s9 = inlined_call_operand.hbm [shape: bf16[3,64,64], index: 9, kind: input, shape index: {}]
  %s10 = inlined_call_operand.hbm [shape: f32[2,64,64], index: 10, kind: output, shape index: {0}]
  %s11 = inlined_call_operand.hbm [shape: f32[2,64,64], index: 11, kind: output, shape index: {1}]
  %s12 = inlined_call_operand.hbm [shape: f32[2,64,64], index: 12, kind: output, shape index: {2}]
  %13 = xla_tuple %s10, %s11, %s12
  %s14 = sld [smem:[#allocation0]]
  $region136: #{tpu_custom_call.1} parent=0
    _
  %s16 = ssub.s32 1, %s14
  %s17 = scalar_select 0, %s16, %s14
  $region1: #{tpu_custom_call.1} parent=0
    #allocation2 [shape = 'u8[65536]{0}', space=vmem, size = 0x10000, scoped, tag = 'input window, operand 0']
    #allocation3 [shape = 's32[2]{0}', space=sflag, size = 0x8, scoped, tag = 'scoped memory for tpu_custom_call.1']
    #allocation4 [shape = 's32[2]{0}', space=sflag, size = 0x8, scoped, tag = 'scoped memory for tpu_custom_call.1']
    #allocation5 [shape = 'u8[65536]{0}', space=vmem, size = 0x10000, scoped, tag = 'input window, operand 1']
    #allocation6 [shape = 's32[2]{0}', space=sflag, size = 0x8, scoped, tag = 'scoped memory for tpu_custom_call.1']
    #allocation7 [shape = 'u8[16384]{0}', space=vmem, size = 0x4000, scoped, tag = 'input window, operand 2, single buffered']
    #allocation8 [shape = 'u8[16384]{0}', space=vmem, size = 0x4000, scoped, tag = 'input window, operand 3, single buffered']
    #allocation9 [shape = 's32[1]{0}', space=sflag, size = 0x4, scoped, tag = 'scoped memory for tpu_custom_call.1']
    #allocation10 [shape = 'u8[16384]{0}', space=vmem, size = 0x4000, scoped, tag = 'input window, operand 4, single buffered']
    #allocation11 [shape = 'u8[16384]{0}', space=vmem, size = 0x4000, scoped, tag = 'input window, operand 5, single buffered']
    #allocation12 [shape = 's32[1]{0}', space=sflag, size = 0x4, scoped, tag = 'scoped memory for tpu_custom_call.1']
    #allocation13 [shape = 'u8[32768]{0}', space=vmem, size = 0x8000, scoped, tag = 'input window, operand 6, single buffered']
    #allocation14 [shape = 'u8[32768]{0}', space=vmem, size = 0x8000, scoped, tag = 'input window, operand 7, single buffered']
    #allocation15 [shape = 's32[1]{0}', space=sflag, size = 0x4, scoped, tag = 'scoped memory for tpu_custom_call.1']
    #allocation16 [shape = 'u8[49152]{0}', space=vmem, size = 0xc000, scoped, tag = 'input window, operand 8, single buffered']
    #allocation17 [shape = 'u8[49152]{0}', space=vmem, size = 0xc000, scoped, tag = 'input window, operand 9, single buffered']
    #allocation18 [shape = 's32[1]{0}', space=sflag, size = 0x4, scoped, tag = 'scoped memory for tpu_custom_call.1']
    #allocation19 [shape = 'u8[65536]{0}', space=vmem, size = 0x10000, scoped, tag = 'output window, operand 0']
    #allocation20 [shape = 'u8[65536]{0}', space=vmem, size = 0x10000, scoped, tag = 'output window, operand 1']
    #allocation21 [shape = 's32[2]{0}', space=sflag, size = 0x8, scoped, tag = 'scoped memory for tpu_custom_call.1']
    #allocation22 [shape = 'u8[65536]{0}', space=vmem, size = 0x10000, scoped, tag = 'output window, operand 2']
    %18 = vsyncpa [#allocation3], 0
    %s19 = scalar_lea.sflag [#allocation3], 1
    %20 = vsyncpa %s19, 0
    %21 = vsyncpa [#allocation6], 0
    %s22 = scalar_lea.sflag [#allocation6], 1
    %23 = vsyncpa %s22, 0
    %24 = vsyncpa [#allocation9], 0
    %25 = vsyncpa [#allocation12], 0
    %26 = vsyncpa [#allocation15], 0
    %27 = vsyncpa [#allocation18], 0
    %28 = vsyncpa [#allocation4], 0
    %s29 = scalar_lea.sflag [#allocation4], 1
    %30 = vsyncpa %s29, 0
    %31 = vsyncpa [#allocation21], 0
    %s32 = scalar_lea.sflag [#allocation21], 1
    %33 = vsyncpa %s32, 0
    loop: start=0, step=1, limit=4
    $region2: #{tpu_custom_call.1} parent=1 // loop_pre_header
      _
    $region3: #{tpu_custom_call.1} parent=1 // loop_header
      %s35 = sphi 0, %s39
      %p36 = scmp.ge.s32.totalorder %s35, 4
      %s45 = sphi 0, %s47
      %s48 = sphi 0, %s45
      %s49 = sphi 0, %s48
      %s65 = sphi 0, %s49
      %s71 = sphi 0, %s73
      %s74 = sphi 0, %s71
      %s75 = sphi 0, %s74
      %s91 = sphi 0, %s75
      %s95 = sphi 0, %s95
      %s97 = sphi 0, %s95
      %s98 = sphi 0, %s97
      %s112 = sphi 0, %s98
      %s116 = sphi 0, %s116
      %s118 = sphi 0, %s116
      %s119 = sphi 0, %s118
      %s133 = sphi 0, %s119
      %s137 = sphi 0, %s137
      %s139 = sphi 0, %s137
      %s140 = sphi 0, %s139
      %s154 = sphi 0, %s140
      %s158 = sphi 0, %s158
      %s160 = sphi 0, %s158
      %s161 = sphi 0, %s160
      %s175 = sphi 0, %s161
      %s179 = sphi 0, %s179
      %s181 = sphi 0, %s179
      %s182 = sphi 0, %s181
      %s196 = sphi 0, %s182
      %s200 = sphi 0, %s200
      %s202 = sphi 0, %s200
      %s203 = sphi 0, %s202
      %s217 = sphi 0, %s203
      %s221 = sphi 0, %s221
      %s223 = sphi 0, %s221
      %s224 = sphi 0, %s223
      %s238 = sphi 0, %s224
      %s242 = sphi 0, %s242
      %s244 = sphi 0, %s242
      %s245 = sphi 0, %s244
      %s259 = sphi 0, %s245
      %s265 = sphi 0, %s267
      %s268 = sphi 0, %s265
      %s269 = sphi 0, %s268
      %s285 = sphi 0, %s269
      %s291 = sphi 0, %s293
      %s294 = sphi 0, %s291
      %s295 = sphi 0, %s294
      %s311 = sphi 0, %s295
      %s317 = sphi 0, %s319
      %s320 = sphi 0, %s317
      %s321 = sphi 0, %s320
      %s337 = sphi 0, %s321
    $region4: #{tpu_custom_call.1} parent=1 // loop_header_branch
      %38 = sbr.rel (%p36) target = $region8
    $region5: #{tpu_custom_call.1} parent=1 // loop_body
      %s40 = ssub.s32 %s35, 1
      %s41 = ssub.s32 %s35, 2
      %s42 = sadd.s32 %s35, 1
      %s43 = ssub.s32 %s35, %s42
      %p44 = scmp.eq.s32.totalorder %s43, 0
      %s46 = sadd.s32 %s45, 1
      %s47 = scalar_select %p44, %s45, %s46
      %p50 = pneg %p44
      %p51 = scmp.eq.s32.totalorder %s35, 1
      %p52 = por %p50, %p51
      %p53 = scmp.ne.s32.totalorder %s45, %s48
      %p54 = scmp.eq.s32.totalorder %s35, 0
      %p55 = por %p53, %p54
      %p56 = scmp.ne.s32.totalorder %s45, %s48
      %p57 = scmp.eq.s32.totalorder %s40, 1
      %p58 = por %p56, %p57
      %p59 = scmp.ne.s32.totalorder %s48, %s49
      %p60 = scmp.eq.s32.totalorder %s40, 0
      %p61 = por %p59, %p60
      %p62 = scmp.ne.s32.totalorder %s48, %s49
      %p63 = scmp.eq.s32.totalorder %s41, 1
      %p64 = por %p62, %p63
      %p66 = scmp.ne.s32.totalorder %s49, %s65
      %p67 = scmp.eq.s32.totalorder %s41, 0
      %p68 = por %p66, %p67
      %s69 = ssub.s32 %s35, %s42
      %p70 = scmp.eq.s32.totalorder %s69, 0
      %s72 = sadd.s32 %s71, 1
      %s73 = scalar_select %p70, %s71, %s72
      %p76 = pneg %p70
      %p77 = scmp.eq.s32.totalorder %s35, 1
      %p78 = por %p76, %p77
      %p79 = scmp.ne.s32.totalorder %s71, %s74
      %p80 = scmp.eq.s32.totalorder %s35, 0
      %p81 = por %p79, %p80
      %p82 = scmp.ne.s32.totalorder %s71, %s74
      %p83 = scmp.eq.s32.totalorder %s40, 1
      %p84 = por %p82, %p83
      %p85 = scmp.ne.s32.totalorder %s74, %s75
      %p86 = scmp.eq.s32.totalorder %s40, 0
      %p87 = por %p85, %p86
      %p88 = scmp.ne.s32.totalorder %s74, %s75
      %p89 = scmp.eq.s32.totalorder %s41, 1
      %p90 = por %p88, %p89
      %p92 = scmp.ne.s32.totalorder %s75, %s91
      %p93 = scmp.eq.s32.totalorder %s41, 0
      %p94 = por %p92, %p93
      %s96 = sadd.s32 %s95, 1
      %p99 = scmp.eq.s32.totalorder %s35, 1
      %p100 = scmp.ne.s32.totalorder %s95, %s97
      %p101 = scmp.eq.s32.totalorder %s35, 0
      %p102 = por %p100, %p101
      %p103 = scmp.ne.s32.totalorder %s95, %s97
      %p104 = scmp.eq.s32.totalorder %s40, 1
      %p105 = por %p103, %p104
      %p106 = scmp.ne.s32.totalorder %s97, %s98
      %p107 = scmp.eq.s32.totalorder %s40, 0
      %p108 = por %p106, %p107
      %p109 = scmp.ne.s32.totalorder %s97, %s98
      %p110 = scmp.eq.s32.totalorder %s41, 1
      %p111 = por %p109, %p110
      %p113 = scmp.ne.s32.totalorder %s98, %s112
      %p114 = scmp.eq.s32.totalorder %s41, 0
      %p115 = por %p113, %p114
      %s117 = sadd.s32 %s116, 1
      %p120 = scmp.eq.s32.totalorder %s35, 1
      %p121 = scmp.ne.s32.totalorder %s116, %s118
      %p122 = scmp.eq.s32.totalorder %s35, 0
      %p123 = por %p121, %p122
      %p124 = scmp.ne.s32.totalorder %s116, %s118
      %p125 = scmp.eq.s32.totalorder %s40, 1
      %p126 = por %p124, %p125
      %p127 = scmp.ne.s32.totalorder %s118, %s119
      %p128 = scmp.eq.s32.totalorder %s40, 0
      %p129 = por %p127, %p128
      %p130 = scmp.ne.s32.totalorder %s118, %s119
      %p131 = scmp.eq.s32.totalorder %s41, 1
      %p132 = por %p130, %p131
      %p134 = scmp.ne.s32.totalorder %s119, %s133
      %p135 = scmp.eq.s32.totalorder %s41, 0
      %p136 = por %p134, %p135
      %s138 = sadd.s32 %s137, 1
      %p141 = scmp.eq.s32.totalorder %s35, 1
      %p142 = scmp.ne.s32.totalorder %s137, %s139
      %p143 = scmp.eq.s32.totalorder %s35, 0
      %p144 = por %p142, %p143
      %p145 = scmp.ne.s32.totalorder %s137, %s139
      %p146 = scmp.eq.s32.totalorder %s40, 1
      %p147 = por %p145, %p146
      %p148 = scmp.ne.s32.totalorder %s139, %s140
      %p149 = scmp.eq.s32.totalorder %s40, 0
      %p150 = por %p148, %p149
      %p151 = scmp.ne.s32.totalorder %s139, %s140
      %p152 = scmp.eq.s32.totalorder %s41, 1
      %p153 = por %p151, %p152
      %p155 = scmp.ne.s32.totalorder %s140, %s154
      %p156 = scmp.eq.s32.totalorder %s41, 0
      %p157 = por %p155, %p156
      %s159 = sadd.s32 %s158, 1
      %p162 = scmp.eq.s32.totalorder %s35, 1
      %p163 = scmp.ne.s32.totalorder %s158, %s160
      %p164 = scmp.eq.s32.totalorder %s35, 0
      %p165 = por %p163, %p164
      %p166 = scmp.ne.s32.totalorder %s158, %s160
      %p167 = scmp.eq.s32.totalorder %s40, 1
      %p168 = por %p166, %p167
      %p169 = scmp.ne.s32.totalorder %s160, %s161
      %p170 = scmp.eq.s32.totalorder %s40, 0
      %p171 = por %p169, %p170
      %p172 = scmp.ne.s32.totalorder %s160, %s161
      %p173 = scmp.eq.s32.totalorder %s41, 1
      %p174 = por %p172, %p173
      %p176 = scmp.ne.s32.totalorder %s161, %s175
      %p177 = scmp.eq.s32.totalorder %s41, 0
      %p178 = por %p176, %p177
      %s180 = sadd.s32 %s179, 1
      %p183 = scmp.eq.s32.totalorder %s35, 1
      %p184 = scmp.ne.s32.totalorder %s179, %s181
      %p185 = scmp.eq.s32.totalorder %s35, 0
      %p186 = por %p184, %p185
      %p187 = scmp.ne.s32.totalorder %s179, %s181
      %p188 = scmp.eq.s32.totalorder %s40, 1
      %p189 = por %p187, %p188
      %p190 = scmp.ne.s32.totalorder %s181, %s182
      %p191 = scmp.eq.s32.totalorder %s40, 0
      %p192 = por %p190, %p191
      %p193 = scmp.ne.s32.totalorder %s181, %s182
      %p194 = scmp.eq.s32.totalorder %s41, 1
      %p195 = por %p193, %p194
      %p197 = scmp.ne.s32.totalorder %s182, %s196
      %p198 = scmp.eq.s32.totalorder %s41, 0
      %p199 = por %p197, %p198
      %s201 = sadd.s32 %s200, 1
      %p204 = scmp.eq.s32.totalorder %s35, 1
      %p205 = scmp.ne.s32.totalorder %s200, %s202
      %p206 = scmp.eq.s32.totalorder %s35, 0
      %p207 = por %p205, %p206
      %p208 = scmp.ne.s32.totalorder %s200, %s202
      %p209 = scmp.eq.s32.totalorder %s40, 1
      %p210 = por %p208, %p209
      %p211 = scmp.ne.s32.totalorder %s202, %s203
      %p212 = scmp.eq.s32.totalorder %s40, 0
      %p213 = por %p211, %p212
      %p214 = scmp.ne.s32.totalorder %s202, %s203
      %p215 = scmp.eq.s32.totalorder %s41, 1
      %p216 = por %p214, %p215
      %p218 = scmp.ne.s32.totalorder %s203, %s217
      %p219 = scmp.eq.s32.totalorder %s41, 0
      %p220 = por %p218, %p219
      %s222 = sadd.s32 %s221, 1
      %p225 = scmp.eq.s32.totalorder %s35, 1
      %p226 = scmp.ne.s32.totalorder %s221, %s223
      %p227 = scmp.eq.s32.totalorder %s35, 0
      %p228 = por %p226, %p227
      %p229 = scmp.ne.s32.totalorder %s221, %s223
      %p230 = scmp.eq.s32.totalorder %s40, 1
      %p231 = por %p229, %p230
      %p232 = scmp.ne.s32.totalorder %s223, %s224
      %p233 = scmp.eq.s32.totalorder %s40, 0
      %p234 = por %p232, %p233
      %p235 = scmp.ne.s32.totalorder %s223, %s224
      %p236 = scmp.eq.s32.totalorder %s41, 1
      %p237 = por %p235, %p236
      %p239 = scmp.ne.s32.totalorder %s224, %s238
      %p240 = scmp.eq.s32.totalorder %s41, 0
      %p241 = por %p239, %p240
      %s243 = sadd.s32 %s242, 1
      %p246 = scmp.eq.s32.totalorder %s35, 1
      %p247 = scmp.ne.s32.totalorder %s242, %s244
      %p248 = scmp.eq.s32.totalorder %s35, 0
      %p249 = por %p247, %p248
      %p250 = scmp.ne.s32.totalorder %s242, %s244
      %p251 = scmp.eq.s32.totalorder %s40, 1
      %p252 = por %p250, %p251
      %p253 = scmp.ne.s32.totalorder %s244, %s245
      %p254 = scmp.eq.s32.totalorder %s40, 0
      %p255 = por %p253, %p254
      %p256 = scmp.ne.s32.totalorder %s244, %s245
      %p257 = scmp.eq.s32.totalorder %s41, 1
      %p258 = por %p256, %p257
      %p260 = scmp.ne.s32.totalorder %s245, %s259
      %p261 = scmp.eq.s32.totalorder %s41, 0
      %p262 = por %p260, %p261
      %s263 = ssub.s32 %s35, %s42
      %p264 = scmp.eq.s32.totalorder %s263, 0
      %s266 = sadd.s32 %s265, 1
      %s267 = scalar_select %p264, %s265, %s266
      %p270 = pneg %p264
      %p271 = scmp.eq.s32.totalorder %s35, 1
      %p272 = por %p270, %p271
      %p273 = scmp.ne.s32.totalorder %s265, %s268
      %p274 = scmp.eq.s32.totalorder %s35, 0
      %p275 = por %p273, %p274
      %p276 = scmp.ne.s32.totalorder %s265, %s268
      %p277 = scmp.eq.s32.totalorder %s40, 1
      %p278 = por %p276, %p277
      %p279 = scmp.ne.s32.totalorder %s268, %s269
      %p280 = scmp.eq.s32.totalorder %s40, 0
      %p281 = por %p279, %p280
      %p282 = scmp.ne.s32.totalorder %s268, %s269
      %p283 = scmp.eq.s32.totalorder %s41, 1
      %p284 = por %p282, %p283
      %p286 = scmp.ne.s32.totalorder %s269, %s285
      %p287 = scmp.eq.s32.totalorder %s41, 0
      %p288 = por %p286, %p287
      %s289 = ssub.s32 %s35, %s42
      %p290 = scmp.eq.s32.totalorder %s289, 0
      %s292 = sadd.s32 %s291, 1
      %s293 = scalar_select %p290, %s291, %s292
      %p296 = pneg %p290
      %p297 = scmp.eq.s32.totalorder %s35, 1
      %p298 = por %p296, %p297
      %p299 = scmp.ne.s32.totalorder %s291, %s294
      %p300 = scmp.eq.s32.totalorder %s35, 0
      %p301 = por %p299, %p300
      %p302 = scmp.ne.s32.totalorder %s291, %s294
      %p303 = scmp.eq.s32.totalorder %s40, 1
      %p304 = por %p302, %p303
      %p305 = scmp.ne.s32.totalorder %s294, %s295
      %p306 = scmp.eq.s32.totalorder %s40, 0
      %p307 = por %p305, %p306
      %p308 = scmp.ne.s32.totalorder %s294, %s295
      %p309 = scmp.eq.s32.totalorder %s41, 1
      %p310 = por %p308, %p309
      %p312 = scmp.ne.s32.totalorder %s295, %s311
      %p313 = scmp.eq.s32.totalorder %s41, 0
      %p314 = por %p312, %p313
      %s315 = ssub.s32 %s35, %s42
      %p316 = scmp.eq.s32.totalorder %s315, 0
      %s318 = sadd.s32 %s317, 1
      %s319 = scalar_select %p316, %s317, %s318
      %p322 = pneg %p316
      %p323 = scmp.eq.s32.totalorder %s35, 1
      %p324 = por %p322, %p323
      %p325 = scmp.ne.s32.totalorder %s317, %s320
      %p326 = scmp.eq.s32.totalorder %s35, 0
      %p327 = por %p325, %p326
      %p328 = scmp.ne.s32.totalorder %s317, %s320
      %p329 = scmp.eq.s32.totalorder %s40, 1
      %p330 = por %p328, %p329
      %p331 = scmp.ne.s32.totalorder %s320, %s321
      %p332 = scmp.eq.s32.totalorder %s40, 0
      %p333 = por %p331, %p332
      %p334 = scmp.ne.s32.totalorder %s320, %s321
      %p335 = scmp.eq.s32.totalorder %s41, 1
      %p336 = por %p334, %p335
      %p338 = scmp.ne.s32.totalorder %s321, %s337
      %p339 = scmp.eq.s32.totalorder %s41, 0
      %p340 = por %p338, %p339
      %p341 = scmp.le.s32.totalorder 1, %s35
      %p342 = scmp.lt.s32.totalorder %s35, 3
      %p343 = pnand %p341, %p342
      %p344 = pneg %p343
      // Predicated region
      $region9: #{tpu_custom_call.1} parent=5 // pred_check
        _
      $region10: #{tpu_custom_call.1} parent=5 // pred_check_branch
        %346 = sbr.rel (%p343) target = $region12
      $region11: #{tpu_custom_call.1} parent=5 // pred_region
        %s347 = ssub.s32 %s35, 1
        // Predicated region
        $region13: #{tpu_custom_call.1} parent=11 // pred_check
          %p348 = pneg %p108
        $region14: #{tpu_custom_call.1} parent=11 // pred_check_branch
          %350 = sbr.rel (%p348) target = $region16
        $region15: #{tpu_custom_call.1} parent=11 // pred_region
          %s352 = ssub.s32 512, 512
          %353 = vsyncadd [#allocation6], %s352
          %s354 = sshll.u32 [#allocation7], 4
          %s355 = int_to_ptr.vmem [resolvable:$true] %s354
          %360 = dma.hbm_to_vmem [thread:$0]  %s2, 512, %s355, [#allocation6], 64, 64, 4
        $region16: #{tpu_custom_call.1} parent=11 // pred_fallthru
          _
        // Predicated region
        $region17: #{tpu_custom_call.1} parent=11 // pred_check
          %p361 = pneg %p129
        $region18: #{tpu_custom_call.1} parent=11 // pred_check_branch
          %363 = sbr.rel (%p361) target = $region20
        $region19: #{tpu_custom_call.1} parent=11 // pred_region
          %s365 = ssub.s32 512, 512
          %366 = vsyncadd [#allocation9], %s365
          %s367 = sshll.u32 [#allocation8], 4
          %s368 = int_to_ptr.vmem [resolvable:$true] %s367
          %373 = dma.hbm_to_vmem [thread:$0]  %s3, 512, %s368, [#allocation9], 64, 64, 4
        $region20: #{tpu_custom_call.1} parent=11 // pred_fallthru
          _
        // Predicated region
        $region21: #{tpu_custom_call.1} parent=11 // pred_check
          %p374 = pneg %p150
        $region22: #{tpu_custom_call.1} parent=11 // pred_check_branch
          %376 = sbr.rel (%p374) target = $region24
        $region23: #{tpu_custom_call.1} parent=11 // pred_region
          %s378 = ssub.s32 512, 512
          %379 = vsyncadd [#allocation9], %s378
          %s380 = sshll.u32 [#allocation10], 4
          %s381 = int_to_ptr.vmem [resolvable:$true] %s380
          %386 = dma.hbm_to_vmem [thread:$0]  %s4, 512, %s381, [#allocation9], 64, 64, 4
        $region24: #{tpu_custom_call.1} parent=11 // pred_fallthru
          _
        // Predicated region
        $region25: #{tpu_custom_call.1} parent=11 // pred_check
          %p387 = pneg %p171
        $region26: #{tpu_custom_call.1} parent=11 // pred_check_branch
          %389 = sbr.rel (%p387) target = $region28
        $region27: #{tpu_custom_call.1} parent=11 // pred_region
          %s391 = ssub.s32 512, 512
          %392 = vsyncadd [#allocation12], %s391
          %s393 = sshll.u32 [#allocation11], 4
          %s394 = int_to_ptr.vmem [resolvable:$true] %s393
          %399 = dma.hbm_to_vmem [thread:$0]  %s5, 512, %s394, [#allocation12], 64, 64, 4
        $region28: #{tpu_custom_call.1} parent=11 // pred_fallthru
          _
        // Predicated region
        $region29: #{tpu_custom_call.1} parent=11 // pred_check
          %p400 = pneg %p192
        $region30: #{tpu_custom_call.1} parent=11 // pred_check_branch
          %402 = sbr.rel (%p400) target = $region32
        $region31: #{tpu_custom_call.1} parent=11 // pred_region
          %s404 = ssub.s32 1024, 1024
          %405 = vsyncadd [#allocation12], %s404
          %s406 = sshll.u32 [#allocation13], 4
          %s407 = int_to_ptr.vmem [resolvable:$true] %s406
          %412 = dma.hbm_to_vmem [thread:$0]  %s6, 1024, %s407, [#allocation12], 128, 128, 8
        $region32: #{tpu_custom_call.1} parent=11 // pred_fallthru
          _
        // Predicated region
        $region33: #{tpu_custom_call.1} parent=11 // pred_check
          %p413 = pneg %p213
        $region34: #{tpu_custom_call.1} parent=11 // pred_check_branch
          %415 = sbr.rel (%p413) target = $region36
        $region35: #{tpu_custom_call.1} parent=11 // pred_region
          %s417 = ssub.s32 1024, 1024
          %418 = vsyncadd [#allocation15], %s417
          %s419 = sshll.u32 [#allocation14], 4
          %s420 = int_to_ptr.vmem [resolvable:$true] %s419
          %425 = dma.hbm_to_vmem [thread:$0]  %s7, 1024, %s420, [#allocation15], 128, 128, 8
        $region36: #{tpu_custom_call.1} parent=11 // pred_fallthru
          _
        // Predicated region
        $region37: #{tpu_custom_call.1} parent=11 // pred_check
          %p426 = pneg %p234
        $region38: #{tpu_custom_call.1} parent=11 // pred_check_branch
          %428 = sbr.rel (%p426) target = $region40
        $region39: #{tpu_custom_call.1} parent=11 // pred_region
          %s430 = ssub.s32 1536, 1536
          %431 = vsyncadd [#allocation15], %s430
          %s432 = sshll.u32 [#allocation16], 4
          %s433 = int_to_ptr.vmem [resolvable:$true] %s432
          %438 = dma.hbm_to_vmem [thread:$0]  %s8, 1536, %s433, [#allocation15], 64, 64, 4
        $region40: #{tpu_custom_call.1} parent=11 // pred_fallthru
          _
        // Predicated region
        $region41: #{tpu_custom_call.1} parent=11 // pred_check
          %p439 = pneg %p255
        $region42: #{tpu_custom_call.1} parent=11 // pred_check_branch
          %441 = sbr.rel (%p439) target = $region44
        $region43: #{tpu_custom_call.1} parent=11 // pred_region
          %s443 = ssub.s32 1536, 1536
          %444 = vsyncadd [#allocation18], %s443
          %s445 = sshll.u32 [#allocation17], 4
          %s446 = int_to_ptr.vmem [resolvable:$true] %s445
          %451 = dma.hbm_to_vmem [thread:$0]  %s9, 1536, %s446, [#allocation18], 64, 64, 4
        $region44: #{tpu_custom_call.1} parent=11 // pred_fallthru
          _
      $region12: #{tpu_custom_call.1} parent=5 // pred_fallthru
        _
      %p452 = scmp.lt.s32.totalorder %s35, 2
      // Predicated region
      $region45: #{tpu_custom_call.1} parent=5 // pred_check
        %p453 = pneg %p452
      $region46: #{tpu_custom_call.1} parent=5 // pred_check_branch
        %455 = sbr.rel (%p453) target = $region48
      $region47: #{tpu_custom_call.1} parent=5 // pred_region
        // Predicated region
        $region49: #{tpu_custom_call.1} parent=47 // pred_check
          %p456 = pneg %p55
        $region50: #{tpu_custom_call.1} parent=47 // pred_check_branch
          %458 = sbr.rel (%p456) target = $region52
        $region51: #{tpu_custom_call.1} parent=47 // pred_region
          %s459 = sand.u32 %s45, 1
          %s460 = scalar_lea.sflag [#allocation3], %s459
          %s461 = sand.u32 %s45, 1
          %s462 = smul.addr %s461, 64
          %s463 = scalar_lea.vmem [#allocation2], %s462
          %s465 = ssub.s32 1024, 1024
          %466 = vsyncadd %s460, %s465
          %s467 = smul.addr %s35, 8
          %s468 = smul.addr %s467, 128
          %s469 = scalar_lea.hbm %s0, %s468
          %s470 = sshll.u32 %s463, 4
          %s471 = int_to_ptr.vmem [resolvable:$true] %s470
          %476 = dma.hbm_to_vmem [thread:$0]  %s469, 1024, %s471, %s460, 128, 128, 8
        $region52: #{tpu_custom_call.1} parent=47 // pred_fallthru
          _
        // Predicated region
        $region53: #{tpu_custom_call.1} parent=47 // pred_check
          %p477 = pneg %p81
        $region54: #{tpu_custom_call.1} parent=47 // pred_check_branch
          %479 = sbr.rel (%p477) target = $region56
        $region55: #{tpu_custom_call.1} parent=47 // pred_region
          %s480 = sand.u32 %s35, 1
          %s481 = scalar_lea.sflag [#allocation6], %s480
          %s482 = sand.u32 %s71, 1
          %s483 = smul.addr %s482, 64
          %s484 = scalar_lea.vmem [#allocation5], %s483
          %s486 = ssub.s32 1024, 1024
          %487 = vsyncadd %s481, %s486
          %s488 = smul.addr %s35, 8
          %s489 = smul.addr %s488, 128
          %s490 = scalar_lea.hbm %s1, %s489
          %s491 = sshll.u32 %s484, 4
          %s492 = int_to_ptr.vmem [resolvable:$true] %s491
          %497 = dma.hbm_to_vmem [thread:$0]  %s490, 1024, %s492, %s481, 128, 128, 8
        $region56: #{tpu_custom_call.1} parent=47 // pred_fallthru
          _
      $region48: #{tpu_custom_call.1} parent=5 // pred_fallthru
        _
      %p498 = scmp.le.s32.totalorder 1, %s35
      %p499 = scmp.lt.s32.totalorder %s35, 3
      %p500 = pnand %p498, %p499
      %p501 = pneg %p500
      // Predicated region
      $region57: #{tpu_custom_call.1} parent=5 // pred_check
        _
      $region58: #{tpu_custom_call.1} parent=5 // pred_check_branch
        %503 = sbr.rel (%p500) target = $region60
      $region59: #{tpu_custom_call.1} parent=5 // pred_region
        %s504 = ssub.s32 %s35, 1
        %s505 = sand.u32 %s48, 1
        %s506 = scalar_lea.sflag [#allocation3], %s505
        %s507 = sand.u32 %s48, 1
        %s508 = smul.addr %s507, 64
        %s509 = scalar_lea.vmem [#allocation2], %s508
        // Predicated region
        $region61: #{tpu_custom_call.1} parent=59 // pred_check
          %p510 = pneg %p61
        $region62: #{tpu_custom_call.1} parent=59 // pred_check_branch
          %512 = sbr.rel (%p510) target = $region64
        $region63: #{tpu_custom_call.1} parent=59 // pred_region
          %513 = dma.done %s506, 1024
        $region64: #{tpu_custom_call.1} parent=59 // pred_fallthru
          _
        %s514 = sand.u32 %s40, 1
        %s515 = scalar_lea.sflag [#allocation6], %s514
        %s516 = sand.u32 %s74, 1
        %s517 = smul.addr %s516, 64
        %s518 = scalar_lea.vmem [#allocation5], %s517
        // Predicated region
        $region65: #{tpu_custom_call.1} parent=59 // pred_check
          %p519 = pneg %p87
        $region66: #{tpu_custom_call.1} parent=59 // pred_check_branch
          %521 = sbr.rel (%p519) target = $region68
        $region67: #{tpu_custom_call.1} parent=59 // pred_region
          %522 = dma.done %s515, 1024
        $region68: #{tpu_custom_call.1} parent=59 // pred_fallthru
          _
        // Predicated region
        $region69: #{tpu_custom_call.1} parent=59 // pred_check
          %p523 = pneg %p108
        $region70: #{tpu_custom_call.1} parent=59 // pred_check_branch
          %525 = sbr.rel (%p523) target = $region72
        $region71: #{tpu_custom_call.1} parent=59 // pred_region
          %526 = dma.done [#allocation6], 512
        $region72: #{tpu_custom_call.1} parent=59 // pred_fallthru
          _
        // Predicated region
        $region73: #{tpu_custom_call.1} parent=59 // pred_check
          %p527 = pneg %p129
        $region74: #{tpu_custom_call.1} parent=59 // pred_check_branch
          %529 = sbr.rel (%p527) target = $region76
        $region75: #{tpu_custom_call.1} parent=59 // pred_region
          %530 = dma.done [#allocation9], 512
        $region76: #{tpu_custom_call.1} parent=59 // pred_fallthru
          _
        // Predicated region
        $region77: #{tpu_custom_call.1} parent=59 // pred_check
          %p531 = pneg %p150
        $region78: #{tpu_custom_call.1} parent=59 // pred_check_branch
          %533 = sbr.rel (%p531) target = $region80
        $region79: #{tpu_custom_call.1} parent=59 // pred_region
          %534 = dma.done [#allocation9], 512
        $region80: #{tpu_custom_call.1} parent=59 // pred_fallthru
          _
        // Predicated region
        $region81: #{tpu_custom_call.1} parent=59 // pred_check
          %p535 = pneg %p171
        $region82: #{tpu_custom_call.1} parent=59 // pred_check_branch
          %537 = sbr.rel (%p535) target = $region84
        $region83: #{tpu_custom_call.1} parent=59 // pred_region
          %538 = dma.done [#allocation12], 512
        $region84: #{tpu_custom_call.1} parent=59 // pred_fallthru
          _
        // Predicated region
        $region85: #{tpu_custom_call.1} parent=59 // pred_check
          %p539 = pneg %p192
        $region86: #{tpu_custom_call.1} parent=59 // pred_check_branch
          %541 = sbr.rel (%p539) target = $region88
        $region87: #{tpu_custom_call.1} parent=59 // pred_region
          %542 = dma.done [#allocation12], 1024
        $region88: #{tpu_custom_call.1} parent=59 // pred_fallthru
          _
        // Predicated region
        $region89: #{tpu_custom_call.1} parent=59 // pred_check
          %p543 = pneg %p213
        $region90: #{tpu_custom_call.1} parent=59 // pred_check_branch
          %545 = sbr.rel (%p543) target = $region92
        $region91: #{tpu_custom_call.1} parent=59 // pred_region
          %546 = dma.done [#allocation15], 1024
        $region92: #{tpu_custom_call.1} parent=59 // pred_fallthru
          _
        // Predicated region
        $region93: #{tpu_custom_call.1} parent=59 // pred_check
          %p547 = pneg %p234
        $region94: #{tpu_custom_call.1} parent=59 // pred_check_branch
          %549 = sbr.rel (%p547) target = $region96
        $region95: #{tpu_custom_call.1} parent=59 // pred_region
          %550 = dma.done [#allocation15], 1536
        $region96: #{tpu_custom_call.1} parent=59 // pred_fallthru
          _
        // Predicated region
        $region97: #{tpu_custom_call.1} parent=59 // pred_check
          %p551 = pneg %p255
        $region98: #{tpu_custom_call.1} parent=59 // pred_check_branch
          %553 = sbr.rel (%p551) target = $region100
        $region99: #{tpu_custom_call.1} parent=59 // pred_region
          %554 = dma.done [#allocation18], 1536
        $region100: #{tpu_custom_call.1} parent=59 // pred_fallthru
          _
        %s555 = sand.u32 %s48, 1
        %s556 = scalar_lea.sflag [#allocation3], %s555
        %s557 = sand.u32 %s48, 1
        %s558 = smul.addr %s557, 64
        %s559 = scalar_lea.vmem [#allocation2], %s558
        %p560 = pneg %p61
        %p561 = pneg %p58
        %s562 = sand.u32 %s40, 1
        %s563 = scalar_lea.sflag [#allocation6], %s562
        %s564 = sand.u32 %s74, 1
        %s565 = smul.addr %s564, 64
        %s566 = scalar_lea.vmem [#allocation5], %s565
        %p567 = pneg %p87
        %p568 = pneg %p84
        %p569 = pneg %p108
        %p570 = pneg %p105
        %p571 = pneg %p129
        %p572 = pneg %p126
        %p573 = pneg %p150
        %p574 = pneg %p147
        %p575 = pneg %p171
        %p576 = pneg %p168
        %p577 = pneg %p192
        %p578 = pneg %p189
        %p579 = pneg %p213
        %p580 = pneg %p210
        %p581 = pneg %p234
        %p582 = pneg %p231
        %p583 = pneg %p255
        %p584 = pneg %p252
        %p585 = pneg %p281
        %p586 = pneg %p278
        %s587 = sand.u32 %s268, 1
        %s588 = scalar_lea.sflag [#allocation4], %s587
        %s589 = sand.u32 %s268, 1
        %s590 = smul.addr %s589, 64
        %s591 = scalar_lea.vmem [#allocation19], %s590
        %p592 = pneg %p307
        %p593 = pneg %p304
        %s594 = sand.u32 %s40, 1
        %s595 = scalar_lea.sflag [#allocation21], %s594
        %s596 = sand.u32 %s294, 1
        %s597 = smul.addr %s596, 64
        %s598 = scalar_lea.vmem [#allocation20], %s597
        %p599 = pneg %p333
        %p600 = pneg %p330
        %s601 = sand.u32 %s40, 1
        %s602 = scalar_lea.sflag [#allocation21], %s601
        %s603 = sand.u32 %s320, 1
        %s604 = smul.addr %s603, 64
        %s605 = scalar_lea.vmem [#allocation22], %s604
        %v607 = vld [vmem:[%s509] sm:$0xff]
        %v608 = vld [vmem:[%s509 + $0x8] sm:$0xff]
        %v609 = vld [vmem:[%s509 + $0x10] sm:$0xff]
        %v610 = vld [vmem:[%s509 + $0x18] sm:$0xff]
        %v611 = vld [vmem:[%s509 + $0x20] sm:$0xff]
        %v612 = vld [vmem:[%s509 + $0x28] sm:$0xff]
        %v613 = vld [vmem:[%s509 + $0x30] sm:$0xff]
        %v614 = vld [vmem:[%s509 + $0x38] sm:$0xff]
        %vm615 = vcmask 523264
        %616 = vst.msk [vmem:[%s591] sm:$0xff] %vm615, %v607
        %617 = vst.msk [vmem:[%s591 + $0x8] sm:$0xff] %vm615, %v608
        %618 = vst.msk [vmem:[%s591 + $0x10] sm:$0xff] %vm615, %v609
        %619 = vst.msk [vmem:[%s591 + $0x18] sm:$0xff] %vm615, %v610
        %620 = vst.msk [vmem:[%s591 + $0x20] sm:$0xff] %vm615, %v611
        %621 = vst.msk [vmem:[%s591 + $0x28] sm:$0xff] %vm615, %v612
        %622 = vst.msk [vmem:[%s591 + $0x30] sm:$0xff] %vm615, %v613
        %623 = vst.msk [vmem:[%s591 + $0x38] sm:$0xff] %vm615, %v614
        %v624 = vld [vmem:[%s518] sm:$0xff]
        %v625 = vld [vmem:[%s518 + $0x8] sm:$0xff]
        %v626 = vld [vmem:[%s518 + $0x10] sm:$0xff]
        %v627 = vld [vmem:[%s518 + $0x18] sm:$0xff]
        %v628 = vld [vmem:[%s518 + $0x20] sm:$0xff]
        %v629 = vld [vmem:[%s518 + $0x28] sm:$0xff]
        %v630 = vld [vmem:[%s518 + $0x30] sm:$0xff]
        %v631 = vld [vmem:[%s518 + $0x38] sm:$0xff]
        %632 = vst.msk [vmem:[%s598] sm:$0xff] %vm615, %v624
        %633 = vst.msk [vmem:[%s598 + $0x8] sm:$0xff] %vm615, %v625
        %634 = vst.msk [vmem:[%s598 + $0x10] sm:$0xff] %vm615, %v626
        %635 = vst.msk [vmem:[%s598 + $0x18] sm:$0xff] %vm615, %v627
        %636 = vst.msk [vmem:[%s598 + $0x20] sm:$0xff] %vm615, %v628
        %637 = vst.msk [vmem:[%s598 + $0x28] sm:$0xff] %vm615, %v629
        %638 = vst.msk [vmem:[%s598 + $0x30] sm:$0xff] %vm615, %v630
        %639 = vst.msk [vmem:[%s598 + $0x38] sm:$0xff] %vm615, %v631
        loop: start=0, step=1, limit=3
        $region101: #{tpu_custom_call.1} parent=59 // loop_pre_header
          _
        $region102: #{tpu_custom_call.1} parent=59 // loop_header
          %s641 = sphi 0, %s645
          %p642 = scmp.ge.s32.totalorder %s641, 3
        $region103: #{tpu_custom_call.1} parent=59 // loop_header_branch
          %644 = sbr.rel (%p642) target = $region107
        $region104: #{tpu_custom_call.1} parent=59 // loop_body
          %v646 = vld [vmem:[%s591] sm:$0xff]
          %v647 = vld [vmem:[%s591 + $0x8] sm:$0xff]
          %v648 = vld [vmem:[%s591 + $0x10] sm:$0xff]
          %v649 = vld [vmem:[%s591 + $0x18] sm:$0xff]
          %v650 = vld [vmem:[%s591 + $0x20] sm:$0xff]
          %v651 = vld [vmem:[%s591 + $0x28] sm:$0xff]
          %v652 = vld [vmem:[%s591 + $0x30] sm:$0xff]
          %v653 = vld [vmem:[%s591 + $0x38] sm:$0xff]
          %v654 = vld [vmem:[%s598] sm:$0xff]
          %v655 = vld [vmem:[%s598 + $0x8] sm:$0xff]
          %v656 = vld [vmem:[%s598 + $0x10] sm:$0xff]
          %v657 = vld [vmem:[%s598 + $0x18] sm:$0xff]
          %v658 = vld [vmem:[%s598 + $0x20] sm:$0xff]
          %v659 = vld [vmem:[%s598 + $0x28] sm:$0xff]
          %v660 = vld [vmem:[%s598 + $0x30] sm:$0xff]
          %v661 = vld [vmem:[%s598 + $0x38] sm:$0xff]
          %v662 = vpack.c.bf16 %v647, %v646
          %v663 = vpack.c.bf16 %v649, %v648
          %v664 = vpack.c.bf16 %v651, %v650
          %v665 = vpack.c.bf16 %v653, %v652
          %v666 = vpack.c.bf16 %v655, %v654
          %v667 = vpack.c.bf16 %v657, %v656
          %v668 = vpack.c.bf16 %v659, %v658
          %v669 = vpack.c.bf16 %v661, %v660
          %v670 = vld [vmem:[#allocation7] sm:$0xf]
          %v671 = vld [vmem:[#allocation7 + $0x4] sm:$0xf]
          %v672 = vld [vmem:[#allocation7 + $0x8] sm:$0xf]
          %v673 = vld [vmem:[#allocation7 + $0xc] sm:$0xf]
          %v674 = vld [vmem:[#allocation7 + $0x10] sm:$0xf]
          %v675 = vld [vmem:[#allocation7 + $0x14] sm:$0xf]
          %v676 = vld [vmem:[#allocation7 + $0x18] sm:$0xf]
          %v677 = vld [vmem:[#allocation7 + $0x1c] sm:$0xf]
          %v686 = vunpack.c.l.b16 %v670
          %v687 = vunpack.c.l.b16 %v671
          %v688 = vunpack.c.l.b16 %v672
          %v689 = vunpack.c.l.b16 %v673
          %v690 = vunpack.c.l.b16 %v674
          %v691 = vunpack.c.l.b16 %v675
          %v692 = vunpack.c.l.b16 %v676
          %v693 = vunpack.c.l.b16 %v677
          %v694 = vpack.c.b16 %v687, %v686
          %v695 = vpack.c.b16 %v689, %v688
          %v696 = vpack.c.b16 %v691, %v690
          %v697 = vpack.c.b16 %v693, %v692
          %v699 = vsel %vm615, %v694, 0
          %v702 = vsel %vm615, %v695, 0
          %v705 = vsel %vm615, %v696, 0
          %v708 = vsel %vm615, %v697, 0
          %710 = vmatprep.subr.bf16.mxu0 0
          %711 = vmatpush1.bf16.msra.mxu0 %v662
          %712 = vmatprep.subr.bf16.mxu0 0
          %713 = vmatpush1.bf16.msra.mxu0 %v663
          %714 = vmatprep.subr.bf16.mxu0 0
          %715 = vmatpush1.bf16.msra.mxu0 %v664
          %716 = vmatprep.subr.bf16.mxu0 0
          %717 = vmatpush1.bf16.msra.mxu0 %v665
          %718 = vmatprep.subr.bf16.mxu0 0
          %719 = vmatpush1.bf16.msra.mxu0 0
          %720 = vmatprep.subr.bf16.mxu0 0
          %721 = vmatpush1.bf16.msra.mxu0 0
          %722 = vmatprep.subr.bf16.mxu0 0
          %723 = vmatpush1.bf16.msra.mxu0 0
          %724 = vmatprep.subr.bf16.mxu0 0
          %725 = vmatpush1.bf16.msra.mxu0 0
          %726 = vmatprep.subr.bf16.mxu0 0
          %727 = vmatpush1.bf16.msra.mxu0 0
          %728 = vmatprep.subr.bf16.mxu0 0
          %729 = vmatpush1.bf16.msra.mxu0 0
          %730 = vmatprep.subr.bf16.mxu0 0
          %731 = vmatpush1.bf16.msra.mxu0 0
          %732 = vmatprep.subr.bf16.mxu0 0
          %733 = vmatpush1.bf16.msra.mxu0 0
          %734 = vmatprep.subr.bf16.mxu0 0
          %735 = vmatpush1.bf16.msra.mxu0 0
          %736 = vmatprep.subr.bf16.mxu0 0
          %737 = vmatpush1.bf16.msra.mxu0 0
          %738 = vmatprep.subr.bf16.mxu0 0
          %739 = vmatpush1.bf16.msra.mxu0 0
          %740 = vmatprep.subr.bf16.mxu0 0
          %741 = vmatpush1.bf16.msra.mxu0 0
          %742 = vmatprep.mubr.bf16.mxu0 0
          %743 = vmatmul.mubr.bf16.gmra.mrb[0].mxu0 %v699
          %v744 = vpop.f32.mrb[0].mxu0
          %v745 = vadd.f32 0.0, %v744
          %v746 = vpop.f32.mrb[0].mxu0
          %v747 = vpop.f32.mrb[0].mxu0
          %v748 = vadd.f32 0.0, %v747
          %v749 = vpop.f32.mrb[0].mxu0
          %750 = vmatprep.mubr.bf16.mxu0 0
          %751 = vmatmul.mubr.bf16.gmra.mrb[0].mxu0 %v702
          %v752 = vpop.f32.mrb[0].mxu0
          %v753 = vadd.f32 0.0, %v752
          %v754 = vpop.f32.mrb[0].mxu0
          %v755 = vpop.f32.mrb[0].mxu0
          %v756 = vadd.f32 0.0, %v755
          %v757 = vpop.f32.mrb[0].mxu0
          %758 = vmatprep.mubr.bf16.mxu0 0
          %759 = vmatmul.mubr.bf16.gmra.mrb[0].mxu0 %v705
          %v760 = vpop.f32.mrb[0].mxu0
          %v761 = vadd.f32 0.0, %v760
          %v762 = vpop.f32.mrb[0].mxu0
          %v763 = vpop.f32.mrb[0].mxu0
          %v764 = vadd.f32 0.0, %v763
          %v765 = vpop.f32.mrb[0].mxu0
          %766 = vmatprep.mubr.bf16.mxu0 0
          %767 = vmatmul.mubr.bf16.gmra.mrb[0].mxu0 %v708
          %v768 = vpop.f32.mrb[0].mxu0
          %v769 = vadd.f32 0.0, %v768
          %v770 = vpop.f32.mrb[0].mxu0
          %v771 = vpop.f32.mrb[0].mxu0
          %v772 = vadd.f32 0.0, %v771
          %v773 = vpop.f32.mrb[0].mxu0
          %774 = vdwg.mxu0
          %v775 = vld [vmem:[#allocation8] sm:$0xf]
          %v776 = vld [vmem:[#allocation8 + $0x4] sm:$0xf]
          %v777 = vld [vmem:[#allocation8 + $0x8] sm:$0xf]
          %v778 = vld [vmem:[#allocation8 + $0xc] sm:$0xf]
          %v779 = vld [vmem:[#allocation8 + $0x10] sm:$0xf]
          %v780 = vld [vmem:[#allocation8 + $0x14] sm:$0xf]
          %v781 = vld [vmem:[#allocation8 + $0x18] sm:$0xf]
          %v782 = vld [vmem:[#allocation8 + $0x1c] sm:$0xf]
          %v791 = vunpack.c.l.b16 %v775
          %v792 = vunpack.c.l.b16 %v776
          %v793 = vunpack.c.l.b16 %v777
          %v794 = vunpack.c.l.b16 %v778
          %v795 = vunpack.c.l.b16 %v779
          %v796 = vunpack.c.l.b16 %v780
          %v797 = vunpack.c.l.b16 %v781
          %v798 = vunpack.c.l.b16 %v782
          %v799 = vpack.c.b16 %v792, %v791
          %v800 = vpack.c.b16 %v794, %v793
          %v801 = vpack.c.b16 %v796, %v795
          %v802 = vpack.c.b16 %v798, %v797
          %v804 = vsel %vm615, %v799, 0
          %v807 = vsel %vm615, %v800, 0
          %v810 = vsel %vm615, %v801, 0
          %v813 = vsel %vm615, %v802, 0
          %815 = vmatprep.subr.bf16.mxu0 0
          %816 = vmatpush1.bf16.msra.mxu0 %v666
          %817 = vmatprep.subr.bf16.mxu0 0
          %818 = vmatpush1.bf16.msra.mxu0 %v667
          %819 = vmatprep.subr.bf16.mxu0 0
          %820 = vmatpush1.bf16.msra.mxu0 %v668
          %821 = vmatprep.subr.bf16.mxu0 0
          %822 = vmatpush1.bf16.msra.mxu0 %v669
          %823 = vmatprep.subr.bf16.mxu0 0
          %824 = vmatpush1.bf16.msra.mxu0 0
          %825 = vmatprep.subr.bf16.mxu0 0
          %826 = vmatpush1.bf16.msra.mxu0 0
          %827 = vmatprep.subr.bf16.mxu0 0
          %828 = vmatpush1.bf16.msra.mxu0 0
          %829 = vmatprep.subr.bf16.mxu0 0
          %830 = vmatpush1.bf16.msra.mxu0 0
          %831 = vmatprep.subr.bf16.mxu0 0
          %832 = vmatpush1.bf16.msra.mxu0 0
          %833 = vmatprep.subr.bf16.mxu0 0
          %834 = vmatpush1.bf16.msra.mxu0 0
          %835 = vmatprep.subr.bf16.mxu0 0
          %836 = vmatpush1.bf16.msra.mxu0 0
          %837 = vmatprep.subr.bf16.mxu0 0
          %838 = vmatpush1.bf16.msra.mxu0 0
          %839 = vmatprep.subr.bf16.mxu0 0
          %840 = vmatpush1.bf16.msra.mxu0 0
          %841 = vmatprep.subr.bf16.mxu0 0
          %842 = vmatpush1.bf16.msra.mxu0 0
          %843 = vmatprep.subr.bf16.mxu0 0
          %844 = vmatpush1.bf16.msra.mxu0 0
          %845 = vmatprep.subr.bf16.mxu0 0
          %846 = vmatpush1.bf16.msra.mxu0 0
          %847 = vmatprep.mubr.bf16.mxu0 0
          %848 = vmatmul.mubr.bf16.gmra.mrb[0].mxu0 %v804
          %v849 = vpop.f32.mrb[0].mxu0
          %v850 = vadd.f32 0.0, %v849
          %v851 = vpop.f32.mrb[0].mxu0
          %v852 = vpop.f32.mrb[0].mxu0
          %v853 = vadd.f32 0.0, %v852
          %v854 = vpop.f32.mrb[0].mxu0
          %855 = vmatprep.mubr.bf16.mxu0 0
          %856 = vmatmul.mubr.bf16.gmra.mrb[0].mxu0 %v807
          %v857 = vpop.f32.mrb[0].mxu0
          %v858 = vadd.f32 0.0, %v857
          %v859 = vpop.f32.mrb[0].mxu0
          %v860 = vpop.f32.mrb[0].mxu0
          %v861 = vadd.f32 0.0, %v860
          %v862 = vpop.f32.mrb[0].mxu0
          %863 = vmatprep.mubr.bf16.mxu0 0
          %864 = vmatmul.mubr.bf16.gmra.mrb[0].mxu0 %v810
          %v865 = vpop.f32.mrb[0].mxu0
          %v866 = vadd.f32 0.0, %v865
          %v867 = vpop.f32.mrb[0].mxu0
          %v868 = vpop.f32.mrb[0].mxu0
          %v869 = vadd.f32 0.0, %v868
          %v870 = vpop.f32.mrb[0].mxu0
          %871 = vmatprep.mubr.bf16.mxu0 0
          %872 = vmatmul.mubr.bf16.gmra.mrb[0].mxu0 %v813
          %v873 = vpop.f32.mrb[0].mxu0
          %v874 = vadd.f32 0.0, %v873
          %v875 = vpop.f32.mrb[0].mxu0
          %v876 = vpop.f32.mrb[0].mxu0
          %v877 = vadd.f32 0.0, %v876
          %v878 = vpop.f32.mrb[0].mxu0
          %879 = vdwg.mxu0
          %v880 = vsub.f32 %v745, %v850
          %v881 = vsub.f32 %v748, %v853
          %v882 = vsub.f32 %v753, %v858
          %v883 = vsub.f32 %v756, %v861
          %v884 = vsub.f32 %v761, %v866
          %v885 = vsub.f32 %v764, %v869
          %v886 = vsub.f32 %v769, %v874
          %v887 = vsub.f32 %v772, %v877
          %888 = vmatprep.subr.bf16.mxu0 0
          %889 = vmatpush1.bf16.msra.mxu0 %v662
          %890 = vmatprep.subr.bf16.mxu0 0
          %891 = vmatpush1.bf16.msra.mxu0 %v663
          %892 = vmatprep.subr.bf16.mxu0 0
          %893 = vmatpush1.bf16.msra.mxu0 %v664
          %894 = vmatprep.subr.bf16.mxu0 0
          %895 = vmatpush1.bf16.msra.mxu0 %v665
          %896 = vmatprep.subr.bf16.mxu0 0
          %897 = vmatpush1.bf16.msra.mxu0 0
          %898 = vmatprep.subr.bf16.mxu0 0
          %899 = vmatpush1.bf16.msra.mxu0 0
          %900 = vmatprep.subr.bf16.mxu0 0
          %901 = vmatpush1.bf16.msra.mxu0 0
          %902 = vmatprep.subr.bf16.mxu0 0
          %903 = vmatpush1.bf16.msra.mxu0 0
          %904 = vmatprep.subr.bf16.mxu0 0
          %905 = vmatpush1.bf16.msra.mxu0 0
          %906 = vmatprep.subr.bf16.mxu0 0
          %907 = vmatpush1.bf16.msra.mxu0 0
          %908 = vmatprep.subr.bf16.mxu0 0
          %909 = vmatpush1.bf16.msra.mxu0 0
          %910 = vmatprep.subr.bf16.mxu0 0
          %911 = vmatpush1.bf16.msra.mxu0 0
          %912 = vmatprep.subr.bf16.mxu0 0
          %913 = vmatpush1.bf16.msra.mxu0 0
          %914 = vmatprep.subr.bf16.mxu0 0
          %915 = vmatpush1.bf16.msra.mxu0 0
          %916 = vmatprep.subr.bf16.mxu0 0
          %917 = vmatpush1.bf16.msra.mxu0 0
          %918 = vmatprep.subr.bf16.mxu0 0
          %919 = vmatpush1.bf16.msra.mxu0 0
          %920 = vmatprep.mubr.bf16.mxu0 0
          %921 = vmatmul.mubr.bf16.gmra.mrb[0].mxu0 %v804
          %v922 = vpop.f32.mrb[0].mxu0
          %v923 = vadd.f32 0.0, %v922
          %v924 = vpop.f32.mrb[0].mxu0
          %v925 = vpop.f32.mrb[0].mxu0
          %v926 = vadd.f32 0.0, %v925
          %v927 = vpop.f32.mrb[0].mxu0
          %928 = vmatprep.mubr.bf16.mxu0 0
          %929 = vmatmul.mubr.bf16.gmra.mrb[0].mxu0 %v807
          %v930 = vpop.f32.mrb[0].mxu0
          %v931 = vadd.f32 0.0, %v930
          %v932 = vpop.f32.mrb[0].mxu0
          %v933 = vpop.f32.mrb[0].mxu0
          %v934 = vadd.f32 0.0, %v933
          %v935 = vpop.f32.mrb[0].mxu0
          %936 = vmatprep.mubr.bf16.mxu0 0
          %937 = vmatmul.mubr.bf16.gmra.mrb[0].mxu0 %v810
          %v938 = vpop.f32.mrb[0].mxu0
          %v939 = vadd.f32 0.0, %v938
          %v940 = vpop.f32.mrb[0].mxu0
          %v941 = vpop.f32.mrb[0].mxu0
          %v942 = vadd.f32 0.0, %v941
          %v943 = vpop.f32.mrb[0].mxu0
          %944 = vmatprep.mubr.bf16.mxu0 0
          %945 = vmatmul.mubr.bf16.gmra.mrb[0].mxu0 %v813
          %v946 = vpop.f32.mrb[0].mxu0
          %v947 = vadd.f32 0.0, %v946
          %v948 = vpop.f32.mrb[0].mxu0
          %v949 = vpop.f32.mrb[0].mxu0
          %v950 = vadd.f32 0.0, %v949
          %v951 = vpop.f32.mrb[0].mxu0
          %952 = vdwg.mxu0
          %953 = vmatprep.subr.bf16.mxu0 0
          %954 = vmatpush1.bf16.msra.mxu0 %v666
          %955 = vmatprep.subr.bf16.mxu0 0
          %956 = vmatpush1.bf16.msra.mxu0 %v667
          %957 = vmatprep.subr.bf16.mxu0 0
          %958 = vmatpush1.bf16.msra.mxu0 %v668
          %959 = vmatprep.subr.bf16.mxu0 0
          %960 = vmatpush1.bf16.msra.mxu0 %v669
          %961 = vmatprep.subr.bf16.mxu0 0
          %962 = vmatpush1.bf16.msra.mxu0 0
          %963 = vmatprep.subr.bf16.mxu0 0
          %964 = vmatpush1.bf16.msra.mxu0 0
          %965 = vmatprep.subr.bf16.mxu0 0
          %966 = vmatpush1.bf16.msra.mxu0 0
          %967 = vmatprep.subr.bf16.mxu0 0
          %968 = vmatpush1.bf16.msra.mxu0 0
          %969 = vmatprep.subr.bf16.mxu0 0
          %970 = vmatpush1.bf16.msra.mxu0 0
          %971 = vmatprep.subr.bf16.mxu0 0
          %972 = vmatpush1.bf16.msra.mxu0 0
          %973 = vmatprep.subr.bf16.mxu0 0
          %974 = vmatpush1.bf16.msra.mxu0 0
          %975 = vmatprep.subr.bf16.mxu0 0
          %976 = vmatpush1.bf16.msra.mxu0 0
          %977 = vmatprep.subr.bf16.mxu0 0
          %978 = vmatpush1.bf16.msra.mxu0 0
          %979 = vmatprep.subr.bf16.mxu0 0
          %980 = vmatpush1.bf16.msra.mxu0 0
          %981 = vmatprep.subr.bf16.mxu0 0
          %982 = vmatpush1.bf16.msra.mxu0 0
          %983 = vmatprep.subr.bf16.mxu0 0
          %984 = vmatpush1.bf16.msra.mxu0 0
          %985 = vmatprep.mubr.bf16.mxu0 0
          %986 = vmatmul.mubr.bf16.gmra.mrb[0].mxu0 %v699
          %v987 = vpop.f32.mrb[0].mxu0
          %v988 = vadd.f32 %v923, %v987
          %v989 = vpop.f32.mrb[0].mxu0
          %v990 = vpop.f32.mrb[0].mxu0
          %v991 = vadd.f32 %v926, %v990
          %v992 = vpop.f32.mrb[0].mxu0
          %993 = vmatprep.mubr.bf16.mxu0 0
          %994 = vmatmul.mubr.bf16.gmra.mrb[0].mxu0 %v702
          %v995 = vpop.f32.mrb[0].mxu0
          %v996 = vadd.f32 %v931, %v995
          %v997 = vpop.f32.mrb[0].mxu0
          %v998 = vpop.f32.mrb[0].mxu0
          %v999 = vadd.f32 %v934, %v998
          %v1000 = vpop.f32.mrb[0].mxu0
          %1001 = vmatprep.mubr.bf16.mxu0 0
          %1002 = vmatmul.mubr.bf16.gmra.mrb[0].mxu0 %v705
          %v1003 = vpop.f32.mrb[0].mxu0
          %v1004 = vadd.f32 %v939, %v1003
          %v1005 = vpop.f32.mrb[0].mxu0
          %v1006 = vpop.f32.mrb[0].mxu0
          %v1007 = vadd.f32 %v942, %v1006
          %v1008 = vpop.f32.mrb[0].mxu0
          %1009 = vmatprep.mubr.bf16.mxu0 0
          %1010 = vmatmul.mubr.bf16.gmra.mrb[0].mxu0 %v708
          %v1011 = vpop.f32.mrb[0].mxu0
          %v1012 = vadd.f32 %v947, %v1011
          %v1013 = vpop.f32.mrb[0].mxu0
          %v1014 = vpop.f32.mrb[0].mxu0
          %v1015 = vadd.f32 %v950, %v1014
          %v1016 = vpop.f32.mrb[0].mxu0
          %1017 = vdwg.mxu0
          %v1018 = vpack.c.bf16 %v881, %v880
          %v1019 = vpack.c.bf16 %v883, %v882
          %v1020 = vpack.c.bf16 %v885, %v884
          %v1021 = vpack.c.bf16 %v887, %v886
          %v1022 = vpack.c.bf16 %v991, %v988
          %v1023 = vpack.c.bf16 %v999, %v996
          %v1024 = vpack.c.bf16 %v1007, %v1004
          %v1025 = vpack.c.bf16 %v1015, %v1012
          %v1031 = vsel %vm615, %v1018, 0
          %v1034 = vsel %vm615, %v1019, 0
          %v1037 = vsel %vm615, %v1020, 0
          %v1040 = vsel %vm615, %v1021, 0
          %1042 = vmatprep.subr.bf16.mxu0 0
          %1043 = vmatpush1.bf16.msra.mxu0 %v694
          %1044 = vmatprep.subr.bf16.mxu0 0
          %1045 = vmatpush1.bf16.msra.mxu0 %v695
          %1046 = vmatprep.subr.bf16.mxu0 0
          %1047 = vmatpush1.bf16.msra.mxu0 %v696
          %1048 = vmatprep.subr.bf16.mxu0 0
          %1049 = vmatpush1.bf16.msra.mxu0 %v697
          %1050 = vmatprep.subr.bf16.mxu0 0
          %1051 = vmatpush1.bf16.msra.mxu0 0
          %1052 = vmatprep.subr.bf16.mxu0 0
          %1053 = vmatpush1.bf16.msra.mxu0 0
          %1054 = vmatprep.subr.bf16.mxu0 0
          %1055 = vmatpush1.bf16.msra.mxu0 0
          %1056 = vmatprep.subr.bf16.mxu0 0
          %1057 = vmatpush1.bf16.msra.mxu0 0
          %1058 = vmatprep.subr.bf16.mxu0 0
          %1059 = vmatpush1.bf16.msra.mxu0 0
          %1060 = vmatprep.subr.bf16.mxu0 0
          %1061 = vmatpush1.bf16.msra.mxu0 0
          %1062 = vmatprep.subr.bf16.mxu0 0
          %1063 = vmatpush1.bf16.msra.mxu0 0
          %1064 = vmatprep.subr.bf16.mxu0 0
          %1065 = vmatpush1.bf16.msra.mxu0 0
          %1066 = vmatprep.subr.bf16.mxu0 0
          %1067 = vmatpush1.bf16.msra.mxu0 0
          %1068 = vmatprep.subr.bf16.mxu0 0
          %1069 = vmatpush1.bf16.msra.mxu0 0
          %1070 = vmatprep.subr.bf16.mxu0 0
          %1071 = vmatpush1.bf16.msra.mxu0 0
          %1072 = vmatprep.subr.bf16.mxu0 0
          %1073 = vmatpush1.bf16.msra.mxu0 0
          %1074 = vmatprep.mubr.bf16.mxu0 0
          %1075 = vmatmul.mubr.bf16.gmra.mrb[0].mxu0 %v1031
          %v1076 = vpop.f32.mrb[0].mxu0
          %v1077 = vadd.f32 0.0, %v1076
          %v1078 = vpop.f32.mrb[0].mxu0
          %v1079 = vpop.f32.mrb[0].mxu0
          %v1080 = vadd.f32 0.0, %v1079
          %v1081 = vpop.f32.mrb[0].mxu0
          %1082 = vmatprep.mubr.bf16.mxu0 0
          %1083 = vmatmul.mubr.bf16.gmra.mrb[0].mxu0 %v1034
          %v1084 = vpop.f32.mrb[0].mxu0
          %v1085 = vadd.f32 0.0, %v1084
          %v1086 = vpop.f32.mrb[0].mxu0
          %v1087 = vpop.f32.mrb[0].mxu0
          %v1088 = vadd.f32 0.0, %v1087
          %v1089 = vpop.f32.mrb[0].mxu0
          %1090 = vmatprep.mubr.bf16.mxu0 0
          %1091 = vmatmul.mubr.bf16.gmra.mrb[0].mxu0 %v1037
          %v1092 = vpop.f32.mrb[0].mxu0
          %v1093 = vadd.f32 0.0, %v1092
          %v1094 = vpop.f32.mrb[0].mxu0
          %v1095 = vpop.f32.mrb[0].mxu0
          %v1096 = vadd.f32 0.0, %v1095
          %v1097 = vpop.f32.mrb[0].mxu0
          %1098 = vmatprep.mubr.bf16.mxu0 0
          %1099 = vmatmul.mubr.bf16.gmra.mrb[0].mxu0 %v1040
          %v1100 = vpop.f32.mrb[0].mxu0
          %v1101 = vadd.f32 0.0, %v1100
          %v1102 = vpop.f32.mrb[0].mxu0
          %v1103 = vpop.f32.mrb[0].mxu0
          %v1104 = vadd.f32 0.0, %v1103
          %v1105 = vpop.f32.mrb[0].mxu0
          %1106 = vdwg.mxu0
          %v1112 = vsel %vm615, %v1022, 0
          %v1115 = vsel %vm615, %v1023, 0
          %v1118 = vsel %vm615, %v1024, 0
          %v1121 = vsel %vm615, %v1025, 0
          %1123 = vmatprep.subr.bf16.mxu0 0
          %1124 = vmatpush1.bf16.msra.mxu0 %v799
          %1125 = vmatprep.subr.bf16.mxu0 0
          %1126 = vmatpush1.bf16.msra.mxu0 %v800
          %1127 = vmatprep.subr.bf16.mxu0 0
          %1128 = vmatpush1.bf16.msra.mxu0 %v801
          %1129 = vmatprep.subr.bf16.mxu0 0
          %1130 = vmatpush1.bf16.msra.mxu0 %v802
          %1131 = vmatprep.subr.bf16.mxu0 0
          %1132 = vmatpush1.bf16.msra.mxu0 0
          %1133 = vmatprep.subr.bf16.mxu0 0
          %1134 = vmatpush1.bf16.msra.mxu0 0
          %1135 = vmatprep.subr.bf16.mxu0 0
          %1136 = vmatpush1.bf16.msra.mxu0 0
          %1137 = vmatprep.subr.bf16.mxu0 0
          %1138 = vmatpush1.bf16.msra.mxu0 0
          %1139 = vmatprep.subr.bf16.mxu0 0
          %1140 = vmatpush1.bf16.msra.mxu0 0
          %1141 = vmatprep.subr.bf16.mxu0 0
          %1142 = vmatpush1.bf16.msra.mxu0 0
          %1143 = vmatprep.subr.bf16.mxu0 0
          %1144 = vmatpush1.bf16.msra.mxu0 0
          %1145 = vmatprep.subr.bf16.mxu0 0
          %1146 = vmatpush1.bf16.msra.mxu0 0
          %1147 = vmatprep.subr.bf16.mxu0 0
          %1148 = vmatpush1.bf16.msra.mxu0 0
          %1149 = vmatprep.subr.bf16.mxu0 0
          %1150 = vmatpush1.bf16.msra.mxu0 0
          %1151 = vmatprep.subr.bf16.mxu0 0
          %1152 = vmatpush1.bf16.msra.mxu0 0
          %1153 = vmatprep.subr.bf16.mxu0 0
          %1154 = vmatpush1.bf16.msra.mxu0 0
          %1155 = vmatprep.mubr.bf16.mxu0 0
          %1156 = vmatmul.mubr.bf16.gmra.mrb[0].mxu0 %v1112
          %v1157 = vpop.f32.mrb[0].mxu0
          %v1158 = vadd.f32 0.0, %v1157
          %v1159 = vpop.f32.mrb[0].mxu0
          %v1160 = vpop.f32.mrb[0].mxu0
          %v1161 = vadd.f32 0.0, %v1160
          %v1162 = vpop.f32.mrb[0].mxu0
          %1163 = vmatprep.mubr.bf16.mxu0 0
          %1164 = vmatmul.mubr.bf16.gmra.mrb[0].mxu0 %v1115
          %v1165 = vpop.f32.mrb[0].mxu0
          %v1166 = vadd.f32 0.0, %v1165
          %v1167 = vpop.f32.mrb[0].mxu0
          %v1168 = vpop.f32.mrb[0].mxu0
          %v1169 = vadd.f32 0.0, %v1168
          %v1170 = vpop.f32.mrb[0].mxu0
          %1171 = vmatprep.mubr.bf16.mxu0 0
          %1172 = vmatmul.mubr.bf16.gmra.mrb[0].mxu0 %v1118
          %v1173 = vpop.f32.mrb[0].mxu0
          %v1174 = vadd.f32 0.0, %v1173
          %v1175 = vpop.f32.mrb[0].mxu0
          %v1176 = vpop.f32.mrb[0].mxu0
          %v1177 = vadd.f32 0.0, %v1176
          %v1178 = vpop.f32.mrb[0].mxu0
          %1179 = vmatprep.mubr.bf16.mxu0 0
          %1180 = vmatmul.mubr.bf16.gmra.mrb[0].mxu0 %v1121
          %v1181 = vpop.f32.mrb[0].mxu0
          %v1182 = vadd.f32 0.0, %v1181
          %v1183 = vpop.f32.mrb[0].mxu0
          %v1184 = vpop.f32.mrb[0].mxu0
          %v1185 = vadd.f32 0.0, %v1184
          %v1186 = vpop.f32.mrb[0].mxu0
          %1187 = vdwg.mxu0
          %v1188 = vsub.f32 %v1077, %v1158
          %v1189 = vsub.f32 %v1080, %v1161
          %v1190 = vsub.f32 %v1085, %v1166
          %v1191 = vsub.f32 %v1088, %v1169
          %v1192 = vsub.f32 %v1093, %v1174
          %v1193 = vsub.f32 %v1096, %v1177
          %v1194 = vsub.f32 %v1101, %v1182
          %v1195 = vsub.f32 %v1104, %v1185
          %1196 = vmatprep.subr.bf16.mxu0 0
          %1197 = vmatpush1.bf16.msra.mxu0 %v694
          %1198 = vmatprep.subr.bf16.mxu0 0
          %1199 = vmatpush1.bf16.msra.mxu0 %v695
          %1200 = vmatprep.subr.bf16.mxu0 0
          %1201 = vmatpush1.bf16.msra.mxu0 %v696
          %1202 = vmatprep.subr.bf16.mxu0 0
          %1203 = vmatpush1.bf16.msra.mxu0 %v697
          %1204 = vmatprep.subr.bf16.mxu0 0
          %1205 = vmatpush1.bf16.msra.mxu0 0
          %1206 = vmatprep.subr.bf16.mxu0 0
          %1207 = vmatpush1.bf16.msra.mxu0 0
          %1208 = vmatprep.subr.bf16.mxu0 0
          %1209 = vmatpush1.bf16.msra.mxu0 0
          %1210 = vmatprep.subr.bf16.mxu0 0
          %1211 = vmatpush1.bf16.msra.mxu0 0
          %1212 = vmatprep.subr.bf16.mxu0 0
          %1213 = vmatpush1.bf16.msra.mxu0 0
          %1214 = vmatprep.subr.bf16.mxu0 0
          %1215 = vmatpush1.bf16.msra.mxu0 0
          %1216 = vmatprep.subr.bf16.mxu0 0
          %1217 = vmatpush1.bf16.msra.mxu0 0
          %1218 = vmatprep.subr.bf16.mxu0 0
          %1219 = vmatpush1.bf16.msra.mxu0 0
          %1220 = vmatprep.subr.bf16.mxu0 0
          %1221 = vmatpush1.bf16.msra.mxu0 0
          %1222 = vmatprep.subr.bf16.mxu0 0
          %1223 = vmatpush1.bf16.msra.mxu0 0
          %1224 = vmatprep.subr.bf16.mxu0 0
          %1225 = vmatpush1.bf16.msra.mxu0 0
          %1226 = vmatprep.subr.bf16.mxu0 0
          %1227 = vmatpush1.bf16.msra.mxu0 0
          %1228 = vmatprep.mubr.bf16.mxu0 0
          %1229 = vmatmul.mubr.bf16.gmra.mrb[0].mxu0 %v1112
          %v1230 = vpop.f32.mrb[0].mxu0
          %v1231 = vadd.f32 0.0, %v1230
          %v1232 = vpop.f32.mrb[0].mxu0
          %v1233 = vpop.f32.mrb[0].mxu0
          %v1234 = vadd.f32 0.0, %v1233
          %v1235 = vpop.f32.mrb[0].mxu0
          %1236 = vmatprep.mubr.bf16.mxu0 0
          %1237 = vmatmul.mubr.bf16.gmra.mrb[0].mxu0 %v1115
          %v1238 = vpop.f32.mrb[0].mxu0
          %v1239 = vadd.f32 0.0, %v1238
          %v1240 = vpop.f32.mrb[0].mxu0
          %v1241 = vpop.f32.mrb[0].mxu0
          %v1242 = vadd.f32 0.0, %v1241
          %v1243 = vpop.f32.mrb[0].mxu0
          %1244 = vmatprep.mubr.bf16.mxu0 0
          %1245 = vmatmul.mubr.bf16.gmra.mrb[0].mxu0 %v1118
          %v1246 = vpop.f32.mrb[0].mxu0
          %v1247 = vadd.f32 0.0, %v1246
          %v1248 = vpop.f32.mrb[0].mxu0
          %v1249 = vpop.f32.mrb[0].mxu0
          %v1250 = vadd.f32 0.0, %v1249
          %v1251 = vpop.f32.mrb[0].mxu0
          %1252 = vmatprep.mubr.bf16.mxu0 0
          %1253 = vmatmul.mubr.bf16.gmra.mrb[0].mxu0 %v1121
          %v1254 = vpop.f32.mrb[0].mxu0
          %v1255 = vadd.f32 0.0, %v1254
          %v1256 = vpop.f32.mrb[0].mxu0
          %v1257 = vpop.f32.mrb[0].mxu0
          %v1258 = vadd.f32 0.0, %v1257
          %v1259 = vpop.f32.mrb[0].mxu0
          %1260 = vdwg.mxu0
          %1261 = vmatprep.subr.bf16.mxu0 0
          %1262 = vmatpush1.bf16.msra.mxu0 %v799
          %1263 = vmatprep.subr.bf16.mxu0 0
          %1264 = vmatpush1.bf16.msra.mxu0 %v800
          %1265 = vmatprep.subr.bf16.mxu0 0
          %1266 = vmatpush1.bf16.msra.mxu0 %v801
          %1267 = vmatprep.subr.bf16.mxu0 0
          %1268 = vmatpush1.bf16.msra.mxu0 %v802
          %1269 = vmatprep.subr.bf16.mxu0 0
          %1270 = vmatpush1.bf16.msra.mxu0 0
          %1271 = vmatprep.subr.bf16.mxu0 0
          %1272 = vmatpush1.bf16.msra.mxu0 0
          %1273 = vmatprep.subr.bf16.mxu0 0
          %1274 = vmatpush1.bf16.msra.mxu0 0
          %1275 = vmatprep.subr.bf16.mxu0 0
          %1276 = vmatpush1.bf16.msra.mxu0 0
          %1277 = vmatprep.subr.bf16.mxu0 0
          %1278 = vmatpush1.bf16.msra.mxu0 0
          %1279 = vmatprep.subr.bf16.mxu0 0
          %1280 = vmatpush1.bf16.msra.mxu0 0
          %1281 = vmatprep.subr.bf16.mxu0 0
          %1282 = vmatpush1.bf16.msra.mxu0 0
          %1283 = vmatprep.subr.bf16.mxu0 0
          %1284 = vmatpush1.bf16.msra.mxu0 0
          %1285 = vmatprep.subr.bf16.mxu0 0
          %1286 = vmatpush1.bf16.msra.mxu0 0
          %1287 = vmatprep.subr.bf16.mxu0 0
          %1288 = vmatpush1.bf16.msra.mxu0 0
          %1289 = vmatprep.subr.bf16.mxu0 0
          %1290 = vmatpush1.bf16.msra.mxu0 0
          %1291 = vmatprep.subr.bf16.mxu0 0
          %1292 = vmatpush1.bf16.msra.mxu0 0
          %1293 = vmatprep.mubr.bf16.mxu0 0
          %1294 = vmatmul.mubr.bf16.gmra.mrb[0].mxu0 %v1031
          %v1295 = vpop.f32.mrb[0].mxu0
          %v1296 = vadd.f32 %v1231, %v1295
          %v1297 = vpop.f32.mrb[0].mxu0
          %v1298 = vpop.f32.mrb[0].mxu0
          %v1299 = vadd.f32 %v1234, %v1298
          %v1300 = vpop.f32.mrb[0].mxu0
          %1301 = vmatprep.mubr.bf16.mxu0 0
          %1302 = vmatmul.mubr.bf16.gmra.mrb[0].mxu0 %v1034
          %v1303 = vpop.f32.mrb[0].mxu0
          %v1304 = vadd.f32 %v1239, %v1303
          %v1305 = vpop.f32.mrb[0].mxu0
          %v1306 = vpop.f32.mrb[0].mxu0
          %v1307 = vadd.f32 %v1242, %v1306
          %v1308 = vpop.f32.mrb[0].mxu0
          %1309 = vmatprep.mubr.bf16.mxu0 0
          %1310 = vmatmul.mubr.bf16.gmra.mrb[0].mxu0 %v1037
          %v1311 = vpop.f32.mrb[0].mxu0
          %v1312 = vadd.f32 %v1247, %v1311
          %v1313 = vpop.f32.mrb[0].mxu0
          %v1314 = vpop.f32.mrb[0].mxu0
          %v1315 = vadd.f32 %v1250, %v1314
          %v1316 = vpop.f32.mrb[0].mxu0
          %1317 = vmatprep.mubr.bf16.mxu0 0
          %1318 = vmatmul.mubr.bf16.gmra.mrb[0].mxu0 %v1040
          %v1319 = vpop.f32.mrb[0].mxu0
          %v1320 = vadd.f32 %v1255, %v1319
          %v1321 = vpop.f32.mrb[0].mxu0
          %v1322 = vpop.f32.mrb[0].mxu0
          %v1323 = vadd.f32 %v1258, %v1322
          %v1324 = vpop.f32.mrb[0].mxu0
          %1325 = vdwg.mxu0
          %v1326 = vld [vmem:[#allocation13] sm:$0xff]
          %v1327 = vld [vmem:[#allocation13 + $0x8] sm:$0xff]
          %v1328 = vld [vmem:[#allocation13 + $0x10] sm:$0xff]
          %v1329 = vld [vmem:[#allocation13 + $0x18] sm:$0xff]
          %v1330 = vld [vmem:[#allocation13 + $0x20] sm:$0xff]
          %v1331 = vld [vmem:[#allocation13 + $0x28] sm:$0xff]
          %v1332 = vld [vmem:[#allocation13 + $0x30] sm:$0xff]
          %v1333 = vld [vmem:[#allocation13 + $0x38] sm:$0xff]
          %v1334 = vld [vmem:[#allocation14] sm:$0xff]
          %v1335 = vld [vmem:[#allocation14 + $0x8] sm:$0xff]
          %v1336 = vld [vmem:[#allocation14 + $0x10] sm:$0xff]
          %v1337 = vld [vmem:[#allocation14 + $0x18] sm:$0xff]
          %v1338 = vld [vmem:[#allocation14 + $0x20] sm:$0xff]
          %v1339 = vld [vmem:[#allocation14 + $0x28] sm:$0xff]
          %v1340 = vld [vmem:[#allocation14 + $0x30] sm:$0xff]
          %v1341 = vld [vmem:[#allocation14 + $0x38] sm:$0xff]
          %v1342 = vmul.f32 %v1188, %v1326
          %v1343 = vmul.f32 %v1189, %v1327
          %v1344 = vmul.f32 %v1190, %v1328
          %v1345 = vmul.f32 %v1191, %v1329
          %v1346 = vmul.f32 %v1192, %v1330
          %v1347 = vmul.f32 %v1193, %v1331
          %v1348 = vmul.f32 %v1194, %v1332
          %v1349 = vmul.f32 %v1195, %v1333
          %v1350 = vmul.f32 %v1296, %v1334
          %v1351 = vmul.f32 %v1299, %v1335
          %v1352 = vmul.f32 %v1304, %v1336
          %v1353 = vmul.f32 %v1307, %v1337
          %v1354 = vmul.f32 %v1312, %v1338
          %v1355 = vmul.f32 %v1315, %v1339
          %v1356 = vmul.f32 %v1320, %v1340
          %v1357 = vmul.f32 %v1323, %v1341
          %v1358 = vsub.f32 %v1342, %v1350
          %v1359 = vsub.f32 %v1343, %v1351
          %v1360 = vsub.f32 %v1344, %v1352
          %v1361 = vsub.f32 %v1345, %v1353
          %v1362 = vsub.f32 %v1346, %v1354
          %v1363 = vsub.f32 %v1347, %v1355
          %v1364 = vsub.f32 %v1348, %v1356
          %v1365 = vsub.f32 %v1349, %v1357
          %v1366 = vmul.f32 %v1188, %v1334
          %v1367 = vmul.f32 %v1189, %v1335
          %v1368 = vmul.f32 %v1190, %v1336
          %v1369 = vmul.f32 %v1191, %v1337
          %v1370 = vmul.f32 %v1192, %v1338
          %v1371 = vmul.f32 %v1193, %v1339
          %v1372 = vmul.f32 %v1194, %v1340
          %v1373 = vmul.f32 %v1195, %v1341
          %v1374 = vmul.f32 %v1296, %v1326
          %v1375 = vmul.f32 %v1299, %v1327
          %v1376 = vmul.f32 %v1304, %v1328
          %v1377 = vmul.f32 %v1307, %v1329
          %v1378 = vmul.f32 %v1312, %v1330
          %v1379 = vmul.f32 %v1315, %v1331
          %v1380 = vmul.f32 %v1320, %v1332
          %v1381 = vmul.f32 %v1323, %v1333
          %v1382 = vadd.f32 %v1366, %v1374
          %v1383 = vadd.f32 %v1367, %v1375
          %v1384 = vadd.f32 %v1368, %v1376
          %v1385 = vadd.f32 %v1369, %v1377
          %v1386 = vadd.f32 %v1370, %v1378
          %v1387 = vadd.f32 %v1371, %v1379
          %v1388 = vadd.f32 %v1372, %v1380
          %v1389 = vadd.f32 %v1373, %v1381
          %v1390 = vpack.c.bf16 %v1359, %v1358
          %v1391 = vpack.c.bf16 %v1361, %v1360
          %v1392 = vpack.c.bf16 %v1363, %v1362
          %v1393 = vpack.c.bf16 %v1365, %v1364
          %v1394 = vpack.c.bf16 %v1383, %v1382
          %v1395 = vpack.c.bf16 %v1385, %v1384
          %v1396 = vpack.c.bf16 %v1387, %v1386
          %v1397 = vpack.c.bf16 %v1389, %v1388
          %v1398 = vld [vmem:[#allocation10] sm:$0xf]
          %v1399 = vld [vmem:[#allocation10 + $0x4] sm:$0xf]
          %v1400 = vld [vmem:[#allocation10 + $0x8] sm:$0xf]
          %v1401 = vld [vmem:[#allocation10 + $0xc] sm:$0xf]
          %v1402 = vld [vmem:[#allocation10 + $0x10] sm:$0xf]
          %v1403 = vld [vmem:[#allocation10 + $0x14] sm:$0xf]
          %v1404 = vld [vmem:[#allocation10 + $0x18] sm:$0xf]
          %v1405 = vld [vmem:[#allocation10 + $0x1c] sm:$0xf]
          %v1414 = vunpack.c.l.b16 %v1398
          %v1415 = vunpack.c.l.b16 %v1399
          %v1416 = vunpack.c.l.b16 %v1400
          %v1417 = vunpack.c.l.b16 %v1401
          %v1418 = vunpack.c.l.b16 %v1402
          %v1419 = vunpack.c.l.b16 %v1403
          %v1420 = vunpack.c.l.b16 %v1404
          %v1421 = vunpack.c.l.b16 %v1405
          %v1422 = vpack.c.b16 %v1415, %v1414
          %v1423 = vpack.c.b16 %v1417, %v1416
          %v1424 = vpack.c.b16 %v1419, %v1418
          %v1425 = vpack.c.b16 %v1421, %v1420
          %v1427 = vsel %vm615, %v1422, 0
          %v1430 = vsel %vm615, %v1423, 0
          %v1433 = vsel %vm615, %v1424, 0
          %v1436 = vsel %vm615, %v1425, 0
          %1438 = vmatprep.subr.bf16.mxu0 0
          %1439 = vmatpush1.bf16.msra.mxu0 %v1390
          %1440 = vmatprep.subr.bf16.mxu0 0
          %1441 = vmatpush1.bf16.msra.mxu0 %v1391
          %1442 = vmatprep.subr.bf16.mxu0 0
          %1443 = vmatpush1.bf16.msra.mxu0 %v1392
          %1444 = vmatprep.subr.bf16.mxu0 0
          %1445 = vmatpush1.bf16.msra.mxu0 %v1393
          %1446 = vmatprep.subr.bf16.mxu0 0
          %1447 = vmatpush1.bf16.msra.mxu0 0
          %1448 = vmatprep.subr.bf16.mxu0 0
          %1449 = vmatpush1.bf16.msra.mxu0 0
          %1450 = vmatprep.subr.bf16.mxu0 0
          %1451 = vmatpush1.bf16.msra.mxu0 0
          %1452 = vmatprep.subr.bf16.mxu0 0
          %1453 = vmatpush1.bf16.msra.mxu0 0
          %1454 = vmatprep.subr.bf16.mxu0 0
          %1455 = vmatpush1.bf16.msra.mxu0 0
          %1456 = vmatprep.subr.bf16.mxu0 0
          %1457 = vmatpush1.bf16.msra.mxu0 0
          %1458 = vmatprep.subr.bf16.mxu0 0
          %1459 = vmatpush1.bf16.msra.mxu0 0
          %1460 = vmatprep.subr.bf16.mxu0 0
          %1461 = vmatpush1.bf16.msra.mxu0 0
          %1462 = vmatprep.subr.bf16.mxu0 0
          %1463 = vmatpush1.bf16.msra.mxu0 0
          %1464 = vmatprep.subr.bf16.mxu0 0
          %1465 = vmatpush1.bf16.msra.mxu0 0
          %1466 = vmatprep.subr.bf16.mxu0 0
          %1467 = vmatpush1.bf16.msra.mxu0 0
          %1468 = vmatprep.subr.bf16.mxu0 0
          %1469 = vmatpush1.bf16.msra.mxu0 0
          %1470 = vmatprep.mubr.bf16.mxu0 0
          %1471 = vmatmul.mubr.bf16.gmra.mrb[0].mxu0 %v1427
          %v1472 = vpop.f32.mrb[0].mxu0
          %v1473 = vadd.f32 0.0, %v1472
          %v1474 = vpop.f32.mrb[0].mxu0
          %v1475 = vpop.f32.mrb[0].mxu0
          %v1476 = vadd.f32 0.0, %v1475
          %v1477 = vpop.f32.mrb[0].mxu0
          %1478 = vmatprep.mubr.bf16.mxu0 0
          %1479 = vmatmul.mubr.bf16.gmra.mrb[0].mxu0 %v1430
          %v1480 = vpop.f32.mrb[0].mxu0
          %v1481 = vadd.f32 0.0, %v1480
          %v1482 = vpop.f32.mrb[0].mxu0
          %v1483 = vpop.f32.mrb[0].mxu0
          %v1484 = vadd.f32 0.0, %v1483
          %v1485 = vpop.f32.mrb[0].mxu0
          %1486 = vmatprep.mubr.bf16.mxu0 0
          %1487 = vmatmul.mubr.bf16.gmra.mrb[0].mxu0 %v1433
          %v1488 = vpop.f32.mrb[0].mxu0
          %v1489 = vadd.f32 0.0, %v1488
          %v1490 = vpop.f32.mrb[0].mxu0
          %v1491 = vpop.f32.mrb[0].mxu0
          %v1492 = vadd.f32 0.0, %v1491
          %v1493 = vpop.f32.mrb[0].mxu0
          %1494 = vmatprep.mubr.bf16.mxu0 0
          %1495 = vmatmul.mubr.bf16.gmra.mrb[0].mxu0 %v1436
          %v1496 = vpop.f32.mrb[0].mxu0
          %v1497 = vadd.f32 0.0, %v1496
          %v1498 = vpop.f32.mrb[0].mxu0
          %v1499 = vpop.f32.mrb[0].mxu0
          %v1500 = vadd.f32 0.0, %v1499
          %v1501 = vpop.f32.mrb[0].mxu0
          %1502 = vdwg.mxu0
          %v1503 = vld [vmem:[#allocation11] sm:$0xf]
          %v1504 = vld [vmem:[#allocation11 + $0x4] sm:$0xf]
          %v1505 = vld [vmem:[#allocation11 + $0x8] sm:$0xf]
          %v1506 = vld [vmem:[#allocation11 + $0xc] sm:$0xf]
          %v1507 = vld [vmem:[#allocation11 + $0x10] sm:$0xf]
          %v1508 = vld [vmem:[#allocation11 + $0x14] sm:$0xf]
          %v1509 = vld [vmem:[#allocation11 + $0x18] sm:$0xf]
          %v1510 = vld [vmem:[#allocation11 + $0x1c] sm:$0xf]
          %v1519 = vunpack.c.l.b16 %v1503
          %v1520 = vunpack.c.l.b16 %v1504
          %v1521 = vunpack.c.l.b16 %v1505
          %v1522 = vunpack.c.l.b16 %v1506
          %v1523 = vunpack.c.l.b16 %v1507
          %v1524 = vunpack.c.l.b16 %v1508
          %v1525 = vunpack.c.l.b16 %v1509
          %v1526 = vunpack.c.l.b16 %v1510
          %v1527 = vpack.c.b16 %v1520, %v1519
          %v1528 = vpack.c.b16 %v1522, %v1521
          %v1529 = vpack.c.b16 %v1524, %v1523
          %v1530 = vpack.c.b16 %v1526, %v1525
          %v1532 = vsel %vm615, %v1527, 0
          %v1535 = vsel %vm615, %v1528, 0
          %v1538 = vsel %vm615, %v1529, 0
          %v1541 = vsel %vm615, %v1530, 0
          %1543 = vmatprep.subr.bf16.mxu0 0
          %1544 = vmatpush1.bf16.msra.mxu0 %v1394
          %1545 = vmatprep.subr.bf16.mxu0 0
          %1546 = vmatpush1.bf16.msra.mxu0 %v1395
          %1547 = vmatprep.subr.bf16.mxu0 0
          %1548 = vmatpush1.bf16.msra.mxu0 %v1396
          %1549 = vmatprep.subr.bf16.mxu0 0
          %1550 = vmatpush1.bf16.msra.mxu0 %v1397
          %1551 = vmatprep.subr.bf16.mxu0 0
          %1552 = vmatpush1.bf16.msra.mxu0 0
          %1553 = vmatprep.subr.bf16.mxu0 0
          %1554 = vmatpush1.bf16.msra.mxu0 0
          %1555 = vmatprep.subr.bf16.mxu0 0
          %1556 = vmatpush1.bf16.msra.mxu0 0
          %1557 = vmatprep.subr.bf16.mxu0 0
          %1558 = vmatpush1.bf16.msra.mxu0 0
          %1559 = vmatprep.subr.bf16.mxu0 0
          %1560 = vmatpush1.bf16.msra.mxu0 0
          %1561 = vmatprep.subr.bf16.mxu0 0
          %1562 = vmatpush1.bf16.msra.mxu0 0
          %1563 = vmatprep.subr.bf16.mxu0 0
          %1564 = vmatpush1.bf16.msra.mxu0 0
          %1565 = vmatprep.subr.bf16.mxu0 0
          %1566 = vmatpush1.bf16.msra.mxu0 0
          %1567 = vmatprep.subr.bf16.mxu0 0
          %1568 = vmatpush1.bf16.msra.mxu0 0
          %1569 = vmatprep.subr.bf16.mxu0 0
          %1570 = vmatpush1.bf16.msra.mxu0 0
          %1571 = vmatprep.subr.bf16.mxu0 0
          %1572 = vmatpush1.bf16.msra.mxu0 0
          %1573 = vmatprep.subr.bf16.mxu0 0
          %1574 = vmatpush1.bf16.msra.mxu0 0
          %1575 = vmatprep.mubr.bf16.mxu0 0
          %1576 = vmatmul.mubr.bf16.gmra.mrb[0].mxu0 %v1532
          %v1577 = vpop.f32.mrb[0].mxu0
          %v1578 = vadd.f32 0.0, %v1577
          %v1579 = vpop.f32.mrb[0].mxu0
          %v1580 = vpop.f32.mrb[0].mxu0
          %v1581 = vadd.f32 0.0, %v1580
          %v1582 = vpop.f32.mrb[0].mxu0
          %1583 = vmatprep.mubr.bf16.mxu0 0
          %1584 = vmatmul.mubr.bf16.gmra.mrb[0].mxu0 %v1535
          %v1585 = vpop.f32.mrb[0].mxu0
          %v1586 = vadd.f32 0.0, %v1585
          %v1587 = vpop.f32.mrb[0].mxu0
          %v1588 = vpop.f32.mrb[0].mxu0
          %v1589 = vadd.f32 0.0, %v1588
          %v1590 = vpop.f32.mrb[0].mxu0
          %1591 = vmatprep.mubr.bf16.mxu0 0
          %1592 = vmatmul.mubr.bf16.gmra.mrb[0].mxu0 %v1538
          %v1593 = vpop.f32.mrb[0].mxu0
          %v1594 = vadd.f32 0.0, %v1593
          %v1595 = vpop.f32.mrb[0].mxu0
          %v1596 = vpop.f32.mrb[0].mxu0
          %v1597 = vadd.f32 0.0, %v1596
          %v1598 = vpop.f32.mrb[0].mxu0
          %1599 = vmatprep.mubr.bf16.mxu0 0
          %1600 = vmatmul.mubr.bf16.gmra.mrb[0].mxu0 %v1541
          %v1601 = vpop.f32.mrb[0].mxu0
          %v1602 = vadd.f32 0.0, %v1601
          %v1603 = vpop.f32.mrb[0].mxu0
          %v1604 = vpop.f32.mrb[0].mxu0
          %v1605 = vadd.f32 0.0, %v1604
          %v1606 = vpop.f32.mrb[0].mxu0
          %1607 = vdwg.mxu0
          %v1608 = vsub.f32 %v1473, %v1578
          %v1609 = vsub.f32 %v1476, %v1581
          %v1610 = vsub.f32 %v1481, %v1586
          %v1611 = vsub.f32 %v1484, %v1589
          %v1612 = vsub.f32 %v1489, %v1594
          %v1613 = vsub.f32 %v1492, %v1597
          %v1614 = vsub.f32 %v1497, %v1602
          %v1615 = vsub.f32 %v1500, %v1605
          %1616 = vmatprep.subr.bf16.mxu0 0
          %1617 = vmatpush1.bf16.msra.mxu0 %v1390
          %1618 = vmatprep.subr.bf16.mxu0 0
          %1619 = vmatpush1.bf16.msra.mxu0 %v1391
          %1620 = vmatprep.subr.bf16.mxu0 0
          %1621 = vmatpush1.bf16.msra.mxu0 %v1392
          %1622 = vmatprep.subr.bf16.mxu0 0
          %1623 = vmatpush1.bf16.msra.mxu0 %v1393
          %1624 = vmatprep.subr.bf16.mxu0 0
          %1625 = vmatpush1.bf16.msra.mxu0 0
          %1626 = vmatprep.subr.bf16.mxu0 0
          %1627 = vmatpush1.bf16.msra.mxu0 0
          %1628 = vmatprep.subr.bf16.mxu0 0
          %1629 = vmatpush1.bf16.msra.mxu0 0
          %1630 = vmatprep.subr.bf16.mxu0 0
          %1631 = vmatpush1.bf16.msra.mxu0 0
          %1632 = vmatprep.subr.bf16.mxu0 0
          %1633 = vmatpush1.bf16.msra.mxu0 0
          %1634 = vmatprep.subr.bf16.mxu0 0
          %1635 = vmatpush1.bf16.msra.mxu0 0
          %1636 = vmatprep.subr.bf16.mxu0 0
          %1637 = vmatpush1.bf16.msra.mxu0 0
          %1638 = vmatprep.subr.bf16.mxu0 0
          %1639 = vmatpush1.bf16.msra.mxu0 0
          %1640 = vmatprep.subr.bf16.mxu0 0
          %1641 = vmatpush1.bf16.msra.mxu0 0
          %1642 = vmatprep.subr.bf16.mxu0 0
          %1643 = vmatpush1.bf16.msra.mxu0 0
          %1644 = vmatprep.subr.bf16.mxu0 0
          %1645 = vmatpush1.bf16.msra.mxu0 0
          %1646 = vmatprep.subr.bf16.mxu0 0
          %1647 = vmatpush1.bf16.msra.mxu0 0
          %1648 = vmatprep.mubr.bf16.mxu0 0
          %1649 = vmatmul.mubr.bf16.gmra.mrb[0].mxu0 %v1532
          %v1650 = vpop.f32.mrb[0].mxu0
          %v1651 = vadd.f32 0.0, %v1650
          %v1652 = vpop.f32.mrb[0].mxu0
          %v1653 = vpop.f32.mrb[0].mxu0
          %v1654 = vadd.f32 0.0, %v1653
          %v1655 = vpop.f32.mrb[0].mxu0
          %1656 = vmatprep.mubr.bf16.mxu0 0
          %1657 = vmatmul.mubr.bf16.gmra.mrb[0].mxu0 %v1535
          %v1658 = vpop.f32.mrb[0].mxu0
          %v1659 = vadd.f32 0.0, %v1658
          %v1660 = vpop.f32.mrb[0].mxu0
          %v1661 = vpop.f32.mrb[0].mxu0
          %v1662 = vadd.f32 0.0, %v1661
          %v1663 = vpop.f32.mrb[0].mxu0
          %1664 = vmatprep.mubr.bf16.mxu0 0
          %1665 = vmatmul.mubr.bf16.gmra.mrb[0].mxu0 %v1538
          %v1666 = vpop.f32.mrb[0].mxu0
          %v1667 = vadd.f32 0.0, %v1666
          %v1668 = vpop.f32.mrb[0].mxu0
          %v1669 = vpop.f32.mrb[0].mxu0
          %v1670 = vadd.f32 0.0, %v1669
          %v1671 = vpop.f32.mrb[0].mxu0
          %1672 = vmatprep.mubr.bf16.mxu0 0
          %1673 = vmatmul.mubr.bf16.gmra.mrb[0].mxu0 %v1541
          %v1674 = vpop.f32.mrb[0].mxu0
          %v1675 = vadd.f32 0.0, %v1674
          %v1676 = vpop.f32.mrb[0].mxu0
          %v1677 = vpop.f32.mrb[0].mxu0
          %v1678 = vadd.f32 0.0, %v1677
          %v1679 = vpop.f32.mrb[0].mxu0
          %1680 = vdwg.mxu0
          %1681 = vmatprep.subr.bf16.mxu0 0
          %1682 = vmatpush1.bf16.msra.mxu0 %v1394
          %1683 = vmatprep.subr.bf16.mxu0 0
          %1684 = vmatpush1.bf16.msra.mxu0 %v1395
          %1685 = vmatprep.subr.bf16.mxu0 0
          %1686 = vmatpush1.bf16.msra.mxu0 %v1396
          %1687 = vmatprep.subr.bf16.mxu0 0
          %1688 = vmatpush1.bf16.msra.mxu0 %v1397
          %1689 = vmatprep.subr.bf16.mxu0 0
          %1690 = vmatpush1.bf16.msra.mxu0 0
          %1691 = vmatprep.subr.bf16.mxu0 0
          %1692 = vmatpush1.bf16.msra.mxu0 0
          %1693 = vmatprep.subr.bf16.mxu0 0
          %1694 = vmatpush1.bf16.msra.mxu0 0
          %1695 = vmatprep.subr.bf16.mxu0 0
          %1696 = vmatpush1.bf16.msra.mxu0 0
          %1697 = vmatprep.subr.bf16.mxu0 0
          %1698 = vmatpush1.bf16.msra.mxu0 0
          %1699 = vmatprep.subr.bf16.mxu0 0
          %1700 = vmatpush1.bf16.msra.mxu0 0
          %1701 = vmatprep.subr.bf16.mxu0 0
          %1702 = vmatpush1.bf16.msra.mxu0 0
          %1703 = vmatprep.subr.bf16.mxu0 0
          %1704 = vmatpush1.bf16.msra.mxu0 0
          %1705 = vmatprep.subr.bf16.mxu0 0
          %1706 = vmatpush1.bf16.msra.mxu0 0
          %1707 = vmatprep.subr.bf16.mxu0 0
          %1708 = vmatpush1.bf16.msra.mxu0 0
          %1709 = vmatprep.subr.bf16.mxu0 0
          %1710 = vmatpush1.bf16.msra.mxu0 0
          %1711 = vmatprep.subr.bf16.mxu0 0
          %1712 = vmatpush1.bf16.msra.mxu0 0
          %1713 = vmatprep.mubr.bf16.mxu0 0
          %1714 = vmatmul.mubr.bf16.gmra.mrb[0].mxu0 %v1427
          %v1715 = vpop.f32.mrb[0].mxu0
          %v1716 = vadd.f32 %v1651, %v1715
          %v1717 = vpop.f32.mrb[0].mxu0
          %v1718 = vpop.f32.mrb[0].mxu0
          %v1719 = vadd.f32 %v1654, %v1718
          %v1720 = vpop.f32.mrb[0].mxu0
          %1721 = vmatprep.mubr.bf16.mxu0 0
          %1722 = vmatmul.mubr.bf16.gmra.mrb[0].mxu0 %v1430
          %v1723 = vpop.f32.mrb[0].mxu0
          %v1724 = vadd.f32 %v1659, %v1723
          %v1725 = vpop.f32.mrb[0].mxu0
          %v1726 = vpop.f32.mrb[0].mxu0
          %v1727 = vadd.f32 %v1662, %v1726
          %v1728 = vpop.f32.mrb[0].mxu0
          %1729 = vmatprep.mubr.bf16.mxu0 0
          %1730 = vmatmul.mubr.bf16.gmra.mrb[0].mxu0 %v1433
          %v1731 = vpop.f32.mrb[0].mxu0
          %v1732 = vadd.f32 %v1667, %v1731
          %v1733 = vpop.f32.mrb[0].mxu0
          %v1734 = vpop.f32.mrb[0].mxu0
          %v1735 = vadd.f32 %v1670, %v1734
          %v1736 = vpop.f32.mrb[0].mxu0
          %1737 = vmatprep.mubr.bf16.mxu0 0
          %1738 = vmatmul.mubr.bf16.gmra.mrb[0].mxu0 %v1436
          %v1739 = vpop.f32.mrb[0].mxu0
          %v1740 = vadd.f32 %v1675, %v1739
          %v1741 = vpop.f32.mrb[0].mxu0
          %v1742 = vpop.f32.mrb[0].mxu0
          %v1743 = vadd.f32 %v1678, %v1742
          %v1744 = vpop.f32.mrb[0].mxu0
          %1745 = vdwg.mxu0
          %v1746 = vpack.c.bf16 %v1609, %v1608
          %v1747 = vpack.c.bf16 %v1611, %v1610
          %v1748 = vpack.c.bf16 %v1613, %v1612
          %v1749 = vpack.c.bf16 %v1615, %v1614
          %v1750 = vpack.c.bf16 %v1719, %v1716
          %v1751 = vpack.c.bf16 %v1727, %v1724
          %v1752 = vpack.c.bf16 %v1735, %v1732
          %v1753 = vpack.c.bf16 %v1743, %v1740
          %v1759 = vsel %vm615, %v1746, 0
          %v1762 = vsel %vm615, %v1747, 0
          %v1765 = vsel %vm615, %v1748, 0
          %v1768 = vsel %vm615, %v1749, 0
          %1770 = vmatprep.subr.bf16.mxu0 0
          %1771 = vmatpush1.bf16.msra.mxu0 %v1422
          %1772 = vmatprep.subr.bf16.mxu0 0
          %1773 = vmatpush1.bf16.msra.mxu0 %v1423
          %1774 = vmatprep.subr.bf16.mxu0 0
          %1775 = vmatpush1.bf16.msra.mxu0 %v1424
          %1776 = vmatprep.subr.bf16.mxu0 0
          %1777 = vmatpush1.bf16.msra.mxu0 %v1425
          %1778 = vmatprep.subr.bf16.mxu0 0
          %1779 = vmatpush1.bf16.msra.mxu0 0
          %1780 = vmatprep.subr.bf16.mxu0 0
          %1781 = vmatpush1.bf16.msra.mxu0 0
          %1782 = vmatprep.subr.bf16.mxu0 0
          %1783 = vmatpush1.bf16.msra.mxu0 0
          %1784 = vmatprep.subr.bf16.mxu0 0
          %1785 = vmatpush1.bf16.msra.mxu0 0
          %1786 = vmatprep.subr.bf16.mxu0 0
          %1787 = vmatpush1.bf16.msra.mxu0 0
          %1788 = vmatprep.subr.bf16.mxu0 0
          %1789 = vmatpush1.bf16.msra.mxu0 0
          %1790 = vmatprep.subr.bf16.mxu0 0
          %1791 = vmatpush1.bf16.msra.mxu0 0
          %1792 = vmatprep.subr.bf16.mxu0 0
          %1793 = vmatpush1.bf16.msra.mxu0 0
          %1794 = vmatprep.subr.bf16.mxu0 0
          %1795 = vmatpush1.bf16.msra.mxu0 0
          %1796 = vmatprep.subr.bf16.mxu0 0
          %1797 = vmatpush1.bf16.msra.mxu0 0
          %1798 = vmatprep.subr.bf16.mxu0 0
          %1799 = vmatpush1.bf16.msra.mxu0 0
          %1800 = vmatprep.subr.bf16.mxu0 0
          %1801 = vmatpush1.bf16.msra.mxu0 0
          %1802 = vmatprep.mubr.bf16.mxu0 0
          %1803 = vmatmul.mubr.bf16.gmra.mrb[0].mxu0 %v1759
          %v1804 = vpop.f32.mrb[0].mxu0
          %v1805 = vadd.f32 0.0, %v1804
          %v1806 = vpop.f32.mrb[0].mxu0
          %v1807 = vpop.f32.mrb[0].mxu0
          %v1808 = vadd.f32 0.0, %v1807
          %v1809 = vpop.f32.mrb[0].mxu0
          %1810 = vmatprep.mubr.bf16.mxu0 0
          %1811 = vmatmul.mubr.bf16.gmra.mrb[0].mxu0 %v1762
          %v1812 = vpop.f32.mrb[0].mxu0
          %v1813 = vadd.f32 0.0, %v1812
          %v1814 = vpop.f32.mrb[0].mxu0
          %v1815 = vpop.f32.mrb[0].mxu0
          %v1816 = vadd.f32 0.0, %v1815
          %v1817 = vpop.f32.mrb[0].mxu0
          %1818 = vmatprep.mubr.bf16.mxu0 0
          %1819 = vmatmul.mubr.bf16.gmra.mrb[0].mxu0 %v1765
          %v1820 = vpop.f32.mrb[0].mxu0
          %v1821 = vadd.f32 0.0, %v1820
          %v1822 = vpop.f32.mrb[0].mxu0
          %v1823 = vpop.f32.mrb[0].mxu0
          %v1824 = vadd.f32 0.0, %v1823
          %v1825 = vpop.f32.mrb[0].mxu0
          %1826 = vmatprep.mubr.bf16.mxu0 0
          %1827 = vmatmul.mubr.bf16.gmra.mrb[0].mxu0 %v1768
          %v1828 = vpop.f32.mrb[0].mxu0
          %v1829 = vadd.f32 0.0, %v1828
          %v1830 = vpop.f32.mrb[0].mxu0
          %v1831 = vpop.f32.mrb[0].mxu0
          %v1832 = vadd.f32 0.0, %v1831
          %v1833 = vpop.f32.mrb[0].mxu0
          %1834 = vdwg.mxu0
          %v1840 = vsel %vm615, %v1750, 0
          %v1843 = vsel %vm615, %v1751, 0
          %v1846 = vsel %vm615, %v1752, 0
          %v1849 = vsel %vm615, %v1753, 0
          %1851 = vmatprep.subr.bf16.mxu0 0
          %1852 = vmatpush1.bf16.msra.mxu0 %v1527
          %1853 = vmatprep.subr.bf16.mxu0 0
          %1854 = vmatpush1.bf16.msra.mxu0 %v1528
          %1855 = vmatprep.subr.bf16.mxu0 0
          %1856 = vmatpush1.bf16.msra.mxu0 %v1529
          %1857 = vmatprep.subr.bf16.mxu0 0
          %1858 = vmatpush1.bf16.msra.mxu0 %v1530
          %1859 = vmatprep.subr.bf16.mxu0 0
          %1860 = vmatpush1.bf16.msra.mxu0 0
          %1861 = vmatprep.subr.bf16.mxu0 0
          %1862 = vmatpush1.bf16.msra.mxu0 0
          %1863 = vmatprep.subr.bf16.mxu0 0
          %1864 = vmatpush1.bf16.msra.mxu0 0
          %1865 = vmatprep.subr.bf16.mxu0 0
          %1866 = vmatpush1.bf16.msra.mxu0 0
          %1867 = vmatprep.subr.bf16.mxu0 0
          %1868 = vmatpush1.bf16.msra.mxu0 0
          %1869 = vmatprep.subr.bf16.mxu0 0
          %1870 = vmatpush1.bf16.msra.mxu0 0
          %1871 = vmatprep.subr.bf16.mxu0 0
          %1872 = vmatpush1.bf16.msra.mxu0 0
          %1873 = vmatprep.subr.bf16.mxu0 0
          %1874 = vmatpush1.bf16.msra.mxu0 0
          %1875 = vmatprep.subr.bf16.mxu0 0
          %1876 = vmatpush1.bf16.msra.mxu0 0
          %1877 = vmatprep.subr.bf16.mxu0 0
          %1878 = vmatpush1.bf16.msra.mxu0 0
          %1879 = vmatprep.subr.bf16.mxu0 0
          %1880 = vmatpush1.bf16.msra.mxu0 0
          %1881 = vmatprep.subr.bf16.mxu0 0
          %1882 = vmatpush1.bf16.msra.mxu0 0
          %1883 = vmatprep.mubr.bf16.mxu0 0
          %1884 = vmatmul.mubr.bf16.gmra.mrb[0].mxu0 %v1840
          %v1885 = vpop.f32.mrb[0].mxu0
          %v1886 = vadd.f32 0.0, %v1885
          %v1887 = vpop.f32.mrb[0].mxu0
          %v1888 = vpop.f32.mrb[0].mxu0
          %v1889 = vadd.f32 0.0, %v1888
          %v1890 = vpop.f32.mrb[0].mxu0
          %1891 = vmatprep.mubr.bf16.mxu0 0
          %1892 = vmatmul.mubr.bf16.gmra.mrb[0].mxu0 %v1843
          %v1893 = vpop.f32.mrb[0].mxu0
          %v1894 = vadd.f32 0.0, %v1893
          %v1895 = vpop.f32.mrb[0].mxu0
          %v1896 = vpop.f32.mrb[0].mxu0
          %v1897 = vadd.f32 0.0, %v1896
          %v1898 = vpop.f32.mrb[0].mxu0
          %1899 = vmatprep.mubr.bf16.mxu0 0
          %1900 = vmatmul.mubr.bf16.gmra.mrb[0].mxu0 %v1846
          %v1901 = vpop.f32.mrb[0].mxu0
          %v1902 = vadd.f32 0.0, %v1901
          %v1903 = vpop.f32.mrb[0].mxu0
          %v1904 = vpop.f32.mrb[0].mxu0
          %v1905 = vadd.f32 0.0, %v1904
          %v1906 = vpop.f32.mrb[0].mxu0
          %1907 = vmatprep.mubr.bf16.mxu0 0
          %1908 = vmatmul.mubr.bf16.gmra.mrb[0].mxu0 %v1849
          %v1909 = vpop.f32.mrb[0].mxu0
          %v1910 = vadd.f32 0.0, %v1909
          %v1911 = vpop.f32.mrb[0].mxu0
          %v1912 = vpop.f32.mrb[0].mxu0
          %v1913 = vadd.f32 0.0, %v1912
          %v1914 = vpop.f32.mrb[0].mxu0
          %1915 = vdwg.mxu0
          %v1916 = vsub.f32 %v1805, %v1886
          %v1917 = vsub.f32 %v1808, %v1889
          %v1918 = vsub.f32 %v1813, %v1894
          %v1919 = vsub.f32 %v1816, %v1897
          %v1920 = vsub.f32 %v1821, %v1902
          %v1921 = vsub.f32 %v1824, %v1905
          %v1922 = vsub.f32 %v1829, %v1910
          %v1923 = vsub.f32 %v1832, %v1913
          %1924 = vmatprep.subr.bf16.mxu0 0
          %1925 = vmatpush1.bf16.msra.mxu0 %v1422
          %1926 = vmatprep.subr.bf16.mxu0 0
          %1927 = vmatpush1.bf16.msra.mxu0 %v1423
          %1928 = vmatprep.subr.bf16.mxu0 0
          %1929 = vmatpush1.bf16.msra.mxu0 %v1424
          %1930 = vmatprep.subr.bf16.mxu0 0
          %1931 = vmatpush1.bf16.msra.mxu0 %v1425
          %1932 = vmatprep.subr.bf16.mxu0 0
          %1933 = vmatpush1.bf16.msra.mxu0 0
          %1934 = vmatprep.subr.bf16.mxu0 0
          %1935 = vmatpush1.bf16.msra.mxu0 0
          %1936 = vmatprep.subr.bf16.mxu0 0
          %1937 = vmatpush1.bf16.msra.mxu0 0
          %1938 = vmatprep.subr.bf16.mxu0 0
          %1939 = vmatpush1.bf16.msra.mxu0 0
          %1940 = vmatprep.subr.bf16.mxu0 0
          %1941 = vmatpush1.bf16.msra.mxu0 0
          %1942 = vmatprep.subr.bf16.mxu0 0
          %1943 = vmatpush1.bf16.msra.mxu0 0
          %1944 = vmatprep.subr.bf16.mxu0 0
          %1945 = vmatpush1.bf16.msra.mxu0 0
          %1946 = vmatprep.subr.bf16.mxu0 0
          %1947 = vmatpush1.bf16.msra.mxu0 0
          %1948 = vmatprep.subr.bf16.mxu0 0
          %1949 = vmatpush1.bf16.msra.mxu0 0
          %1950 = vmatprep.subr.bf16.mxu0 0
          %1951 = vmatpush1.bf16.msra.mxu0 0
          %1952 = vmatprep.subr.bf16.mxu0 0
          %1953 = vmatpush1.bf16.msra.mxu0 0
          %1954 = vmatprep.subr.bf16.mxu0 0
          %1955 = vmatpush1.bf16.msra.mxu0 0
          %1956 = vmatprep.mubr.bf16.mxu0 0
          %1957 = vmatmul.mubr.bf16.gmra.mrb[0].mxu0 %v1840
          %v1958 = vpop.f32.mrb[0].mxu0
          %v1959 = vadd.f32 0.0, %v1958
          %v1960 = vpop.f32.mrb[0].mxu0
          %v1961 = vpop.f32.mrb[0].mxu0
          %v1962 = vadd.f32 0.0, %v1961
          %v1963 = vpop.f32.mrb[0].mxu0
          %1964 = vmatprep.mubr.bf16.mxu0 0
          %1965 = vmatmul.mubr.bf16.gmra.mrb[0].mxu0 %v1843
          %v1966 = vpop.f32.mrb[0].mxu0
          %v1967 = vadd.f32 0.0, %v1966
          %v1968 = vpop.f32.mrb[0].mxu0
          %v1969 = vpop.f32.mrb[0].mxu0
          %v1970 = vadd.f32 0.0, %v1969
          %v1971 = vpop.f32.mrb[0].mxu0
          %1972 = vmatprep.mubr.bf16.mxu0 0
          %1973 = vmatmul.mubr.bf16.gmra.mrb[0].mxu0 %v1846
          %v1974 = vpop.f32.mrb[0].mxu0
          %v1975 = vadd.f32 0.0, %v1974
          %v1976 = vpop.f32.mrb[0].mxu0
          %v1977 = vpop.f32.mrb[0].mxu0
          %v1978 = vadd.f32 0.0, %v1977
          %v1979 = vpop.f32.mrb[0].mxu0
          %1980 = vmatprep.mubr.bf16.mxu0 0
          %1981 = vmatmul.mubr.bf16.gmra.mrb[0].mxu0 %v1849
          %v1982 = vpop.f32.mrb[0].mxu0
          %v1983 = vadd.f32 0.0, %v1982
          %v1984 = vpop.f32.mrb[0].mxu0
          %v1985 = vpop.f32.mrb[0].mxu0
          %v1986 = vadd.f32 0.0, %v1985
          %v1987 = vpop.f32.mrb[0].mxu0
          %1988 = vdwg.mxu0
          %1989 = vmatprep.subr.bf16.mxu0 0
          %1990 = vmatpush1.bf16.msra.mxu0 %v1527
          %1991 = vmatprep.subr.bf16.mxu0 0
          %1992 = vmatpush1.bf16.msra.mxu0 %v1528
          %1993 = vmatprep.subr.bf16.mxu0 0
          %1994 = vmatpush1.bf16.msra.mxu0 %v1529
          %1995 = vmatprep.subr.bf16.mxu0 0
          %1996 = vmatpush1.bf16.msra.mxu0 %v1530
          %1997 = vmatprep.subr.bf16.mxu0 0
          %1998 = vmatpush1.bf16.msra.mxu0 0
          %1999 = vmatprep.subr.bf16.mxu0 0
          %2000 = vmatpush1.bf16.msra.mxu0 0
          %2001 = vmatprep.subr.bf16.mxu0 0
          %2002 = vmatpush1.bf16.msra.mxu0 0
          %2003 = vmatprep.subr.bf16.mxu0 0
          %2004 = vmatpush1.bf16.msra.mxu0 0
          %2005 = vmatprep.subr.bf16.mxu0 0
          %2006 = vmatpush1.bf16.msra.mxu0 0
          %2007 = vmatprep.subr.bf16.mxu0 0
          %2008 = vmatpush1.bf16.msra.mxu0 0
          %2009 = vmatprep.subr.bf16.mxu0 0
          %2010 = vmatpush1.bf16.msra.mxu0 0
          %2011 = vmatprep.subr.bf16.mxu0 0
          %2012 = vmatpush1.bf16.msra.mxu0 0
          %2013 = vmatprep.subr.bf16.mxu0 0
          %2014 = vmatpush1.bf16.msra.mxu0 0
          %2015 = vmatprep.subr.bf16.mxu0 0
          %2016 = vmatpush1.bf16.msra.mxu0 0
          %2017 = vmatprep.subr.bf16.mxu0 0
          %2018 = vmatpush1.bf16.msra.mxu0 0
          %2019 = vmatprep.subr.bf16.mxu0 0
          %2020 = vmatpush1.bf16.msra.mxu0 0
          %2021 = vmatprep.mubr.bf16.mxu0 0
          %2022 = vmatmul.mubr.bf16.gmra.mrb[0].mxu0 %v1759
          %v2023 = vpop.f32.mrb[0].mxu0
          %v2024 = vadd.f32 %v1959, %v2023
          %v2025 = vpop.f32.mrb[0].mxu0
          %v2026 = vpop.f32.mrb[0].mxu0
          %v2027 = vadd.f32 %v1962, %v2026
          %v2028 = vpop.f32.mrb[0].mxu0
          %2029 = vmatprep.mubr.bf16.mxu0 0
          %2030 = vmatmul.mubr.bf16.gmra.mrb[0].mxu0 %v1762
          %v2031 = vpop.f32.mrb[0].mxu0
          %v2032 = vadd.f32 %v1967, %v2031
          %v2033 = vpop.f32.mrb[0].mxu0
          %v2034 = vpop.f32.mrb[0].mxu0
          %v2035 = vadd.f32 %v1970, %v2034
          %v2036 = vpop.f32.mrb[0].mxu0
          %2037 = vmatprep.mubr.bf16.mxu0 0
          %2038 = vmatmul.mubr.bf16.gmra.mrb[0].mxu0 %v1765
          %v2039 = vpop.f32.mrb[0].mxu0
          %v2040 = vadd.f32 %v1975, %v2039
          %v2041 = vpop.f32.mrb[0].mxu0
          %v2042 = vpop.f32.mrb[0].mxu0
          %v2043 = vadd.f32 %v1978, %v2042
          %v2044 = vpop.f32.mrb[0].mxu0
          %2045 = vmatprep.mubr.bf16.mxu0 0
          %2046 = vmatmul.mubr.bf16.gmra.mrb[0].mxu0 %v1768
          %v2047 = vpop.f32.mrb[0].mxu0
          %v2048 = vadd.f32 %v1983, %v2047
          %v2049 = vpop.f32.mrb[0].mxu0
          %v2050 = vpop.f32.mrb[0].mxu0
          %v2051 = vadd.f32 %v1986, %v2050
          %v2052 = vpop.f32.mrb[0].mxu0
          %2053 = vdwg.mxu0
          %s2054 = smul.u32 %s641, 8
          %s2055 = smul.addr %s2054, 4
          %s2056 = scalar_lea.vmem [#allocation16], %s2055
          %v2057 = vld [vmem:[%s2056] sm:$0xf]
          %v2058 = vld [vmem:[%s2056 + $0x4] sm:$0xf]
          %v2059 = vld [vmem:[%s2056 + $0x8] sm:$0xf]
          %v2060 = vld [vmem:[%s2056 + $0xc] sm:$0xf]
          %v2061 = vld [vmem:[%s2056 + $0x10] sm:$0xf]
          %v2062 = vld [vmem:[%s2056 + $0x14] sm:$0xf]
          %v2063 = vld [vmem:[%s2056 + $0x18] sm:$0xf]
          %v2064 = vld [vmem:[%s2056 + $0x1c] sm:$0xf]
          %v2065 = vunpack.c.l.bf16 %v2057
          %v2066 = vunpack.c.l.bf16 %v2058
          %v2067 = vunpack.c.l.bf16 %v2059
          %v2068 = vunpack.c.l.bf16 %v2060
          %v2069 = vunpack.c.l.bf16 %v2061
          %v2070 = vunpack.c.l.bf16 %v2062
          %v2071 = vunpack.c.l.bf16 %v2063
          %v2072 = vunpack.c.l.bf16 %v2064
          %s2073 = smul.addr %s2054, 4
          %s2074 = scalar_lea.vmem [#allocation17], %s2073
          %v2075 = vld [vmem:[%s2074] sm:$0xf]
          %v2076 = vld [vmem:[%s2074 + $0x4] sm:$0xf]
          %v2077 = vld [vmem:[%s2074 + $0x8] sm:$0xf]
          %v2078 = vld [vmem:[%s2074 + $0xc] sm:$0xf]
          %v2079 = vld [vmem:[%s2074 + $0x10] sm:$0xf]
          %v2080 = vld [vmem:[%s2074 + $0x14] sm:$0xf]
          %v2081 = vld [vmem:[%s2074 + $0x18] sm:$0xf]
          %v2082 = vld [vmem:[%s2074 + $0x1c] sm:$0xf]
          %v2083 = vunpack.c.l.bf16 %v2075
          %v2084 = vunpack.c.l.bf16 %v2076
          %v2085 = vunpack.c.l.bf16 %v2077
          %v2086 = vunpack.c.l.bf16 %v2078
          %v2087 = vunpack.c.l.bf16 %v2079
          %v2088 = vunpack.c.l.bf16 %v2080
          %v2089 = vunpack.c.l.bf16 %v2081
          %v2090 = vunpack.c.l.bf16 %v2082
          %v2091 = vmul.f32 %v1916, %v2065
          %v2092 = vmul.f32 %v1917, %v2066
          %v2093 = vmul.f32 %v1918, %v2067
          %v2094 = vmul.f32 %v1919, %v2068
          %v2095 = vmul.f32 %v1920, %v2069
          %v2096 = vmul.f32 %v1921, %v2070
          %v2097 = vmul.f32 %v1922, %v2071
          %v2098 = vmul.f32 %v1923, %v2072
          %v2099 = vmul.f32 %v2024, %v2083
          %v2100 = vmul.f32 %v2027, %v2084
          %v2101 = vmul.f32 %v2032, %v2085
          %v2102 = vmul.f32 %v2035, %v2086
          %v2103 = vmul.f32 %v2040, %v2087
          %v2104 = vmul.f32 %v2043, %v2088
          %v2105 = vmul.f32 %v2048, %v2089
          %v2106 = vmul.f32 %v2051, %v2090
          %v2107 = vsub.f32 %v2091, %v2099
          %v2108 = vsub.f32 %v2092, %v2100
          %v2109 = vsub.f32 %v2093, %v2101
          %v2110 = vsub.f32 %v2094, %v2102
          %v2111 = vsub.f32 %v2095, %v2103
          %v2112 = vsub.f32 %v2096, %v2104
          %v2113 = vsub.f32 %v2097, %v2105
          %v2114 = vsub.f32 %v2098, %v2106
          %2115 = vst.msk [vmem:[%s591] sm:$0xff] %vm615, %v2107
          %2116 = vst.msk [vmem:[%s591 + $0x8] sm:$0xff] %vm615, %v2108
          %2117 = vst.msk [vmem:[%s591 + $0x10] sm:$0xff] %vm615, %v2109
          %2118 = vst.msk [vmem:[%s591 + $0x18] sm:$0xff] %vm615, %v2110
          %2119 = vst.msk [vmem:[%s591 + $0x20] sm:$0xff] %vm615, %v2111
          %2120 = vst.msk [vmem:[%s591 + $0x28] sm:$0xff] %vm615, %v2112
          %2121 = vst.msk [vmem:[%s591 + $0x30] sm:$0xff] %vm615, %v2113
          %2122 = vst.msk [vmem:[%s591 + $0x38] sm:$0xff] %vm615, %v2114
          %v2123 = vmul.f32 %v1916, %v2083
          %v2124 = vmul.f32 %v1917, %v2084
          %v2125 = vmul.f32 %v1918, %v2085
          %v2126 = vmul.f32 %v1919, %v2086
          %v2127 = vmul.f32 %v1920, %v2087
          %v2128 = vmul.f32 %v1921, %v2088
          %v2129 = vmul.f32 %v1922, %v2089
          %v2130 = vmul.f32 %v1923, %v2090
          %v2131 = vmul.f32 %v2024, %v2065
          %v2132 = vmul.f32 %v2027, %v2066
          %v2133 = vmul.f32 %v2032, %v2067
          %v2134 = vmul.f32 %v2035, %v2068
          %v2135 = vmul.f32 %v2040, %v2069
          %v2136 = vmul.f32 %v2043, %v2070
          %v2137 = vmul.f32 %v2048, %v2071
          %v2138 = vmul.f32 %v2051, %v2072
          %v2139 = vadd.f32 %v2123, %v2131
          %v2140 = vadd.f32 %v2124, %v2132
          %v2141 = vadd.f32 %v2125, %v2133
          %v2142 = vadd.f32 %v2126, %v2134
          %v2143 = vadd.f32 %v2127, %v2135
          %v2144 = vadd.f32 %v2128, %v2136
          %v2145 = vadd.f32 %v2129, %v2137
          %v2146 = vadd.f32 %v2130, %v2138
          %2147 = vst.msk [vmem:[%s598] sm:$0xff] %vm615, %v2139
          %2148 = vst.msk [vmem:[%s598 + $0x8] sm:$0xff] %vm615, %v2140
          %2149 = vst.msk [vmem:[%s598 + $0x10] sm:$0xff] %vm615, %v2141
          %2150 = vst.msk [vmem:[%s598 + $0x18] sm:$0xff] %vm615, %v2142
          %2151 = vst.msk [vmem:[%s598 + $0x20] sm:$0xff] %vm615, %v2143
          %2152 = vst.msk [vmem:[%s598 + $0x28] sm:$0xff] %vm615, %v2144
          %2153 = vst.msk [vmem:[%s598 + $0x30] sm:$0xff] %vm615, %v2145
          %2154 = vst.msk [vmem:[%s598 + $0x38] sm:$0xff] %vm615, %v2146
        $region105: #{tpu_custom_call.1} parent=59 // loop_footer
          %s645 = sadd.s32 1, %s641
        $region106: #{tpu_custom_call.1} parent=59 // loop_footer_branch
          %640 = sbr.rel target = $region102
        $region107: #{tpu_custom_call.1} parent=59 // loop_exit
          _
        %v2155 = vld [vmem:[%s591] sm:$0xff]
        %v2156 = vld [vmem:[%s591 + $0x8] sm:$0xff]
        %v2157 = vld [vmem:[%s591 + $0x10] sm:$0xff]
        %v2158 = vld [vmem:[%s591 + $0x18] sm:$0xff]
        %v2159 = vld [vmem:[%s591 + $0x20] sm:$0xff]
        %v2160 = vld [vmem:[%s591 + $0x28] sm:$0xff]
        %v2161 = vld [vmem:[%s591 + $0x30] sm:$0xff]
        %v2162 = vld [vmem:[%s591 + $0x38] sm:$0xff]
        %v2163 = vld [vmem:[%s598] sm:$0xff]
        %v2164 = vld [vmem:[%s598 + $0x8] sm:$0xff]
        %v2165 = vld [vmem:[%s598 + $0x10] sm:$0xff]
        %v2166 = vld [vmem:[%s598 + $0x18] sm:$0xff]
        %v2167 = vld [vmem:[%s598 + $0x20] sm:$0xff]
        %v2168 = vld [vmem:[%s598 + $0x28] sm:$0xff]
        %v2169 = vld [vmem:[%s598 + $0x30] sm:$0xff]
        %v2170 = vld [vmem:[%s598 + $0x38] sm:$0xff]
        %v2171 = vpack.c.bf16 %v2156, %v2155
        %v2172 = vpack.c.bf16 %v2158, %v2157
        %v2173 = vpack.c.bf16 %v2160, %v2159
        %v2174 = vpack.c.bf16 %v2162, %v2161
        %v2175 = vpack.c.bf16 %v2164, %v2163
        %v2176 = vpack.c.bf16 %v2166, %v2165
        %v2177 = vpack.c.bf16 %v2168, %v2167
        %v2178 = vpack.c.bf16 %v2170, %v2169
        %v2179 = vld [vmem:[#allocation7] sm:$0xf]
        %v2180 = vld [vmem:[#allocation7 + $0x4] sm:$0xf]
        %v2181 = vld [vmem:[#allocation7 + $0x8] sm:$0xf]
        %v2182 = vld [vmem:[#allocation7 + $0xc] sm:$0xf]
        %v2183 = vld [vmem:[#allocation7 + $0x10] sm:$0xf]
        %v2184 = vld [vmem:[#allocation7 + $0x14] sm:$0xf]
        %v2185 = vld [vmem:[#allocation7 + $0x18] sm:$0xf]
        %v2186 = vld [vmem:[#allocation7 + $0x1c] sm:$0xf]
        %v2195 = vunpack.c.l.b16 %v2179
        %v2196 = vunpack.c.l.b16 %v2180
        %v2197 = vunpack.c.l.b16 %v2181
        %v2198 = vunpack.c.l.b16 %v2182
        %v2199 = vunpack.c.l.b16 %v2183
        %v2200 = vunpack.c.l.b16 %v2184
        %v2201 = vunpack.c.l.b16 %v2185
        %v2202 = vunpack.c.l.b16 %v2186
        %v2203 = vpack.c.b16 %v2196, %v2195
        %v2204 = vpack.c.b16 %v2198, %v2197
        %v2205 = vpack.c.b16 %v2200, %v2199
        %v2206 = vpack.c.b16 %v2202, %v2201
        %v2208 = vsel %vm615, %v2203, 0
        %v2211 = vsel %vm615, %v2204, 0
        %v2214 = vsel %vm615, %v2205, 0
        %v2217 = vsel %vm615, %v2206, 0
        %2219 = vmatprep.subr.bf16.mxu0 0
        %2220 = vmatpush1.bf16.msra.mxu0 %v2171
        %2221 = vmatprep.subr.bf16.mxu0 0
        %2222 = vmatpush1.bf16.msra.mxu0 %v2172
        %2223 = vmatprep.subr.bf16.mxu0 0
        %2224 = vmatpush1.bf16.msra.mxu0 %v2173
        %2225 = vmatprep.subr.bf16.mxu0 0
        %2226 = vmatpush1.bf16.msra.mxu0 %v2174
        %2227 = vmatprep.subr.bf16.mxu0 0
        %2228 = vmatpush1.bf16.msra.mxu0 0
        %2229 = vmatprep.subr.bf16.mxu0 0
        %2230 = vmatpush1.bf16.msra.mxu0 0
        %2231 = vmatprep.subr.bf16.mxu0 0
        %2232 = vmatpush1.bf16.msra.mxu0 0
        %2233 = vmatprep.subr.bf16.mxu0 0
        %2234 = vmatpush1.bf16.msra.mxu0 0
        %2235 = vmatprep.subr.bf16.mxu0 0
        %2236 = vmatpush1.bf16.msra.mxu0 0
        %2237 = vmatprep.subr.bf16.mxu0 0
        %2238 = vmatpush1.bf16.msra.mxu0 0
        %2239 = vmatprep.subr.bf16.mxu0 0
        %2240 = vmatpush1.bf16.msra.mxu0 0
        %2241 = vmatprep.subr.bf16.mxu0 0
        %2242 = vmatpush1.bf16.msra.mxu0 0
        %2243 = vmatprep.subr.bf16.mxu0 0
        %2244 = vmatpush1.bf16.msra.mxu0 0
        %2245 = vmatprep.subr.bf16.mxu0 0
        %2246 = vmatpush1.bf16.msra.mxu0 0
        %2247 = vmatprep.subr.bf16.mxu0 0
        %2248 = vmatpush1.bf16.msra.mxu0 0
        %2249 = vmatprep.subr.bf16.mxu0 0
        %2250 = vmatpush1.bf16.msra.mxu0 0
        %2251 = vmatprep.mubr.bf16.mxu0 0
        %2252 = vmatmul.mubr.bf16.gmra.mrb[0].mxu0 %v2208
        %v2253 = vpop.f32.mrb[0].mxu0
        %v2254 = vadd.f32 0.0, %v2253
        %v2255 = vpop.f32.mrb[0].mxu0
        %v2256 = vpop.f32.mrb[0].mxu0
        %v2257 = vadd.f32 0.0, %v2256
        %v2258 = vpop.f32.mrb[0].mxu0
        %2259 = vmatprep.mubr.bf16.mxu0 0
        %2260 = vmatmul.mubr.bf16.gmra.mrb[0].mxu0 %v2211
        %v2261 = vpop.f32.mrb[0].mxu0
        %v2262 = vadd.f32 0.0, %v2261
        %v2263 = vpop.f32.mrb[0].mxu0
        %v2264 = vpop.f32.mrb[0].mxu0
        %v2265 = vadd.f32 0.0, %v2264
        %v2266 = vpop.f32.mrb[0].mxu0
        %2267 = vmatprep.mubr.bf16.mxu0 0
        %2268 = vmatmul.mubr.bf16.gmra.mrb[0].mxu0 %v2214
        %v2269 = vpop.f32.mrb[0].mxu0
        %v2270 = vadd.f32 0.0, %v2269
        %v2271 = vpop.f32.mrb[0].mxu0
        %v2272 = vpop.f32.mrb[0].mxu0
        %v2273 = vadd.f32 0.0, %v2272
        %v2274 = vpop.f32.mrb[0].mxu0
        %2275 = vmatprep.mubr.bf16.mxu0 0
        %2276 = vmatmul.mubr.bf16.gmra.mrb[0].mxu0 %v2217
        %v2277 = vpop.f32.mrb[0].mxu0
        %v2278 = vadd.f32 0.0, %v2277
        %v2279 = vpop.f32.mrb[0].mxu0
        %v2280 = vpop.f32.mrb[0].mxu0
        %v2281 = vadd.f32 0.0, %v2280
        %v2282 = vpop.f32.mrb[0].mxu0
        %2283 = vdwg.mxu0
        %v2284 = vld [vmem:[#allocation8] sm:$0xf]
        %v2285 = vld [vmem:[#allocation8 + $0x4] sm:$0xf]
        %v2286 = vld [vmem:[#allocation8 + $0x8] sm:$0xf]
        %v2287 = vld [vmem:[#allocation8 + $0xc] sm:$0xf]
        %v2288 = vld [vmem:[#allocation8 + $0x10] sm:$0xf]
        %v2289 = vld [vmem:[#allocation8 + $0x14] sm:$0xf]
        %v2290 = vld [vmem:[#allocation8 + $0x18] sm:$0xf]
        %v2291 = vld [vmem:[#allocation8 + $0x1c] sm:$0xf]
        %v2300 = vunpack.c.l.b16 %v2284
        %v2301 = vunpack.c.l.b16 %v2285
        %v2302 = vunpack.c.l.b16 %v2286
        %v2303 = vunpack.c.l.b16 %v2287
        %v2304 = vunpack.c.l.b16 %v2288
        %v2305 = vunpack.c.l.b16 %v2289
        %v2306 = vunpack.c.l.b16 %v2290
        %v2307 = vunpack.c.l.b16 %v2291
        %v2308 = vpack.c.b16 %v2301, %v2300
        %v2309 = vpack.c.b16 %v2303, %v2302
        %v2310 = vpack.c.b16 %v2305, %v2304
        %v2311 = vpack.c.b16 %v2307, %v2306
        %v2313 = vsel %vm615, %v2308, 0
        %v2316 = vsel %vm615, %v2309, 0
        %v2319 = vsel %vm615, %v2310, 0
        %v2322 = vsel %vm615, %v2311, 0
        %2324 = vmatprep.subr.bf16.mxu0 0
        %2325 = vmatpush1.bf16.msra.mxu0 %v2175
        %2326 = vmatprep.subr.bf16.mxu0 0
        %2327 = vmatpush1.bf16.msra.mxu0 %v2176
        %2328 = vmatprep.subr.bf16.mxu0 0
        %2329 = vmatpush1.bf16.msra.mxu0 %v2177
        %2330 = vmatprep.subr.bf16.mxu0 0
        %2331 = vmatpush1.bf16.msra.mxu0 %v2178
        %2332 = vmatprep.subr.bf16.mxu0 0
        %2333 = vmatpush1.bf16.msra.mxu0 0
        %2334 = vmatprep.subr.bf16.mxu0 0
        %2335 = vmatpush1.bf16.msra.mxu0 0
        %2336 = vmatprep.subr.bf16.mxu0 0
        %2337 = vmatpush1.bf16.msra.mxu0 0
        %2338 = vmatprep.subr.bf16.mxu0 0
        %2339 = vmatpush1.bf16.msra.mxu0 0
        %2340 = vmatprep.subr.bf16.mxu0 0
        %2341 = vmatpush1.bf16.msra.mxu0 0
        %2342 = vmatprep.subr.bf16.mxu0 0
        %2343 = vmatpush1.bf16.msra.mxu0 0
        %2344 = vmatprep.subr.bf16.mxu0 0
        %2345 = vmatpush1.bf16.msra.mxu0 0
        %2346 = vmatprep.subr.bf16.mxu0 0
        %2347 = vmatpush1.bf16.msra.mxu0 0
        %2348 = vmatprep.subr.bf16.mxu0 0
        %2349 = vmatpush1.bf16.msra.mxu0 0
        %2350 = vmatprep.subr.bf16.mxu0 0
        %2351 = vmatpush1.bf16.msra.mxu0 0
        %2352 = vmatprep.subr.bf16.mxu0 0
        %2353 = vmatpush1.bf16.msra.mxu0 0
        %2354 = vmatprep.subr.bf16.mxu0 0
        %2355 = vmatpush1.bf16.msra.mxu0 0
        %2356 = vmatprep.mubr.bf16.mxu0 0
        %2357 = vmatmul.mubr.bf16.gmra.mrb[0].mxu0 %v2313
        %v2358 = vpop.f32.mrb[0].mxu0
        %v2359 = vadd.f32 0.0, %v2358
        %v2360 = vpop.f32.mrb[0].mxu0
        %v2361 = vpop.f32.mrb[0].mxu0
        %v2362 = vadd.f32 0.0, %v2361
        %v2363 = vpop.f32.mrb[0].mxu0
        %2364 = vmatprep.mubr.bf16.mxu0 0
        %2365 = vmatmul.mubr.bf16.gmra.mrb[0].mxu0 %v2316
        %v2366 = vpop.f32.mrb[0].mxu0
        %v2367 = vadd.f32 0.0, %v2366
        %v2368 = vpop.f32.mrb[0].mxu0
        %v2369 = vpop.f32.mrb[0].mxu0
        %v2370 = vadd.f32 0.0, %v2369
        %v2371 = vpop.f32.mrb[0].mxu0
        %2372 = vmatprep.mubr.bf16.mxu0 0
        %2373 = vmatmul.mubr.bf16.gmra.mrb[0].mxu0 %v2319
        %v2374 = vpop.f32.mrb[0].mxu0
        %v2375 = vadd.f32 0.0, %v2374
        %v2376 = vpop.f32.mrb[0].mxu0
        %v2377 = vpop.f32.mrb[0].mxu0
        %v2378 = vadd.f32 0.0, %v2377
        %v2379 = vpop.f32.mrb[0].mxu0
        %2380 = vmatprep.mubr.bf16.mxu0 0
        %2381 = vmatmul.mubr.bf16.gmra.mrb[0].mxu0 %v2322
        %v2382 = vpop.f32.mrb[0].mxu0
        %v2383 = vadd.f32 0.0, %v2382
        %v2384 = vpop.f32.mrb[0].mxu0
        %v2385 = vpop.f32.mrb[0].mxu0
        %v2386 = vadd.f32 0.0, %v2385
        %v2387 = vpop.f32.mrb[0].mxu0
        %2388 = vdwg.mxu0
        %v2389 = vsub.f32 %v2254, %v2359
        %v2390 = vsub.f32 %v2257, %v2362
        %v2391 = vsub.f32 %v2262, %v2367
        %v2392 = vsub.f32 %v2265, %v2370
        %v2393 = vsub.f32 %v2270, %v2375
        %v2394 = vsub.f32 %v2273, %v2378
        %v2395 = vsub.f32 %v2278, %v2383
        %v2396 = vsub.f32 %v2281, %v2386
        %2397 = vmatprep.subr.bf16.mxu0 0
        %2398 = vmatpush1.bf16.msra.mxu0 %v2171
        %2399 = vmatprep.subr.bf16.mxu0 0
        %2400 = vmatpush1.bf16.msra.mxu0 %v2172
        %2401 = vmatprep.subr.bf16.mxu0 0
        %2402 = vmatpush1.bf16.msra.mxu0 %v2173
        %2403 = vmatprep.subr.bf16.mxu0 0
        %2404 = vmatpush1.bf16.msra.mxu0 %v2174
        %2405 = vmatprep.subr.bf16.mxu0 0
        %2406 = vmatpush1.bf16.msra.mxu0 0
        %2407 = vmatprep.subr.bf16.mxu0 0
        %2408 = vmatpush1.bf16.msra.mxu0 0
        %2409 = vmatprep.subr.bf16.mxu0 0
        %2410 = vmatpush1.bf16.msra.mxu0 0
        %2411 = vmatprep.subr.bf16.mxu0 0
        %2412 = vmatpush1.bf16.msra.mxu0 0
        %2413 = vmatprep.subr.bf16.mxu0 0
        %2414 = vmatpush1.bf16.msra.mxu0 0
        %2415 = vmatprep.subr.bf16.mxu0 0
        %2416 = vmatpush1.bf16.msra.mxu0 0
        %2417 = vmatprep.subr.bf16.mxu0 0
        %2418 = vmatpush1.bf16.msra.mxu0 0
        %2419 = vmatprep.subr.bf16.mxu0 0
        %2420 = vmatpush1.bf16.msra.mxu0 0
        %2421 = vmatprep.subr.bf16.mxu0 0
        %2422 = vmatpush1.bf16.msra.mxu0 0
        %2423 = vmatprep.subr.bf16.mxu0 0
        %2424 = vmatpush1.bf16.msra.mxu0 0
        %2425 = vmatprep.subr.bf16.mxu0 0
        %2426 = vmatpush1.bf16.msra.mxu0 0
        %2427 = vmatprep.subr.bf16.mxu0 0
        %2428 = vmatpush1.bf16.msra.mxu0 0
        %2429 = vmatprep.mubr.bf16.mxu0 0
        %2430 = vmatmul.mubr.bf16.gmra.mrb[0].mxu0 %v2313
        %v2431 = vpop.f32.mrb[0].mxu0
        %v2432 = vadd.f32 0.0, %v2431
        %v2433 = vpop.f32.mrb[0].mxu0
        %v2434 = vpop.f32.mrb[0].mxu0
        %v2435 = vadd.f32 0.0, %v2434
        %v2436 = vpop.f32.mrb[0].mxu0
        %2437 = vmatprep.mubr.bf16.mxu0 0
        %2438 = vmatmul.mubr.bf16.gmra.mrb[0].mxu0 %v2316
        %v2439 = vpop.f32.mrb[0].mxu0
        %v2440 = vadd.f32 0.0, %v2439
        %v2441 = vpop.f32.mrb[0].mxu0
        %v2442 = vpop.f32.mrb[0].mxu0
        %v2443 = vadd.f32 0.0, %v2442
        %v2444 = vpop.f32.mrb[0].mxu0
        %2445 = vmatprep.mubr.bf16.mxu0 0
        %2446 = vmatmul.mubr.bf16.gmra.mrb[0].mxu0 %v2319
        %v2447 = vpop.f32.mrb[0].mxu0
        %v2448 = vadd.f32 0.0, %v2447
        %v2449 = vpop.f32.mrb[0].mxu0
        %v2450 = vpop.f32.mrb[0].mxu0
        %v2451 = vadd.f32 0.0, %v2450
        %v2452 = vpop.f32.mrb[0].mxu0
        %2453 = vmatprep.mubr.bf16.mxu0 0
        %2454 = vmatmul.mubr.bf16.gmra.mrb[0].mxu0 %v2322
        %v2455 = vpop.f32.mrb[0].mxu0
        %v2456 = vadd.f32 0.0, %v2455
        %v2457 = vpop.f32.mrb[0].mxu0
        %v2458 = vpop.f32.mrb[0].mxu0
        %v2459 = vadd.f32 0.0, %v2458
        %v2460 = vpop.f32.mrb[0].mxu0
        %2461 = vdwg.mxu0
        %2462 = vmatprep.subr.bf16.mxu0 0
        %2463 = vmatpush1.bf16.msra.mxu0 %v2175
        %2464 = vmatprep.subr.bf16.mxu0 0
        %2465 = vmatpush1.bf16.msra.mxu0 %v2176
        %2466 = vmatprep.subr.bf16.mxu0 0
        %2467 = vmatpush1.bf16.msra.mxu0 %v2177
        %2468 = vmatprep.subr.bf16.mxu0 0
        %2469 = vmatpush1.bf16.msra.mxu0 %v2178
        %2470 = vmatprep.subr.bf16.mxu0 0
        %2471 = vmatpush1.bf16.msra.mxu0 0
        %2472 = vmatprep.subr.bf16.mxu0 0
        %2473 = vmatpush1.bf16.msra.mxu0 0
        %2474 = vmatprep.subr.bf16.mxu0 0
        %2475 = vmatpush1.bf16.msra.mxu0 0
        %2476 = vmatprep.subr.bf16.mxu0 0
        %2477 = vmatpush1.bf16.msra.mxu0 0
        %2478 = vmatprep.subr.bf16.mxu0 0
        %2479 = vmatpush1.bf16.msra.mxu0 0
        %2480 = vmatprep.subr.bf16.mxu0 0
        %2481 = vmatpush1.bf16.msra.mxu0 0
        %2482 = vmatprep.subr.bf16.mxu0 0
        %2483 = vmatpush1.bf16.msra.mxu0 0
        %2484 = vmatprep.subr.bf16.mxu0 0
        %2485 = vmatpush1.bf16.msra.mxu0 0
        %2486 = vmatprep.subr.bf16.mxu0 0
        %2487 = vmatpush1.bf16.msra.mxu0 0
        %2488 = vmatprep.subr.bf16.mxu0 0
        %2489 = vmatpush1.bf16.msra.mxu0 0
        %2490 = vmatprep.subr.bf16.mxu0 0
        %2491 = vmatpush1.bf16.msra.mxu0 0
        %2492 = vmatprep.subr.bf16.mxu0 0
        %2493 = vmatpush1.bf16.msra.mxu0 0
        %2494 = vmatprep.mubr.bf16.mxu0 0
        %2495 = vmatmul.mubr.bf16.gmra.mrb[0].mxu0 %v2208
        %v2496 = vpop.f32.mrb[0].mxu0
        %v2497 = vadd.f32 %v2432, %v2496
        %v2498 = vpop.f32.mrb[0].mxu0
        %v2499 = vpop.f32.mrb[0].mxu0
        %v2500 = vadd.f32 %v2435, %v2499
        %v2501 = vpop.f32.mrb[0].mxu0
        %2502 = vmatprep.mubr.bf16.mxu0 0
        %2503 = vmatmul.mubr.bf16.gmra.mrb[0].mxu0 %v2211
        %v2504 = vpop.f32.mrb[0].mxu0
        %v2505 = vadd.f32 %v2440, %v2504
        %v2506 = vpop.f32.mrb[0].mxu0
        %v2507 = vpop.f32.mrb[0].mxu0
        %v2508 = vadd.f32 %v2443, %v2507
        %v2509 = vpop.f32.mrb[0].mxu0
        %2510 = vmatprep.mubr.bf16.mxu0 0
        %2511 = vmatmul.mubr.bf16.gmra.mrb[0].mxu0 %v2214
        %v2512 = vpop.f32.mrb[0].mxu0
        %v2513 = vadd.f32 %v2448, %v2512
        %v2514 = vpop.f32.mrb[0].mxu0
        %v2515 = vpop.f32.mrb[0].mxu0
        %v2516 = vadd.f32 %v2451, %v2515
        %v2517 = vpop.f32.mrb[0].mxu0
        %2518 = vmatprep.mubr.bf16.mxu0 0
        %2519 = vmatmul.mubr.bf16.gmra.mrb[0].mxu0 %v2217
        %v2520 = vpop.f32.mrb[0].mxu0
        %v2521 = vadd.f32 %v2456, %v2520
        %v2522 = vpop.f32.mrb[0].mxu0
        %v2523 = vpop.f32.mrb[0].mxu0
        %v2524 = vadd.f32 %v2459, %v2523
        %v2525 = vpop.f32.mrb[0].mxu0
        %2526 = vdwg.mxu0
        %v2527 = vpack.c.bf16 %v2390, %v2389
        %v2528 = vpack.c.bf16 %v2392, %v2391
        %v2529 = vpack.c.bf16 %v2394, %v2393
        %v2530 = vpack.c.bf16 %v2396, %v2395
        %v2531 = vpack.c.bf16 %v2500, %v2497
        %v2532 = vpack.c.bf16 %v2508, %v2505
        %v2533 = vpack.c.bf16 %v2516, %v2513
        %v2534 = vpack.c.bf16 %v2524, %v2521
        %v2540 = vsel %vm615, %v2527, 0
        %v2543 = vsel %vm615, %v2528, 0
        %v2546 = vsel %vm615, %v2529, 0
        %v2549 = vsel %vm615, %v2530, 0
        %2551 = vmatprep.subr.bf16.mxu0 0
        %2552 = vmatpush1.bf16.msra.mxu0 %v2203
        %2553 = vmatprep.subr.bf16.mxu0 0
        %2554 = vmatpush1.bf16.msra.mxu0 %v2204
        %2555 = vmatprep.subr.bf16.mxu0 0
        %2556 = vmatpush1.bf16.msra.mxu0 %v2205
        %2557 = vmatprep.subr.bf16.mxu0 0
        %2558 = vmatpush1.bf16.msra.mxu0 %v2206
        %2559 = vmatprep.subr.bf16.mxu0 0
        %2560 = vmatpush1.bf16.msra.mxu0 0
        %2561 = vmatprep.subr.bf16.mxu0 0
        %2562 = vmatpush1.bf16.msra.mxu0 0
        %2563 = vmatprep.subr.bf16.mxu0 0
        %2564 = vmatpush1.bf16.msra.mxu0 0
        %2565 = vmatprep.subr.bf16.mxu0 0
        %2566 = vmatpush1.bf16.msra.mxu0 0
        %2567 = vmatprep.subr.bf16.mxu0 0
        %2568 = vmatpush1.bf16.msra.mxu0 0
        %2569 = vmatprep.subr.bf16.mxu0 0
        %2570 = vmatpush1.bf16.msra.mxu0 0
        %2571 = vmatprep.subr.bf16.mxu0 0
        %2572 = vmatpush1.bf16.msra.mxu0 0
        %2573 = vmatprep.subr.bf16.mxu0 0
        %2574 = vmatpush1.bf16.msra.mxu0 0
        %2575 = vmatprep.subr.bf16.mxu0 0
        %2576 = vmatpush1.bf16.msra.mxu0 0
        %2577 = vmatprep.subr.bf16.mxu0 0
        %2578 = vmatpush1.bf16.msra.mxu0 0
        %2579 = vmatprep.subr.bf16.mxu0 0
        %2580 = vmatpush1.bf16.msra.mxu0 0
        %2581 = vmatprep.subr.bf16.mxu0 0
        %2582 = vmatpush1.bf16.msra.mxu0 0
        %2583 = vmatprep.mubr.bf16.mxu0 0
        %2584 = vmatmul.mubr.bf16.gmra.mrb[0].mxu0 %v2540
        %v2585 = vpop.f32.mrb[0].mxu0
        %v2586 = vadd.f32 0.0, %v2585
        %v2587 = vpop.f32.mrb[0].mxu0
        %v2588 = vpop.f32.mrb[0].mxu0
        %v2589 = vadd.f32 0.0, %v2588
        %v2590 = vpop.f32.mrb[0].mxu0
        %2591 = vmatprep.mubr.bf16.mxu0 0
        %2592 = vmatmul.mubr.bf16.gmra.mrb[0].mxu0 %v2543
        %v2593 = vpop.f32.mrb[0].mxu0
        %v2594 = vadd.f32 0.0, %v2593
        %v2595 = vpop.f32.mrb[0].mxu0
        %v2596 = vpop.f32.mrb[0].mxu0
        %v2597 = vadd.f32 0.0, %v2596
        %v2598 = vpop.f32.mrb[0].mxu0
        %2599 = vmatprep.mubr.bf16.mxu0 0
        %2600 = vmatmul.mubr.bf16.gmra.mrb[0].mxu0 %v2546
        %v2601 = vpop.f32.mrb[0].mxu0
        %v2602 = vadd.f32 0.0, %v2601
        %v2603 = vpop.f32.mrb[0].mxu0
        %v2604 = vpop.f32.mrb[0].mxu0
        %v2605 = vadd.f32 0.0, %v2604
        %v2606 = vpop.f32.mrb[0].mxu0
        %2607 = vmatprep.mubr.bf16.mxu0 0
        %2608 = vmatmul.mubr.bf16.gmra.mrb[0].mxu0 %v2549
        %v2609 = vpop.f32.mrb[0].mxu0
        %v2610 = vadd.f32 0.0, %v2609
        %v2611 = vpop.f32.mrb[0].mxu0
        %v2612 = vpop.f32.mrb[0].mxu0
        %v2613 = vadd.f32 0.0, %v2612
        %v2614 = vpop.f32.mrb[0].mxu0
        %2615 = vdwg.mxu0
        %v2621 = vsel %vm615, %v2531, 0
        %v2624 = vsel %vm615, %v2532, 0
        %v2627 = vsel %vm615, %v2533, 0
        %v2630 = vsel %vm615, %v2534, 0
        %2632 = vmatprep.subr.bf16.mxu0 0
        %2633 = vmatpush1.bf16.msra.mxu0 %v2308
        %2634 = vmatprep.subr.bf16.mxu0 0
        %2635 = vmatpush1.bf16.msra.mxu0 %v2309
        %2636 = vmatprep.subr.bf16.mxu0 0
        %2637 = vmatpush1.bf16.msra.mxu0 %v2310
        %2638 = vmatprep.subr.bf16.mxu0 0
        %2639 = vmatpush1.bf16.msra.mxu0 %v2311
        %2640 = vmatprep.subr.bf16.mxu0 0
        %2641 = vmatpush1.bf16.msra.mxu0 0
        %2642 = vmatprep.subr.bf16.mxu0 0
        %2643 = vmatpush1.bf16.msra.mxu0 0
        %2644 = vmatprep.subr.bf16.mxu0 0
        %2645 = vmatpush1.bf16.msra.mxu0 0
        %2646 = vmatprep.subr.bf16.mxu0 0
        %2647 = vmatpush1.bf16.msra.mxu0 0
        %2648 = vmatprep.subr.bf16.mxu0 0
        %2649 = vmatpush1.bf16.msra.mxu0 0
        %2650 = vmatprep.subr.bf16.mxu0 0
        %2651 = vmatpush1.bf16.msra.mxu0 0
        %2652 = vmatprep.subr.bf16.mxu0 0
        %2653 = vmatpush1.bf16.msra.mxu0 0
        %2654 = vmatprep.subr.bf16.mxu0 0
        %2655 = vmatpush1.bf16.msra.mxu0 0
        %2656 = vmatprep.subr.bf16.mxu0 0
        %2657 = vmatpush1.bf16.msra.mxu0 0
        %2658 = vmatprep.subr.bf16.mxu0 0
        %2659 = vmatpush1.bf16.msra.mxu0 0
        %2660 = vmatprep.subr.bf16.mxu0 0
        %2661 = vmatpush1.bf16.msra.mxu0 0
        %2662 = vmatprep.subr.bf16.mxu0 0
        %2663 = vmatpush1.bf16.msra.mxu0 0
        %2664 = vmatprep.mubr.bf16.mxu0 0
        %2665 = vmatmul.mubr.bf16.gmra.mrb[0].mxu0 %v2621
        %v2666 = vpop.f32.mrb[0].mxu0
        %v2667 = vadd.f32 0.0, %v2666
        %v2668 = vpop.f32.mrb[0].mxu0
        %v2669 = vpop.f32.mrb[0].mxu0
        %v2670 = vadd.f32 0.0, %v2669
        %v2671 = vpop.f32.mrb[0].mxu0
        %2672 = vmatprep.mubr.bf16.mxu0 0
        %2673 = vmatmul.mubr.bf16.gmra.mrb[0].mxu0 %v2624
        %v2674 = vpop.f32.mrb[0].mxu0
        %v2675 = vadd.f32 0.0, %v2674
        %v2676 = vpop.f32.mrb[0].mxu0
        %v2677 = vpop.f32.mrb[0].mxu0
        %v2678 = vadd.f32 0.0, %v2677
        %v2679 = vpop.f32.mrb[0].mxu0
        %2680 = vmatprep.mubr.bf16.mxu0 0
        %2681 = vmatmul.mubr.bf16.gmra.mrb[0].mxu0 %v2627
        %v2682 = vpop.f32.mrb[0].mxu0
        %v2683 = vadd.f32 0.0, %v2682
        %v2684 = vpop.f32.mrb[0].mxu0
        %v2685 = vpop.f32.mrb[0].mxu0
        %v2686 = vadd.f32 0.0, %v2685
        %v2687 = vpop.f32.mrb[0].mxu0
        %2688 = vmatprep.mubr.bf16.mxu0 0
        %2689 = vmatmul.mubr.bf16.gmra.mrb[0].mxu0 %v2630
        %v2690 = vpop.f32.mrb[0].mxu0
        %v2691 = vadd.f32 0.0, %v2690
        %v2692 = vpop.f32.mrb[0].mxu0
        %v2693 = vpop.f32.mrb[0].mxu0
        %v2694 = vadd.f32 0.0, %v2693
        %v2695 = vpop.f32.mrb[0].mxu0
        %2696 = vdwg.mxu0
        %v2697 = vsub.f32 %v2586, %v2667
        %v2698 = vsub.f32 %v2589, %v2670
        %v2699 = vsub.f32 %v2594, %v2675
        %v2700 = vsub.f32 %v2597, %v2678
        %v2701 = vsub.f32 %v2602, %v2683
        %v2702 = vsub.f32 %v2605, %v2686
        %v2703 = vsub.f32 %v2610, %v2691
        %v2704 = vsub.f32 %v2613, %v2694
        %2705 = vmatprep.subr.bf16.mxu0 0
        %2706 = vmatpush1.bf16.msra.mxu0 %v2203
        %2707 = vmatprep.subr.bf16.mxu0 0
        %2708 = vmatpush1.bf16.msra.mxu0 %v2204
        %2709 = vmatprep.subr.bf16.mxu0 0
        %2710 = vmatpush1.bf16.msra.mxu0 %v2205
        %2711 = vmatprep.subr.bf16.mxu0 0
        %2712 = vmatpush1.bf16.msra.mxu0 %v2206
        %2713 = vmatprep.subr.bf16.mxu0 0
        %2714 = vmatpush1.bf16.msra.mxu0 0
        %2715 = vmatprep.subr.bf16.mxu0 0
        %2716 = vmatpush1.bf16.msra.mxu0 0
        %2717 = vmatprep.subr.bf16.mxu0 0
        %2718 = vmatpush1.bf16.msra.mxu0 0
        %2719 = vmatprep.subr.bf16.mxu0 0
        %2720 = vmatpush1.bf16.msra.mxu0 0
        %2721 = vmatprep.subr.bf16.mxu0 0
        %2722 = vmatpush1.bf16.msra.mxu0 0
        %2723 = vmatprep.subr.bf16.mxu0 0
        %2724 = vmatpush1.bf16.msra.mxu0 0
        %2725 = vmatprep.subr.bf16.mxu0 0
        %2726 = vmatpush1.bf16.msra.mxu0 0
        %2727 = vmatprep.subr.bf16.mxu0 0
        %2728 = vmatpush1.bf16.msra.mxu0 0
        %2729 = vmatprep.subr.bf16.mxu0 0
        %2730 = vmatpush1.bf16.msra.mxu0 0
        %2731 = vmatprep.subr.bf16.mxu0 0
        %2732 = vmatpush1.bf16.msra.mxu0 0
        %2733 = vmatprep.subr.bf16.mxu0 0
        %2734 = vmatpush1.bf16.msra.mxu0 0
        %2735 = vmatprep.subr.bf16.mxu0 0
        %2736 = vmatpush1.bf16.msra.mxu0 0
        %2737 = vmatprep.mubr.bf16.mxu0 0
        %2738 = vmatmul.mubr.bf16.gmra.mrb[0].mxu0 %v2621
        %v2739 = vpop.f32.mrb[0].mxu0
        %v2740 = vadd.f32 0.0, %v2739
        %v2741 = vpop.f32.mrb[0].mxu0
        %v2742 = vpop.f32.mrb[0].mxu0
        %v2743 = vadd.f32 0.0, %v2742
        %v2744 = vpop.f32.mrb[0].mxu0
        %2745 = vmatprep.mubr.bf16.mxu0 0
        %2746 = vmatmul.mubr.bf16.gmra.mrb[0].mxu0 %v2624
        %v2747 = vpop.f32.mrb[0].mxu0
        %v2748 = vadd.f32 0.0, %v2747
        %v2749 = vpop.f32.mrb[0].mxu0
        %v2750 = vpop.f32.mrb[0].mxu0
        %v2751 = vadd.f32 0.0, %v2750
        %v2752 = vpop.f32.mrb[0].mxu0
        %2753 = vmatprep.mubr.bf16.mxu0 0
        %2754 = vmatmul.mubr.bf16.gmra.mrb[0].mxu0 %v2627
        %v2755 = vpop.f32.mrb[0].mxu0
        %v2756 = vadd.f32 0.0, %v2755
        %v2757 = vpop.f32.mrb[0].mxu0
        %v2758 = vpop.f32.mrb[0].mxu0
        %v2759 = vadd.f32 0.0, %v2758
        %v2760 = vpop.f32.mrb[0].mxu0
        %2761 = vmatprep.mubr.bf16.mxu0 0
        %2762 = vmatmul.mubr.bf16.gmra.mrb[0].mxu0 %v2630
        %v2763 = vpop.f32.mrb[0].mxu0
        %v2764 = vadd.f32 0.0, %v2763
        %v2765 = vpop.f32.mrb[0].mxu0
        %v2766 = vpop.f32.mrb[0].mxu0
        %v2767 = vadd.f32 0.0, %v2766
        %v2768 = vpop.f32.mrb[0].mxu0
        %2769 = vdwg.mxu0
        %2770 = vmatprep.subr.bf16.mxu0 0
        %2771 = vmatpush1.bf16.msra.mxu0 %v2308
        %2772 = vmatprep.subr.bf16.mxu0 0
        %2773 = vmatpush1.bf16.msra.mxu0 %v2309
        %2774 = vmatprep.subr.bf16.mxu0 0
        %2775 = vmatpush1.bf16.msra.mxu0 %v2310
        %2776 = vmatprep.subr.bf16.mxu0 0
        %2777 = vmatpush1.bf16.msra.mxu0 %v2311
        %2778 = vmatprep.subr.bf16.mxu0 0
        %2779 = vmatpush1.bf16.msra.mxu0 0
        %2780 = vmatprep.subr.bf16.mxu0 0
        %2781 = vmatpush1.bf16.msra.mxu0 0
        %2782 = vmatprep.subr.bf16.mxu0 0
        %2783 = vmatpush1.bf16.msra.mxu0 0
        %2784 = vmatprep.subr.bf16.mxu0 0
        %2785 = vmatpush1.bf16.msra.mxu0 0
        %2786 = vmatprep.subr.bf16.mxu0 0
        %2787 = vmatpush1.bf16.msra.mxu0 0
        %2788 = vmatprep.subr.bf16.mxu0 0
        %2789 = vmatpush1.bf16.msra.mxu0 0
        %2790 = vmatprep.subr.bf16.mxu0 0
        %2791 = vmatpush1.bf16.msra.mxu0 0
        %2792 = vmatprep.subr.bf16.mxu0 0
        %2793 = vmatpush1.bf16.msra.mxu0 0
        %2794 = vmatprep.subr.bf16.mxu0 0
        %2795 = vmatpush1.bf16.msra.mxu0 0
        %2796 = vmatprep.subr.bf16.mxu0 0
        %2797 = vmatpush1.bf16.msra.mxu0 0
        %2798 = vmatprep.subr.bf16.mxu0 0
        %2799 = vmatpush1.bf16.msra.mxu0 0
        %2800 = vmatprep.subr.bf16.mxu0 0
        %2801 = vmatpush1.bf16.msra.mxu0 0
        %2802 = vmatprep.mubr.bf16.mxu0 0
        %2803 = vmatmul.mubr.bf16.gmra.mrb[0].mxu0 %v2540
        %v2804 = vpop.f32.mrb[0].mxu0
        %v2805 = vadd.f32 %v2740, %v2804
        %v2806 = vpop.f32.mrb[0].mxu0
        %v2807 = vpop.f32.mrb[0].mxu0
        %v2808 = vadd.f32 %v2743, %v2807
        %v2809 = vpop.f32.mrb[0].mxu0
        %2810 = vmatprep.mubr.bf16.mxu0 0
        %2811 = vmatmul.mubr.bf16.gmra.mrb[0].mxu0 %v2543
        %v2812 = vpop.f32.mrb[0].mxu0
        %v2813 = vadd.f32 %v2748, %v2812
        %v2814 = vpop.f32.mrb[0].mxu0
        %v2815 = vpop.f32.mrb[0].mxu0
        %v2816 = vadd.f32 %v2751, %v2815
        %v2817 = vpop.f32.mrb[0].mxu0
        %2818 = vmatprep.mubr.bf16.mxu0 0
        %2819 = vmatmul.mubr.bf16.gmra.mrb[0].mxu0 %v2546
        %v2820 = vpop.f32.mrb[0].mxu0
        %v2821 = vadd.f32 %v2756, %v2820
        %v2822 = vpop.f32.mrb[0].mxu0
        %v2823 = vpop.f32.mrb[0].mxu0
        %v2824 = vadd.f32 %v2759, %v2823
        %v2825 = vpop.f32.mrb[0].mxu0
        %2826 = vmatprep.mubr.bf16.mxu0 0
        %2827 = vmatmul.mubr.bf16.gmra.mrb[0].mxu0 %v2549
        %v2828 = vpop.f32.mrb[0].mxu0
        %v2829 = vadd.f32 %v2764, %v2828
        %v2830 = vpop.f32.mrb[0].mxu0
        %v2831 = vpop.f32.mrb[0].mxu0
        %v2832 = vadd.f32 %v2767, %v2831
        %v2833 = vpop.f32.mrb[0].mxu0
        %2834 = vdwg.mxu0
        %v2835 = vld [vmem:[#allocation13] sm:$0xff]
        %v2836 = vld [vmem:[#allocation13 + $0x8] sm:$0xff]
        %v2837 = vld [vmem:[#allocation13 + $0x10] sm:$0xff]
        %v2838 = vld [vmem:[#allocation13 + $0x18] sm:$0xff]
        %v2839 = vld [vmem:[#allocation13 + $0x20] sm:$0xff]
        %v2840 = vld [vmem:[#allocation13 + $0x28] sm:$0xff]
        %v2841 = vld [vmem:[#allocation13 + $0x30] sm:$0xff]
        %v2842 = vld [vmem:[#allocation13 + $0x38] sm:$0xff]
        %v2843 = vld [vmem:[#allocation14] sm:$0xff]
        %v2844 = vld [vmem:[#allocation14 + $0x8] sm:$0xff]
        %v2845 = vld [vmem:[#allocation14 + $0x10] sm:$0xff]
        %v2846 = vld [vmem:[#allocation14 + $0x18] sm:$0xff]
        %v2847 = vld [vmem:[#allocation14 + $0x20] sm:$0xff]
        %v2848 = vld [vmem:[#allocation14 + $0x28] sm:$0xff]
        %v2849 = vld [vmem:[#allocation14 + $0x30] sm:$0xff]
        %v2850 = vld [vmem:[#allocation14 + $0x38] sm:$0xff]
        %v2851 = vmul.f32 %v2697, %v2835
        %v2852 = vmul.f32 %v2698, %v2836
        %v2853 = vmul.f32 %v2699, %v2837
        %v2854 = vmul.f32 %v2700, %v2838
        %v2855 = vmul.f32 %v2701, %v2839
        %v2856 = vmul.f32 %v2702, %v2840
        %v2857 = vmul.f32 %v2703, %v2841
        %v2858 = vmul.f32 %v2704, %v2842
        %v2859 = vmul.f32 %v2805, %v2843
        %v2860 = vmul.f32 %v2808, %v2844
        %v2861 = vmul.f32 %v2813, %v2845
        %v2862 = vmul.f32 %v2816, %v2846
        %v2863 = vmul.f32 %v2821, %v2847
        %v2864 = vmul.f32 %v2824, %v2848
        %v2865 = vmul.f32 %v2829, %v2849
        %v2866 = vmul.f32 %v2832, %v2850
        %v2867 = vsub.f32 %v2851, %v2859
        %v2868 = vsub.f32 %v2852, %v2860
        %v2869 = vsub.f32 %v2853, %v2861
        %v2870 = vsub.f32 %v2854, %v2862
        %v2871 = vsub.f32 %v2855, %v2863
        %v2872 = vsub.f32 %v2856, %v2864
        %v2873 = vsub.f32 %v2857, %v2865
        %v2874 = vsub.f32 %v2858, %v2866
        %v2875 = vmul.f32 %v2697, %v2843
        %v2876 = vmul.f32 %v2698, %v2844
        %v2877 = vmul.f32 %v2699, %v2845
        %v2878 = vmul.f32 %v2700, %v2846
        %v2879 = vmul.f32 %v2701, %v2847
        %v2880 = vmul.f32 %v2702, %v2848
        %v2881 = vmul.f32 %v2703, %v2849
        %v2882 = vmul.f32 %v2704, %v2850
        %v2883 = vmul.f32 %v2805, %v2835
        %v2884 = vmul.f32 %v2808, %v2836
        %v2885 = vmul.f32 %v2813, %v2837
        %v2886 = vmul.f32 %v2816, %v2838
        %v2887 = vmul.f32 %v2821, %v2839
        %v2888 = vmul.f32 %v2824, %v2840
        %v2889 = vmul.f32 %v2829, %v2841
        %v2890 = vmul.f32 %v2832, %v2842
        %v2891 = vadd.f32 %v2875, %v2883
        %v2892 = vadd.f32 %v2876, %v2884
        %v2893 = vadd.f32 %v2877, %v2885
        %v2894 = vadd.f32 %v2878, %v2886
        %v2895 = vadd.f32 %v2879, %v2887
        %v2896 = vadd.f32 %v2880, %v2888
        %v2897 = vadd.f32 %v2881, %v2889
        %v2898 = vadd.f32 %v2882, %v2890
        %v2899 = vpack.c.bf16 %v2868, %v2867
        %v2900 = vpack.c.bf16 %v2870, %v2869
        %v2901 = vpack.c.bf16 %v2872, %v2871
        %v2902 = vpack.c.bf16 %v2874, %v2873
        %v2903 = vpack.c.bf16 %v2892, %v2891
        %v2904 = vpack.c.bf16 %v2894, %v2893
        %v2905 = vpack.c.bf16 %v2896, %v2895
        %v2906 = vpack.c.bf16 %v2898, %v2897
        %v2907 = vld [vmem:[#allocation10] sm:$0xf]
        %v2908 = vld [vmem:[#allocation10 + $0x4] sm:$0xf]
        %v2909 = vld [vmem:[#allocation10 + $0x8] sm:$0xf]
        %v2910 = vld [vmem:[#allocation10 + $0xc] sm:$0xf]
        %v2911 = vld [vmem:[#allocation10 + $0x10] sm:$0xf]
        %v2912 = vld [vmem:[#allocation10 + $0x14] sm:$0xf]
        %v2913 = vld [vmem:[#allocation10 + $0x18] sm:$0xf]
        %v2914 = vld [vmem:[#allocation10 + $0x1c] sm:$0xf]
        %v2923 = vunpack.c.l.b16 %v2907
        %v2924 = vunpack.c.l.b16 %v2908
        %v2925 = vunpack.c.l.b16 %v2909
        %v2926 = vunpack.c.l.b16 %v2910
        %v2927 = vunpack.c.l.b16 %v2911
        %v2928 = vunpack.c.l.b16 %v2912
        %v2929 = vunpack.c.l.b16 %v2913
        %v2930 = vunpack.c.l.b16 %v2914
        %v2931 = vpack.c.b16 %v2924, %v2923
        %v2932 = vpack.c.b16 %v2926, %v2925
        %v2933 = vpack.c.b16 %v2928, %v2927
        %v2934 = vpack.c.b16 %v2930, %v2929
        %v2936 = vsel %vm615, %v2931, 0
        %v2939 = vsel %vm615, %v2932, 0
        %v2942 = vsel %vm615, %v2933, 0
        %v2945 = vsel %vm615, %v2934, 0
        %2947 = vmatprep.subr.bf16.mxu0 0
        %2948 = vmatpush1.bf16.msra.mxu0 %v2899
        %2949 = vmatprep.subr.bf16.mxu0 0
        %2950 = vmatpush1.bf16.msra.mxu0 %v2900
        %2951 = vmatprep.subr.bf16.mxu0 0
        %2952 = vmatpush1.bf16.msra.mxu0 %v2901
        %2953 = vmatprep.subr.bf16.mxu0 0
        %2954 = vmatpush1.bf16.msra.mxu0 %v2902
        %2955 = vmatprep.subr.bf16.mxu0 0
        %2956 = vmatpush1.bf16.msra.mxu0 0
        %2957 = vmatprep.subr.bf16.mxu0 0
        %2958 = vmatpush1.bf16.msra.mxu0 0
        %2959 = vmatprep.subr.bf16.mxu0 0
        %2960 = vmatpush1.bf16.msra.mxu0 0
        %2961 = vmatprep.subr.bf16.mxu0 0
        %2962 = vmatpush1.bf16.msra.mxu0 0
        %2963 = vmatprep.subr.bf16.mxu0 0
        %2964 = vmatpush1.bf16.msra.mxu0 0
        %2965 = vmatprep.subr.bf16.mxu0 0
        %2966 = vmatpush1.bf16.msra.mxu0 0
        %2967 = vmatprep.subr.bf16.mxu0 0
        %2968 = vmatpush1.bf16.msra.mxu0 0
        %2969 = vmatprep.subr.bf16.mxu0 0
        %2970 = vmatpush1.bf16.msra.mxu0 0
        %2971 = vmatprep.subr.bf16.mxu0 0
        %2972 = vmatpush1.bf16.msra.mxu0 0
        %2973 = vmatprep.subr.bf16.mxu0 0
        %2974 = vmatpush1.bf16.msra.mxu0 0
        %2975 = vmatprep.subr.bf16.mxu0 0
        %2976 = vmatpush1.bf16.msra.mxu0 0
        %2977 = vmatprep.subr.bf16.mxu0 0
        %2978 = vmatpush1.bf16.msra.mxu0 0
        %2979 = vmatprep.mubr.bf16.mxu0 0
        %2980 = vmatmul.mubr.bf16.gmra.mrb[0].mxu0 %v2936
        %v2981 = vpop.f32.mrb[0].mxu0
        %v2982 = vadd.f32 0.0, %v2981
        %v2983 = vpop.f32.mrb[0].mxu0
        %v2984 = vpop.f32.mrb[0].mxu0
        %v2985 = vadd.f32 0.0, %v2984
        %v2986 = vpop.f32.mrb[0].mxu0
        %2987 = vmatprep.mubr.bf16.mxu0 0
        %2988 = vmatmul.mubr.bf16.gmra.mrb[0].mxu0 %v2939
        %v2989 = vpop.f32.mrb[0].mxu0
        %v2990 = vadd.f32 0.0, %v2989
        %v2991 = vpop.f32.mrb[0].mxu0
        %v2992 = vpop.f32.mrb[0].mxu0
        %v2993 = vadd.f32 0.0, %v2992
        %v2994 = vpop.f32.mrb[0].mxu0
        %2995 = vmatprep.mubr.bf16.mxu0 0
        %2996 = vmatmul.mubr.bf16.gmra.mrb[0].mxu0 %v2942
        %v2997 = vpop.f32.mrb[0].mxu0
        %v2998 = vadd.f32 0.0, %v2997
        %v2999 = vpop.f32.mrb[0].mxu0
        %v3000 = vpop.f32.mrb[0].mxu0
        %v3001 = vadd.f32 0.0, %v3000
        %v3002 = vpop.f32.mrb[0].mxu0
        %3003 = vmatprep.mubr.bf16.mxu0 0
        %3004 = vmatmul.mubr.bf16.gmra.mrb[0].mxu0 %v2945
        %v3005 = vpop.f32.mrb[0].mxu0
        %v3006 = vadd.f32 0.0, %v3005
        %v3007 = vpop.f32.mrb[0].mxu0
        %v3008 = vpop.f32.mrb[0].mxu0
        %v3009 = vadd.f32 0.0, %v3008
        %v3010 = vpop.f32.mrb[0].mxu0
        %3011 = vdwg.mxu0
        %v3012 = vld [vmem:[#allocation11] sm:$0xf]
        %v3013 = vld [vmem:[#allocation11 + $0x4] sm:$0xf]
        %v3014 = vld [vmem:[#allocation11 + $0x8] sm:$0xf]
        %v3015 = vld [vmem:[#allocation11 + $0xc] sm:$0xf]
        %v3016 = vld [vmem:[#allocation11 + $0x10] sm:$0xf]
        %v3017 = vld [vmem:[#allocation11 + $0x14] sm:$0xf]
        %v3018 = vld [vmem:[#allocation11 + $0x18] sm:$0xf]
        %v3019 = vld [vmem:[#allocation11 + $0x1c] sm:$0xf]
        %v3028 = vunpack.c.l.b16 %v3012
        %v3029 = vunpack.c.l.b16 %v3013
        %v3030 = vunpack.c.l.b16 %v3014
        %v3031 = vunpack.c.l.b16 %v3015
        %v3032 = vunpack.c.l.b16 %v3016
        %v3033 = vunpack.c.l.b16 %v3017
        %v3034 = vunpack.c.l.b16 %v3018
        %v3035 = vunpack.c.l.b16 %v3019
        %v3036 = vpack.c.b16 %v3029, %v3028
        %v3037 = vpack.c.b16 %v3031, %v3030
        %v3038 = vpack.c.b16 %v3033, %v3032
        %v3039 = vpack.c.b16 %v3035, %v3034
        %v3041 = vsel %vm615, %v3036, 0
        %v3044 = vsel %vm615, %v3037, 0
        %v3047 = vsel %vm615, %v3038, 0
        %v3050 = vsel %vm615, %v3039, 0
        %3052 = vmatprep.subr.bf16.mxu0 0
        %3053 = vmatpush1.bf16.msra.mxu0 %v2903
        %3054 = vmatprep.subr.bf16.mxu0 0
        %3055 = vmatpush1.bf16.msra.mxu0 %v2904
        %3056 = vmatprep.subr.bf16.mxu0 0
        %3057 = vmatpush1.bf16.msra.mxu0 %v2905
        %3058 = vmatprep.subr.bf16.mxu0 0
        %3059 = vmatpush1.bf16.msra.mxu0 %v2906
        %3060 = vmatprep.subr.bf16.mxu0 0
        %3061 = vmatpush1.bf16.msra.mxu0 0
        %3062 = vmatprep.subr.bf16.mxu0 0
        %3063 = vmatpush1.bf16.msra.mxu0 0
        %3064 = vmatprep.subr.bf16.mxu0 0
        %3065 = vmatpush1.bf16.msra.mxu0 0
        %3066 = vmatprep.subr.bf16.mxu0 0
        %3067 = vmatpush1.bf16.msra.mxu0 0
        %3068 = vmatprep.subr.bf16.mxu0 0
        %3069 = vmatpush1.bf16.msra.mxu0 0
        %3070 = vmatprep.subr.bf16.mxu0 0
        %3071 = vmatpush1.bf16.msra.mxu0 0
        %3072 = vmatprep.subr.bf16.mxu0 0
        %3073 = vmatpush1.bf16.msra.mxu0 0
        %3074 = vmatprep.subr.bf16.mxu0 0
        %3075 = vmatpush1.bf16.msra.mxu0 0
        %3076 = vmatprep.subr.bf16.mxu0 0
        %3077 = vmatpush1.bf16.msra.mxu0 0
        %3078 = vmatprep.subr.bf16.mxu0 0
        %3079 = vmatpush1.bf16.msra.mxu0 0
        %3080 = vmatprep.subr.bf16.mxu0 0
        %3081 = vmatpush1.bf16.msra.mxu0 0
        %3082 = vmatprep.subr.bf16.mxu0 0
        %3083 = vmatpush1.bf16.msra.mxu0 0
        %3084 = vmatprep.mubr.bf16.mxu0 0
        %3085 = vmatmul.mubr.bf16.gmra.mrb[0].mxu0 %v3041
        %v3086 = vpop.f32.mrb[0].mxu0
        %v3087 = vadd.f32 0.0, %v3086
        %v3088 = vpop.f32.mrb[0].mxu0
        %v3089 = vpop.f32.mrb[0].mxu0
        %v3090 = vadd.f32 0.0, %v3089
        %v3091 = vpop.f32.mrb[0].mxu0
        %3092 = vmatprep.mubr.bf16.mxu0 0
        %3093 = vmatmul.mubr.bf16.gmra.mrb[0].mxu0 %v3044
        %v3094 = vpop.f32.mrb[0].mxu0
        %v3095 = vadd.f32 0.0, %v3094
        %v3096 = vpop.f32.mrb[0].mxu0
        %v3097 = vpop.f32.mrb[0].mxu0
        %v3098 = vadd.f32 0.0, %v3097
        %v3099 = vpop.f32.mrb[0].mxu0
        %3100 = vmatprep.mubr.bf16.mxu0 0
        %3101 = vmatmul.mubr.bf16.gmra.mrb[0].mxu0 %v3047
        %v3102 = vpop.f32.mrb[0].mxu0
        %v3103 = vadd.f32 0.0, %v3102
        %v3104 = vpop.f32.mrb[0].mxu0
        %v3105 = vpop.f32.mrb[0].mxu0
        %v3106 = vadd.f32 0.0, %v3105
        %v3107 = vpop.f32.mrb[0].mxu0
        %3108 = vmatprep.mubr.bf16.mxu0 0
        %3109 = vmatmul.mubr.bf16.gmra.mrb[0].mxu0 %v3050
        %v3110 = vpop.f32.mrb[0].mxu0
        %v3111 = vadd.f32 0.0, %v3110
        %v3112 = vpop.f32.mrb[0].mxu0
        %v3113 = vpop.f32.mrb[0].mxu0
        %v3114 = vadd.f32 0.0, %v3113
        %v3115 = vpop.f32.mrb[0].mxu0
        %3116 = vdwg.mxu0
        %v3117 = vsub.f32 %v2982, %v3087
        %v3118 = vsub.f32 %v2985, %v3090
        %v3119 = vsub.f32 %v2990, %v3095
        %v3120 = vsub.f32 %v2993, %v3098
        %v3121 = vsub.f32 %v2998, %v3103
        %v3122 = vsub.f32 %v3001, %v3106
        %v3123 = vsub.f32 %v3006, %v3111
        %v3124 = vsub.f32 %v3009, %v3114
        %3125 = vmatprep.subr.bf16.mxu0 0
        %3126 = vmatpush1.bf16.msra.mxu0 %v2899
        %3127 = vmatprep.subr.bf16.mxu0 0
        %3128 = vmatpush1.bf16.msra.mxu0 %v2900
        %3129 = vmatprep.subr.bf16.mxu0 0
        %3130 = vmatpush1.bf16.msra.mxu0 %v2901
        %3131 = vmatprep.subr.bf16.mxu0 0
        %3132 = vmatpush1.bf16.msra.mxu0 %v2902
        %3133 = vmatprep.subr.bf16.mxu0 0
        %3134 = vmatpush1.bf16.msra.mxu0 0
        %3135 = vmatprep.subr.bf16.mxu0 0
        %3136 = vmatpush1.bf16.msra.mxu0 0
        %3137 = vmatprep.subr.bf16.mxu0 0
        %3138 = vmatpush1.bf16.msra.mxu0 0
        %3139 = vmatprep.subr.bf16.mxu0 0
        %3140 = vmatpush1.bf16.msra.mxu0 0
        %3141 = vmatprep.subr.bf16.mxu0 0
        %3142 = vmatpush1.bf16.msra.mxu0 0
        %3143 = vmatprep.subr.bf16.mxu0 0
        %3144 = vmatpush1.bf16.msra.mxu0 0
        %3145 = vmatprep.subr.bf16.mxu0 0
        %3146 = vmatpush1.bf16.msra.mxu0 0
        %3147 = vmatprep.subr.bf16.mxu0 0
        %3148 = vmatpush1.bf16.msra.mxu0 0
        %3149 = vmatprep.subr.bf16.mxu0 0
        %3150 = vmatpush1.bf16.msra.mxu0 0
        %3151 = vmatprep.subr.bf16.mxu0 0
        %3152 = vmatpush1.bf16.msra.mxu0 0
        %3153 = vmatprep.subr.bf16.mxu0 0
        %3154 = vmatpush1.bf16.msra.mxu0 0
        %3155 = vmatprep.subr.bf16.mxu0 0
        %3156 = vmatpush1.bf16.msra.mxu0 0
        %3157 = vmatprep.mubr.bf16.mxu0 0
        %3158 = vmatmul.mubr.bf16.gmra.mrb[0].mxu0 %v3041
        %v3159 = vpop.f32.mrb[0].mxu0
        %v3160 = vadd.f32 0.0, %v3159
        %v3161 = vpop.f32.mrb[0].mxu0
        %v3162 = vpop.f32.mrb[0].mxu0
        %v3163 = vadd.f32 0.0, %v3162
        %v3164 = vpop.f32.mrb[0].mxu0
        %3165 = vmatprep.mubr.bf16.mxu0 0
        %3166 = vmatmul.mubr.bf16.gmra.mrb[0].mxu0 %v3044
        %v3167 = vpop.f32.mrb[0].mxu0
        %v3168 = vadd.f32 0.0, %v3167
        %v3169 = vpop.f32.mrb[0].mxu0
        %v3170 = vpop.f32.mrb[0].mxu0
        %v3171 = vadd.f32 0.0, %v3170
        %v3172 = vpop.f32.mrb[0].mxu0
        %3173 = vmatprep.mubr.bf16.mxu0 0
        %3174 = vmatmul.mubr.bf16.gmra.mrb[0].mxu0 %v3047
        %v3175 = vpop.f32.mrb[0].mxu0
        %v3176 = vadd.f32 0.0, %v3175
        %v3177 = vpop.f32.mrb[0].mxu0
        %v3178 = vpop.f32.mrb[0].mxu0
        %v3179 = vadd.f32 0.0, %v3178
        %v3180 = vpop.f32.mrb[0].mxu0
        %3181 = vmatprep.mubr.bf16.mxu0 0
        %3182 = vmatmul.mubr.bf16.gmra.mrb[0].mxu0 %v3050
        %v3183 = vpop.f32.mrb[0].mxu0
        %v3184 = vadd.f32 0.0, %v3183
        %v3185 = vpop.f32.mrb[0].mxu0
        %v3186 = vpop.f32.mrb[0].mxu0
        %v3187 = vadd.f32 0.0, %v3186
        %v3188 = vpop.f32.mrb[0].mxu0
        %3189 = vdwg.mxu0
        %3190 = vmatprep.subr.bf16.mxu0 0
        %3191 = vmatpush1.bf16.msra.mxu0 %v2903
        %3192 = vmatprep.subr.bf16.mxu0 0
        %3193 = vmatpush1.bf16.msra.mxu0 %v2904
        %3194 = vmatprep.subr.bf16.mxu0 0
        %3195 = vmatpush1.bf16.msra.mxu0 %v2905
        %3196 = vmatprep.subr.bf16.mxu0 0
        %3197 = vmatpush1.bf16.msra.mxu0 %v2906
        %3198 = vmatprep.subr.bf16.mxu0 0
        %3199 = vmatpush1.bf16.msra.mxu0 0
        %3200 = vmatprep.subr.bf16.mxu0 0
        %3201 = vmatpush1.bf16.msra.mxu0 0
        %3202 = vmatprep.subr.bf16.mxu0 0
        %3203 = vmatpush1.bf16.msra.mxu0 0
        %3204 = vmatprep.subr.bf16.mxu0 0
        %3205 = vmatpush1.bf16.msra.mxu0 0
        %3206 = vmatprep.subr.bf16.mxu0 0
        %3207 = vmatpush1.bf16.msra.mxu0 0
        %3208 = vmatprep.subr.bf16.mxu0 0
        %3209 = vmatpush1.bf16.msra.mxu0 0
        %3210 = vmatprep.subr.bf16.mxu0 0
        %3211 = vmatpush1.bf16.msra.mxu0 0
        %3212 = vmatprep.subr.bf16.mxu0 0
        %3213 = vmatpush1.bf16.msra.mxu0 0
        %3214 = vmatprep.subr.bf16.mxu0 0
        %3215 = vmatpush1.bf16.msra.mxu0 0
        %3216 = vmatprep.subr.bf16.mxu0 0
        %3217 = vmatpush1.bf16.msra.mxu0 0
        %3218 = vmatprep.subr.bf16.mxu0 0
        %3219 = vmatpush1.bf16.msra.mxu0 0
        %3220 = vmatprep.subr.bf16.mxu0 0
        %3221 = vmatpush1.bf16.msra.mxu0 0
        %3222 = vmatprep.mubr.bf16.mxu0 0
        %3223 = vmatmul.mubr.bf16.gmra.mrb[0].mxu0 %v2936
        %v3224 = vpop.f32.mrb[0].mxu0
        %v3225 = vadd.f32 %v3160, %v3224
        %v3226 = vpop.f32.mrb[0].mxu0
        %v3227 = vpop.f32.mrb[0].mxu0
        %v3228 = vadd.f32 %v3163, %v3227
        %v3229 = vpop.f32.mrb[0].mxu0
        %3230 = vmatprep.mubr.bf16.mxu0 0
        %3231 = vmatmul.mubr.bf16.gmra.mrb[0].mxu0 %v2939
        %v3232 = vpop.f32.mrb[0].mxu0
        %v3233 = vadd.f32 %v3168, %v3232
        %v3234 = vpop.f32.mrb[0].mxu0
        %v3235 = vpop.f32.mrb[0].mxu0
        %v3236 = vadd.f32 %v3171, %v3235
        %v3237 = vpop.f32.mrb[0].mxu0
        %3238 = vmatprep.mubr.bf16.mxu0 0
        %3239 = vmatmul.mubr.bf16.gmra.mrb[0].mxu0 %v2942
        %v3240 = vpop.f32.mrb[0].mxu0
        %v3241 = vadd.f32 %v3176, %v3240
        %v3242 = vpop.f32.mrb[0].mxu0
        %v3243 = vpop.f32.mrb[0].mxu0
        %v3244 = vadd.f32 %v3179, %v3243
        %v3245 = vpop.f32.mrb[0].mxu0
        %3246 = vmatprep.mubr.bf16.mxu0 0
        %3247 = vmatmul.mubr.bf16.gmra.mrb[0].mxu0 %v2945
        %v3248 = vpop.f32.mrb[0].mxu0
        %v3249 = vadd.f32 %v3184, %v3248
        %v3250 = vpop.f32.mrb[0].mxu0
        %v3251 = vpop.f32.mrb[0].mxu0
        %v3252 = vadd.f32 %v3187, %v3251
        %v3253 = vpop.f32.mrb[0].mxu0
        %3254 = vdwg.mxu0
        %v3255 = vpack.c.bf16 %v3118, %v3117
        %v3256 = vpack.c.bf16 %v3120, %v3119
        %v3257 = vpack.c.bf16 %v3122, %v3121
        %v3258 = vpack.c.bf16 %v3124, %v3123
        %v3259 = vpack.c.bf16 %v3228, %v3225
        %v3260 = vpack.c.bf16 %v3236, %v3233
        %v3261 = vpack.c.bf16 %v3244, %v3241
        %v3262 = vpack.c.bf16 %v3252, %v3249
        %v3268 = vsel %vm615, %v3255, 0
        %v3271 = vsel %vm615, %v3256, 0
        %v3274 = vsel %vm615, %v3257, 0
        %v3277 = vsel %vm615, %v3258, 0
        %3279 = vmatprep.subr.bf16.mxu0 0
        %3280 = vmatpush1.bf16.msra.mxu0 %v2931
        %3281 = vmatprep.subr.bf16.mxu0 0
        %3282 = vmatpush1.bf16.msra.mxu0 %v2932
        %3283 = vmatprep.subr.bf16.mxu0 0
        %3284 = vmatpush1.bf16.msra.mxu0 %v2933
        %3285 = vmatprep.subr.bf16.mxu0 0
        %3286 = vmatpush1.bf16.msra.mxu0 %v2934
        %3287 = vmatprep.subr.bf16.mxu0 0
        %3288 = vmatpush1.bf16.msra.mxu0 0
        %3289 = vmatprep.subr.bf16.mxu0 0
        %3290 = vmatpush1.bf16.msra.mxu0 0
        %3291 = vmatprep.subr.bf16.mxu0 0
        %3292 = vmatpush1.bf16.msra.mxu0 0
        %3293 = vmatprep.subr.bf16.mxu0 0
        %3294 = vmatpush1.bf16.msra.mxu0 0
        %3295 = vmatprep.subr.bf16.mxu0 0
        %3296 = vmatpush1.bf16.msra.mxu0 0
        %3297 = vmatprep.subr.bf16.mxu0 0
        %3298 = vmatpush1.bf16.msra.mxu0 0
        %3299 = vmatprep.subr.bf16.mxu0 0
        %3300 = vmatpush1.bf16.msra.mxu0 0
        %3301 = vmatprep.subr.bf16.mxu0 0
        %3302 = vmatpush1.bf16.msra.mxu0 0
        %3303 = vmatprep.subr.bf16.mxu0 0
        %3304 = vmatpush1.bf16.msra.mxu0 0
        %3305 = vmatprep.subr.bf16.mxu0 0
        %3306 = vmatpush1.bf16.msra.mxu0 0
        %3307 = vmatprep.subr.bf16.mxu0 0
        %3308 = vmatpush1.bf16.msra.mxu0 0
        %3309 = vmatprep.subr.bf16.mxu0 0
        %3310 = vmatpush1.bf16.msra.mxu0 0
        %3311 = vmatprep.mubr.bf16.mxu0 0
        %3312 = vmatmul.mubr.bf16.gmra.mrb[0].mxu0 %v3268
        %v3313 = vpop.f32.mrb[0].mxu0
        %v3314 = vadd.f32 0.0, %v3313
        %v3315 = vpop.f32.mrb[0].mxu0
        %v3316 = vpop.f32.mrb[0].mxu0
        %v3317 = vadd.f32 0.0, %v3316
        %v3318 = vpop.f32.mrb[0].mxu0
        %3319 = vmatprep.mubr.bf16.mxu0 0
        %3320 = vmatmul.mubr.bf16.gmra.mrb[0].mxu0 %v3271
        %v3321 = vpop.f32.mrb[0].mxu0
        %v3322 = vadd.f32 0.0, %v3321
        %v3323 = vpop.f32.mrb[0].mxu0
        %v3324 = vpop.f32.mrb[0].mxu0
        %v3325 = vadd.f32 0.0, %v3324
        %v3326 = vpop.f32.mrb[0].mxu0
        %3327 = vmatprep.mubr.bf16.mxu0 0
        %3328 = vmatmul.mubr.bf16.gmra.mrb[0].mxu0 %v3274
        %v3329 = vpop.f32.mrb[0].mxu0
        %v3330 = vadd.f32 0.0, %v3329
        %v3331 = vpop.f32.mrb[0].mxu0
        %v3332 = vpop.f32.mrb[0].mxu0
        %v3333 = vadd.f32 0.0, %v3332
        %v3334 = vpop.f32.mrb[0].mxu0
        %3335 = vmatprep.mubr.bf16.mxu0 0
        %3336 = vmatmul.mubr.bf16.gmra.mrb[0].mxu0 %v3277
        %v3337 = vpop.f32.mrb[0].mxu0
        %v3338 = vadd.f32 0.0, %v3337
        %v3339 = vpop.f32.mrb[0].mxu0
        %v3340 = vpop.f32.mrb[0].mxu0
        %v3341 = vadd.f32 0.0, %v3340
        %v3342 = vpop.f32.mrb[0].mxu0
        %3343 = vdwg.mxu0
        %v3349 = vsel %vm615, %v3259, 0
        %v3352 = vsel %vm615, %v3260, 0
        %v3355 = vsel %vm615, %v3261, 0
        %v3358 = vsel %vm615, %v3262, 0
        %3360 = vmatprep.subr.bf16.mxu0 0
        %3361 = vmatpush1.bf16.msra.mxu0 %v3036
        %3362 = vmatprep.subr.bf16.mxu0 0
        %3363 = vmatpush1.bf16.msra.mxu0 %v3037
        %3364 = vmatprep.subr.bf16.mxu0 0
        %3365 = vmatpush1.bf16.msra.mxu0 %v3038
        %3366 = vmatprep.subr.bf16.mxu0 0
        %3367 = vmatpush1.bf16.msra.mxu0 %v3039
        %3368 = vmatprep.subr.bf16.mxu0 0
        %3369 = vmatpush1.bf16.msra.mxu0 0
        %3370 = vmatprep.subr.bf16.mxu0 0
        %3371 = vmatpush1.bf16.msra.mxu0 0
        %3372 = vmatprep.subr.bf16.mxu0 0
        %3373 = vmatpush1.bf16.msra.mxu0 0
        %3374 = vmatprep.subr.bf16.mxu0 0
        %3375 = vmatpush1.bf16.msra.mxu0 0
        %3376 = vmatprep.subr.bf16.mxu0 0
        %3377 = vmatpush1.bf16.msra.mxu0 0
        %3378 = vmatprep.subr.bf16.mxu0 0
        %3379 = vmatpush1.bf16.msra.mxu0 0
        %3380 = vmatprep.subr.bf16.mxu0 0
        %3381 = vmatpush1.bf16.msra.mxu0 0
        %3382 = vmatprep.subr.bf16.mxu0 0
        %3383 = vmatpush1.bf16.msra.mxu0 0
        %3384 = vmatprep.subr.bf16.mxu0 0
        %3385 = vmatpush1.bf16.msra.mxu0 0
        %3386 = vmatprep.subr.bf16.mxu0 0
        %3387 = vmatpush1.bf16.msra.mxu0 0
        %3388 = vmatprep.subr.bf16.mxu0 0
        %3389 = vmatpush1.bf16.msra.mxu0 0
        %3390 = vmatprep.subr.bf16.mxu0 0
        %3391 = vmatpush1.bf16.msra.mxu0 0
        %3392 = vmatprep.mubr.bf16.mxu0 0
        %3393 = vmatmul.mubr.bf16.gmra.mrb[0].mxu0 %v3349
        %v3394 = vpop.f32.mrb[0].mxu0
        %v3395 = vadd.f32 0.0, %v3394
        %v3396 = vpop.f32.mrb[0].mxu0
        %v3397 = vpop.f32.mrb[0].mxu0
        %v3398 = vadd.f32 0.0, %v3397
        %v3399 = vpop.f32.mrb[0].mxu0
        %3400 = vmatprep.mubr.bf16.mxu0 0
        %3401 = vmatmul.mubr.bf16.gmra.mrb[0].mxu0 %v3352
        %v3402 = vpop.f32.mrb[0].mxu0
        %v3403 = vadd.f32 0.0, %v3402
        %v3404 = vpop.f32.mrb[0].mxu0
        %v3405 = vpop.f32.mrb[0].mxu0
        %v3406 = vadd.f32 0.0, %v3405
        %v3407 = vpop.f32.mrb[0].mxu0
        %3408 = vmatprep.mubr.bf16.mxu0 0
        %3409 = vmatmul.mubr.bf16.gmra.mrb[0].mxu0 %v3355
        %v3410 = vpop.f32.mrb[0].mxu0
        %v3411 = vadd.f32 0.0, %v3410
        %v3412 = vpop.f32.mrb[0].mxu0
        %v3413 = vpop.f32.mrb[0].mxu0
        %v3414 = vadd.f32 0.0, %v3413
        %v3415 = vpop.f32.mrb[0].mxu0
        %3416 = vmatprep.mubr.bf16.mxu0 0
        %3417 = vmatmul.mubr.bf16.gmra.mrb[0].mxu0 %v3358
        %v3418 = vpop.f32.mrb[0].mxu0
        %v3419 = vadd.f32 0.0, %v3418
        %v3420 = vpop.f32.mrb[0].mxu0
        %v3421 = vpop.f32.mrb[0].mxu0
        %v3422 = vadd.f32 0.0, %v3421
        %v3423 = vpop.f32.mrb[0].mxu0
        %3424 = vdwg.mxu0
        %v3425 = vsub.f32 %v3314, %v3395
        %v3426 = vsub.f32 %v3317, %v3398
        %v3427 = vsub.f32 %v3322, %v3403
        %v3428 = vsub.f32 %v3325, %v3406
        %v3429 = vsub.f32 %v3330, %v3411
        %v3430 = vsub.f32 %v3333, %v3414
        %v3431 = vsub.f32 %v3338, %v3419
        %v3432 = vsub.f32 %v3341, %v3422
        %3433 = vmatprep.subr.bf16.mxu0 0
        %3434 = vmatpush1.bf16.msra.mxu0 %v2931
        %3435 = vmatprep.subr.bf16.mxu0 0
        %3436 = vmatpush1.bf16.msra.mxu0 %v2932
        %3437 = vmatprep.subr.bf16.mxu0 0
        %3438 = vmatpush1.bf16.msra.mxu0 %v2933
        %3439 = vmatprep.subr.bf16.mxu0 0
        %3440 = vmatpush1.bf16.msra.mxu0 %v2934
        %3441 = vmatprep.subr.bf16.mxu0 0
        %3442 = vmatpush1.bf16.msra.mxu0 0
        %3443 = vmatprep.subr.bf16.mxu0 0
        %3444 = vmatpush1.bf16.msra.mxu0 0
        %3445 = vmatprep.subr.bf16.mxu0 0
        %3446 = vmatpush1.bf16.msra.mxu0 0
        %3447 = vmatprep.subr.bf16.mxu0 0
        %3448 = vmatpush1.bf16.msra.mxu0 0
        %3449 = vmatprep.subr.bf16.mxu0 0
        %3450 = vmatpush1.bf16.msra.mxu0 0
        %3451 = vmatprep.subr.bf16.mxu0 0
        %3452 = vmatpush1.bf16.msra.mxu0 0
        %3453 = vmatprep.subr.bf16.mxu0 0
        %3454 = vmatpush1.bf16.msra.mxu0 0
        %3455 = vmatprep.subr.bf16.mxu0 0
        %3456 = vmatpush1.bf16.msra.mxu0 0
        %3457 = vmatprep.subr.bf16.mxu0 0
        %3458 = vmatpush1.bf16.msra.mxu0 0
        %3459 = vmatprep.subr.bf16.mxu0 0
        %3460 = vmatpush1.bf16.msra.mxu0 0
        %3461 = vmatprep.subr.bf16.mxu0 0
        %3462 = vmatpush1.bf16.msra.mxu0 0
        %3463 = vmatprep.subr.bf16.mxu0 0
        %3464 = vmatpush1.bf16.msra.mxu0 0
        %3465 = vmatprep.mubr.bf16.mxu0 0
        %3466 = vmatmul.mubr.bf16.gmra.mrb[0].mxu0 %v3349
        %v3467 = vpop.f32.mrb[0].mxu0
        %v3468 = vadd.f32 0.0, %v3467
        %v3469 = vpop.f32.mrb[0].mxu0
        %v3470 = vpop.f32.mrb[0].mxu0
        %v3471 = vadd.f32 0.0, %v3470
        %v3472 = vpop.f32.mrb[0].mxu0
        %3473 = vmatprep.mubr.bf16.mxu0 0
        %3474 = vmatmul.mubr.bf16.gmra.mrb[0].mxu0 %v3352
        %v3475 = vpop.f32.mrb[0].mxu0
        %v3476 = vadd.f32 0.0, %v3475
        %v3477 = vpop.f32.mrb[0].mxu0
        %v3478 = vpop.f32.mrb[0].mxu0
        %v3479 = vadd.f32 0.0, %v3478
        %v3480 = vpop.f32.mrb[0].mxu0
        %3481 = vmatprep.mubr.bf16.mxu0 0
        %3482 = vmatmul.mubr.bf16.gmra.mrb[0].mxu0 %v3355
        %v3483 = vpop.f32.mrb[0].mxu0
        %v3484 = vadd.f32 0.0, %v3483
        %v3485 = vpop.f32.mrb[0].mxu0
        %v3486 = vpop.f32.mrb[0].mxu0
        %v3487 = vadd.f32 0.0, %v3486
        %v3488 = vpop.f32.mrb[0].mxu0
        %3489 = vmatprep.mubr.bf16.mxu0 0
        %3490 = vmatmul.mubr.bf16.gmra.mrb[0].mxu0 %v3358
        %v3491 = vpop.f32.mrb[0].mxu0
        %v3492 = vadd.f32 0.0, %v3491
        %v3493 = vpop.f32.mrb[0].mxu0
        %v3494 = vpop.f32.mrb[0].mxu0
        %v3495 = vadd.f32 0.0, %v3494
        %v3496 = vpop.f32.mrb[0].mxu0
        %3497 = vdwg.mxu0
        %3498 = vmatprep.subr.bf16.mxu0 0
        %3499 = vmatpush1.bf16.msra.mxu0 %v3036
        %3500 = vmatprep.subr.bf16.mxu0 0
        %3501 = vmatpush1.bf16.msra.mxu0 %v3037
        %3502 = vmatprep.subr.bf16.mxu0 0
        %3503 = vmatpush1.bf16.msra.mxu0 %v3038
        %3504 = vmatprep.subr.bf16.mxu0 0
        %3505 = vmatpush1.bf16.msra.mxu0 %v3039
        %3506 = vmatprep.subr.bf16.mxu0 0
        %3507 = vmatpush1.bf16.msra.mxu0 0
        %3508 = vmatprep.subr.bf16.mxu0 0
        %3509 = vmatpush1.bf16.msra.mxu0 0
        %3510 = vmatprep.subr.bf16.mxu0 0
        %3511 = vmatpush1.bf16.msra.mxu0 0
        %3512 = vmatprep.subr.bf16.mxu0 0
        %3513 = vmatpush1.bf16.msra.mxu0 0
        %3514 = vmatprep.subr.bf16.mxu0 0
        %3515 = vmatpush1.bf16.msra.mxu0 0
        %3516 = vmatprep.subr.bf16.mxu0 0
        %3517 = vmatpush1.bf16.msra.mxu0 0
        %3518 = vmatprep.subr.bf16.mxu0 0
        %3519 = vmatpush1.bf16.msra.mxu0 0
        %3520 = vmatprep.subr.bf16.mxu0 0
        %3521 = vmatpush1.bf16.msra.mxu0 0
        %3522 = vmatprep.subr.bf16.mxu0 0
        %3523 = vmatpush1.bf16.msra.mxu0 0
        %3524 = vmatprep.subr.bf16.mxu0 0
        %3525 = vmatpush1.bf16.msra.mxu0 0
        %3526 = vmatprep.subr.bf16.mxu0 0
        %3527 = vmatpush1.bf16.msra.mxu0 0
        %3528 = vmatprep.subr.bf16.mxu0 0
        %3529 = vmatpush1.bf16.msra.mxu0 0
        %3530 = vmatprep.mubr.bf16.mxu0 0
        %3531 = vmatmul.mubr.bf16.gmra.mrb[0].mxu0 %v3268
        %v3532 = vpop.f32.mrb[0].mxu0
        %v3533 = vadd.f32 %v3468, %v3532
        %v3534 = vpop.f32.mrb[0].mxu0
        %v3535 = vpop.f32.mrb[0].mxu0
        %v3536 = vadd.f32 %v3471, %v3535
        %v3537 = vpop.f32.mrb[0].mxu0
        %3538 = vmatprep.mubr.bf16.mxu0 0
        %3539 = vmatmul.mubr.bf16.gmra.mrb[0].mxu0 %v3271
        %v3540 = vpop.f32.mrb[0].mxu0
        %v3541 = vadd.f32 %v3476, %v3540
        %v3542 = vpop.f32.mrb[0].mxu0
        %v3543 = vpop.f32.mrb[0].mxu0
        %v3544 = vadd.f32 %v3479, %v3543
        %v3545 = vpop.f32.mrb[0].mxu0
        %3546 = vmatprep.mubr.bf16.mxu0 0
        %3547 = vmatmul.mubr.bf16.gmra.mrb[0].mxu0 %v3274
        %v3548 = vpop.f32.mrb[0].mxu0
        %v3549 = vadd.f32 %v3484, %v3548
        %v3550 = vpop.f32.mrb[0].mxu0
        %v3551 = vpop.f32.mrb[0].mxu0
        %v3552 = vadd.f32 %v3487, %v3551
        %v3553 = vpop.f32.mrb[0].mxu0
        %3554 = vmatprep.mubr.bf16.mxu0 0
        %3555 = vmatmul.mubr.bf16.gmra.mrb[0].mxu0 %v3277
        %v3556 = vpop.f32.mrb[0].mxu0
        %v3557 = vadd.f32 %v3492, %v3556
        %v3558 = vpop.f32.mrb[0].mxu0
        %v3559 = vpop.f32.mrb[0].mxu0
        %v3560 = vadd.f32 %v3495, %v3559
        %v3561 = vpop.f32.mrb[0].mxu0
        %3562 = vdwg.mxu0
        %3563 = vst.msk [vmem:[%s591] sm:$0xff] %vm615, %v3425
        %3564 = vst.msk [vmem:[%s591 + $0x8] sm:$0xff] %vm615, %v3426
        %3565 = vst.msk [vmem:[%s591 + $0x10] sm:$0xff] %vm615, %v3427
        %3566 = vst.msk [vmem:[%s591 + $0x18] sm:$0xff] %vm615, %v3428
        %3567 = vst.msk [vmem:[%s591 + $0x20] sm:$0xff] %vm615, %v3429
        %3568 = vst.msk [vmem:[%s591 + $0x28] sm:$0xff] %vm615, %v3430
        %3569 = vst.msk [vmem:[%s591 + $0x30] sm:$0xff] %vm615, %v3431
        %3570 = vst.msk [vmem:[%s591 + $0x38] sm:$0xff] %vm615, %v3432
        %3571 = vst.msk [vmem:[%s598] sm:$0xff] %vm615, %v3533
        %3572 = vst.msk [vmem:[%s598 + $0x8] sm:$0xff] %vm615, %v3536
        %3573 = vst.msk [vmem:[%s598 + $0x10] sm:$0xff] %vm615, %v3541
        %3574 = vst.msk [vmem:[%s598 + $0x18] sm:$0xff] %vm615, %v3544
        %3575 = vst.msk [vmem:[%s598 + $0x20] sm:$0xff] %vm615, %v3549
        %3576 = vst.msk [vmem:[%s598 + $0x28] sm:$0xff] %vm615, %v3552
        %3577 = vst.msk [vmem:[%s598 + $0x30] sm:$0xff] %vm615, %v3557
        %3578 = vst.msk [vmem:[%s598 + $0x38] sm:$0xff] %vm615, %v3560
        %v3579 = vmul.f32 %v3425, %v3425
        %v3580 = vmul.f32 %v3426, %v3426
        %v3581 = vmul.f32 %v3427, %v3427
        %v3582 = vmul.f32 %v3428, %v3428
        %v3583 = vmul.f32 %v3429, %v3429
        %v3584 = vmul.f32 %v3430, %v3430
        %v3585 = vmul.f32 %v3431, %v3431
        %v3586 = vmul.f32 %v3432, %v3432
        %v3587 = vmul.f32 %v3533, %v3533
        %v3588 = vmul.f32 %v3536, %v3536
        %v3589 = vmul.f32 %v3541, %v3541
        %v3590 = vmul.f32 %v3544, %v3544
        %v3591 = vmul.f32 %v3549, %v3549
        %v3592 = vmul.f32 %v3552, %v3552
        %v3593 = vmul.f32 %v3557, %v3557
        %v3594 = vmul.f32 %v3560, %v3560
        %v3595 = vadd.f32 %v3579, %v3587
        %v3596 = vadd.f32 %v3580, %v3588
        %v3597 = vadd.f32 %v3581, %v3589
        %v3598 = vadd.f32 %v3582, %v3590
        %v3599 = vadd.f32 %v3583, %v3591
        %v3600 = vadd.f32 %v3584, %v3592
        %v3601 = vadd.f32 %v3585, %v3593
        %v3602 = vadd.f32 %v3586, %v3594
        %3603 = vst.msk [vmem:[%s605] sm:$0xff] %vm615, %v3595
        %3604 = vst.msk [vmem:[%s605 + $0x8] sm:$0xff] %vm615, %v3596
        %3605 = vst.msk [vmem:[%s605 + $0x10] sm:$0xff] %vm615, %v3597
        %3606 = vst.msk [vmem:[%s605 + $0x18] sm:$0xff] %vm615, %v3598
        %3607 = vst.msk [vmem:[%s605 + $0x20] sm:$0xff] %vm615, %v3599
        %3608 = vst.msk [vmem:[%s605 + $0x28] sm:$0xff] %vm615, %v3600
        %3609 = vst.msk [vmem:[%s605 + $0x30] sm:$0xff] %vm615, %v3601
        %3610 = vst.msk [vmem:[%s605 + $0x38] sm:$0xff] %vm615, %v3602
        %s3611 = sand.u32 %s268, 1
        %s3612 = scalar_lea.sflag [#allocation4], %s3611
        %s3613 = sand.u32 %s268, 1
        %s3614 = smul.addr %s3613, 64
        %s3615 = scalar_lea.vmem [#allocation19], %s3614
        %s3616 = sand.u32 %s40, 1
        %s3617 = scalar_lea.sflag [#allocation21], %s3616
        %s3618 = sand.u32 %s294, 1
        %s3619 = smul.addr %s3618, 64
        %s3620 = scalar_lea.vmem [#allocation20], %s3619
        %s3621 = sand.u32 %s40, 1
        %s3622 = scalar_lea.sflag [#allocation21], %s3621
        %s3623 = sand.u32 %s320, 1
        %s3624 = smul.addr %s3623, 64
        %s3625 = scalar_lea.vmem [#allocation22], %s3624
        // Predicated region
        $region108: #{tpu_custom_call.1} parent=59 // pred_check
          %p3626 = pneg %p278
        $region109: #{tpu_custom_call.1} parent=59 // pred_check_branch
          %3628 = sbr.rel (%p3626) target = $region111
        $region110: #{tpu_custom_call.1} parent=59 // pred_region
          %s3630 = ssub.s32 1024, 1024
          %3631 = vsyncadd %s3612, %s3630
          %s3632 = smul.addr %s40, 8
          %s3633 = smul.addr %s3632, 128
          %s3634 = scalar_lea.hbm %s10, %s3633
          %s3635 = sshll.u32 %s3615, 4
          %s3636 = int_to_ptr.vmem [resolvable:$true] %s3635
          %3641 = dma.vmem_to_hbm [thread:$0]  %s3636, 1024, %s3634, %s3612, 128, 128, 8
        $region111: #{tpu_custom_call.1} parent=59 // pred_fallthru
          _
        // Predicated region
        $region112: #{tpu_custom_call.1} parent=59 // pred_check
          %p3642 = pneg %p304
        $region113: #{tpu_custom_call.1} parent=59 // pred_check_branch
          %3644 = sbr.rel (%p3642) target = $region115
        $region114: #{tpu_custom_call.1} parent=59 // pred_region
          %s3646 = ssub.s32 1024, 1024
          %3647 = vsyncadd %s3617, %s3646
          %s3648 = smul.addr %s40, 8
          %s3649 = smul.addr %s3648, 128
          %s3650 = scalar_lea.hbm %s11, %s3649
          %s3651 = sshll.u32 %s3620, 4
          %s3652 = int_to_ptr.vmem [resolvable:$true] %s3651
          %3657 = dma.vmem_to_hbm [thread:$0]  %s3652, 1024, %s3650, %s3617, 128, 128, 8
        $region115: #{tpu_custom_call.1} parent=59 // pred_fallthru
          _
        // Predicated region
        $region116: #{tpu_custom_call.1} parent=59 // pred_check
          %p3658 = pneg %p330
        $region117: #{tpu_custom_call.1} parent=59 // pred_check_branch
          %3660 = sbr.rel (%p3658) target = $region119
        $region118: #{tpu_custom_call.1} parent=59 // pred_region
          %s3662 = ssub.s32 1024, 1024
          %3663 = vsyncadd %s3622, %s3662
          %s3664 = smul.addr %s40, 8
          %s3665 = smul.addr %s3664, 128
          %s3666 = scalar_lea.hbm %s12, %s3665
          %s3667 = sshll.u32 %s3625, 4
          %s3668 = int_to_ptr.vmem [resolvable:$true] %s3667
          %3673 = dma.vmem_to_hbm [thread:$0]  %s3668, 1024, %s3666, %s3622, 128, 128, 8
        $region119: #{tpu_custom_call.1} parent=59 // pred_fallthru
          _
      $region60: #{tpu_custom_call.1} parent=5 // pred_fallthru
        _
      %p3674 = scmp.le.s32.totalorder 2, %s35
      // Predicated region
      $region120: #{tpu_custom_call.1} parent=5 // pred_check
        %p3675 = pneg %p3674
      $region121: #{tpu_custom_call.1} parent=5 // pred_check_branch
        %3677 = sbr.rel (%p3675) target = $region123
      $region122: #{tpu_custom_call.1} parent=5 // pred_region
        %s3678 = ssub.s32 %s35, 2
        // Predicated region
        $region124: #{tpu_custom_call.1} parent=122 // pred_check
          %p3679 = pneg %p284
        $region125: #{tpu_custom_call.1} parent=122 // pred_check_branch
          %3681 = sbr.rel (%p3679) target = $region127
        $region126: #{tpu_custom_call.1} parent=122 // pred_region
          %s3682 = sand.u32 %s269, 1
          %s3683 = scalar_lea.sflag [#allocation4], %s3682
          %s3684 = sand.u32 %s269, 1
          %s3685 = smul.addr %s3684, 64
          %s3686 = scalar_lea.vmem [#allocation19], %s3685
          %3687 = dma.done %s3683, 1024
        $region127: #{tpu_custom_call.1} parent=122 // pred_fallthru
          _
        // Predicated region
        $region128: #{tpu_custom_call.1} parent=122 // pred_check
          %p3688 = pneg %p310
        $region129: #{tpu_custom_call.1} parent=122 // pred_check_branch
          %3690 = sbr.rel (%p3688) target = $region131
        $region130: #{tpu_custom_call.1} parent=122 // pred_region
          %s3691 = sand.u32 %s41, 1
          %s3692 = scalar_lea.sflag [#allocation21], %s3691
          %s3693 = sand.u32 %s295, 1
          %s3694 = smul.addr %s3693, 64
          %s3695 = scalar_lea.vmem [#allocation20], %s3694
          %3696 = dma.done %s3692, 1024
        $region131: #{tpu_custom_call.1} parent=122 // pred_fallthru
          _
        // Predicated region
        $region132: #{tpu_custom_call.1} parent=122 // pred_check
          %p3697 = pneg %p336
        $region133: #{tpu_custom_call.1} parent=122 // pred_check_branch
          %3699 = sbr.rel (%p3697) target = $region135
        $region134: #{tpu_custom_call.1} parent=122 // pred_region
          %s3700 = sand.u32 %s41, 1
          %s3701 = scalar_lea.sflag [#allocation21], %s3700
          %s3702 = sand.u32 %s321, 1
          %s3703 = smul.addr %s3702, 64
          %s3704 = scalar_lea.vmem [#allocation22], %s3703
          %3705 = dma.done %s3701, 1024
        $region135: #{tpu_custom_call.1} parent=122 // pred_fallthru
          _
      $region123: #{tpu_custom_call.1} parent=5 // pred_fallthru
        _
    $region6: #{tpu_custom_call.1} parent=1 // loop_footer
      %s39 = sadd.s32 1, %s35
    $region7: #{tpu_custom_call.1} parent=1 // loop_footer_branch
      %34 = sbr.rel target = $region3
    $region8: #{tpu_custom_call.1} parent=1 // loop_exit
      _
    %3706 = vsyncpa [#allocation3], 1
    %s3707 = scalar_lea.sflag [#allocation3], 1
    %3708 = vsyncpa %s3707, 1
    %3709 = vsyncpa [#allocation6], 1
    %s3710 = scalar_lea.sflag [#allocation6], 1
    %3711 = vsyncpa %s3710, 1
    %3712 = vsyncpa [#allocation9], 1
    %3713 = vsyncpa [#allocation12], 1
    %3714 = vsyncpa [#allocation15], 1
    %3715 = vsyncpa [#allocation18], 1
    %3716 = vsyncpa [#allocation4], 1
    %s3717 = scalar_lea.sflag [#allocation4], 1
    %3718 = vsyncpa %s3717, 1
    %3719 = vsyncpa [#allocation21], 1
    %s3720 = scalar_lea.sflag [#allocation21], 1
    %3721 = vsyncpa %s3720, 1

</llo_original>
